<compile_context>
chip_gen: v7x
topology: tpu7x:2x2x1
jax: 0.10.0
libtpu: 0.0.40
codegen_flags: <defaults>
</compile_context>

<pallas_src>
import functools

import jax
import jax.numpy as jnp
from jax.experimental import pallas as pl
from jax.experimental.pallas import tpu as pltpu


def _layernorm(x, gamma, beta, eps=1e-5):
    """Fused single-pass LayerNorm: one sum and one sum-of-squares reduction."""
    x = x.astype(jnp.float32)
    n = jnp.float32(x.shape[-1])
    s = jnp.sum(x, axis=-1, keepdims=True)
    ss = jnp.sum(x * x, axis=-1, keepdims=True)
    mu = s / n
    var = ss / n - mu * mu
    return (x - mu) * jax.lax.rsqrt(var + eps) * gamma + beta


def _decoder_block_kernel(
    enc_ref, dec_ref,
    wq_ref, wkv_ref, wo_ref, bo_ref,
    g1_ref, b1_ref, g2_ref, b2_ref,
    w1_ref, bb1_ref, w2_ref, bb2_ref,
    out_ref,
    *, num_heads, head_size, t_dec, t_enc, batch_block, use_mask, mxu_dtype,
):
    E = num_heads * head_size
    Rq = batch_block * t_dec
    Rk = batch_block * t_enc
    BH = batch_block * num_heads

    # Collapse (batch_block, T, E) -> (batch_block*T, E) so every row-wise op sees one
    # tall, lane-dense slab (single MXU pass per matmul, unmasked stores).
    enc = enc_ref[...].astype(jnp.float32).reshape(Rk, E)
    dec = dec_ref[...].astype(jnp.float32).reshape(Rq, E)

    g1 = g1_ref[...]
    b1 = b1_ref[...]
    enc_n = _layernorm(enc, g1, b1)
    dec_n = _layernorm(dec, g1, b1)

    def mm(a, w_ref):
        w = w_ref[...]
        return jnp.dot(a.astype(w.dtype), w, preferred_element_type=jnp.float32)

    # Projections; cast to the MXU dtype ONCE here (not per-head slice).
    q = mm(dec_n, wq_ref).astype(mxu_dtype)        # (Rq, E)
    kv = mm(enc_n, wkv_ref).astype(mxu_dtype)      # (Rk, 2E)  -- fused k|v projection
    k = kv[:, :E]
    v = kv[:, E:]

    # Split heads: (R, E) -> (b, T, H, D) -> (b, H, T, D) -> (b*H, T, D).
    def split_heads(x, t):
        x = x.reshape(batch_block, t, num_heads, head_size)
        x = jnp.transpose(x, (0, 2, 1, 3))
        return x.reshape(BH, t, head_size)

    qh = split_heads(q, t_dec)
    kh = split_heads(k, t_enc)
    vh = split_heads(v, t_enc)

    # Batched attention: one dot_general over all (batch, head) pairs.
    scale = jnp.float32(head_size ** -0.5)
    scores = jnp.einsum("bqd,bkd->bqk", qh, kh,
                        preferred_element_type=jnp.float32) * scale
    if use_mask:
        # Causal mask (row >= col), hoisted and applied once to the batched scores.
        # -1e30 (not -inf): the diagonal is always kept so no row is fully masked;
        # revisit the sentinel if the masking scheme generalizes (t_dec != t_enc).
        row = jax.lax.broadcasted_iota(jnp.int32, (t_dec, t_enc), 0)
        col = jax.lax.broadcasted_iota(jnp.int32, (t_dec, t_enc), 1)
        scores = jnp.where((row >= col)[None, :, :], scores, jnp.float32(-1e30))
    scores = scores - jnp.max(scores, axis=-1, keepdims=True)
    p = jnp.exp(scores)
    # EUP reciprocal keeps the softmax divide off the VPU critical path.
    p = p * pl.reciprocal(jnp.sum(p, axis=-1, keepdims=True), approx=True)

    att = jnp.einsum("bqk,bkd->bqd", p.astype(mxu_dtype), vh,
                     preferred_element_type=jnp.float32)      # (BH, t_dec, D)
    # Merge heads back into one lane-dense (Rq, E) slab and feed straight into Wo
    # (no per-head scratch writes).
    att = att.reshape(batch_block, num_heads, t_dec, head_size)
    att = jnp.transpose(att, (0, 2, 1, 3)).reshape(Rq, E)

    mha = mm(att, wo_ref) + bo_ref[...]
    x = dec + mha                                   # first residual (f32)

    x_n = _layernorm(x, g2_ref[...], b2_ref[...])
    h1 = jnp.maximum(mm(x_n, w1_ref) + bb1_ref[...], 0.0)
    ff = mm(h1, w2_ref) + bb2_ref[...]

    out_ref[...] = (x + ff).reshape(batch_block, t_dec, E).astype(out_ref.dtype)


def _vmem_limit_bytes():
    """Generation-aware scoped-VMEM limit: ~56 MiB on v7x (64 MiB physical per TC),
    up to ~110 MiB on v5e/v6e (128 MiB physical)."""
    cap = 64 * 1024 * 1024
    try:
        info = pltpu.get_tpu_info()
        cap = int(getattr(info, "vmem_capacity_bytes", cap) or cap)
    except Exception:
        pass
    return int(min(cap - cap // 8, 110 * 1024 * 1024))


def _est_step_vmem_bytes(batch_block, t_dec, t_enc, E, num_heads,
                         act_itemsize, w_itemsize, out_itemsize):
    """Rough per-grid-step VMEM footprint: resident weights (single-buffered) +
    double-buffered activation blocks + f32 intermediates inside the body."""
    Rq, Rk = batch_block * t_dec, batch_block * t_enc
    weights = 12 * E * E * w_itemsize + 14 * E * 4
    io = 2 * (Rk + Rq) * E * act_itemsize + 2 * Rq * E * out_itemsize
    interm = (4 * Rq * E + 4 * Rk * E
              + 2 * batch_block * num_heads * t_dec * t_enc
              + Rq * 4 * E) * 4
    return weights + io + interm


def cross_attention_decoder_block(enc, dec, params, *, num_heads, mask=True,
                                  batch_block=None, mxu_dtype=jnp.bfloat16,
                                  out_dtype=None):
    B, Tq, E = dec.shape
    Bk, Tk, Ek = enc.shape
    assert B == Bk and E == Ek, "enc/dec batch and embedding dims must match"
    head_size = E // num_heads
    assert head_size * num_heads == E

    mxu_dtype = jnp.dtype(mxu_dtype)
    out_dtype = jnp.dtype(out_dtype) if out_dtype is not None else jnp.dtype(dec.dtype)
    vmem_limit = _vmem_limit_bytes()

    divisors = [d for d in range(1, B + 1) if B % d == 0]
    if batch_block is None:
        # Keep >=2 grid steps when B allows (both v7x TensorCores get work); among
        # those pick the largest block targeting ~256-512 rows per step, bounded by
        # the per-generation VMEM budget.
        good = [d for d in divisors if B // d >= 2] or divisors
        target = max(1, -(-384 // Tq))                 # ceil(384 / Tq)
        fit = [d for d in good if d <= target]
        batch_block = max(fit) if fit else min(good)
        while batch_block > 1 and _est_step_vmem_bytes(
                batch_block, Tq, Tk, E, num_heads,
                jnp.dtype(dec.dtype).itemsize, mxu_dtype.itemsize,
                out_dtype.itemsize) > int(0.8 * vmem_limit):
            smaller = [d for d in divisors if d < batch_block]
            batch_block = max(smaller) if smaller else 1
    assert B % batch_block == 0
    grid = (B // batch_block,)

    # Pre-cast matmul weights to the MXU dtype (bf16 default: bf16-native MXUs on all
    # of v5e/v6e/v7x; halves resident-weight VMEM and HBM traffic).
    wq = params["wq"].astype(mxu_dtype)
    wkv = jnp.concatenate([params["wk"], params["wv"]], axis=1).astype(mxu_dtype)
    wo = params["wo"].astype(mxu_dtype)
    w1 = params["w1"].astype(mxu_dtype)
    w2 = params["w2"].astype(mxu_dtype)

    kernel = functools.partial(
        _decoder_block_kernel,
        num_heads=num_heads, head_size=head_size,
        t_dec=Tq, t_enc=Tk, batch_block=batch_block,
        use_mask=bool(mask), mxu_dtype=mxu_dtype,
    )

    cost = pl.CostEstimate(
        flops=int(2 * B * (Tq * E * E                       # q projection
                           + Tk * E * 2 * E                 # fused k|v projection
                           + 2 * num_heads * Tq * Tk * head_size   # scores + p@v
                           + Tq * E * E                     # Wo
                           + 2 * Tq * E * 4 * E)),          # FF
        transcendentals=int(B * num_heads * Tq * Tk),       # softmax exp
        bytes_accessed=int((B * Tk * E + B * Tq * E) * jnp.dtype(dec.dtype).itemsize
                           + B * Tq * E * out_dtype.itemsize
                           + 12 * E * E * mxu_dtype.itemsize + 14 * E * 4),
    )

    def act_spec(T):
        return pl.BlockSpec((batch_block, T, E), lambda b: (b, 0, 0))

    args = (enc, dec,
            wq, wkv, wo, params["bo"],
            params["g1"], params["b1"], params["g2"], params["b2"],
            w1, params["bb1"], w2, params["bb2"])

    def build(single_buffer_weights):
        def wspec(shape):
            # Constant index map -> weight stays resident across the batch grid.
            # Buffered(1): a second pipeline buffer would never be used, so drop it
            # (halves resident-weight VMEM; matters most on v7x's 64 MiB VMEM).
            kw = {"pipeline_mode": pl.Buffered(1)} if single_buffer_weights else {}
            return pl.BlockSpec(shape, lambda b: (0,) * len(shape), **kw)

        in_specs = [
            act_spec(Tk),           # enc
            act_spec(Tq),           # dec
            wspec((E, E)),          # Wq
            wspec((E, 2 * E)),      # Wk|Wv fused
            wspec((E, E)),          # Wo
            wspec((1, E)),          # bo
            wspec((1, E)),          # ln1 gamma
            wspec((1, E)),          # ln1 beta
            wspec((1, E)),          # ln2 gamma
            wspec((1, E)),          # ln2 beta
            wspec((E, 4 * E)),      # ff W1
            wspec((1, 4 * E)),      # ff b1
            wspec((4 * E, E)),      # ff W2
            wspec((1, E)),          # ff b2
        ]
        return pl.pallas_call(
            kernel,
            out_shape=jax.ShapeDtypeStruct((B, Tq, E), out_dtype),
            grid_spec=pltpu.PrefetchScalarGridSpec(
                num_scalar_prefetch=0,
                grid=grid,
                in_specs=in_specs,
                out_specs=act_spec(Tq),
            ),
            compiler_params=pltpu.CompilerParams(
                dimension_semantics=("parallel",),
                vmem_limit_bytes=vmem_limit,
            ),
            cost_estimate=cost,
        )

    try:
        return build(True)(*args)
    except Exception:
        # pipeline_mode=pl.Buffered(1) rejected on this jax/Mosaic build:
        # fall back to default (double-buffered) weight specs.
        return build(False)(*args)


def _reference(enc, dec, params, *, num_heads, mask=True):
    """Pure-JAX reference mirroring the PyTorch forward (eval mode)."""
    E = dec.shape[-1]
    hd = E // num_heads

    def ln(x, g, b):
        mu = x.mean(-1, keepdims=True)
        var = ((x - mu) ** 2).mean(-1, keepdims=True)
        return (x - mu) / jnp.sqrt(var + 1e-5) * g + b

    enc_n = ln(enc, params["g1"][0], params["b1"][0])
    dec_n = ln(dec, params["g1"][0], params["b1"][0])
    q = dec_n @ params["wq"]
    k = enc_n @ params["wk"]
    v = enc_n @ params["wv"]
    B, T, _ = q.shape
    q = q.reshape(B, T, num_heads, hd).transpose(0, 2, 1, 3)
    k = k.reshape(B, T, num_heads, hd).transpose(0, 2, 1, 3)
    v = v.reshape(B, T, num_heads, hd).transpose(0, 2, 1, 3)
    scores = jnp.einsum("bhqd,bhkd->bhqk", q, k) * hd ** -0.5
    if mask:
        tril = jnp.tril(jnp.ones((T, T), bool))
        scores = jnp.where(tril, scores, -jnp.inf)
    p = jax.nn.softmax(scores, axis=-1)
    att = jnp.einsum("bhqk,bhkd->bhqd", p, v).transpose(0, 2, 1, 3).reshape(B, T, E)
    mha = att @ params["wo"] + params["bo"][0]
    x = dec + mha
    x_n = ln(x, params["g2"][0], params["b2"][0])
    ff = jnp.maximum(x_n @ params["w1"] + params["bb1"][0], 0.0) @ params["w2"] + params["bb2"][0]
    return x + ff


if __name__ == "__main__":
    # E=128 -> lane-dense activation/output blocks; head_size = 32 (toy size).
    B, T, E, H = 2, 16, 128, 4

    key = jax.random.PRNGKey(0)
    ks = jax.random.split(key, 12)
    sc = 0.05
    params = {
        "wq": jax.random.normal(ks[0], (E, E), jnp.float32) * sc,
        "wk": jax.random.normal(ks[1], (E, E), jnp.float32) * sc,
        "wv": jax.random.normal(ks[2], (E, E), jnp.float32) * sc,
        "wo": jax.random.normal(ks[3], (E, E), jnp.float32) * sc,
        "bo": jax.random.normal(ks[4], (1, E), jnp.float32) * sc,
        "g1": jnp.ones((1, E), jnp.float32),
        "b1": jnp.zeros((1, E), jnp.float32),
        "g2": jnp.ones((1, E), jnp.float32),
        "b2": jnp.zeros((1, E), jnp.float32),
        "w1": jax.random.normal(ks[5], (E, 4 * E), jnp.float32) * sc,
        "bb1": jax.random.normal(ks[6], (1, 4 * E), jnp.float32) * sc,
        "w2": jax.random.normal(ks[7], (4 * E, E), jnp.float32) * sc,
        "bb2": jax.random.normal(ks[8], (1, E), jnp.float32) * sc,
    }

    enc = jax.random.normal(ks[9], (B, T, E), jnp.float32)
    dec = jax.random.normal(ks[10], (B, T, E), jnp.float32)

    ref = _reference(enc, dec, params, num_heads=H, mask=True)

    # f32 MXU path (tight check; softmax uses approx reciprocal -> slightly looser tol).
    out = cross_attention_decoder_block(
        enc, dec, params, num_heads=H, mask=True, mxu_dtype=jnp.float32)
    out = jax.block_until_ready(out)
    assert out.shape == (B, T, E)
    assert jnp.allclose(out, ref, atol=5e-3, rtol=5e-3), float(jnp.max(jnp.abs(out - ref)))

    # Default path: bf16 MXU operands (recommended on v5e/v6e/v7x); looser tolerance.
    out_bf16 = cross_attention_decoder_block(enc, dec, params, num_heads=H, mask=True)
    out_bf16 = jax.block_until_ready(out_bf16)
    assert jnp.allclose(out_bf16, ref, atol=5e-2, rtol=5e-2), \
        float(jnp.max(jnp.abs(out_bf16 - ref)))

    print("KERNEL_OK")
</pallas_src>

<mosaic_0001>
module attributes {stable_mosaic.version = 11 : i64} {
  func.func @_decoder_block_kernel(%arg0: i32, %arg1: memref<1x16x128xf32, #tpu.memory_space<vmem>>, %arg2: memref<1x16x128xf32, #tpu.memory_space<vmem>>, %arg3: memref<128x128xf32, #tpu.memory_space<vmem>>, %arg4: memref<128x256xf32, #tpu.memory_space<vmem>>, %arg5: memref<128x128xf32, #tpu.memory_space<vmem>>, %arg6: memref<1x128xf32, #tpu.memory_space<vmem>>, %arg7: memref<1x128xf32, #tpu.memory_space<vmem>>, %arg8: memref<1x128xf32, #tpu.memory_space<vmem>>, %arg9: memref<1x128xf32, #tpu.memory_space<vmem>>, %arg10: memref<1x128xf32, #tpu.memory_space<vmem>>, %arg11: memref<128x512xf32, #tpu.memory_space<vmem>>, %arg12: memref<1x512xf32, #tpu.memory_space<vmem>>, %arg13: memref<512x128xf32, #tpu.memory_space<vmem>>, %arg14: memref<1x128xf32, #tpu.memory_space<vmem>>, %arg15: memref<1x16x128xf32, #tpu.memory_space<vmem>>) attributes {dimension_semantics = [#tpu.dimension_semantics<parallel>], iteration_bounds = array<i64: 2>, scalar_prefetch = 0 : i64, scratch_operands = 0 : i64, tpu.core_type = #tpu.core_type<tc>, window_params = [{transform_indices = @transform_0, window_bounds = array<i64: 1, 16, 128>}, {transform_indices = @transform_1, window_bounds = array<i64: 1, 16, 128>}, {pipeline_mode = #tpu.pipeline_mode<synchronous>, transform_indices = @transform_2, window_bounds = array<i64: 128, 128>}, {pipeline_mode = #tpu.pipeline_mode<synchronous>, transform_indices = @transform_3, window_bounds = array<i64: 128, 256>}, {pipeline_mode = #tpu.pipeline_mode<synchronous>, transform_indices = @transform_4, window_bounds = array<i64: 128, 128>}, {pipeline_mode = #tpu.pipeline_mode<synchronous>, transform_indices = @transform_5, window_bounds = array<i64: 1, 128>}, {pipeline_mode = #tpu.pipeline_mode<synchronous>, transform_indices = @transform_6, window_bounds = array<i64: 1, 128>}, {pipeline_mode = #tpu.pipeline_mode<synchronous>, transform_indices = @transform_7, window_bounds = array<i64: 1, 128>}, {pipeline_mode = #tpu.pipeline_mode<synchronous>, transform_indices = @transform_8, window_bounds = array<i64: 1, 128>}, {pipeline_mode = #tpu.pipeline_mode<synchronous>, transform_indices = @transform_9, window_bounds = array<i64: 1, 128>}, {pipeline_mode = #tpu.pipeline_mode<synchronous>, transform_indices = @transform_10, window_bounds = array<i64: 128, 512>}, {pipeline_mode = #tpu.pipeline_mode<synchronous>, transform_indices = @transform_11, window_bounds = array<i64: 1, 512>}, {pipeline_mode = #tpu.pipeline_mode<synchronous>, transform_indices = @transform_12, window_bounds = array<i64: 512, 128>}, {pipeline_mode = #tpu.pipeline_mode<synchronous>, transform_indices = @transform_13, window_bounds = array<i64: 1, 128>}, {transform_indices = @transform_14, window_bounds = array<i64: 1, 16, 128>}]} {
    %c0 = arith.constant 0 : index
    %c0_0 = arith.constant 0 : index
    %c0_1 = arith.constant 0 : index
    %0 = vector.load %arg1[%c0, %c0_0, %c0_1] : memref<1x16x128xf32, #tpu.memory_space<vmem>>, vector<1x16x128xf32>
    %1 = vector.shape_cast %0 : vector<1x16x128xf32> to vector<16x128xf32>
    %c0_2 = arith.constant 0 : index
    %c0_3 = arith.constant 0 : index
    %c0_4 = arith.constant 0 : index
    %2 = vector.load %arg2[%c0_2, %c0_3, %c0_4] : memref<1x16x128xf32, #tpu.memory_space<vmem>>, vector<1x16x128xf32>
    %3 = vector.shape_cast %2 : vector<1x16x128xf32> to vector<16x128xf32>
    %c0_5 = arith.constant 0 : index
    %c0_6 = arith.constant 0 : index
    %4 = vector.load %arg7[%c0_5, %c0_6] : memref<1x128xf32, #tpu.memory_space<vmem>>, vector<1x128xf32>
    %c0_7 = arith.constant 0 : index
    %c0_8 = arith.constant 0 : index
    %5 = vector.load %arg8[%c0_7, %c0_8] : memref<1x128xf32, #tpu.memory_space<vmem>>, vector<1x128xf32>
    %cst = arith.constant dense<0.000000e+00> : vector<16xf32>
    %6 = vector.multi_reduction <add>, %1, %cst [1] : vector<16x128xf32> to vector<16xf32>
    %7 = vector.shape_cast %6 : vector<16xf32> to vector<16x1xf32>
    %8 = arith.mulf %1, %1 : vector<16x128xf32>
    %cst_9 = arith.constant dense<0.000000e+00> : vector<16xf32>
    %9 = vector.multi_reduction <add>, %8, %cst_9 [1] : vector<16x128xf32> to vector<16xf32>
    %10 = vector.shape_cast %9 : vector<16xf32> to vector<16x1xf32>
    %cst_10 = arith.constant 1.280000e+02 : f32
    %11 = vector.broadcast %cst_10 : f32 to vector<16x1xf32>
    %12 = arith.divf %7, %11 : vector<16x1xf32>
    %cst_11 = arith.constant 1.280000e+02 : f32
    %13 = vector.broadcast %cst_11 : f32 to vector<16x1xf32>
    %14 = arith.divf %10, %13 : vector<16x1xf32>
    %15 = arith.mulf %12, %12 : vector<16x1xf32>
    %16 = arith.subf %14, %15 : vector<16x1xf32>
    %17 = vector.broadcast %12 : vector<16x1xf32> to vector<16x128xf32>
    %18 = arith.subf %1, %17 : vector<16x128xf32>
    %cst_12 = arith.constant 9.99999974E-6 : f32
    %19 = vector.broadcast %cst_12 : f32 to vector<16x1xf32>
    %20 = arith.addf %16, %19 : vector<16x1xf32>
    %21 = math.rsqrt %20 : vector<16x1xf32>
    %22 = vector.broadcast %21 : vector<16x1xf32> to vector<16x128xf32>
    %23 = arith.mulf %18, %22 : vector<16x128xf32>
    %24 = vector.broadcast %4 : vector<1x128xf32> to vector<16x128xf32>
    %25 = arith.mulf %23, %24 : vector<16x128xf32>
    %26 = vector.broadcast %5 : vector<1x128xf32> to vector<16x128xf32>
    %27 = arith.addf %25, %26 : vector<16x128xf32>
    %cst_13 = arith.constant dense<0.000000e+00> : vector<16xf32>
    %28 = vector.multi_reduction <add>, %3, %cst_13 [1] : vector<16x128xf32> to vector<16xf32>
    %29 = vector.shape_cast %28 : vector<16xf32> to vector<16x1xf32>
    %30 = arith.mulf %3, %3 : vector<16x128xf32>
    %cst_14 = arith.constant dense<0.000000e+00> : vector<16xf32>
    %31 = vector.multi_reduction <add>, %30, %cst_14 [1] : vector<16x128xf32> to vector<16xf32>
    %32 = vector.shape_cast %31 : vector<16xf32> to vector<16x1xf32>
    %cst_15 = arith.constant 1.280000e+02 : f32
    %33 = vector.broadcast %cst_15 : f32 to vector<16x1xf32>
    %34 = arith.divf %29, %33 : vector<16x1xf32>
    %cst_16 = arith.constant 1.280000e+02 : f32
    %35 = vector.broadcast %cst_16 : f32 to vector<16x1xf32>
    %36 = arith.divf %32, %35 : vector<16x1xf32>
    %37 = arith.mulf %34, %34 : vector<16x1xf32>
    %38 = arith.subf %36, %37 : vector<16x1xf32>
    %39 = vector.broadcast %34 : vector<16x1xf32> to vector<16x128xf32>
    %40 = arith.subf %3, %39 : vector<16x128xf32>
    %cst_17 = arith.constant 9.99999974E-6 : f32
    %41 = vector.broadcast %cst_17 : f32 to vector<16x1xf32>
    %42 = arith.addf %38, %41 : vector<16x1xf32>
    %43 = math.rsqrt %42 : vector<16x1xf32>
    %44 = vector.broadcast %43 : vector<16x1xf32> to vector<16x128xf32>
    %45 = arith.mulf %40, %44 : vector<16x128xf32>
    %46 = vector.broadcast %4 : vector<1x128xf32> to vector<16x128xf32>
    %47 = arith.mulf %45, %46 : vector<16x128xf32>
    %48 = vector.broadcast %5 : vector<1x128xf32> to vector<16x128xf32>
    %49 = arith.addf %47, %48 : vector<16x128xf32>
    %c0_18 = arith.constant 0 : index
    %c0_19 = arith.constant 0 : index
    %50 = vector.load %arg3[%c0_18, %c0_19] : memref<128x128xf32, #tpu.memory_space<vmem>>, vector<128x128xf32>
    %cst_20 = arith.constant dense<0.000000e+00> : vector<16x128xf32>
    %51 = tpu.matmul %49, %50, %cst_20 {dimension_numbers = #tpu.dot_dimension_numbers<[1], [0], [0], [1], [0, 0, 1, 1], [], []>} : vector<16x128xf32>, vector<128x128xf32>, vector<16x128xf32> -> vector<16x128xf32>
    %c0_21 = arith.constant 0 : index
    %c0_22 = arith.constant 0 : index
    %52 = vector.load %arg4[%c0_21, %c0_22] : memref<128x256xf32, #tpu.memory_space<vmem>>, vector<128x256xf32>
    %cst_23 = arith.constant dense<0.000000e+00> : vector<16x256xf32>
    %53 = tpu.matmul %27, %52, %cst_23 {dimension_numbers = #tpu.dot_dimension_numbers<[1], [0], [0], [1], [0, 0, 1, 1], [], []>} : vector<16x128xf32>, vector<128x256xf32>, vector<16x256xf32> -> vector<16x256xf32>
    %54 = vector.extract_strided_slice %53 {offsets = [0, 0], sizes = [16, 128], strides = [1, 1]} : vector<16x256xf32> to vector<16x128xf32>
    %55 = vector.extract_strided_slice %53 {offsets = [0, 128], sizes = [16, 128], strides = [1, 1]} : vector<16x256xf32> to vector<16x128xf32>
    %56 = vector.shape_cast %51 : vector<16x128xf32> to vector<1x16x4x32xf32>
    %57 = tpu.transpose %56, [0, 2, 1, 3] : vector<1x16x4x32xf32> -> vector<1x4x16x32xf32>
    %58 = vector.shape_cast %57 : vector<1x4x16x32xf32> to vector<4x16x32xf32>
    %59 = vector.shape_cast %54 : vector<16x128xf32> to vector<1x16x4x32xf32>
    %60 = tpu.transpose %59, [0, 2, 1, 3] : vector<1x16x4x32xf32> -> vector<1x4x16x32xf32>
    %61 = vector.shape_cast %60 : vector<1x4x16x32xf32> to vector<4x16x32xf32>
    %62 = vector.shape_cast %55 : vector<16x128xf32> to vector<1x16x4x32xf32>
    %63 = tpu.transpose %62, [0, 2, 1, 3] : vector<1x16x4x32xf32> -> vector<1x4x16x32xf32>
    %64 = vector.shape_cast %63 : vector<1x4x16x32xf32> to vector<4x16x32xf32>
    "tpu.trace_start"() <{level = 10 : i32, message = "bqd,bkd->bqk"}> : () -> ()
    %cst_24 = arith.constant dense<0.000000e+00> : vector<4x16x16xf32>
    %65 = tpu.matmul %58, %61, %cst_24 {dimension_numbers = #tpu.dot_dimension_numbers<[2], [2], [1], [1], [0, 0, 0, 1, 1, 1], [0], [0]>} : vector<4x16x32xf32>, vector<4x16x32xf32>, vector<4x16x16xf32> -> vector<4x16x16xf32>
    "tpu.trace_stop"() : () -> ()
    %cst_25 = arith.constant 0.176776692 : f32
    %66 = vector.broadcast %cst_25 : f32 to vector<4x16x16xf32>
    %67 = arith.mulf %65, %66 : vector<4x16x16xf32>
    %68 = tpu.iota {dimensions = array<i32: 0>} : vector<16x16xi32>
    %69 = tpu.iota {dimensions = array<i32: 1>} : vector<16x16xi32>
    %70 = arith.cmpi sge, %68, %69 : vector<16x16xi32>
    %71 = vector.shape_cast %70 : vector<16x16xi1> to vector<1x16x16xi1>
    %cst_26 = arith.constant -1.000000e+30 : f32
    %72 = vector.shape_cast %71 : vector<1x16x16xi1> to vector<1x16x16xi1>
    %73 = vector.broadcast %72 : vector<1x16x16xi1> to vector<4x16x16xi1>
    %74 = vector.broadcast %cst_26 : f32 to vector<4x16x16xf32>
    %75 = arith.select %73, %67, %74 : vector<4x16x16xi1>, vector<4x16x16xf32>
    %cst_27 = arith.constant dense<0xFF800000> : vector<4x16xf32>
    %76 = vector.multi_reduction <maximumf>, %75, %cst_27 [2] : vector<4x16x16xf32> to vector<4x16xf32>
    %77 = vector.shape_cast %76 : vector<4x16xf32> to vector<4x16x1xf32>
    %78 = vector.broadcast %77 : vector<4x16x1xf32> to vector<4x16x16xf32>
    %79 = arith.subf %75, %78 : vector<4x16x16xf32>
    %80 = math.exp %79 : vector<4x16x16xf32>
    %cst_28 = arith.constant dense<0.000000e+00> : vector<4x16xf32>
    %81 = vector.multi_reduction <add>, %80, %cst_28 [2] : vector<4x16x16xf32> to vector<4x16xf32>
    %82 = vector.shape_cast %81 : vector<4x16xf32> to vector<4x16x1xf32>
    %83 = tpu.reciprocal %82 {approx = true} : vector<4x16x1xf32> -> vector<4x16x1xf32>
    %84 = vector.broadcast %83 : vector<4x16x1xf32> to vector<4x16x16xf32>
    %85 = arith.mulf %80, %84 : vector<4x16x16xf32>
    "tpu.trace_start"() <{level = 10 : i32, message = "bqk,bkd->bqd"}> : () -> ()
    %cst_29 = arith.constant dense<0.000000e+00> : vector<4x16x32xf32>
    %86 = tpu.matmul %85, %64, %cst_29 {dimension_numbers = #tpu.dot_dimension_numbers<[2], [1], [1], [2], [0, 0, 0, 1, 1, 2], [0], [0]>} : vector<4x16x16xf32>, vector<4x16x32xf32>, vector<4x16x32xf32> -> vector<4x16x32xf32>
    "tpu.trace_stop"() : () -> ()
    %87 = vector.shape_cast %86 : vector<4x16x32xf32> to vector<1x4x16x32xf32>
    %88 = tpu.transpose %87, [0, 2, 1, 3] : vector<1x4x16x32xf32> -> vector<1x16x4x32xf32>
    %89 = vector.shape_cast %88 : vector<1x16x4x32xf32> to vector<16x128xf32>
    %c0_30 = arith.constant 0 : index
    %c0_31 = arith.constant 0 : index
    %90 = vector.load %arg5[%c0_30, %c0_31] : memref<128x128xf32, #tpu.memory_space<vmem>>, vector<128x128xf32>
    %cst_32 = arith.constant dense<0.000000e+00> : vector<16x128xf32>
    %91 = tpu.matmul %89, %90, %cst_32 {dimension_numbers = #tpu.dot_dimension_numbers<[1], [0], [0], [1], [0, 0, 1, 1], [], []>} : vector<16x128xf32>, vector<128x128xf32>, vector<16x128xf32> -> vector<16x128xf32>
    %c0_33 = arith.constant 0 : index
    %c0_34 = arith.constant 0 : index
    %92 = vector.load %arg6[%c0_33, %c0_34] : memref<1x128xf32, #tpu.memory_space<vmem>>, vector<1x128xf32>
    %93 = vector.broadcast %92 : vector<1x128xf32> to vector<16x128xf32>
    %94 = arith.addf %91, %93 : vector<16x128xf32>
    %95 = arith.addf %3, %94 : vector<16x128xf32>
    %c0_35 = arith.constant 0 : index
    %c0_36 = arith.constant 0 : index
    %96 = vector.load %arg9[%c0_35, %c0_36] : memref<1x128xf32, #tpu.memory_space<vmem>>, vector<1x128xf32>
    %c0_37 = arith.constant 0 : index
    %c0_38 = arith.constant 0 : index
    %97 = vector.load %arg10[%c0_37, %c0_38] : memref<1x128xf32, #tpu.memory_space<vmem>>, vector<1x128xf32>
    %cst_39 = arith.constant dense<0.000000e+00> : vector<16xf32>
    %98 = vector.multi_reduction <add>, %95, %cst_39 [1] : vector<16x128xf32> to vector<16xf32>
    %99 = vector.shape_cast %98 : vector<16xf32> to vector<16x1xf32>
    %100 = arith.mulf %95, %95 : vector<16x128xf32>
    %cst_40 = arith.constant dense<0.000000e+00> : vector<16xf32>
    %101 = vector.multi_reduction <add>, %100, %cst_40 [1] : vector<16x128xf32> to vector<16xf32>
    %102 = vector.shape_cast %101 : vector<16xf32> to vector<16x1xf32>
    %cst_41 = arith.constant 1.280000e+02 : f32
    %103 = vector.broadcast %cst_41 : f32 to vector<16x1xf32>
    %104 = arith.divf %99, %103 : vector<16x1xf32>
    %cst_42 = arith.constant 1.280000e+02 : f32
    %105 = vector.broadcast %cst_42 : f32 to vector<16x1xf32>
    %106 = arith.divf %102, %105 : vector<16x1xf32>
    %107 = arith.mulf %104, %104 : vector<16x1xf32>
    %108 = arith.subf %106, %107 : vector<16x1xf32>
    %109 = vector.broadcast %104 : vector<16x1xf32> to vector<16x128xf32>
    %110 = arith.subf %95, %109 : vector<16x128xf32>
    %cst_43 = arith.constant 9.99999974E-6 : f32
    %111 = vector.broadcast %cst_43 : f32 to vector<16x1xf32>
    %112 = arith.addf %108, %111 : vector<16x1xf32>
    %113 = math.rsqrt %112 : vector<16x1xf32>
    %114 = vector.broadcast %113 : vector<16x1xf32> to vector<16x128xf32>
    %115 = arith.mulf %110, %114 : vector<16x128xf32>
    %116 = vector.broadcast %96 : vector<1x128xf32> to vector<16x128xf32>
    %117 = arith.mulf %115, %116 : vector<16x128xf32>
    %118 = vector.broadcast %97 : vector<1x128xf32> to vector<16x128xf32>
    %119 = arith.addf %117, %118 : vector<16x128xf32>
    %c0_44 = arith.constant 0 : index
    %c0_45 = arith.constant 0 : index
    %120 = vector.load %arg11[%c0_44, %c0_45] : memref<128x512xf32, #tpu.memory_space<vmem>>, vector<128x512xf32>
    %cst_46 = arith.constant dense<0.000000e+00> : vector<16x512xf32>
    %121 = tpu.matmul %119, %120, %cst_46 {dimension_numbers = #tpu.dot_dimension_numbers<[1], [0], [0], [1], [0, 0, 1, 1], [], []>} : vector<16x128xf32>, vector<128x512xf32>, vector<16x512xf32> -> vector<16x512xf32>
    %c0_47 = arith.constant 0 : index
    %c0_48 = arith.constant 0 : index
    %122 = vector.load %arg12[%c0_47, %c0_48] : memref<1x512xf32, #tpu.memory_space<vmem>>, vector<1x512xf32>
    %123 = vector.broadcast %122 : vector<1x512xf32> to vector<16x512xf32>
    %124 = arith.addf %121, %123 : vector<16x512xf32>
    %cst_49 = arith.constant 0.000000e+00 : f32
    %125 = vector.broadcast %cst_49 : f32 to vector<16x512xf32>
    %126 = arith.maximumf %124, %125 : vector<16x512xf32>
    %c0_50 = arith.constant 0 : index
    %c0_51 = arith.constant 0 : index
    %127 = vector.load %arg13[%c0_50, %c0_51] : memref<512x128xf32, #tpu.memory_space<vmem>>, vector<512x128xf32>
    %cst_52 = arith.constant dense<0.000000e+00> : vector<16x128xf32>
    %128 = tpu.matmul %126, %127, %cst_52 {dimension_numbers = #tpu.dot_dimension_numbers<[1], [0], [0], [1], [0, 0, 1, 1], [], []>} : vector<16x512xf32>, vector<512x128xf32>, vector<16x128xf32> -> vector<16x128xf32>
    %c0_53 = arith.constant 0 : index
    %c0_54 = arith.constant 0 : index
    %129 = vector.load %arg14[%c0_53, %c0_54] : memref<1x128xf32, #tpu.memory_space<vmem>>, vector<1x128xf32>
    %130 = vector.broadcast %129 : vector<1x128xf32> to vector<16x128xf32>
    %131 = arith.addf %128, %130 : vector<16x128xf32>
    %132 = arith.addf %95, %131 : vector<16x128xf32>
    %133 = vector.shape_cast %132 : vector<16x128xf32> to vector<1x16x128xf32>
    %c0_55 = arith.constant 0 : index
    %c0_56 = arith.constant 0 : index
    %c0_57 = arith.constant 0 : index
    %134 = vector.load %arg15[%c0_55, %c0_56, %c0_57] : memref<1x16x128xf32, #tpu.memory_space<vmem>>, vector<1x16x128xf32>
    tpu.vector_store %arg15[%c0_55, %c0_56, %c0_57], %133 {strides = array<i32>} : memref<1x16x128xf32, #tpu.memory_space<vmem>>, vector<1x16x128xf32>,
    return
  }
  func.func @transform_0(%arg0: i32) -> (i32, i32, i32) {
    %c0_i32 = arith.constant 0 : i32
    %c0_i32_0 = arith.constant 0 : i32
    %c0_i32_1 = arith.constant 0 : i32
    return %arg0, %c0_i32, %c0_i32_0 : i32, i32, i32
  }
  func.func @transform_1(%arg0: i32) -> (i32, i32, i32) {
    %c0_i32 = arith.constant 0 : i32
    %c0_i32_0 = arith.constant 0 : i32
    %c0_i32_1 = arith.constant 0 : i32
    return %arg0, %c0_i32, %c0_i32_0 : i32, i32, i32
  }
  func.func @transform_2(%arg0: i32) -> (i32, i32) {
    %c0_i32 = arith.constant 0 : i32
    %c0_i32_0 = arith.constant 0 : i32
    %c0_i32_1 = arith.constant 0 : i32
    return %c0_i32, %c0_i32_0 : i32, i32
  }
  func.func @transform_3(%arg0: i32) -> (i32, i32) {
    %c0_i32 = arith.constant 0 : i32
    %c0_i32_0 = arith.constant 0 : i32
    %c0_i32_1 = arith.constant 0 : i32
    return %c0_i32, %c0_i32_0 : i32, i32
  }
  func.func @transform_4(%arg0: i32) -> (i32, i32) {
    %c0_i32 = arith.constant 0 : i32
    %c0_i32_0 = arith.constant 0 : i32
    %c0_i32_1 = arith.constant 0 : i32
    return %c0_i32, %c0_i32_0 : i32, i32
  }
  func.func @transform_5(%arg0: i32) -> (i32, i32) {
    %c0_i32 = arith.constant 0 : i32
    %c0_i32_0 = arith.constant 0 : i32
    %c0_i32_1 = arith.constant 0 : i32
    return %c0_i32, %c0_i32_0 : i32, i32
  }
  func.func @transform_6(%arg0: i32) -> (i32, i32) {
    %c0_i32 = arith.constant 0 : i32
    %c0_i32_0 = arith.constant 0 : i32
    %c0_i32_1 = arith.constant 0 : i32
    return %c0_i32, %c0_i32_0 : i32, i32
  }
  func.func @transform_7(%arg0: i32) -> (i32, i32) {
    %c0_i32 = arith.constant 0 : i32
    %c0_i32_0 = arith.constant 0 : i32
    %c0_i32_1 = arith.constant 0 : i32
    return %c0_i32, %c0_i32_0 : i32, i32
  }
  func.func @transform_8(%arg0: i32) -> (i32, i32) {
    %c0_i32 = arith.constant 0 : i32
    %c0_i32_0 = arith.constant 0 : i32
    %c0_i32_1 = arith.constant 0 : i32
    return %c0_i32, %c0_i32_0 : i32, i32
  }
  func.func @transform_9(%arg0: i32) -> (i32, i32) {
    %c0_i32 = arith.constant 0 : i32
    %c0_i32_0 = arith.constant 0 : i32
    %c0_i32_1 = arith.constant 0 : i32
    return %c0_i32, %c0_i32_0 : i32, i32
  }
  func.func @transform_10(%arg0: i32) -> (i32, i32) {
    %c0_i32 = arith.constant 0 : i32
    %c0_i32_0 = arith.constant 0 : i32
    %c0_i32_1 = arith.constant 0 : i32
    return %c0_i32, %c0_i32_0 : i32, i32
  }
  func.func @transform_11(%arg0: i32) -> (i32, i32) {
    %c0_i32 = arith.constant 0 : i32
    %c0_i32_0 = arith.constant 0 : i32
    %c0_i32_1 = arith.constant 0 : i32
    return %c0_i32, %c0_i32_0 : i32, i32
  }
  func.func @transform_12(%arg0: i32) -> (i32, i32) {
    %c0_i32 = arith.constant 0 : i32
    %c0_i32_0 = arith.constant 0 : i32
    %c0_i32_1 = arith.constant 0 : i32
    return %c0_i32, %c0_i32_0 : i32, i32
  }
  func.func @transform_13(%arg0: i32) -> (i32, i32) {
    %c0_i32 = arith.constant 0 : i32
    %c0_i32_0 = arith.constant 0 : i32
    %c0_i32_1 = arith.constant 0 : i32
    return %c0_i32, %c0_i32_0 : i32, i32
  }
  func.func @transform_14(%arg0: i32) -> (i32, i32, i32) {
    %c0_i32 = arith.constant 0 : i32
    %c0_i32_0 = arith.constant 0 : i32
    %c0_i32_1 = arith.constant 0 : i32
    return %arg0, %c0_i32, %c0_i32_0 : i32, i32, i32
  }
}

module attributes {stable_mosaic.version = 11 : i64} {
  func.func @_decoder_block_kernel(%arg0: i32, %arg1: memref<1x16x128xf32, #tpu.memory_space<vmem>>, %arg2: memref<1x16x128xf32, #tpu.memory_space<vmem>>, %arg3: memref<128x128xf32, #tpu.memory_space<vmem>>, %arg4: memref<128x256xf32, #tpu.memory_space<vmem>>, %arg5: memref<128x128xf32, #tpu.memory_space<vmem>>, %arg6: memref<1x128xf32, #tpu.memory_space<vmem>>, %arg7: memref<1x128xf32, #tpu.memory_space<vmem>>, %arg8: memref<1x128xf32, #tpu.memory_space<vmem>>, %arg9: memref<1x128xf32, #tpu.memory_space<vmem>>, %arg10: memref<1x128xf32, #tpu.memory_space<vmem>>, %arg11: memref<128x512xf32, #tpu.memory_space<vmem>>, %arg12: memref<1x512xf32, #tpu.memory_space<vmem>>, %arg13: memref<512x128xf32, #tpu.memory_space<vmem>>, %arg14: memref<1x128xf32, #tpu.memory_space<vmem>>, %arg15: memref<1x16x128xf32, #tpu.memory_space<vmem>>) attributes {dimension_semantics = [#tpu.dimension_semantics<parallel>], iteration_bounds = array<i64: 2>, scalar_prefetch = 0 : i64, scratch_operands = 0 : i64, tpu.core_type = #tpu.core_type<tc>, window_params = [{transform_indices = @transform_0, window_bounds = array<i64: 1, 16, 128>}, {transform_indices = @transform_1, window_bounds = array<i64: 1, 16, 128>}, {pipeline_mode = #tpu.pipeline_mode<synchronous>, transform_indices = @transform_2, window_bounds = array<i64: 128, 128>}, {pipeline_mode = #tpu.pipeline_mode<synchronous>, transform_indices = @transform_3, window_bounds = array<i64: 128, 256>}, {pipeline_mode = #tpu.pipeline_mode<synchronous>, transform_indices = @transform_4, window_bounds = array<i64: 128, 128>}, {pipeline_mode = #tpu.pipeline_mode<synchronous>, transform_indices = @transform_5, window_bounds = array<i64: 1, 128>}, {pipeline_mode = #tpu.pipeline_mode<synchronous>, transform_indices = @transform_6, window_bounds = array<i64: 1, 128>}, {pipeline_mode = #tpu.pipeline_mode<synchronous>, transform_indices = @transform_7, window_bounds = array<i64: 1, 128>}, {pipeline_mode = #tpu.pipeline_mode<synchronous>, transform_indices = @transform_8, window_bounds = array<i64: 1, 128>}, {pipeline_mode = #tpu.pipeline_mode<synchronous>, transform_indices = @transform_9, window_bounds = array<i64: 1, 128>}, {pipeline_mode = #tpu.pipeline_mode<synchronous>, transform_indices = @transform_10, window_bounds = array<i64: 128, 512>}, {pipeline_mode = #tpu.pipeline_mode<synchronous>, transform_indices = @transform_11, window_bounds = array<i64: 1, 512>}, {pipeline_mode = #tpu.pipeline_mode<synchronous>, transform_indices = @transform_12, window_bounds = array<i64: 512, 128>}, {pipeline_mode = #tpu.pipeline_mode<synchronous>, transform_indices = @transform_13, window_bounds = array<i64: 1, 128>}, {transform_indices = @transform_14, window_bounds = array<i64: 1, 16, 128>}]} {
    %c0 = arith.constant 0 : index
    %c0_0 = arith.constant 0 : index
    %c0_1 = arith.constant 0 : index
    %0 = vector.load %arg1[%c0, %c0_0, %c0_1] : memref<1x16x128xf32, #tpu.memory_space<vmem>>, vector<1x16x128xf32>
    %1 = vector.shape_cast %0 : vector<1x16x128xf32> to vector<16x128xf32>
    %c0_2 = arith.constant 0 : index
    %c0_3 = arith.constant 0 : index
    %c0_4 = arith.constant 0 : index
    %2 = vector.load %arg2[%c0_2, %c0_3, %c0_4] : memref<1x16x128xf32, #tpu.memory_space<vmem>>, vector<1x16x128xf32>
    %3 = vector.shape_cast %2 : vector<1x16x128xf32> to vector<16x128xf32>
    %c0_5 = arith.constant 0 : index
    %c0_6 = arith.constant 0 : index
    %4 = vector.load %arg7[%c0_5, %c0_6] : memref<1x128xf32, #tpu.memory_space<vmem>>, vector<1x128xf32>
    %c0_7 = arith.constant 0 : index
    %c0_8 = arith.constant 0 : index
    %5 = vector.load %arg8[%c0_7, %c0_8] : memref<1x128xf32, #tpu.memory_space<vmem>>, vector<1x128xf32>
    %cst = arith.constant dense<0.000000e+00> : vector<16xf32>
    %6 = vector.multi_reduction <add>, %1, %cst [1] : vector<16x128xf32> to vector<16xf32>
    %7 = vector.shape_cast %6 : vector<16xf32> to vector<16x1xf32>
    %8 = arith.mulf %1, %1 : vector<16x128xf32>
    %cst_9 = arith.constant dense<0.000000e+00> : vector<16xf32>
    %9 = vector.multi_reduction <add>, %8, %cst_9 [1] : vector<16x128xf32> to vector<16xf32>
    %10 = vector.shape_cast %9 : vector<16xf32> to vector<16x1xf32>
    %cst_10 = arith.constant 1.280000e+02 : f32
    %11 = vector.broadcast %cst_10 : f32 to vector<16x1xf32>
    %12 = arith.divf %7, %11 : vector<16x1xf32>
    %cst_11 = arith.constant 1.280000e+02 : f32
    %13 = vector.broadcast %cst_11 : f32 to vector<16x1xf32>
    %14 = arith.divf %10, %13 : vector<16x1xf32>
    %15 = arith.mulf %12, %12 : vector<16x1xf32>
    %16 = arith.subf %14, %15 : vector<16x1xf32>
    %17 = vector.broadcast %12 : vector<16x1xf32> to vector<16x128xf32>
    %18 = arith.subf %1, %17 : vector<16x128xf32>
    %cst_12 = arith.constant 9.99999974E-6 : f32
    %19 = vector.broadcast %cst_12 : f32 to vector<16x1xf32>
    %20 = arith.addf %16, %19 : vector<16x1xf32>
    %21 = math.rsqrt %20 : vector<16x1xf32>
    %22 = vector.broadcast %21 : vector<16x1xf32> to vector<16x128xf32>
    %23 = arith.mulf %18, %22 : vector<16x128xf32>
    %24 = vector.broadcast %4 : vector<1x128xf32> to vector<16x128xf32>
    %25 = arith.mulf %23, %24 : vector<16x128xf32>
    %26 = vector.broadcast %5 : vector<1x128xf32> to vector<16x128xf32>
    %27 = arith.addf %25, %26 : vector<16x128xf32>
    %cst_13 = arith.constant dense<0.000000e+00> : vector<16xf32>
    %28 = vector.multi_reduction <add>, %3, %cst_13 [1] : vector<16x128xf32> to vector<16xf32>
    %29 = vector.shape_cast %28 : vector<16xf32> to vector<16x1xf32>
    %30 = arith.mulf %3, %3 : vector<16x128xf32>
    %cst_14 = arith.constant dense<0.000000e+00> : vector<16xf32>
    %31 = vector.multi_reduction <add>, %30, %cst_14 [1] : vector<16x128xf32> to vector<16xf32>
    %32 = vector.shape_cast %31 : vector<16xf32> to vector<16x1xf32>
    %cst_15 = arith.constant 1.280000e+02 : f32
    %33 = vector.broadcast %cst_15 : f32 to vector<16x1xf32>
    %34 = arith.divf %29, %33 : vector<16x1xf32>
    %cst_16 = arith.constant 1.280000e+02 : f32
    %35 = vector.broadcast %cst_16 : f32 to vector<16x1xf32>
    %36 = arith.divf %32, %35 : vector<16x1xf32>
    %37 = arith.mulf %34, %34 : vector<16x1xf32>
    %38 = arith.subf %36, %37 : vector<16x1xf32>
    %39 = vector.broadcast %34 : vector<16x1xf32> to vector<16x128xf32>
    %40 = arith.subf %3, %39 : vector<16x128xf32>
    %cst_17 = arith.constant 9.99999974E-6 : f32
    %41 = vector.broadcast %cst_17 : f32 to vector<16x1xf32>
    %42 = arith.addf %38, %41 : vector<16x1xf32>
    %43 = math.rsqrt %42 : vector<16x1xf32>
    %44 = vector.broadcast %43 : vector<16x1xf32> to vector<16x128xf32>
    %45 = arith.mulf %40, %44 : vector<16x128xf32>
    %46 = vector.broadcast %4 : vector<1x128xf32> to vector<16x128xf32>
    %47 = arith.mulf %45, %46 : vector<16x128xf32>
    %48 = vector.broadcast %5 : vector<1x128xf32> to vector<16x128xf32>
    %49 = arith.addf %47, %48 : vector<16x128xf32>
    %c0_18 = arith.constant 0 : index
    %c0_19 = arith.constant 0 : index
    %50 = vector.load %arg3[%c0_18, %c0_19] : memref<128x128xf32, #tpu.memory_space<vmem>>, vector<128x128xf32>
    %cst_20 = arith.constant dense<0.000000e+00> : vector<16x128xf32>
    %51 = tpu.matmul %49, %50, %cst_20 {dimension_numbers = #tpu.dot_dimension_numbers<[1], [0], [0], [1], [0, 0, 1, 1], [], []>} : vector<16x128xf32>, vector<128x128xf32>, vector<16x128xf32> -> vector<16x128xf32>
    %c0_21 = arith.constant 0 : index
    %c0_22 = arith.constant 0 : index
    %52 = vector.load %arg4[%c0_21, %c0_22] : memref<128x256xf32, #tpu.memory_space<vmem>>, vector<128x256xf32>
    %cst_23 = arith.constant dense<0.000000e+00> : vector<16x256xf32>
    %53 = tpu.matmul %27, %52, %cst_23 {dimension_numbers = #tpu.dot_dimension_numbers<[1], [0], [0], [1], [0, 0, 1, 1], [], []>} : vector<16x128xf32>, vector<128x256xf32>, vector<16x256xf32> -> vector<16x256xf32>
    %54 = vector.extract_strided_slice %53 {offsets = [0, 0], sizes = [16, 128], strides = [1, 1]} : vector<16x256xf32> to vector<16x128xf32>
    %55 = vector.extract_strided_slice %53 {offsets = [0, 128], sizes = [16, 128], strides = [1, 1]} : vector<16x256xf32> to vector<16x128xf32>
    %56 = vector.shape_cast %51 : vector<16x128xf32> to vector<1x16x4x32xf32>
    %57 = tpu.transpose %56, [0, 2, 1, 3] : vector<1x16x4x32xf32> -> vector<1x4x16x32xf32>
    %58 = vector.shape_cast %57 : vector<1x4x16x32xf32> to vector<4x16x32xf32>
    %59 = vector.shape_cast %54 : vector<16x128xf32> to vector<1x16x4x32xf32>
    %60 = tpu.transpose %59, [0, 2, 1, 3] : vector<1x16x4x32xf32> -> vector<1x4x16x32xf32>
    %61 = vector.shape_cast %60 : vector<1x4x16x32xf32> to vector<4x16x32xf32>
    %62 = vector.shape_cast %55 : vector<16x128xf32> to vector<1x16x4x32xf32>
    %63 = tpu.transpose %62, [0, 2, 1, 3] : vector<1x16x4x32xf32> -> vector<1x4x16x32xf32>
    %64 = vector.shape_cast %63 : vector<1x4x16x32xf32> to vector<4x16x32xf32>
    "tpu.trace_start"() <{level = 10 : i32, message = "bqd,bkd->bqk"}> : () -> ()
    %cst_24 = arith.constant dense<0.000000e+00> : vector<4x16x16xf32>
    %65 = tpu.matmul %58, %61, %cst_24 {dimension_numbers = #tpu.dot_dimension_numbers<[2], [2], [1], [1], [0, 0, 0, 1, 1, 1], [0], [0]>} : vector<4x16x32xf32>, vector<4x16x32xf32>, vector<4x16x16xf32> -> vector<4x16x16xf32>
    "tpu.trace_stop"() : () -> ()
    %cst_25 = arith.constant 0.176776692 : f32
    %66 = vector.broadcast %cst_25 : f32 to vector<4x16x16xf32>
    %67 = arith.mulf %65, %66 : vector<4x16x16xf32>
    %68 = tpu.iota {dimensions = array<i32: 0>} : vector<16x16xi32>
    %69 = tpu.iota {dimensions = array<i32: 1>} : vector<16x16xi32>
    %70 = arith.cmpi sge, %68, %69 : vector<16x16xi32>
    %71 = vector.shape_cast %70 : vector<16x16xi1> to vector<1x16x16xi1>
    %cst_26 = arith.constant -1.000000e+30 : f32
    %72 = vector.shape_cast %71 : vector<1x16x16xi1> to vector<1x16x16xi1>
    %73 = vector.broadcast %72 : vector<1x16x16xi1> to vector<4x16x16xi1>
    %74 = vector.broadcast %cst_26 : f32 to vector<4x16x16xf32>
    %75 = arith.select %73, %67, %74 : vector<4x16x16xi1>, vector<4x16x16xf32>
    %cst_27 = arith.constant dense<0xFF800000> : vector<4x16xf32>
    %76 = vector.multi_reduction <maximumf>, %75, %cst_27 [2] : vector<4x16x16xf32> to vector<4x16xf32>
    %77 = vector.shape_cast %76 : vector<4x16xf32> to vector<4x16x1xf32>
    %78 = vector.broadcast %77 : vector<4x16x1xf32> to vector<4x16x16xf32>
    %79 = arith.subf %75, %78 : vector<4x16x16xf32>
    %80 = math.exp %79 : vector<4x16x16xf32>
    %cst_28 = arith.constant dense<0.000000e+00> : vector<4x16xf32>
    %81 = vector.multi_reduction <add>, %80, %cst_28 [2] : vector<4x16x16xf32> to vector<4x16xf32>
    %82 = vector.shape_cast %81 : vector<4x16xf32> to vector<4x16x1xf32>
    %83 = tpu.reciprocal %82 {approx = true} : vector<4x16x1xf32> -> vector<4x16x1xf32>
    %84 = vector.broadcast %83 : vector<4x16x1xf32> to vector<4x16x16xf32>
    %85 = arith.mulf %80, %84 : vector<4x16x16xf32>
    "tpu.trace_start"() <{level = 10 : i32, message = "bqk,bkd->bqd"}> : () -> ()
    %cst_29 = arith.constant dense<0.000000e+00> : vector<4x16x32xf32>
    %86 = tpu.matmul %85, %64, %cst_29 {dimension_numbers = #tpu.dot_dimension_numbers<[2], [1], [1], [2], [0, 0, 0, 1, 1, 2], [0], [0]>} : vector<4x16x16xf32>, vector<4x16x32xf32>, vector<4x16x32xf32> -> vector<4x16x32xf32>
    "tpu.trace_stop"() : () -> ()
    %87 = vector.shape_cast %86 : vector<4x16x32xf32> to vector<1x4x16x32xf32>
    %88 = tpu.transpose %87, [0, 2, 1, 3] : vector<1x4x16x32xf32> -> vector<1x16x4x32xf32>
    %89 = vector.shape_cast %88 : vector<1x16x4x32xf32> to vector<16x128xf32>
    %c0_30 = arith.constant 0 : index
    %c0_31 = arith.constant 0 : index
    %90 = vector.load %arg5[%c0_30, %c0_31] : memref<128x128xf32, #tpu.memory_space<vmem>>, vector<128x128xf32>
    %cst_32 = arith.constant dense<0.000000e+00> : vector<16x128xf32>
    %91 = tpu.matmul %89, %90, %cst_32 {dimension_numbers = #tpu.dot_dimension_numbers<[1], [0], [0], [1], [0, 0, 1, 1], [], []>} : vector<16x128xf32>, vector<128x128xf32>, vector<16x128xf32> -> vector<16x128xf32>
    %c0_33 = arith.constant 0 : index
    %c0_34 = arith.constant 0 : index
    %92 = vector.load %arg6[%c0_33, %c0_34] : memref<1x128xf32, #tpu.memory_space<vmem>>, vector<1x128xf32>
    %93 = vector.broadcast %92 : vector<1x128xf32> to vector<16x128xf32>
    %94 = arith.addf %91, %93 : vector<16x128xf32>
    %95 = arith.addf %3, %94 : vector<16x128xf32>
    %c0_35 = arith.constant 0 : index
    %c0_36 = arith.constant 0 : index
    %96 = vector.load %arg9[%c0_35, %c0_36] : memref<1x128xf32, #tpu.memory_space<vmem>>, vector<1x128xf32>
    %c0_37 = arith.constant 0 : index
    %c0_38 = arith.constant 0 : index
    %97 = vector.load %arg10[%c0_37, %c0_38] : memref<1x128xf32, #tpu.memory_space<vmem>>, vector<1x128xf32>
    %cst_39 = arith.constant dense<0.000000e+00> : vector<16xf32>
    %98 = vector.multi_reduction <add>, %95, %cst_39 [1] : vector<16x128xf32> to vector<16xf32>
    %99 = vector.shape_cast %98 : vector<16xf32> to vector<16x1xf32>
    %100 = arith.mulf %95, %95 : vector<16x128xf32>
    %cst_40 = arith.constant dense<0.000000e+00> : vector<16xf32>
    %101 = vector.multi_reduction <add>, %100, %cst_40 [1] : vector<16x128xf32> to vector<16xf32>
    %102 = vector.shape_cast %101 : vector<16xf32> to vector<16x1xf32>
    %cst_41 = arith.constant 1.280000e+02 : f32
    %103 = vector.broadcast %cst_41 : f32 to vector<16x1xf32>
    %104 = arith.divf %99, %103 : vector<16x1xf32>
    %cst_42 = arith.constant 1.280000e+02 : f32
    %105 = vector.broadcast %cst_42 : f32 to vector<16x1xf32>
    %106 = arith.divf %102, %105 : vector<16x1xf32>
    %107 = arith.mulf %104, %104 : vector<16x1xf32>
    %108 = arith.subf %106, %107 : vector<16x1xf32>
    %109 = vector.broadcast %104 : vector<16x1xf32> to vector<16x128xf32>
    %110 = arith.subf %95, %109 : vector<16x128xf32>
    %cst_43 = arith.constant 9.99999974E-6 : f32
    %111 = vector.broadcast %cst_43 : f32 to vector<16x1xf32>
    %112 = arith.addf %108, %111 : vector<16x1xf32>
    %113 = math.rsqrt %112 : vector<16x1xf32>
    %114 = vector.broadcast %113 : vector<16x1xf32> to vector<16x128xf32>
    %115 = arith.mulf %110, %114 : vector<16x128xf32>
    %116 = vector.broadcast %96 : vector<1x128xf32> to vector<16x128xf32>
    %117 = arith.mulf %115, %116 : vector<16x128xf32>
    %118 = vector.broadcast %97 : vector<1x128xf32> to vector<16x128xf32>
    %119 = arith.addf %117, %118 : vector<16x128xf32>
    %c0_44 = arith.constant 0 : index
    %c0_45 = arith.constant 0 : index
    %120 = vector.load %arg11[%c0_44, %c0_45] : memref<128x512xf32, #tpu.memory_space<vmem>>, vector<128x512xf32>
    %cst_46 = arith.constant dense<0.000000e+00> : vector<16x512xf32>
    %121 = tpu.matmul %119, %120, %cst_46 {dimension_numbers = #tpu.dot_dimension_numbers<[1], [0], [0], [1], [0, 0, 1, 1], [], []>} : vector<16x128xf32>, vector<128x512xf32>, vector<16x512xf32> -> vector<16x512xf32>
    %c0_47 = arith.constant 0 : index
    %c0_48 = arith.constant 0 : index
    %122 = vector.load %arg12[%c0_47, %c0_48] : memref<1x512xf32, #tpu.memory_space<vmem>>, vector<1x512xf32>
    %123 = vector.broadcast %122 : vector<1x512xf32> to vector<16x512xf32>
    %124 = arith.addf %121, %123 : vector<16x512xf32>
    %cst_49 = arith.constant 0.000000e+00 : f32
    %125 = vector.broadcast %cst_49 : f32 to vector<16x512xf32>
    %126 = arith.maximumf %124, %125 : vector<16x512xf32>
    %c0_50 = arith.constant 0 : index
    %c0_51 = arith.constant 0 : index
    %127 = vector.load %arg13[%c0_50, %c0_51] : memref<512x128xf32, #tpu.memory_space<vmem>>, vector<512x128xf32>
    %cst_52 = arith.constant dense<0.000000e+00> : vector<16x128xf32>
    %128 = tpu.matmul %126, %127, %cst_52 {dimension_numbers = #tpu.dot_dimension_numbers<[1], [0], [0], [1], [0, 0, 1, 1], [], []>} : vector<16x512xf32>, vector<512x128xf32>, vector<16x128xf32> -> vector<16x128xf32>
    %c0_53 = arith.constant 0 : index
    %c0_54 = arith.constant 0 : index
    %129 = vector.load %arg14[%c0_53, %c0_54] : memref<1x128xf32, #tpu.memory_space<vmem>>, vector<1x128xf32>
    %130 = vector.broadcast %129 : vector<1x128xf32> to vector<16x128xf32>
    %131 = arith.addf %128, %130 : vector<16x128xf32>
    %132 = arith.addf %95, %131 : vector<16x128xf32>
    %133 = vector.shape_cast %132 : vector<16x128xf32> to vector<1x16x128xf32>
    %c0_55 = arith.constant 0 : index
    %c0_56 = arith.constant 0 : index
    %c0_57 = arith.constant 0 : index
    %134 = vector.load %arg15[%c0_55, %c0_56, %c0_57] : memref<1x16x128xf32, #tpu.memory_space<vmem>>, vector<1x16x128xf32>
    tpu.vector_store %arg15[%c0_55, %c0_56, %c0_57], %133 {strides = array<i32>} : memref<1x16x128xf32, #tpu.memory_space<vmem>>, vector<1x16x128xf32>,
    return
  }
  func.func @transform_0(%arg0: i32) -> (i32, i32, i32) {
    %c0_i32 = arith.constant 0 : i32
    %c0_i32_0 = arith.constant 0 : i32
    %c0_i32_1 = arith.constant 0 : i32
    return %arg0, %c0_i32, %c0_i32_0 : i32, i32, i32
  }
  func.func @transform_1(%arg0: i32) -> (i32, i32, i32) {
    %c0_i32 = arith.constant 0 : i32
    %c0_i32_0 = arith.constant 0 : i32
    %c0_i32_1 = arith.constant 0 : i32
    return %arg0, %c0_i32, %c0_i32_0 : i32, i32, i32
  }
  func.func @transform_2(%arg0: i32) -> (i32, i32) {
    %c0_i32 = arith.constant 0 : i32
    %c0_i32_0 = arith.constant 0 : i32
    %c0_i32_1 = arith.constant 0 : i32
    return %c0_i32, %c0_i32_0 : i32, i32
  }
  func.func @transform_3(%arg0: i32) -> (i32, i32) {
    %c0_i32 = arith.constant 0 : i32
    %c0_i32_0 = arith.constant 0 : i32
    %c0_i32_1 = arith.constant 0 : i32
    return %c0_i32, %c0_i32_0 : i32, i32
  }
  func.func @transform_4(%arg0: i32) -> (i32, i32) {
    %c0_i32 = arith.constant 0 : i32
    %c0_i32_0 = arith.constant 0 : i32
    %c0_i32_1 = arith.constant 0 : i32
    return %c0_i32, %c0_i32_0 : i32, i32
  }
  func.func @transform_5(%arg0: i32) -> (i32, i32) {
    %c0_i32 = arith.constant 0 : i32
    %c0_i32_0 = arith.constant 0 : i32
    %c0_i32_1 = arith.constant 0 : i32
    return %c0_i32, %c0_i32_0 : i32, i32
  }
  func.func @transform_6(%arg0: i32) -> (i32, i32) {
    %c0_i32 = arith.constant 0 : i32
    %c0_i32_0 = arith.constant 0 : i32
    %c0_i32_1 = arith.constant 0 : i32
    return %c0_i32, %c0_i32_0 : i32, i32
  }
  func.func @transform_7(%arg0: i32) -> (i32, i32) {
    %c0_i32 = arith.constant 0 : i32
    %c0_i32_0 = arith.constant 0 : i32
    %c0_i32_1 = arith.constant 0 : i32
    return %c0_i32, %c0_i32_0 : i32, i32
  }
  func.func @transform_8(%arg0: i32) -> (i32, i32) {
    %c0_i32 = arith.constant 0 : i32
    %c0_i32_0 = arith.constant 0 : i32
    %c0_i32_1 = arith.constant 0 : i32
    return %c0_i32, %c0_i32_0 : i32, i32
  }
  func.func @transform_9(%arg0: i32) -> (i32, i32) {
    %c0_i32 = arith.constant 0 : i32
    %c0_i32_0 = arith.constant 0 : i32
    %c0_i32_1 = arith.constant 0 : i32
    return %c0_i32, %c0_i32_0 : i32, i32
  }
  func.func @transform_10(%arg0: i32) -> (i32, i32) {
    %c0_i32 = arith.constant 0 : i32
    %c0_i32_0 = arith.constant 0 : i32
    %c0_i32_1 = arith.constant 0 : i32
    return %c0_i32, %c0_i32_0 : i32, i32
  }
  func.func @transform_11(%arg0: i32) -> (i32, i32) {
    %c0_i32 = arith.constant 0 : i32
    %c0_i32_0 = arith.constant 0 : i32
    %c0_i32_1 = arith.constant 0 : i32
    return %c0_i32, %c0_i32_0 : i32, i32
  }
  func.func @transform_12(%arg0: i32) -> (i32, i32) {
    %c0_i32 = arith.constant 0 : i32
    %c0_i32_0 = arith.constant 0 : i32
    %c0_i32_1 = arith.constant 0 : i32
    return %c0_i32, %c0_i32_0 : i32, i32
  }
  func.func @transform_13(%arg0: i32) -> (i32, i32) {
    %c0_i32 = arith.constant 0 : i32
    %c0_i32_0 = arith.constant 0 : i32
    %c0_i32_1 = arith.constant 0 : i32
    return %c0_i32, %c0_i32_0 : i32, i32
  }
  func.func @transform_14(%arg0: i32) -> (i32, i32, i32) {
    %c0_i32 = arith.constant 0 : i32
    %c0_i32_0 = arith.constant 0 : i32
    %c0_i32_1 = arith.constant 0 : i32
    return %arg0, %c0_i32, %c0_i32_0 : i32, i32, i32
  }
}

</mosaic_0001>

<llo_original>
// kernel: tpu_custom_call.1
$region0: #{tpu_custom_call.1}
  #allocation0 [shape = 'u32[]', space=smem, size = 0x4, offset = 0x4, fixed_abs, tag = 'smem constant byte address 0x4 - core index']
  #allocation1 [shape = 'u32[144,128]{1,0:T(1,128)}', space=vmem, size = 0x12000, scoped, tag = 'internal scratch']
  %s0 = inlined_call_operand.hbm [shape: f32[2,16,128], index: 0, kind: input, shape index: {}]
  %s1 = inlined_call_operand.hbm [shape: f32[2,16,128], index: 1, kind: input, shape index: {}]
  %s2 = inlined_call_operand.hbm [shape: f32[128,128], index: 2, kind: input, shape index: {}]
  %s3 = inlined_call_operand.hbm [shape: f32[128,256], index: 3, kind: input, shape index: {}]
  %s4 = inlined_call_operand.hbm [shape: f32[128,128], index: 4, kind: input, shape index: {}]
  %s5 = inlined_call_operand.vmem [shape: f32[1,128], index: 5, kind: input, shape index: {}]
  %s6 = inlined_call_operand.vmem [shape: f32[1,128], index: 6, kind: input, shape index: {}]
  %s7 = inlined_call_operand.vmem [shape: f32[1,128], index: 7, kind: input, shape index: {}]
  %s8 = inlined_call_operand.vmem [shape: f32[1,128], index: 8, kind: input, shape index: {}]
  %s9 = inlined_call_operand.vmem [shape: f32[1,128], index: 9, kind: input, shape index: {}]
  %s10 = inlined_call_operand.hbm [shape: f32[128,512], index: 10, kind: input, shape index: {}]
  %s11 = inlined_call_operand.vmem [shape: f32[1,512], index: 11, kind: input, shape index: {}]
  %s12 = inlined_call_operand.hbm [shape: f32[512,128], index: 12, kind: input, shape index: {}]
  %s13 = inlined_call_operand.vmem [shape: f32[1,128], index: 13, kind: input, shape index: {}]
  %s14 = inlined_call_operand.hbm [shape: f32[2,16,128], index: 14, kind: output, shape index: {}]
  %s15 = sld [smem:[#allocation0]]
  $region117: #{tpu_custom_call.1} parent=0
    _
  %s17 = ssub.s32 1, %s15
  %s18 = scalar_select 0, %s17, %s15
  $region1: #{tpu_custom_call.1} parent=0
    #allocation2 [shape = 'u8[16384]{0}', space=vmem, size = 0x4000, scoped, tag = 'input window, operand 0']
    #allocation3 [shape = 's32[2]{0}', space=sflag, size = 0x8, scoped, tag = 'scoped memory for tpu_custom_call.1']
    #allocation4 [shape = 's32[2]{0}', space=sflag, size = 0x8, scoped, tag = 'scoped memory for tpu_custom_call.1']
    #allocation5 [shape = 'u8[16384]{0}', space=vmem, size = 0x4000, scoped, tag = 'input window, operand 1']
    #allocation6 [shape = 's32[2]{0}', space=sflag, size = 0x8, scoped, tag = 'scoped memory for tpu_custom_call.1']
    #allocation7 [shape = 'u8[65536]{0}', space=vmem, size = 0x10000, scoped, tag = 'input window, operand 2, single buffered']
    #allocation8 [shape = 'u8[131072]{0}', space=vmem, size = 0x20000, scoped, tag = 'input window, operand 3, single buffered']
    #allocation9 [shape = 's32[1]{0}', space=sflag, size = 0x4, scoped, tag = 'scoped memory for tpu_custom_call.1']
    #allocation10 [shape = 'u8[65536]{0}', space=vmem, size = 0x10000, scoped, tag = 'input window, operand 4, single buffered']
    #allocation11 [shape = 'u8[262144]{0}', space=vmem, size = 0x40000, scoped, tag = 'input window, operand 10, single buffered']
    #allocation12 [shape = 's32[1]{0}', space=sflag, size = 0x4, scoped, tag = 'scoped memory for tpu_custom_call.1']
    #allocation13 [shape = 'u8[262144]{0}', space=vmem, size = 0x40000, scoped, tag = 'input window, operand 12, single buffered']
    #allocation14 [shape = 'u8[16384]{0}', space=vmem, size = 0x4000, scoped, tag = 'output window, operand 0']
    %19 = vsyncpa [#allocation3], 0
    %s20 = scalar_lea.sflag [#allocation3], 1
    %21 = vsyncpa %s20, 0
    %22 = vsyncpa [#allocation6], 0
    %s23 = scalar_lea.sflag [#allocation6], 1
    %24 = vsyncpa %s23, 0
    %25 = vsyncpa [#allocation9], 0
    %26 = vsyncpa [#allocation12], 0
    %27 = vsyncpa [#allocation4], 0
    %s28 = scalar_lea.sflag [#allocation4], 1
    %29 = vsyncpa %s28, 0
    loop: start=0, step=1, limit=4
    $region2: #{tpu_custom_call.1} parent=1 // loop_pre_header
      _
    $region3: #{tpu_custom_call.1} parent=1 // loop_header
      %s31 = sphi 0, %s35
      %p32 = scmp.ge.s32.totalorder %s31, 4
      %s41 = sphi 0, %s43
      %s44 = sphi 0, %s41
      %s45 = sphi 0, %s44
      %s61 = sphi 0, %s45
      %s67 = sphi 0, %s69
      %s70 = sphi 0, %s67
      %s71 = sphi 0, %s70
      %s87 = sphi 0, %s71
      %s91 = sphi 0, %s91
      %s93 = sphi 0, %s91
      %s94 = sphi 0, %s93
      %s108 = sphi 0, %s94
      %s112 = sphi 0, %s112
      %s114 = sphi 0, %s112
      %s115 = sphi 0, %s114
      %s129 = sphi 0, %s115
      %s133 = sphi 0, %s133
      %s135 = sphi 0, %s133
      %s136 = sphi 0, %s135
      %s150 = sphi 0, %s136
      %s154 = sphi 0, %s154
      %s156 = sphi 0, %s154
      %s157 = sphi 0, %s156
      %s171 = sphi 0, %s157
      %s175 = sphi 0, %s175
      %s177 = sphi 0, %s175
      %s178 = sphi 0, %s177
      %s192 = sphi 0, %s178
      %s196 = sphi 0, %s196
      %s198 = sphi 0, %s196
      %s199 = sphi 0, %s198
      %s213 = sphi 0, %s199
      %s217 = sphi 0, %s217
      %s219 = sphi 0, %s217
      %s220 = sphi 0, %s219
      %s234 = sphi 0, %s220
      %s238 = sphi 0, %s238
      %s240 = sphi 0, %s238
      %s241 = sphi 0, %s240
      %s255 = sphi 0, %s241
      %s259 = sphi 0, %s259
      %s261 = sphi 0, %s259
      %s262 = sphi 0, %s261
      %s276 = sphi 0, %s262
      %s280 = sphi 0, %s280
      %s282 = sphi 0, %s280
      %s283 = sphi 0, %s282
      %s297 = sphi 0, %s283
      %s301 = sphi 0, %s301
      %s303 = sphi 0, %s301
      %s304 = sphi 0, %s303
      %s318 = sphi 0, %s304
      %s322 = sphi 0, %s322
      %s324 = sphi 0, %s322
      %s325 = sphi 0, %s324
      %s339 = sphi 0, %s325
      %s345 = sphi 0, %s347
      %s348 = sphi 0, %s345
      %s349 = sphi 0, %s348
      %s365 = sphi 0, %s349
    $region4: #{tpu_custom_call.1} parent=1 // loop_header_branch
      %34 = sbr.rel (%p32) target = $region8
    $region5: #{tpu_custom_call.1} parent=1 // loop_body
      %s36 = ssub.s32 %s31, 1
      %s37 = ssub.s32 %s31, 2
      %s38 = sadd.s32 %s31, 1
      %s39 = ssub.s32 %s31, %s38
      %p40 = scmp.eq.s32.totalorder %s39, 0
      %s42 = sadd.s32 %s41, 1
      %s43 = scalar_select %p40, %s41, %s42
      %p46 = pneg %p40
      %p47 = scmp.eq.s32.totalorder %s31, 1
      %p48 = por %p46, %p47
      %p49 = scmp.ne.s32.totalorder %s41, %s44
      %p50 = scmp.eq.s32.totalorder %s31, 0
      %p51 = por %p49, %p50
      %p52 = scmp.ne.s32.totalorder %s41, %s44
      %p53 = scmp.eq.s32.totalorder %s36, 1
      %p54 = por %p52, %p53
      %p55 = scmp.ne.s32.totalorder %s44, %s45
      %p56 = scmp.eq.s32.totalorder %s36, 0
      %p57 = por %p55, %p56
      %p58 = scmp.ne.s32.totalorder %s44, %s45
      %p59 = scmp.eq.s32.totalorder %s37, 1
      %p60 = por %p58, %p59
      %p62 = scmp.ne.s32.totalorder %s45, %s61
      %p63 = scmp.eq.s32.totalorder %s37, 0
      %p64 = por %p62, %p63
      %s65 = ssub.s32 %s31, %s38
      %p66 = scmp.eq.s32.totalorder %s65, 0
      %s68 = sadd.s32 %s67, 1
      %s69 = scalar_select %p66, %s67, %s68
      %p72 = pneg %p66
      %p73 = scmp.eq.s32.totalorder %s31, 1
      %p74 = por %p72, %p73
      %p75 = scmp.ne.s32.totalorder %s67, %s70
      %p76 = scmp.eq.s32.totalorder %s31, 0
      %p77 = por %p75, %p76
      %p78 = scmp.ne.s32.totalorder %s67, %s70
      %p79 = scmp.eq.s32.totalorder %s36, 1
      %p80 = por %p78, %p79
      %p81 = scmp.ne.s32.totalorder %s70, %s71
      %p82 = scmp.eq.s32.totalorder %s36, 0
      %p83 = por %p81, %p82
      %p84 = scmp.ne.s32.totalorder %s70, %s71
      %p85 = scmp.eq.s32.totalorder %s37, 1
      %p86 = por %p84, %p85
      %p88 = scmp.ne.s32.totalorder %s71, %s87
      %p89 = scmp.eq.s32.totalorder %s37, 0
      %p90 = por %p88, %p89
      %s92 = sadd.s32 %s91, 1
      %p95 = scmp.eq.s32.totalorder %s31, 1
      %p96 = scmp.ne.s32.totalorder %s91, %s93
      %p97 = scmp.eq.s32.totalorder %s31, 0
      %p98 = por %p96, %p97
      %p99 = scmp.ne.s32.totalorder %s91, %s93
      %p100 = scmp.eq.s32.totalorder %s36, 1
      %p101 = por %p99, %p100
      %p102 = scmp.ne.s32.totalorder %s93, %s94
      %p103 = scmp.eq.s32.totalorder %s36, 0
      %p104 = por %p102, %p103
      %p105 = scmp.ne.s32.totalorder %s93, %s94
      %p106 = scmp.eq.s32.totalorder %s37, 1
      %p107 = por %p105, %p106
      %p109 = scmp.ne.s32.totalorder %s94, %s108
      %p110 = scmp.eq.s32.totalorder %s37, 0
      %p111 = por %p109, %p110
      %s113 = sadd.s32 %s112, 1
      %p116 = scmp.eq.s32.totalorder %s31, 1
      %p117 = scmp.ne.s32.totalorder %s112, %s114
      %p118 = scmp.eq.s32.totalorder %s31, 0
      %p119 = por %p117, %p118
      %p120 = scmp.ne.s32.totalorder %s112, %s114
      %p121 = scmp.eq.s32.totalorder %s36, 1
      %p122 = por %p120, %p121
      %p123 = scmp.ne.s32.totalorder %s114, %s115
      %p124 = scmp.eq.s32.totalorder %s36, 0
      %p125 = por %p123, %p124
      %p126 = scmp.ne.s32.totalorder %s114, %s115
      %p127 = scmp.eq.s32.totalorder %s37, 1
      %p128 = por %p126, %p127
      %p130 = scmp.ne.s32.totalorder %s115, %s129
      %p131 = scmp.eq.s32.totalorder %s37, 0
      %p132 = por %p130, %p131
      %s134 = sadd.s32 %s133, 1
      %p137 = scmp.eq.s32.totalorder %s31, 1
      %p138 = scmp.ne.s32.totalorder %s133, %s135
      %p139 = scmp.eq.s32.totalorder %s31, 0
      %p140 = por %p138, %p139
      %p141 = scmp.ne.s32.totalorder %s133, %s135
      %p142 = scmp.eq.s32.totalorder %s36, 1
      %p143 = por %p141, %p142
      %p144 = scmp.ne.s32.totalorder %s135, %s136
      %p145 = scmp.eq.s32.totalorder %s36, 0
      %p146 = por %p144, %p145
      %p147 = scmp.ne.s32.totalorder %s135, %s136
      %p148 = scmp.eq.s32.totalorder %s37, 1
      %p149 = por %p147, %p148
      %p151 = scmp.ne.s32.totalorder %s136, %s150
      %p152 = scmp.eq.s32.totalorder %s37, 0
      %p153 = por %p151, %p152
      %s155 = sadd.s32 %s154, 1
      %p158 = scmp.eq.s32.totalorder %s31, 1
      %p159 = scmp.ne.s32.totalorder %s154, %s156
      %p160 = scmp.eq.s32.totalorder %s31, 0
      %p161 = por %p159, %p160
      %p162 = scmp.ne.s32.totalorder %s154, %s156
      %p163 = scmp.eq.s32.totalorder %s36, 1
      %p164 = por %p162, %p163
      %p165 = scmp.ne.s32.totalorder %s156, %s157
      %p166 = scmp.eq.s32.totalorder %s36, 0
      %p167 = por %p165, %p166
      %p168 = scmp.ne.s32.totalorder %s156, %s157
      %p169 = scmp.eq.s32.totalorder %s37, 1
      %p170 = por %p168, %p169
      %p172 = scmp.ne.s32.totalorder %s157, %s171
      %p173 = scmp.eq.s32.totalorder %s37, 0
      %p174 = por %p172, %p173
      %s176 = sadd.s32 %s175, 1
      %p179 = scmp.eq.s32.totalorder %s31, 1
      %p180 = scmp.ne.s32.totalorder %s175, %s177
      %p181 = scmp.eq.s32.totalorder %s31, 0
      %p182 = por %p180, %p181
      %p183 = scmp.ne.s32.totalorder %s175, %s177
      %p184 = scmp.eq.s32.totalorder %s36, 1
      %p185 = por %p183, %p184
      %p186 = scmp.ne.s32.totalorder %s177, %s178
      %p187 = scmp.eq.s32.totalorder %s36, 0
      %p188 = por %p186, %p187
      %p189 = scmp.ne.s32.totalorder %s177, %s178
      %p190 = scmp.eq.s32.totalorder %s37, 1
      %p191 = por %p189, %p190
      %p193 = scmp.ne.s32.totalorder %s178, %s192
      %p194 = scmp.eq.s32.totalorder %s37, 0
      %p195 = por %p193, %p194
      %s197 = sadd.s32 %s196, 1
      %p200 = scmp.eq.s32.totalorder %s31, 1
      %p201 = scmp.ne.s32.totalorder %s196, %s198
      %p202 = scmp.eq.s32.totalorder %s31, 0
      %p203 = por %p201, %p202
      %p204 = scmp.ne.s32.totalorder %s196, %s198
      %p205 = scmp.eq.s32.totalorder %s36, 1
      %p206 = por %p204, %p205
      %p207 = scmp.ne.s32.totalorder %s198, %s199
      %p208 = scmp.eq.s32.totalorder %s36, 0
      %p209 = por %p207, %p208
      %p210 = scmp.ne.s32.totalorder %s198, %s199
      %p211 = scmp.eq.s32.totalorder %s37, 1
      %p212 = por %p210, %p211
      %p214 = scmp.ne.s32.totalorder %s199, %s213
      %p215 = scmp.eq.s32.totalorder %s37, 0
      %p216 = por %p214, %p215
      %s218 = sadd.s32 %s217, 1
      %p221 = scmp.eq.s32.totalorder %s31, 1
      %p222 = scmp.ne.s32.totalorder %s217, %s219
      %p223 = scmp.eq.s32.totalorder %s31, 0
      %p224 = por %p222, %p223
      %p225 = scmp.ne.s32.totalorder %s217, %s219
      %p226 = scmp.eq.s32.totalorder %s36, 1
      %p227 = por %p225, %p226
      %p228 = scmp.ne.s32.totalorder %s219, %s220
      %p229 = scmp.eq.s32.totalorder %s36, 0
      %p230 = por %p228, %p229
      %p231 = scmp.ne.s32.totalorder %s219, %s220
      %p232 = scmp.eq.s32.totalorder %s37, 1
      %p233 = por %p231, %p232
      %p235 = scmp.ne.s32.totalorder %s220, %s234
      %p236 = scmp.eq.s32.totalorder %s37, 0
      %p237 = por %p235, %p236
      %s239 = sadd.s32 %s238, 1
      %p242 = scmp.eq.s32.totalorder %s31, 1
      %p243 = scmp.ne.s32.totalorder %s238, %s240
      %p244 = scmp.eq.s32.totalorder %s31, 0
      %p245 = por %p243, %p244
      %p246 = scmp.ne.s32.totalorder %s238, %s240
      %p247 = scmp.eq.s32.totalorder %s36, 1
      %p248 = por %p246, %p247
      %p249 = scmp.ne.s32.totalorder %s240, %s241
      %p250 = scmp.eq.s32.totalorder %s36, 0
      %p251 = por %p249, %p250
      %p252 = scmp.ne.s32.totalorder %s240, %s241
      %p253 = scmp.eq.s32.totalorder %s37, 1
      %p254 = por %p252, %p253
      %p256 = scmp.ne.s32.totalorder %s241, %s255
      %p257 = scmp.eq.s32.totalorder %s37, 0
      %p258 = por %p256, %p257
      %s260 = sadd.s32 %s259, 1
      %p263 = scmp.eq.s32.totalorder %s31, 1
      %p264 = scmp.ne.s32.totalorder %s259, %s261
      %p265 = scmp.eq.s32.totalorder %s31, 0
      %p266 = por %p264, %p265
      %p267 = scmp.ne.s32.totalorder %s259, %s261
      %p268 = scmp.eq.s32.totalorder %s36, 1
      %p269 = por %p267, %p268
      %p270 = scmp.ne.s32.totalorder %s261, %s262
      %p271 = scmp.eq.s32.totalorder %s36, 0
      %p272 = por %p270, %p271
      %p273 = scmp.ne.s32.totalorder %s261, %s262
      %p274 = scmp.eq.s32.totalorder %s37, 1
      %p275 = por %p273, %p274
      %p277 = scmp.ne.s32.totalorder %s262, %s276
      %p278 = scmp.eq.s32.totalorder %s37, 0
      %p279 = por %p277, %p278
      %s281 = sadd.s32 %s280, 1
      %p284 = scmp.eq.s32.totalorder %s31, 1
      %p285 = scmp.ne.s32.totalorder %s280, %s282
      %p286 = scmp.eq.s32.totalorder %s31, 0
      %p287 = por %p285, %p286
      %p288 = scmp.ne.s32.totalorder %s280, %s282
      %p289 = scmp.eq.s32.totalorder %s36, 1
      %p290 = por %p288, %p289
      %p291 = scmp.ne.s32.totalorder %s282, %s283
      %p292 = scmp.eq.s32.totalorder %s36, 0
      %p293 = por %p291, %p292
      %p294 = scmp.ne.s32.totalorder %s282, %s283
      %p295 = scmp.eq.s32.totalorder %s37, 1
      %p296 = por %p294, %p295
      %p298 = scmp.ne.s32.totalorder %s283, %s297
      %p299 = scmp.eq.s32.totalorder %s37, 0
      %p300 = por %p298, %p299
      %s302 = sadd.s32 %s301, 1
      %p305 = scmp.eq.s32.totalorder %s31, 1
      %p306 = scmp.ne.s32.totalorder %s301, %s303
      %p307 = scmp.eq.s32.totalorder %s31, 0
      %p308 = por %p306, %p307
      %p309 = scmp.ne.s32.totalorder %s301, %s303
      %p310 = scmp.eq.s32.totalorder %s36, 1
      %p311 = por %p309, %p310
      %p312 = scmp.ne.s32.totalorder %s303, %s304
      %p313 = scmp.eq.s32.totalorder %s36, 0
      %p314 = por %p312, %p313
      %p315 = scmp.ne.s32.totalorder %s303, %s304
      %p316 = scmp.eq.s32.totalorder %s37, 1
      %p317 = por %p315, %p316
      %p319 = scmp.ne.s32.totalorder %s304, %s318
      %p320 = scmp.eq.s32.totalorder %s37, 0
      %p321 = por %p319, %p320
      %s323 = sadd.s32 %s322, 1
      %p326 = scmp.eq.s32.totalorder %s31, 1
      %p327 = scmp.ne.s32.totalorder %s322, %s324
      %p328 = scmp.eq.s32.totalorder %s31, 0
      %p329 = por %p327, %p328
      %p330 = scmp.ne.s32.totalorder %s322, %s324
      %p331 = scmp.eq.s32.totalorder %s36, 1
      %p332 = por %p330, %p331
      %p333 = scmp.ne.s32.totalorder %s324, %s325
      %p334 = scmp.eq.s32.totalorder %s36, 0
      %p335 = por %p333, %p334
      %p336 = scmp.ne.s32.totalorder %s324, %s325
      %p337 = scmp.eq.s32.totalorder %s37, 1
      %p338 = por %p336, %p337
      %p340 = scmp.ne.s32.totalorder %s325, %s339
      %p341 = scmp.eq.s32.totalorder %s37, 0
      %p342 = por %p340, %p341
      %s343 = ssub.s32 %s31, %s38
      %p344 = scmp.eq.s32.totalorder %s343, 0
      %s346 = sadd.s32 %s345, 1
      %s347 = scalar_select %p344, %s345, %s346
      %p350 = pneg %p344
      %p351 = scmp.eq.s32.totalorder %s31, 1
      %p352 = por %p350, %p351
      %p353 = scmp.ne.s32.totalorder %s345, %s348
      %p354 = scmp.eq.s32.totalorder %s31, 0
      %p355 = por %p353, %p354
      %p356 = scmp.ne.s32.totalorder %s345, %s348
      %p357 = scmp.eq.s32.totalorder %s36, 1
      %p358 = por %p356, %p357
      %p359 = scmp.ne.s32.totalorder %s348, %s349
      %p360 = scmp.eq.s32.totalorder %s36, 0
      %p361 = por %p359, %p360
      %p362 = scmp.ne.s32.totalorder %s348, %s349
      %p363 = scmp.eq.s32.totalorder %s37, 1
      %p364 = por %p362, %p363
      %p366 = scmp.ne.s32.totalorder %s349, %s365
      %p367 = scmp.eq.s32.totalorder %s37, 0
      %p368 = por %p366, %p367
      %p369 = scmp.le.s32.totalorder 1, %s31
      %p370 = scmp.lt.s32.totalorder %s31, 3
      %p371 = pnand %p369, %p370
      %p372 = pneg %p371
      // Predicated region
      $region9: #{tpu_custom_call.1} parent=5 // pred_check
        _
      $region10: #{tpu_custom_call.1} parent=5 // pred_check_branch
        %374 = sbr.rel (%p371) target = $region12
      $region11: #{tpu_custom_call.1} parent=5 // pred_region
        %s375 = ssub.s32 %s31, 1
        // Predicated region
        $region13: #{tpu_custom_call.1} parent=11 // pred_check
          %p376 = pneg %p104
        $region14: #{tpu_custom_call.1} parent=11 // pred_check_branch
          %378 = sbr.rel (%p376) target = $region16
        $region15: #{tpu_custom_call.1} parent=11 // pred_region
          %s380 = ssub.s32 2048, 2048
          %381 = vsyncadd [#allocation6], %s380
          %s382 = sshll.u32 [#allocation7], 4
          %s383 = int_to_ptr.vmem [resolvable:$true] %s382
          %388 = dma.hbm_to_vmem [thread:$0]  %s2, 2048, %s383, [#allocation6], 128, 128, 8
        $region16: #{tpu_custom_call.1} parent=11 // pred_fallthru
          _
        // Predicated region
        $region17: #{tpu_custom_call.1} parent=11 // pred_check
          %p389 = pneg %p125
        $region18: #{tpu_custom_call.1} parent=11 // pred_check_branch
          %391 = sbr.rel (%p389) target = $region20
        $region19: #{tpu_custom_call.1} parent=11 // pred_region
          %s393 = ssub.s32 4096, 4096
          %394 = vsyncadd [#allocation9], %s393
          %s395 = sshll.u32 [#allocation8], 4
          %s396 = int_to_ptr.vmem [resolvable:$true] %s395
          %401 = dma.hbm_to_vmem [thread:$0]  %s3, 4096, %s396, [#allocation9], 256, 256, 16
        $region20: #{tpu_custom_call.1} parent=11 // pred_fallthru
          _
        // Predicated region
        $region21: #{tpu_custom_call.1} parent=11 // pred_check
          %p402 = pneg %p146
        $region22: #{tpu_custom_call.1} parent=11 // pred_check_branch
          %404 = sbr.rel (%p402) target = $region24
        $region23: #{tpu_custom_call.1} parent=11 // pred_region
          %s406 = ssub.s32 2048, 2048
          %407 = vsyncadd [#allocation9], %s406
          %s408 = sshll.u32 [#allocation10], 4
          %s409 = int_to_ptr.vmem [resolvable:$true] %s408
          %414 = dma.hbm_to_vmem [thread:$0]  %s4, 2048, %s409, [#allocation9], 128, 128, 8
        $region24: #{tpu_custom_call.1} parent=11 // pred_fallthru
          _
        // Predicated region
        $region25: #{tpu_custom_call.1} parent=11 // pred_check
          %p415 = pneg %p167
        $region26: #{tpu_custom_call.1} parent=11 // pred_check_branch
          %417 = sbr.rel (%p415) target = $region28
        $region27: #{tpu_custom_call.1} parent=11 // pred_region
          _
        $region28: #{tpu_custom_call.1} parent=11 // pred_fallthru
          _
        // Predicated region
        $region29: #{tpu_custom_call.1} parent=11 // pred_check
          %p418 = pneg %p188
        $region30: #{tpu_custom_call.1} parent=11 // pred_check_branch
          %420 = sbr.rel (%p418) target = $region32
        $region31: #{tpu_custom_call.1} parent=11 // pred_region
          _
        $region32: #{tpu_custom_call.1} parent=11 // pred_fallthru
          _
        // Predicated region
        $region33: #{tpu_custom_call.1} parent=11 // pred_check
          %p421 = pneg %p209
        $region34: #{tpu_custom_call.1} parent=11 // pred_check_branch
          %423 = sbr.rel (%p421) target = $region36
        $region35: #{tpu_custom_call.1} parent=11 // pred_region
          _
        $region36: #{tpu_custom_call.1} parent=11 // pred_fallthru
          _
        // Predicated region
        $region37: #{tpu_custom_call.1} parent=11 // pred_check
          %p424 = pneg %p230
        $region38: #{tpu_custom_call.1} parent=11 // pred_check_branch
          %426 = sbr.rel (%p424) target = $region40
        $region39: #{tpu_custom_call.1} parent=11 // pred_region
          _
        $region40: #{tpu_custom_call.1} parent=11 // pred_fallthru
          _
        // Predicated region
        $region41: #{tpu_custom_call.1} parent=11 // pred_check
          %p427 = pneg %p251
        $region42: #{tpu_custom_call.1} parent=11 // pred_check_branch
          %429 = sbr.rel (%p427) target = $region44
        $region43: #{tpu_custom_call.1} parent=11 // pred_region
          _
        $region44: #{tpu_custom_call.1} parent=11 // pred_fallthru
          _
        // Predicated region
        $region45: #{tpu_custom_call.1} parent=11 // pred_check
          %p430 = pneg %p272
        $region46: #{tpu_custom_call.1} parent=11 // pred_check_branch
          %432 = sbr.rel (%p430) target = $region48
        $region47: #{tpu_custom_call.1} parent=11 // pred_region
          %s434 = ssub.s32 8192, 8192
          %435 = vsyncadd [#allocation12], %s434
          %s436 = sshll.u32 [#allocation11], 4
          %s437 = int_to_ptr.vmem [resolvable:$true] %s436
          %442 = dma.hbm_to_vmem [thread:$0]  %s10, 8192, %s437, [#allocation12], 512, 512, 32
        $region48: #{tpu_custom_call.1} parent=11 // pred_fallthru
          _
        // Predicated region
        $region49: #{tpu_custom_call.1} parent=11 // pred_check
          %p443 = pneg %p293
        $region50: #{tpu_custom_call.1} parent=11 // pred_check_branch
          %445 = sbr.rel (%p443) target = $region52
        $region51: #{tpu_custom_call.1} parent=11 // pred_region
          _
        $region52: #{tpu_custom_call.1} parent=11 // pred_fallthru
          _
        // Predicated region
        $region53: #{tpu_custom_call.1} parent=11 // pred_check
          %p446 = pneg %p314
        $region54: #{tpu_custom_call.1} parent=11 // pred_check_branch
          %448 = sbr.rel (%p446) target = $region56
        $region55: #{tpu_custom_call.1} parent=11 // pred_region
          %s450 = ssub.s32 8192, 8192
          %451 = vsyncadd [#allocation12], %s450
          %s452 = sshll.u32 [#allocation13], 4
          %s453 = int_to_ptr.vmem [resolvable:$true] %s452
          %458 = dma.hbm_to_vmem [thread:$0]  %s12, 8192, %s453, [#allocation12], 128, 128, 8
        $region56: #{tpu_custom_call.1} parent=11 // pred_fallthru
          _
        // Predicated region
        $region57: #{tpu_custom_call.1} parent=11 // pred_check
          %p459 = pneg %p335
        $region58: #{tpu_custom_call.1} parent=11 // pred_check_branch
          %461 = sbr.rel (%p459) target = $region60
        $region59: #{tpu_custom_call.1} parent=11 // pred_region
          _
        $region60: #{tpu_custom_call.1} parent=11 // pred_fallthru
          _
      $region12: #{tpu_custom_call.1} parent=5 // pred_fallthru
        _
      %p462 = scmp.lt.s32.totalorder %s31, 2
      // Predicated region
      $region61: #{tpu_custom_call.1} parent=5 // pred_check
        %p463 = pneg %p462
      $region62: #{tpu_custom_call.1} parent=5 // pred_check_branch
        %465 = sbr.rel (%p463) target = $region64
      $region63: #{tpu_custom_call.1} parent=5 // pred_region
        // Predicated region
        $region65: #{tpu_custom_call.1} parent=63 // pred_check
          %p466 = pneg %p51
        $region66: #{tpu_custom_call.1} parent=63 // pred_check_branch
          %468 = sbr.rel (%p466) target = $region68
        $region67: #{tpu_custom_call.1} parent=63 // pred_region
          %s469 = sand.u32 %s41, 1
          %s470 = scalar_lea.sflag [#allocation3], %s469
          %s471 = sand.u32 %s41, 1
          %s472 = smul.addr %s471, 16
          %s473 = scalar_lea.vmem [#allocation2], %s472
          %s475 = ssub.s32 256, 256
          %476 = vsyncadd %s470, %s475
          %s477 = smul.addr %s31, 2
          %s478 = smul.addr %s477, 128
          %s479 = scalar_lea.hbm %s0, %s478
          %s480 = sshll.u32 %s473, 4
          %s481 = int_to_ptr.vmem [resolvable:$true] %s480
          %486 = dma.hbm_to_vmem [thread:$0]  %s479, 256, %s481, %s470, 128, 128, 8
        $region68: #{tpu_custom_call.1} parent=63 // pred_fallthru
          _
        // Predicated region
        $region69: #{tpu_custom_call.1} parent=63 // pred_check
          %p487 = pneg %p77
        $region70: #{tpu_custom_call.1} parent=63 // pred_check_branch
          %489 = sbr.rel (%p487) target = $region72
        $region71: #{tpu_custom_call.1} parent=63 // pred_region
          %s490 = sand.u32 %s31, 1
          %s491 = scalar_lea.sflag [#allocation6], %s490
          %s492 = sand.u32 %s67, 1
          %s493 = smul.addr %s492, 16
          %s494 = scalar_lea.vmem [#allocation5], %s493
          %s496 = ssub.s32 256, 256
          %497 = vsyncadd %s491, %s496
          %s498 = smul.addr %s31, 2
          %s499 = smul.addr %s498, 128
          %s500 = scalar_lea.hbm %s1, %s499
          %s501 = sshll.u32 %s494, 4
          %s502 = int_to_ptr.vmem [resolvable:$true] %s501
          %507 = dma.hbm_to_vmem [thread:$0]  %s500, 256, %s502, %s491, 128, 128, 8
        $region72: #{tpu_custom_call.1} parent=63 // pred_fallthru
          _
      $region64: #{tpu_custom_call.1} parent=5 // pred_fallthru
        _
      %p508 = scmp.le.s32.totalorder 1, %s31
      %p509 = scmp.lt.s32.totalorder %s31, 3
      %p510 = pnand %p508, %p509
      %p511 = pneg %p510
      // Predicated region
      $region73: #{tpu_custom_call.1} parent=5 // pred_check
        _
      $region74: #{tpu_custom_call.1} parent=5 // pred_check_branch
        %513 = sbr.rel (%p510) target = $region76
      $region75: #{tpu_custom_call.1} parent=5 // pred_region
        %s514 = ssub.s32 %s31, 1
        %s515 = sand.u32 %s44, 1
        %s516 = scalar_lea.sflag [#allocation3], %s515
        %s517 = sand.u32 %s44, 1
        %s518 = smul.addr %s517, 16
        %s519 = scalar_lea.vmem [#allocation2], %s518
        // Predicated region
        $region77: #{tpu_custom_call.1} parent=75 // pred_check
          %p520 = pneg %p57
        $region78: #{tpu_custom_call.1} parent=75 // pred_check_branch
          %522 = sbr.rel (%p520) target = $region80
        $region79: #{tpu_custom_call.1} parent=75 // pred_region
          %523 = dma.done %s516, 256
        $region80: #{tpu_custom_call.1} parent=75 // pred_fallthru
          _
        %s524 = sand.u32 %s36, 1
        %s525 = scalar_lea.sflag [#allocation6], %s524
        %s526 = sand.u32 %s70, 1
        %s527 = smul.addr %s526, 16
        %s528 = scalar_lea.vmem [#allocation5], %s527
        // Predicated region
        $region81: #{tpu_custom_call.1} parent=75 // pred_check
          %p529 = pneg %p83
        $region82: #{tpu_custom_call.1} parent=75 // pred_check_branch
          %531 = sbr.rel (%p529) target = $region84
        $region83: #{tpu_custom_call.1} parent=75 // pred_region
          %532 = dma.done %s525, 256
        $region84: #{tpu_custom_call.1} parent=75 // pred_fallthru
          _
        // Predicated region
        $region85: #{tpu_custom_call.1} parent=75 // pred_check
          %p533 = pneg %p104
        $region86: #{tpu_custom_call.1} parent=75 // pred_check_branch
          %535 = sbr.rel (%p533) target = $region88
        $region87: #{tpu_custom_call.1} parent=75 // pred_region
          %536 = dma.done [#allocation6], 2048
        $region88: #{tpu_custom_call.1} parent=75 // pred_fallthru
          _
        // Predicated region
        $region89: #{tpu_custom_call.1} parent=75 // pred_check
          %p537 = pneg %p125
        $region90: #{tpu_custom_call.1} parent=75 // pred_check_branch
          %539 = sbr.rel (%p537) target = $region92
        $region91: #{tpu_custom_call.1} parent=75 // pred_region
          %540 = dma.done [#allocation9], 4096
        $region92: #{tpu_custom_call.1} parent=75 // pred_fallthru
          _
        // Predicated region
        $region93: #{tpu_custom_call.1} parent=75 // pred_check
          %p541 = pneg %p146
        $region94: #{tpu_custom_call.1} parent=75 // pred_check_branch
          %543 = sbr.rel (%p541) target = $region96
        $region95: #{tpu_custom_call.1} parent=75 // pred_region
          %544 = dma.done [#allocation9], 2048
        $region96: #{tpu_custom_call.1} parent=75 // pred_fallthru
          _
        // Predicated region
        $region97: #{tpu_custom_call.1} parent=75 // pred_check
          %p545 = pneg %p272
        $region98: #{tpu_custom_call.1} parent=75 // pred_check_branch
          %547 = sbr.rel (%p545) target = $region100
        $region99: #{tpu_custom_call.1} parent=75 // pred_region
          %548 = dma.done [#allocation12], 8192
        $region100: #{tpu_custom_call.1} parent=75 // pred_fallthru
          _
        // Predicated region
        $region101: #{tpu_custom_call.1} parent=75 // pred_check
          %p549 = pneg %p314
        $region102: #{tpu_custom_call.1} parent=75 // pred_check_branch
          %551 = sbr.rel (%p549) target = $region104
        $region103: #{tpu_custom_call.1} parent=75 // pred_region
          %552 = dma.done [#allocation12], 8192
        $region104: #{tpu_custom_call.1} parent=75 // pred_fallthru
          _
        %s553 = sand.u32 %s44, 1
        %s554 = scalar_lea.sflag [#allocation3], %s553
        %s555 = sand.u32 %s44, 1
        %s556 = smul.addr %s555, 16
        %s557 = scalar_lea.vmem [#allocation2], %s556
        %p558 = pneg %p57
        %p559 = pneg %p54
        %s560 = sand.u32 %s36, 1
        %s561 = scalar_lea.sflag [#allocation6], %s560
        %s562 = sand.u32 %s70, 1
        %s563 = smul.addr %s562, 16
        %s564 = scalar_lea.vmem [#allocation5], %s563
        %p565 = pneg %p83
        %p566 = pneg %p80
        %p567 = pneg %p104
        %p568 = pneg %p101
        %p569 = pneg %p125
        %p570 = pneg %p122
        %p571 = pneg %p146
        %p572 = pneg %p143
        %p573 = pneg %p167
        %p574 = pneg %p164
        %p575 = pneg %p188
        %p576 = pneg %p185
        %p577 = pneg %p209
        %p578 = pneg %p206
        %p579 = pneg %p230
        %p580 = pneg %p227
        %p581 = pneg %p251
        %p582 = pneg %p248
        %p583 = pneg %p272
        %p584 = pneg %p269
        %p585 = pneg %p293
        %p586 = pneg %p290
        %p587 = pneg %p314
        %p588 = pneg %p311
        %p589 = pneg %p335
        %p590 = pneg %p332
        %p591 = pneg %p361
        %p592 = pneg %p358
        %s593 = sand.u32 %s348, 1
        %s594 = scalar_lea.sflag [#allocation4], %s593
        %s595 = sand.u32 %s348, 1
        %s596 = smul.addr %s595, 16
        %s597 = scalar_lea.vmem [#allocation14], %s596
        %v598 = vld [vmem:[%s519] sm:$0xff]
        %v599 = vld [vmem:[%s519 + $0x8] sm:$0xff]
        %v600 = vld [vmem:[%s528] sm:$0xff]
        %v601 = vld [vmem:[%s528 + $0x8] sm:$0xff]
        %v602 = vld [vmem:[%s6] sm:$0x1]
        %v603 = vld [vmem:[%s7] sm:$0x1]
        %604 = vadd.xlane.f32.xlu0 %v598
        %v605 = vpop.xlane.xlu0 %604
        %606 = vadd.xlane.f32.xlu0 %v599
        %v607 = vpop.xlane.xlu0 %606
        %v608 = vmul.f32 %v598, %v598
        %v609 = vmul.f32 %v599, %v599
        %610 = vadd.xlane.f32.xlu0 %v608
        %v611 = vpop.xlane.xlu0 %610
        %612 = vadd.xlane.f32.xlu0 %v609
        %v613 = vpop.xlane.xlu0 %612
        %v614 = vrcp.pop 128.0
        %v615 = vmul.f32 %v605, %v614
        %v616 = vmul.f32 %v607, %v614
        %v617 = vmul.f32 %v611, %v614
        %v618 = vmul.f32 %v613, %v614
        %v619 = vmul.f32 %v615, %v615
        %v620 = vmul.f32 %v616, %v616
        %v621 = vsub.f32 %v617, %v619
        %v622 = vsub.f32 %v618, %v620
        %v623 = vsub.f32 %v598, %v615
        %v624 = vsub.f32 %v599, %v616
        %v625 = vadd.f32 %v621, 1e-05
        %v626 = vadd.f32 %v622, 1e-05
        %v627 = vrsqrt.pop %v625
        %v628 = vrsqrt.pop %v626
        %v629 = vmul.f32 %v623, %v627
        %v630 = vmul.f32 %v624, %v628
        %v632 = vlaneseq
        %v633 = vshrl.u32 %v632, 7
        %v634 = vsub.s32 0, %v633
        %v635 = vrot.slane %v602, %v634
        %v637 = vmul.f32 %v629, %v635
        %v638 = vmul.f32 %v630, %v635
        %v640 = vlaneseq
        %v641 = vshrl.u32 %v640, 7
        %v642 = vsub.s32 0, %v641
        %v643 = vrot.slane %v603, %v642
        %v645 = vadd.f32 %v637, %v643
        %v646 = vadd.f32 %v638, %v643
        %647 = vadd.xlane.f32.xlu0 %v600
        %v648 = vpop.xlane.xlu0 %647
        %649 = vadd.xlane.f32.xlu0 %v601
        %v650 = vpop.xlane.xlu0 %649
        %v651 = vmul.f32 %v600, %v600
        %v652 = vmul.f32 %v601, %v601
        %653 = vadd.xlane.f32.xlu0 %v651
        %v654 = vpop.xlane.xlu0 %653
        %655 = vadd.xlane.f32.xlu0 %v652
        %v656 = vpop.xlane.xlu0 %655
        %v657 = vmul.f32 %v648, %v614
        %v658 = vmul.f32 %v650, %v614
        %v659 = vmul.f32 %v654, %v614
        %v660 = vmul.f32 %v656, %v614
        %v661 = vmul.f32 %v657, %v657
        %v662 = vmul.f32 %v658, %v658
        %v663 = vsub.f32 %v659, %v661
        %v664 = vsub.f32 %v660, %v662
        %v665 = vsub.f32 %v600, %v657
        %v666 = vsub.f32 %v601, %v658
        %v667 = vadd.f32 %v663, 1e-05
        %v668 = vadd.f32 %v664, 1e-05
        %v669 = vrsqrt.pop %v667
        %v670 = vrsqrt.pop %v668
        %v671 = vmul.f32 %v665, %v669
        %v672 = vmul.f32 %v666, %v670
        %v673 = vmul.f32 %v671, %v635
        %v674 = vmul.f32 %v672, %v635
        %v675 = vadd.f32 %v673, %v643
        %v676 = vadd.f32 %v674, %v643
        %v677 = vld [vmem:[#allocation7] sm:$0xff]
        %v678 = vld [vmem:[#allocation7 + $0x8] sm:$0xff]
        %v679 = vld [vmem:[#allocation7 + $0x10] sm:$0xff]
        %v680 = vld [vmem:[#allocation7 + $0x18] sm:$0xff]
        %v681 = vld [vmem:[#allocation7 + $0x20] sm:$0xff]
        %v682 = vld [vmem:[#allocation7 + $0x28] sm:$0xff]
        %v683 = vld [vmem:[#allocation7 + $0x30] sm:$0xff]
        %v684 = vld [vmem:[#allocation7 + $0x38] sm:$0xff]
        %v685 = vld [vmem:[#allocation7 + $0x40] sm:$0xff]
        %v686 = vld [vmem:[#allocation7 + $0x48] sm:$0xff]
        %v687 = vld [vmem:[#allocation7 + $0x50] sm:$0xff]
        %v688 = vld [vmem:[#allocation7 + $0x58] sm:$0xff]
        %v689 = vld [vmem:[#allocation7 + $0x60] sm:$0xff]
        %v690 = vld [vmem:[#allocation7 + $0x68] sm:$0xff]
        %v691 = vld [vmem:[#allocation7 + $0x70] sm:$0xff]
        %v692 = vld [vmem:[#allocation7 + $0x78] sm:$0xff]
        %693 = vmatprep.subr.mxu0 0.0
        %694 = vmatpush1.msra.mxu0 %v677
        %695 = vmatprep.subr.mxu0 0.0
        %696 = vmatpush1.msra.mxu0 %v678
        %697 = vmatprep.subr.mxu0 0.0
        %698 = vmatpush1.msra.mxu0 %v679
        %699 = vmatprep.subr.mxu0 0.0
        %700 = vmatpush1.msra.mxu0 %v680
        %701 = vmatprep.subr.mxu0 0.0
        %702 = vmatpush1.msra.mxu0 %v681
        %703 = vmatprep.subr.mxu0 0.0
        %704 = vmatpush1.msra.mxu0 %v682
        %705 = vmatprep.subr.mxu0 0.0
        %706 = vmatpush1.msra.mxu0 %v683
        %707 = vmatprep.subr.mxu0 0.0
        %708 = vmatpush1.msra.mxu0 %v684
        %709 = vmatprep.subr.mxu0 0.0
        %710 = vmatpush1.msra.mxu0 %v685
        %711 = vmatprep.subr.mxu0 0.0
        %712 = vmatpush1.msra.mxu0 %v686
        %713 = vmatprep.subr.mxu0 0.0
        %714 = vmatpush1.msra.mxu0 %v687
        %715 = vmatprep.subr.mxu0 0.0
        %716 = vmatpush1.msra.mxu0 %v688
        %717 = vmatprep.subr.mxu0 0.0
        %718 = vmatpush1.msra.mxu0 %v689
        %719 = vmatprep.subr.mxu0 0.0
        %720 = vmatpush1.msra.mxu0 %v690
        %721 = vmatprep.subr.mxu0 0.0
        %722 = vmatpush1.msra.mxu0 %v691
        %723 = vmatprep.subr.mxu0 0.0
        %724 = vmatpush1.msra.mxu0 %v692
        %725 = vmatprep.subr.mxu0 0.0
        %726 = vmatpush1.msra.mxu0 0.0
        %727 = vmatprep.subr.mxu0 0.0
        %728 = vmatpush1.msra.mxu0 0.0
        %729 = vmatprep.subr.mxu0 0.0
        %730 = vmatpush1.msra.mxu0 0.0
        %731 = vmatprep.subr.mxu0 0.0
        %732 = vmatpush1.msra.mxu0 0.0
        %733 = vmatprep.subr.mxu0 0.0
        %734 = vmatpush1.msra.mxu0 0.0
        %735 = vmatprep.subr.mxu0 0.0
        %736 = vmatpush1.msra.mxu0 0.0
        %737 = vmatprep.subr.mxu0 0.0
        %738 = vmatpush1.msra.mxu0 0.0
        %739 = vmatprep.subr.mxu0 0.0
        %740 = vmatpush1.msra.mxu0 0.0
        %741 = vmatprep.subr.mxu0 0.0
        %742 = vmatpush1.msra.mxu0 0.0
        %743 = vmatprep.subr.mxu0 0.0
        %744 = vmatpush1.msra.mxu0 0.0
        %745 = vmatprep.subr.mxu0 0.0
        %746 = vmatpush1.msra.mxu0 0.0
        %747 = vmatprep.subr.mxu0 0.0
        %748 = vmatpush1.msra.mxu0 0.0
        %749 = vmatprep.subr.mxu0 0.0
        %750 = vmatpush1.msra.mxu0 0.0
        %751 = vmatprep.subr.mxu0 0.0
        %752 = vmatpush1.msra.mxu0 0.0
        %753 = vmatprep.subr.mxu0 0.0
        %754 = vmatpush1.msra.mxu0 0.0
        %755 = vmatprep.subr.mxu0 0.0
        %756 = vmatpush1.msra.mxu0 0.0
        %757 = vmatprep.mubr.f32.mxu0 0.0
        %758 = vmatmul.mubr.f32.gmra.mrb[0].mxu0 %v675
        %v759 = vpop.f32.mrb[0].mxu0
        %v760 = vadd.f32 0.0, %v759
        %v761 = vpop.f32.mrb[0].mxu0
        %762 = vmatprep.mubr.f32.mxu0 0.0
        %763 = vmatmul.mubr.f32.gmra.mrb[0].mxu0 %v676
        %v764 = vpop.f32.mrb[0].mxu0
        %v765 = vadd.f32 0.0, %v764
        %v766 = vpop.f32.mrb[0].mxu0
        %767 = vdwg.mxu0
        %v768 = vld [vmem:[#allocation8] sm:$0xff]
        %v769 = vld [vmem:[#allocation8 + $0x8] sm:$0xff]
        %v770 = vld [vmem:[#allocation8 + $0x10] sm:$0xff]
        %v771 = vld [vmem:[#allocation8 + $0x18] sm:$0xff]
        %v772 = vld [vmem:[#allocation8 + $0x20] sm:$0xff]
        %v773 = vld [vmem:[#allocation8 + $0x28] sm:$0xff]
        %v774 = vld [vmem:[#allocation8 + $0x30] sm:$0xff]
        %v775 = vld [vmem:[#allocation8 + $0x38] sm:$0xff]
        %v776 = vld [vmem:[#allocation8 + $0x40] sm:$0xff]
        %v777 = vld [vmem:[#allocation8 + $0x48] sm:$0xff]
        %v778 = vld [vmem:[#allocation8 + $0x50] sm:$0xff]
        %v779 = vld [vmem:[#allocation8 + $0x58] sm:$0xff]
        %v780 = vld [vmem:[#allocation8 + $0x60] sm:$0xff]
        %v781 = vld [vmem:[#allocation8 + $0x68] sm:$0xff]
        %v782 = vld [vmem:[#allocation8 + $0x70] sm:$0xff]
        %v783 = vld [vmem:[#allocation8 + $0x78] sm:$0xff]
        %v784 = vld [vmem:[#allocation8 + $0x80] sm:$0xff]
        %v785 = vld [vmem:[#allocation8 + $0x88] sm:$0xff]
        %v786 = vld [vmem:[#allocation8 + $0x90] sm:$0xff]
        %v787 = vld [vmem:[#allocation8 + $0x98] sm:$0xff]
        %v788 = vld [vmem:[#allocation8 + $0xa0] sm:$0xff]
        %v789 = vld [vmem:[#allocation8 + $0xa8] sm:$0xff]
        %v790 = vld [vmem:[#allocation8 + $0xb0] sm:$0xff]
        %v791 = vld [vmem:[#allocation8 + $0xb8] sm:$0xff]
        %v792 = vld [vmem:[#allocation8 + $0xc0] sm:$0xff]
        %v793 = vld [vmem:[#allocation8 + $0xc8] sm:$0xff]
        %v794 = vld [vmem:[#allocation8 + $0xd0] sm:$0xff]
        %v795 = vld [vmem:[#allocation8 + $0xd8] sm:$0xff]
        %v796 = vld [vmem:[#allocation8 + $0xe0] sm:$0xff]
        %v797 = vld [vmem:[#allocation8 + $0xe8] sm:$0xff]
        %v798 = vld [vmem:[#allocation8 + $0xf0] sm:$0xff]
        %v799 = vld [vmem:[#allocation8 + $0xf8] sm:$0xff]
        %800 = vmatprep.subr.mxu0 %v769
        %801 = vmatpush1.msra.mxu0 %v768
        %802 = vmatprep.subr.mxu0 %v771
        %803 = vmatpush1.msra.mxu0 %v770
        %804 = vmatprep.subr.mxu0 %v773
        %805 = vmatpush1.msra.mxu0 %v772
        %806 = vmatprep.subr.mxu0 %v775
        %807 = vmatpush1.msra.mxu0 %v774
        %808 = vmatprep.subr.mxu0 %v777
        %809 = vmatpush1.msra.mxu0 %v776
        %810 = vmatprep.subr.mxu0 %v779
        %811 = vmatpush1.msra.mxu0 %v778
        %812 = vmatprep.subr.mxu0 %v781
        %813 = vmatpush1.msra.mxu0 %v780
        %814 = vmatprep.subr.mxu0 %v783
        %815 = vmatpush1.msra.mxu0 %v782
        %816 = vmatprep.subr.mxu0 %v785
        %817 = vmatpush1.msra.mxu0 %v784
        %818 = vmatprep.subr.mxu0 %v787
        %819 = vmatpush1.msra.mxu0 %v786
        %820 = vmatprep.subr.mxu0 %v789
        %821 = vmatpush1.msra.mxu0 %v788
        %822 = vmatprep.subr.mxu0 %v791
        %823 = vmatpush1.msra.mxu0 %v790
        %824 = vmatprep.subr.mxu0 %v793
        %825 = vmatpush1.msra.mxu0 %v792
        %826 = vmatprep.subr.mxu0 %v795
        %827 = vmatpush1.msra.mxu0 %v794
        %828 = vmatprep.subr.mxu0 %v797
        %829 = vmatpush1.msra.mxu0 %v796
        %830 = vmatprep.subr.mxu0 %v799
        %831 = vmatpush1.msra.mxu0 %v798
        %832 = vmatprep.subr.mxu0 0.0
        %833 = vmatpush1.msra.mxu0 0.0
        %834 = vmatprep.subr.mxu0 0.0
        %835 = vmatpush1.msra.mxu0 0.0
        %836 = vmatprep.subr.mxu0 0.0
        %837 = vmatpush1.msra.mxu0 0.0
        %838 = vmatprep.subr.mxu0 0.0
        %839 = vmatpush1.msra.mxu0 0.0
        %840 = vmatprep.subr.mxu0 0.0
        %841 = vmatpush1.msra.mxu0 0.0
        %842 = vmatprep.subr.mxu0 0.0
        %843 = vmatpush1.msra.mxu0 0.0
        %844 = vmatprep.subr.mxu0 0.0
        %845 = vmatpush1.msra.mxu0 0.0
        %846 = vmatprep.subr.mxu0 0.0
        %847 = vmatpush1.msra.mxu0 0.0
        %848 = vmatprep.subr.mxu0 0.0
        %849 = vmatpush1.msra.mxu0 0.0
        %850 = vmatprep.subr.mxu0 0.0
        %851 = vmatpush1.msra.mxu0 0.0
        %852 = vmatprep.subr.mxu0 0.0
        %853 = vmatpush1.msra.mxu0 0.0
        %854 = vmatprep.subr.mxu0 0.0
        %855 = vmatpush1.msra.mxu0 0.0
        %856 = vmatprep.subr.mxu0 0.0
        %857 = vmatpush1.msra.mxu0 0.0
        %858 = vmatprep.subr.mxu0 0.0
        %859 = vmatpush1.msra.mxu0 0.0
        %860 = vmatprep.subr.mxu0 0.0
        %861 = vmatpush1.msra.mxu0 0.0
        %862 = vmatprep.subr.mxu0 0.0
        %863 = vmatpush1.msra.mxu0 0.0
        %864 = vmatprep.mubr.f32.mxu0 0.0
        %865 = vmatmul.mubr.f32.gmra.mrb[0].mxu0 %v645
        %v866 = vpop.f32.mrb[0].mxu0
        %v867 = vadd.f32 0.0, %v866
        %v868 = vpop.f32.mrb[0].mxu0
        %v869 = vadd.f32 0.0, %v868
        %870 = vmatprep.mubr.f32.mxu0 0.0
        %871 = vmatmul.mubr.f32.gmra.mrb[0].mxu0 %v646
        %v872 = vpop.f32.mrb[0].mxu0
        %v873 = vadd.f32 0.0, %v872
        %v874 = vpop.f32.mrb[0].mxu0
        %v875 = vadd.f32 0.0, %v874
        %876 = vdwg.mxu0
        %879 = vrot.lane.b32.xlu0 %v760, 96
        %v880 = vpop.permute.xlu0 %879
        %881 = vrot.lane.b32.xlu0 %v765, 96
        %v882 = vpop.permute.xlu0 %881
        %885 = vrot.lane.b32.xlu0 %v760, 64
        %v886 = vpop.permute.xlu0 %885
        %887 = vrot.lane.b32.xlu0 %v765, 64
        %v888 = vpop.permute.xlu0 %887
        %891 = vrot.lane.b32.xlu0 %v760, 32
        %v892 = vpop.permute.xlu0 %891
        %893 = vrot.lane.b32.xlu0 %v765, 32
        %v894 = vpop.permute.xlu0 %893
        %v897 = vcombine.low %v760, %v886
        %v898 = vcombine.high %v760, %v886
        %v900 = vunpack.c.l.s4 1983009808
        %v901 = vunpack.c.0.s8 %v900
        %v902 = vlaneseq
        %v903 = vshrl.u32 %v902, 7
        %v904 = vsub.s32 %v901, %v903
        %v905 = vrot.slane %v897, %v904
        %v907 = vunpack.c.l.s4 1983009808
        %v908 = vunpack.c.0.s8 %v907
        %v909 = vlaneseq
        %v910 = vshrl.u32 %v909, 7
        %v911 = vsub.s32 %v908, %v910
        %v912 = vrot.slane %v898, %v911
        %v913 = vcombine.low %v880, %v892
        %v914 = vcombine.high %v880, %v892
        %v916 = vunpack.c.l.s4 1983009808
        %v917 = vunpack.c.0.s8 %v916
        %v918 = vlaneseq
        %v919 = vshrl.u32 %v918, 7
        %v920 = vsub.s32 %v917, %v919
        %v921 = vrot.slane %v913, %v920
        %v923 = vunpack.c.l.s4 1983009808
        %v924 = vunpack.c.0.s8 %v923
        %v925 = vlaneseq
        %v926 = vshrl.u32 %v925, 7
        %v927 = vsub.s32 %v924, %v926
        %v928 = vrot.slane %v914, %v927
        %v929 = vcombine.low %v905, %v921
        %v930 = vcombine.high %v905, %v921
        %v932 = vunpack.c.l.s4 1934713408
        %v933 = vunpack.c.0.s8 %v932
        %v934 = vlaneseq
        %v935 = vshrl.u32 %v934, 7
        %v936 = vsub.s32 %v933, %v935
        %v937 = vrot.slane %v929, %v936
        %v939 = vunpack.c.l.s4 1934713408
        %v940 = vunpack.c.0.s8 %v939
        %v941 = vlaneseq
        %v942 = vshrl.u32 %v941, 7
        %v943 = vsub.s32 %v940, %v942
        %v944 = vrot.slane %v930, %v943
        %v945 = vcombine.low %v912, %v928
        %v946 = vcombine.high %v912, %v928
        %v948 = vunpack.c.l.s4 1934713408
        %v949 = vunpack.c.0.s8 %v948
        %v950 = vlaneseq
        %v951 = vshrl.u32 %v950, 7
        %v952 = vsub.s32 %v949, %v951
        %v953 = vrot.slane %v945, %v952
        %v955 = vunpack.c.l.s4 1934713408
        %v956 = vunpack.c.0.s8 %v955
        %v957 = vlaneseq
        %v958 = vshrl.u32 %v957, 7
        %v959 = vsub.s32 %v956, %v958
        %v960 = vrot.slane %v946, %v959
        %v961 = vcombine.high %v937, 0.0
        %v962 = vcombine.high %v944, 0.0
        %v963 = vcombine.high %v953, 0.0
        %v964 = vcombine.high %v960, 0.0
        %v965 = vcombine.low %v765, %v888
        %v966 = vcombine.high %v765, %v888
        %v968 = vunpack.c.l.s4 1983009808
        %v969 = vunpack.c.0.s8 %v968
        %v970 = vlaneseq
        %v971 = vshrl.u32 %v970, 7
        %v972 = vsub.s32 %v969, %v971
        %v973 = vrot.slane %v965, %v972
        %v975 = vunpack.c.l.s4 1983009808
        %v976 = vunpack.c.0.s8 %v975
        %v977 = vlaneseq
        %v978 = vshrl.u32 %v977, 7
        %v979 = vsub.s32 %v976, %v978
        %v980 = vrot.slane %v966, %v979
        %v981 = vcombine.low %v882, %v894
        %v982 = vcombine.high %v882, %v894
        %v984 = vunpack.c.l.s4 1983009808
        %v985 = vunpack.c.0.s8 %v984
        %v986 = vlaneseq
        %v987 = vshrl.u32 %v986, 7
        %v988 = vsub.s32 %v985, %v987
        %v989 = vrot.slane %v981, %v988
        %v991 = vunpack.c.l.s4 1983009808
        %v992 = vunpack.c.0.s8 %v991
        %v993 = vlaneseq
        %v994 = vshrl.u32 %v993, 7
        %v995 = vsub.s32 %v992, %v994
        %v996 = vrot.slane %v982, %v995
        %v997 = vcombine.low %v973, %v989
        %v998 = vcombine.high %v973, %v989
        %v1000 = vunpack.c.l.s4 1934713408
        %v1001 = vunpack.c.0.s8 %v1000
        %v1002 = vlaneseq
        %v1003 = vshrl.u32 %v1002, 7
        %v1004 = vsub.s32 %v1001, %v1003
        %v1005 = vrot.slane %v997, %v1004
        %v1007 = vunpack.c.l.s4 1934713408
        %v1008 = vunpack.c.0.s8 %v1007
        %v1009 = vlaneseq
        %v1010 = vshrl.u32 %v1009, 7
        %v1011 = vsub.s32 %v1008, %v1010
        %v1012 = vrot.slane %v998, %v1011
        %v1013 = vcombine.low %v980, %v996
        %v1014 = vcombine.high %v980, %v996
        %v1016 = vunpack.c.l.s4 1934713408
        %v1017 = vunpack.c.0.s8 %v1016
        %v1018 = vlaneseq
        %v1019 = vshrl.u32 %v1018, 7
        %v1020 = vsub.s32 %v1017, %v1019
        %v1021 = vrot.slane %v1013, %v1020
        %v1023 = vunpack.c.l.s4 1934713408
        %v1024 = vunpack.c.0.s8 %v1023
        %v1025 = vlaneseq
        %v1026 = vshrl.u32 %v1025, 7
        %v1027 = vsub.s32 %v1024, %v1026
        %v1028 = vrot.slane %v1014, %v1027
        %v1029 = vcombine.high %v1005, 0.0
        %v1030 = vcombine.high %v1012, 0.0
        %v1031 = vcombine.high %v1021, 0.0
        %v1032 = vcombine.high %v1028, 0.0
        %v1033 = vcombine.low %v937, %v944
        %v1035 = vunpack.c.l.s4 1983009808
        %v1036 = vunpack.c.0.s8 %v1035
        %v1037 = vlaneseq
        %v1038 = vshrl.u32 %v1037, 7
        %v1039 = vsub.s32 %v1036, %v1038
        %v1040 = vrot.slane %v1033, %v1039
        %v1041 = vcombine.low %v961, %v962
        %v1043 = vunpack.c.l.s4 1983009808
        %v1044 = vunpack.c.0.s8 %v1043
        %v1045 = vlaneseq
        %v1046 = vshrl.u32 %v1045, 7
        %v1047 = vsub.s32 %v1044, %v1046
        %v1048 = vrot.slane %v1041, %v1047
        %v1049 = vcombine.low %v953, %v960
        %v1051 = vunpack.c.l.s4 1983009808
        %v1052 = vunpack.c.0.s8 %v1051
        %v1053 = vlaneseq
        %v1054 = vshrl.u32 %v1053, 7
        %v1055 = vsub.s32 %v1052, %v1054
        %v1056 = vrot.slane %v1049, %v1055
        %v1057 = vcombine.low %v963, %v964
        %v1059 = vunpack.c.l.s4 1983009808
        %v1060 = vunpack.c.0.s8 %v1059
        %v1061 = vlaneseq
        %v1062 = vshrl.u32 %v1061, 7
        %v1063 = vsub.s32 %v1060, %v1062
        %v1064 = vrot.slane %v1057, %v1063
        %v1065 = vcombine.low %v1040, %v1048
        %v1066 = vcombine.high %v1040, %v1048
        %v1068 = vunpack.c.l.s4 1934713408
        %v1069 = vunpack.c.0.s8 %v1068
        %v1070 = vlaneseq
        %v1071 = vshrl.u32 %v1070, 7
        %v1072 = vsub.s32 %v1069, %v1071
        %v1073 = vrot.slane %v1065, %v1072
        %v1075 = vunpack.c.l.s4 1934713408
        %v1076 = vunpack.c.0.s8 %v1075
        %v1077 = vlaneseq
        %v1078 = vshrl.u32 %v1077, 7
        %v1079 = vsub.s32 %v1076, %v1078
        %v1080 = vrot.slane %v1066, %v1079
        %v1081 = vcombine.low %v1056, %v1064
        %v1082 = vcombine.high %v1056, %v1064
        %v1084 = vunpack.c.l.s4 1934713408
        %v1085 = vunpack.c.0.s8 %v1084
        %v1086 = vlaneseq
        %v1087 = vshrl.u32 %v1086, 7
        %v1088 = vsub.s32 %v1085, %v1087
        %v1089 = vrot.slane %v1081, %v1088
        %v1091 = vunpack.c.l.s4 1934713408
        %v1092 = vunpack.c.0.s8 %v1091
        %v1093 = vlaneseq
        %v1094 = vshrl.u32 %v1093, 7
        %v1095 = vsub.s32 %v1092, %v1094
        %v1096 = vrot.slane %v1082, %v1095
        %v1097 = vcombine.low %v1073, %v1089
        %v1098 = vcombine.high %v1073, %v1089
        %v1099 = vcombine.low %v1080, %v1096
        %v1100 = vcombine.high %v1080, %v1096
        %v1101 = vcombine.low %v1005, %v1012
        %v1103 = vunpack.c.l.s4 1983009808
        %v1104 = vunpack.c.0.s8 %v1103
        %v1105 = vlaneseq
        %v1106 = vshrl.u32 %v1105, 7
        %v1107 = vsub.s32 %v1104, %v1106
        %v1108 = vrot.slane %v1101, %v1107
        %v1109 = vcombine.low %v1029, %v1030
        %v1111 = vunpack.c.l.s4 1983009808
        %v1112 = vunpack.c.0.s8 %v1111
        %v1113 = vlaneseq
        %v1114 = vshrl.u32 %v1113, 7
        %v1115 = vsub.s32 %v1112, %v1114
        %v1116 = vrot.slane %v1109, %v1115
        %v1117 = vcombine.low %v1021, %v1028
        %v1119 = vunpack.c.l.s4 1983009808
        %v1120 = vunpack.c.0.s8 %v1119
        %v1121 = vlaneseq
        %v1122 = vshrl.u32 %v1121, 7
        %v1123 = vsub.s32 %v1120, %v1122
        %v1124 = vrot.slane %v1117, %v1123
        %v1125 = vcombine.low %v1031, %v1032
        %v1127 = vunpack.c.l.s4 1983009808
        %v1128 = vunpack.c.0.s8 %v1127
        %v1129 = vlaneseq
        %v1130 = vshrl.u32 %v1129, 7
        %v1131 = vsub.s32 %v1128, %v1130
        %v1132 = vrot.slane %v1125, %v1131
        %v1133 = vcombine.low %v1108, %v1116
        %v1134 = vcombine.high %v1108, %v1116
        %v1136 = vunpack.c.l.s4 1934713408
        %v1137 = vunpack.c.0.s8 %v1136
        %v1138 = vlaneseq
        %v1139 = vshrl.u32 %v1138, 7
        %v1140 = vsub.s32 %v1137, %v1139
        %v1141 = vrot.slane %v1133, %v1140
        %v1143 = vunpack.c.l.s4 1934713408
        %v1144 = vunpack.c.0.s8 %v1143
        %v1145 = vlaneseq
        %v1146 = vshrl.u32 %v1145, 7
        %v1147 = vsub.s32 %v1144, %v1146
        %v1148 = vrot.slane %v1134, %v1147
        %v1149 = vcombine.low %v1124, %v1132
        %v1150 = vcombine.high %v1124, %v1132
        %v1152 = vunpack.c.l.s4 1934713408
        %v1153 = vunpack.c.0.s8 %v1152
        %v1154 = vlaneseq
        %v1155 = vshrl.u32 %v1154, 7
        %v1156 = vsub.s32 %v1153, %v1155
        %v1157 = vrot.slane %v1149, %v1156
        %v1159 = vunpack.c.l.s4 1934713408
        %v1160 = vunpack.c.0.s8 %v1159
        %v1161 = vlaneseq
        %v1162 = vshrl.u32 %v1161, 7
        %v1163 = vsub.s32 %v1160, %v1162
        %v1164 = vrot.slane %v1150, %v1163
        %v1165 = vcombine.low %v1141, %v1157
        %v1166 = vcombine.high %v1141, %v1157
        %v1167 = vcombine.low %v1148, %v1164
        %v1168 = vcombine.high %v1148, %v1164
        %1171 = vrot.lane.b32.xlu0 %v867, 96
        %v1172 = vpop.permute.xlu0 %1171
        %1173 = vrot.lane.b32.xlu0 %v873, 96
        %v1174 = vpop.permute.xlu0 %1173
        %1177 = vrot.lane.b32.xlu0 %v867, 64
        %v1178 = vpop.permute.xlu0 %1177
        %1179 = vrot.lane.b32.xlu0 %v873, 64
        %v1180 = vpop.permute.xlu0 %1179
        %1183 = vrot.lane.b32.xlu0 %v867, 32
        %v1184 = vpop.permute.xlu0 %1183
        %1185 = vrot.lane.b32.xlu0 %v873, 32
        %v1186 = vpop.permute.xlu0 %1185
        %v1189 = vcombine.low %v867, %v1178
        %v1190 = vcombine.high %v867, %v1178
        %v1192 = vunpack.c.l.s4 1983009808
        %v1193 = vunpack.c.0.s8 %v1192
        %v1194 = vlaneseq
        %v1195 = vshrl.u32 %v1194, 7
        %v1196 = vsub.s32 %v1193, %v1195
        %v1197 = vrot.slane %v1189, %v1196
        %v1199 = vunpack.c.l.s4 1983009808
        %v1200 = vunpack.c.0.s8 %v1199
        %v1201 = vlaneseq
        %v1202 = vshrl.u32 %v1201, 7
        %v1203 = vsub.s32 %v1200, %v1202
        %v1204 = vrot.slane %v1190, %v1203
        %v1205 = vcombine.low %v1172, %v1184
        %v1206 = vcombine.high %v1172, %v1184
        %v1208 = vunpack.c.l.s4 1983009808
        %v1209 = vunpack.c.0.s8 %v1208
        %v1210 = vlaneseq
        %v1211 = vshrl.u32 %v1210, 7
        %v1212 = vsub.s32 %v1209, %v1211
        %v1213 = vrot.slane %v1205, %v1212
        %v1215 = vunpack.c.l.s4 1983009808
        %v1216 = vunpack.c.0.s8 %v1215
        %v1217 = vlaneseq
        %v1218 = vshrl.u32 %v1217, 7
        %v1219 = vsub.s32 %v1216, %v1218
        %v1220 = vrot.slane %v1206, %v1219
        %v1221 = vcombine.low %v1197, %v1213
        %v1222 = vcombine.high %v1197, %v1213
        %v1224 = vunpack.c.l.s4 1934713408
        %v1225 = vunpack.c.0.s8 %v1224
        %v1226 = vlaneseq
        %v1227 = vshrl.u32 %v1226, 7
        %v1228 = vsub.s32 %v1225, %v1227
        %v1229 = vrot.slane %v1221, %v1228
        %v1231 = vunpack.c.l.s4 1934713408
        %v1232 = vunpack.c.0.s8 %v1231
        %v1233 = vlaneseq
        %v1234 = vshrl.u32 %v1233, 7
        %v1235 = vsub.s32 %v1232, %v1234
        %v1236 = vrot.slane %v1222, %v1235
        %v1237 = vcombine.low %v1204, %v1220
        %v1238 = vcombine.high %v1204, %v1220
        %v1240 = vunpack.c.l.s4 1934713408
        %v1241 = vunpack.c.0.s8 %v1240
        %v1242 = vlaneseq
        %v1243 = vshrl.u32 %v1242, 7
        %v1244 = vsub.s32 %v1241, %v1243
        %v1245 = vrot.slane %v1237, %v1244
        %v1247 = vunpack.c.l.s4 1934713408
        %v1248 = vunpack.c.0.s8 %v1247
        %v1249 = vlaneseq
        %v1250 = vshrl.u32 %v1249, 7
        %v1251 = vsub.s32 %v1248, %v1250
        %v1252 = vrot.slane %v1238, %v1251
        %v1253 = vcombine.high %v1229, 0.0
        %v1254 = vcombine.high %v1236, 0.0
        %v1255 = vcombine.high %v1245, 0.0
        %v1256 = vcombine.high %v1252, 0.0
        %v1257 = vcombine.low %v873, %v1180
        %v1258 = vcombine.high %v873, %v1180
        %v1260 = vunpack.c.l.s4 1983009808
        %v1261 = vunpack.c.0.s8 %v1260
        %v1262 = vlaneseq
        %v1263 = vshrl.u32 %v1262, 7
        %v1264 = vsub.s32 %v1261, %v1263
        %v1265 = vrot.slane %v1257, %v1264
        %v1267 = vunpack.c.l.s4 1983009808
        %v1268 = vunpack.c.0.s8 %v1267
        %v1269 = vlaneseq
        %v1270 = vshrl.u32 %v1269, 7
        %v1271 = vsub.s32 %v1268, %v1270
        %v1272 = vrot.slane %v1258, %v1271
        %v1273 = vcombine.low %v1174, %v1186
        %v1274 = vcombine.high %v1174, %v1186
        %v1276 = vunpack.c.l.s4 1983009808
        %v1277 = vunpack.c.0.s8 %v1276
        %v1278 = vlaneseq
        %v1279 = vshrl.u32 %v1278, 7
        %v1280 = vsub.s32 %v1277, %v1279
        %v1281 = vrot.slane %v1273, %v1280
        %v1283 = vunpack.c.l.s4 1983009808
        %v1284 = vunpack.c.0.s8 %v1283
        %v1285 = vlaneseq
        %v1286 = vshrl.u32 %v1285, 7
        %v1287 = vsub.s32 %v1284, %v1286
        %v1288 = vrot.slane %v1274, %v1287
        %v1289 = vcombine.low %v1265, %v1281
        %v1290 = vcombine.high %v1265, %v1281
        %v1292 = vunpack.c.l.s4 1934713408
        %v1293 = vunpack.c.0.s8 %v1292
        %v1294 = vlaneseq
        %v1295 = vshrl.u32 %v1294, 7
        %v1296 = vsub.s32 %v1293, %v1295
        %v1297 = vrot.slane %v1289, %v1296
        %v1299 = vunpack.c.l.s4 1934713408
        %v1300 = vunpack.c.0.s8 %v1299
        %v1301 = vlaneseq
        %v1302 = vshrl.u32 %v1301, 7
        %v1303 = vsub.s32 %v1300, %v1302
        %v1304 = vrot.slane %v1290, %v1303
        %v1305 = vcombine.low %v1272, %v1288
        %v1306 = vcombine.high %v1272, %v1288
        %v1308 = vunpack.c.l.s4 1934713408
        %v1309 = vunpack.c.0.s8 %v1308
        %v1310 = vlaneseq
        %v1311 = vshrl.u32 %v1310, 7
        %v1312 = vsub.s32 %v1309, %v1311
        %v1313 = vrot.slane %v1305, %v1312
        %v1315 = vunpack.c.l.s4 1934713408
        %v1316 = vunpack.c.0.s8 %v1315
        %v1317 = vlaneseq
        %v1318 = vshrl.u32 %v1317, 7
        %v1319 = vsub.s32 %v1316, %v1318
        %v1320 = vrot.slane %v1306, %v1319
        %v1321 = vcombine.high %v1297, 0.0
        %v1322 = vcombine.high %v1304, 0.0
        %v1323 = vcombine.high %v1313, 0.0
        %v1324 = vcombine.high %v1320, 0.0
        %v1325 = vcombine.low %v1229, %v1236
        %v1327 = vunpack.c.l.s4 1983009808
        %v1328 = vunpack.c.0.s8 %v1327
        %v1329 = vlaneseq
        %v1330 = vshrl.u32 %v1329, 7
        %v1331 = vsub.s32 %v1328, %v1330
        %v1332 = vrot.slane %v1325, %v1331
        %v1333 = vcombine.low %v1253, %v1254
        %v1335 = vunpack.c.l.s4 1983009808
        %v1336 = vunpack.c.0.s8 %v1335
        %v1337 = vlaneseq
        %v1338 = vshrl.u32 %v1337, 7
        %v1339 = vsub.s32 %v1336, %v1338
        %v1340 = vrot.slane %v1333, %v1339
        %v1341 = vcombine.low %v1245, %v1252
        %v1343 = vunpack.c.l.s4 1983009808
        %v1344 = vunpack.c.0.s8 %v1343
        %v1345 = vlaneseq
        %v1346 = vshrl.u32 %v1345, 7
        %v1347 = vsub.s32 %v1344, %v1346
        %v1348 = vrot.slane %v1341, %v1347
        %v1349 = vcombine.low %v1255, %v1256
        %v1351 = vunpack.c.l.s4 1983009808
        %v1352 = vunpack.c.0.s8 %v1351
        %v1353 = vlaneseq
        %v1354 = vshrl.u32 %v1353, 7
        %v1355 = vsub.s32 %v1352, %v1354
        %v1356 = vrot.slane %v1349, %v1355
        %v1357 = vcombine.low %v1332, %v1340
        %v1358 = vcombine.high %v1332, %v1340
        %v1360 = vunpack.c.l.s4 1934713408
        %v1361 = vunpack.c.0.s8 %v1360
        %v1362 = vlaneseq
        %v1363 = vshrl.u32 %v1362, 7
        %v1364 = vsub.s32 %v1361, %v1363
        %v1365 = vrot.slane %v1357, %v1364
        %v1367 = vunpack.c.l.s4 1934713408
        %v1368 = vunpack.c.0.s8 %v1367
        %v1369 = vlaneseq
        %v1370 = vshrl.u32 %v1369, 7
        %v1371 = vsub.s32 %v1368, %v1370
        %v1372 = vrot.slane %v1358, %v1371
        %v1373 = vcombine.low %v1348, %v1356
        %v1374 = vcombine.high %v1348, %v1356
        %v1376 = vunpack.c.l.s4 1934713408
        %v1377 = vunpack.c.0.s8 %v1376
        %v1378 = vlaneseq
        %v1379 = vshrl.u32 %v1378, 7
        %v1380 = vsub.s32 %v1377, %v1379
        %v1381 = vrot.slane %v1373, %v1380
        %v1383 = vunpack.c.l.s4 1934713408
        %v1384 = vunpack.c.0.s8 %v1383
        %v1385 = vlaneseq
        %v1386 = vshrl.u32 %v1385, 7
        %v1387 = vsub.s32 %v1384, %v1386
        %v1388 = vrot.slane %v1374, %v1387
        %v1389 = vcombine.low %v1365, %v1381
        %v1390 = vcombine.high %v1365, %v1381
        %v1391 = vcombine.low %v1372, %v1388
        %v1392 = vcombine.high %v1372, %v1388
        %v1393 = vcombine.low %v1297, %v1304
        %v1395 = vunpack.c.l.s4 1983009808
        %v1396 = vunpack.c.0.s8 %v1395
        %v1397 = vlaneseq
        %v1398 = vshrl.u32 %v1397, 7
        %v1399 = vsub.s32 %v1396, %v1398
        %v1400 = vrot.slane %v1393, %v1399
        %v1401 = vcombine.low %v1321, %v1322
        %v1403 = vunpack.c.l.s4 1983009808
        %v1404 = vunpack.c.0.s8 %v1403
        %v1405 = vlaneseq
        %v1406 = vshrl.u32 %v1405, 7
        %v1407 = vsub.s32 %v1404, %v1406
        %v1408 = vrot.slane %v1401, %v1407
        %v1409 = vcombine.low %v1313, %v1320
        %v1411 = vunpack.c.l.s4 1983009808
        %v1412 = vunpack.c.0.s8 %v1411
        %v1413 = vlaneseq
        %v1414 = vshrl.u32 %v1413, 7
        %v1415 = vsub.s32 %v1412, %v1414
        %v1416 = vrot.slane %v1409, %v1415
        %v1417 = vcombine.low %v1323, %v1324
        %v1419 = vunpack.c.l.s4 1983009808
        %v1420 = vunpack.c.0.s8 %v1419
        %v1421 = vlaneseq
        %v1422 = vshrl.u32 %v1421, 7
        %v1423 = vsub.s32 %v1420, %v1422
        %v1424 = vrot.slane %v1417, %v1423
        %v1425 = vcombine.low %v1400, %v1408
        %v1426 = vcombine.high %v1400, %v1408
        %v1428 = vunpack.c.l.s4 1934713408
        %v1429 = vunpack.c.0.s8 %v1428
        %v1430 = vlaneseq
        %v1431 = vshrl.u32 %v1430, 7
        %v1432 = vsub.s32 %v1429, %v1431
        %v1433 = vrot.slane %v1425, %v1432
        %v1435 = vunpack.c.l.s4 1934713408
        %v1436 = vunpack.c.0.s8 %v1435
        %v1437 = vlaneseq
        %v1438 = vshrl.u32 %v1437, 7
        %v1439 = vsub.s32 %v1436, %v1438
        %v1440 = vrot.slane %v1426, %v1439
        %v1441 = vcombine.low %v1416, %v1424
        %v1442 = vcombine.high %v1416, %v1424
        %v1444 = vunpack.c.l.s4 1934713408
        %v1445 = vunpack.c.0.s8 %v1444
        %v1446 = vlaneseq
        %v1447 = vshrl.u32 %v1446, 7
        %v1448 = vsub.s32 %v1445, %v1447
        %v1449 = vrot.slane %v1441, %v1448
        %v1451 = vunpack.c.l.s4 1934713408
        %v1452 = vunpack.c.0.s8 %v1451
        %v1453 = vlaneseq
        %v1454 = vshrl.u32 %v1453, 7
        %v1455 = vsub.s32 %v1452, %v1454
        %v1456 = vrot.slane %v1442, %v1455
        %v1457 = vcombine.low %v1433, %v1449
        %v1458 = vcombine.high %v1433, %v1449
        %v1459 = vcombine.low %v1440, %v1456
        %v1460 = vcombine.high %v1440, %v1456
        %1463 = vrot.lane.b32.xlu0 %v869, 96
        %v1464 = vpop.permute.xlu0 %1463
        %1465 = vrot.lane.b32.xlu0 %v875, 96
        %v1466 = vpop.permute.xlu0 %1465
        %1469 = vrot.lane.b32.xlu0 %v869, 64
        %v1470 = vpop.permute.xlu0 %1469
        %1471 = vrot.lane.b32.xlu0 %v875, 64
        %v1472 = vpop.permute.xlu0 %1471
        %1475 = vrot.lane.b32.xlu0 %v869, 32
        %v1476 = vpop.permute.xlu0 %1475
        %1477 = vrot.lane.b32.xlu0 %v875, 32
        %v1478 = vpop.permute.xlu0 %1477
        %v1481 = vcombine.low %v869, %v1470
        %v1482 = vcombine.high %v869, %v1470
        %v1484 = vunpack.c.l.s4 1983009808
        %v1485 = vunpack.c.0.s8 %v1484
        %v1486 = vlaneseq
        %v1487 = vshrl.u32 %v1486, 7
        %v1488 = vsub.s32 %v1485, %v1487
        %v1489 = vrot.slane %v1481, %v1488
        %v1491 = vunpack.c.l.s4 1983009808
        %v1492 = vunpack.c.0.s8 %v1491
        %v1493 = vlaneseq
        %v1494 = vshrl.u32 %v1493, 7
        %v1495 = vsub.s32 %v1492, %v1494
        %v1496 = vrot.slane %v1482, %v1495
        %v1497 = vcombine.low %v1464, %v1476
        %v1498 = vcombine.high %v1464, %v1476
        %v1500 = vunpack.c.l.s4 1983009808
        %v1501 = vunpack.c.0.s8 %v1500
        %v1502 = vlaneseq
        %v1503 = vshrl.u32 %v1502, 7
        %v1504 = vsub.s32 %v1501, %v1503
        %v1505 = vrot.slane %v1497, %v1504
        %v1507 = vunpack.c.l.s4 1983009808
        %v1508 = vunpack.c.0.s8 %v1507
        %v1509 = vlaneseq
        %v1510 = vshrl.u32 %v1509, 7
        %v1511 = vsub.s32 %v1508, %v1510
        %v1512 = vrot.slane %v1498, %v1511
        %v1513 = vcombine.low %v1489, %v1505
        %v1514 = vcombine.high %v1489, %v1505
        %v1516 = vunpack.c.l.s4 1934713408
        %v1517 = vunpack.c.0.s8 %v1516
        %v1518 = vlaneseq
        %v1519 = vshrl.u32 %v1518, 7
        %v1520 = vsub.s32 %v1517, %v1519
        %v1521 = vrot.slane %v1513, %v1520
        %v1523 = vunpack.c.l.s4 1934713408
        %v1524 = vunpack.c.0.s8 %v1523
        %v1525 = vlaneseq
        %v1526 = vshrl.u32 %v1525, 7
        %v1527 = vsub.s32 %v1524, %v1526
        %v1528 = vrot.slane %v1514, %v1527
        %v1529 = vcombine.low %v1496, %v1512
        %v1530 = vcombine.high %v1496, %v1512
        %v1532 = vunpack.c.l.s4 1934713408
        %v1533 = vunpack.c.0.s8 %v1532
        %v1534 = vlaneseq
        %v1535 = vshrl.u32 %v1534, 7
        %v1536 = vsub.s32 %v1533, %v1535
        %v1537 = vrot.slane %v1529, %v1536
        %v1539 = vunpack.c.l.s4 1934713408
        %v1540 = vunpack.c.0.s8 %v1539
        %v1541 = vlaneseq
        %v1542 = vshrl.u32 %v1541, 7
        %v1543 = vsub.s32 %v1540, %v1542
        %v1544 = vrot.slane %v1530, %v1543
        %v1545 = vcombine.high %v1521, 0.0
        %v1546 = vcombine.high %v1528, 0.0
        %v1547 = vcombine.high %v1537, 0.0
        %v1548 = vcombine.high %v1544, 0.0
        %v1549 = vcombine.low %v875, %v1472
        %v1550 = vcombine.high %v875, %v1472
        %v1552 = vunpack.c.l.s4 1983009808
        %v1553 = vunpack.c.0.s8 %v1552
        %v1554 = vlaneseq
        %v1555 = vshrl.u32 %v1554, 7
        %v1556 = vsub.s32 %v1553, %v1555
        %v1557 = vrot.slane %v1549, %v1556
        %v1559 = vunpack.c.l.s4 1983009808
        %v1560 = vunpack.c.0.s8 %v1559
        %v1561 = vlaneseq
        %v1562 = vshrl.u32 %v1561, 7
        %v1563 = vsub.s32 %v1560, %v1562
        %v1564 = vrot.slane %v1550, %v1563
        %v1565 = vcombine.low %v1466, %v1478
        %v1566 = vcombine.high %v1466, %v1478
        %v1568 = vunpack.c.l.s4 1983009808
        %v1569 = vunpack.c.0.s8 %v1568
        %v1570 = vlaneseq
        %v1571 = vshrl.u32 %v1570, 7
        %v1572 = vsub.s32 %v1569, %v1571
        %v1573 = vrot.slane %v1565, %v1572
        %v1575 = vunpack.c.l.s4 1983009808
        %v1576 = vunpack.c.0.s8 %v1575
        %v1577 = vlaneseq
        %v1578 = vshrl.u32 %v1577, 7
        %v1579 = vsub.s32 %v1576, %v1578
        %v1580 = vrot.slane %v1566, %v1579
        %v1581 = vcombine.low %v1557, %v1573
        %v1582 = vcombine.high %v1557, %v1573
        %v1584 = vunpack.c.l.s4 1934713408
        %v1585 = vunpack.c.0.s8 %v1584
        %v1586 = vlaneseq
        %v1587 = vshrl.u32 %v1586, 7
        %v1588 = vsub.s32 %v1585, %v1587
        %v1589 = vrot.slane %v1581, %v1588
        %v1591 = vunpack.c.l.s4 1934713408
        %v1592 = vunpack.c.0.s8 %v1591
        %v1593 = vlaneseq
        %v1594 = vshrl.u32 %v1593, 7
        %v1595 = vsub.s32 %v1592, %v1594
        %v1596 = vrot.slane %v1582, %v1595
        %v1597 = vcombine.low %v1564, %v1580
        %v1598 = vcombine.high %v1564, %v1580
        %v1600 = vunpack.c.l.s4 1934713408
        %v1601 = vunpack.c.0.s8 %v1600
        %v1602 = vlaneseq
        %v1603 = vshrl.u32 %v1602, 7
        %v1604 = vsub.s32 %v1601, %v1603
        %v1605 = vrot.slane %v1597, %v1604
        %v1607 = vunpack.c.l.s4 1934713408
        %v1608 = vunpack.c.0.s8 %v1607
        %v1609 = vlaneseq
        %v1610 = vshrl.u32 %v1609, 7
        %v1611 = vsub.s32 %v1608, %v1610
        %v1612 = vrot.slane %v1598, %v1611
        %v1613 = vcombine.high %v1589, 0.0
        %v1614 = vcombine.high %v1596, 0.0
        %v1615 = vcombine.high %v1605, 0.0
        %v1616 = vcombine.high %v1612, 0.0
        %v1617 = vcombine.low %v1521, %v1528
        %v1619 = vunpack.c.l.s4 1983009808
        %v1620 = vunpack.c.0.s8 %v1619
        %v1621 = vlaneseq
        %v1622 = vshrl.u32 %v1621, 7
        %v1623 = vsub.s32 %v1620, %v1622
        %v1624 = vrot.slane %v1617, %v1623
        %v1625 = vcombine.low %v1545, %v1546
        %v1627 = vunpack.c.l.s4 1983009808
        %v1628 = vunpack.c.0.s8 %v1627
        %v1629 = vlaneseq
        %v1630 = vshrl.u32 %v1629, 7
        %v1631 = vsub.s32 %v1628, %v1630
        %v1632 = vrot.slane %v1625, %v1631
        %v1633 = vcombine.low %v1537, %v1544
        %v1635 = vunpack.c.l.s4 1983009808
        %v1636 = vunpack.c.0.s8 %v1635
        %v1637 = vlaneseq
        %v1638 = vshrl.u32 %v1637, 7
        %v1639 = vsub.s32 %v1636, %v1638
        %v1640 = vrot.slane %v1633, %v1639
        %v1641 = vcombine.low %v1547, %v1548
        %v1643 = vunpack.c.l.s4 1983009808
        %v1644 = vunpack.c.0.s8 %v1643
        %v1645 = vlaneseq
        %v1646 = vshrl.u32 %v1645, 7
        %v1647 = vsub.s32 %v1644, %v1646
        %v1648 = vrot.slane %v1641, %v1647
        %v1649 = vcombine.low %v1624, %v1632
        %v1650 = vcombine.high %v1624, %v1632
        %v1652 = vunpack.c.l.s4 1934713408
        %v1653 = vunpack.c.0.s8 %v1652
        %v1654 = vlaneseq
        %v1655 = vshrl.u32 %v1654, 7
        %v1656 = vsub.s32 %v1653, %v1655
        %v1657 = vrot.slane %v1649, %v1656
        %v1659 = vunpack.c.l.s4 1934713408
        %v1660 = vunpack.c.0.s8 %v1659
        %v1661 = vlaneseq
        %v1662 = vshrl.u32 %v1661, 7
        %v1663 = vsub.s32 %v1660, %v1662
        %v1664 = vrot.slane %v1650, %v1663
        %v1665 = vcombine.low %v1640, %v1648
        %v1666 = vcombine.high %v1640, %v1648
        %v1668 = vunpack.c.l.s4 1934713408
        %v1669 = vunpack.c.0.s8 %v1668
        %v1670 = vlaneseq
        %v1671 = vshrl.u32 %v1670, 7
        %v1672 = vsub.s32 %v1669, %v1671
        %v1673 = vrot.slane %v1665, %v1672
        %v1675 = vunpack.c.l.s4 1934713408
        %v1676 = vunpack.c.0.s8 %v1675
        %v1677 = vlaneseq
        %v1678 = vshrl.u32 %v1677, 7
        %v1679 = vsub.s32 %v1676, %v1678
        %v1680 = vrot.slane %v1666, %v1679
        %v1681 = vcombine.low %v1657, %v1673
        %v1682 = vcombine.high %v1657, %v1673
        %v1683 = vcombine.low %v1664, %v1680
        %v1684 = vcombine.high %v1664, %v1680
        %v1685 = vcombine.low %v1589, %v1596
        %v1687 = vunpack.c.l.s4 1983009808
        %v1688 = vunpack.c.0.s8 %v1687
        %v1689 = vlaneseq
        %v1690 = vshrl.u32 %v1689, 7
        %v1691 = vsub.s32 %v1688, %v1690
        %v1692 = vrot.slane %v1685, %v1691
        %v1693 = vcombine.low %v1613, %v1614
        %v1695 = vunpack.c.l.s4 1983009808
        %v1696 = vunpack.c.0.s8 %v1695
        %v1697 = vlaneseq
        %v1698 = vshrl.u32 %v1697, 7
        %v1699 = vsub.s32 %v1696, %v1698
        %v1700 = vrot.slane %v1693, %v1699
        %v1701 = vcombine.low %v1605, %v1612
        %v1703 = vunpack.c.l.s4 1983009808
        %v1704 = vunpack.c.0.s8 %v1703
        %v1705 = vlaneseq
        %v1706 = vshrl.u32 %v1705, 7
        %v1707 = vsub.s32 %v1704, %v1706
        %v1708 = vrot.slane %v1701, %v1707
        %v1709 = vcombine.low %v1615, %v1616
        %v1711 = vunpack.c.l.s4 1983009808
        %v1712 = vunpack.c.0.s8 %v1711
        %v1713 = vlaneseq
        %v1714 = vshrl.u32 %v1713, 7
        %v1715 = vsub.s32 %v1712, %v1714
        %v1716 = vrot.slane %v1709, %v1715
        %v1717 = vcombine.low %v1692, %v1700
        %v1718 = vcombine.high %v1692, %v1700
        %v1720 = vunpack.c.l.s4 1934713408
        %v1721 = vunpack.c.0.s8 %v1720
        %v1722 = vlaneseq
        %v1723 = vshrl.u32 %v1722, 7
        %v1724 = vsub.s32 %v1721, %v1723
        %v1725 = vrot.slane %v1717, %v1724
        %v1727 = vunpack.c.l.s4 1934713408
        %v1728 = vunpack.c.0.s8 %v1727
        %v1729 = vlaneseq
        %v1730 = vshrl.u32 %v1729, 7
        %v1731 = vsub.s32 %v1728, %v1730
        %v1732 = vrot.slane %v1718, %v1731
        %v1733 = vcombine.low %v1708, %v1716
        %v1734 = vcombine.high %v1708, %v1716
        %v1736 = vunpack.c.l.s4 1934713408
        %v1737 = vunpack.c.0.s8 %v1736
        %v1738 = vlaneseq
        %v1739 = vshrl.u32 %v1738, 7
        %v1740 = vsub.s32 %v1737, %v1739
        %v1741 = vrot.slane %v1733, %v1740
        %v1743 = vunpack.c.l.s4 1934713408
        %v1744 = vunpack.c.0.s8 %v1743
        %v1745 = vlaneseq
        %v1746 = vshrl.u32 %v1745, 7
        %v1747 = vsub.s32 %v1744, %v1746
        %v1748 = vrot.slane %v1734, %v1747
        %v1749 = vcombine.low %v1725, %v1741
        %v1750 = vcombine.high %v1725, %v1741
        %v1751 = vcombine.low %v1732, %v1748
        %v1752 = vcombine.high %v1732, %v1748
        %vm1753 = vcmask 261120
        %v1755 = vsel %vm1753, %v1097, 0
        %v1758 = vsel %vm1753, %v1165, 0
        %v1761 = vsel %vm1753, %v1389, 0
        %v1764 = vsel %vm1753, %v1457, 0
        %1766 = vmatprep.subr.mxu0 0.0
        %1767 = vmatpush1.xpose.msra.mxu0 %v1761
        %1768 = vmatprep.subr.mxu0 0.0
        %1769 = vmatpush1.xpose.msra.mxu0 %v1764
        %1770 = vmatprep.subr.mxu0 0.0
        %1771 = vmatpush1.xpose.msra.mxu0 0.0
        %1772 = vmatprep.subr.mxu0 0.0
        %1773 = vmatpush1.xpose.msra.mxu0 0.0
        %1774 = vmatprep.subr.mxu0 0.0
        %1775 = vmatpush1.xpose.msra.mxu0 0.0
        %1776 = vmatprep.subr.mxu0 0.0
        %1777 = vmatpush1.xpose.msra.mxu0 0.0
        %1778 = vmatprep.subr.mxu0 0.0
        %1779 = vmatpush1.xpose.msra.mxu0 0.0
        %1780 = vmatprep.subr.mxu0 0.0
        %1781 = vmatpush1.xpose.msra.mxu0 0.0
        %1782 = vmatprep.subr.mxu0 0.0
        %1783 = vmatpush1.xpose.msra.mxu0 0.0
        %1784 = vmatprep.subr.mxu0 0.0
        %1785 = vmatpush1.xpose.msra.mxu0 0.0
        %1786 = vmatprep.subr.mxu0 0.0
        %1787 = vmatpush1.xpose.msra.mxu0 0.0
        %1788 = vmatprep.subr.mxu0 0.0
        %1789 = vmatpush1.xpose.msra.mxu0 0.0
        %1790 = vmatprep.subr.mxu0 0.0
        %1791 = vmatpush1.xpose.msra.mxu0 0.0
        %1792 = vmatprep.subr.mxu0 0.0
        %1793 = vmatpush1.xpose.msra.mxu0 0.0
        %1794 = vmatprep.subr.mxu0 0.0
        %1795 = vmatpush1.xpose.msra.mxu0 0.0
        %1796 = vmatprep.subr.mxu0 0.0
        %1797 = vmatpush1.xpose.msra.mxu0 0.0
        %1798 = vmatprep.subr.mxu0 0.0
        %1799 = vmatpush1.xpose.msra.mxu0 0.0
        %1800 = vmatprep.subr.mxu0 0.0
        %1801 = vmatpush1.xpose.msra.mxu0 0.0
        %1802 = vmatprep.subr.mxu0 0.0
        %1803 = vmatpush1.xpose.msra.mxu0 0.0
        %1804 = vmatprep.subr.mxu0 0.0
        %1805 = vmatpush1.xpose.msra.mxu0 0.0
        %1806 = vmatprep.subr.mxu0 0.0
        %1807 = vmatpush1.xpose.msra.mxu0 0.0
        %1808 = vmatprep.subr.mxu0 0.0
        %1809 = vmatpush1.xpose.msra.mxu0 0.0
        %1810 = vmatprep.subr.mxu0 0.0
        %1811 = vmatpush1.xpose.msra.mxu0 0.0
        %1812 = vmatprep.subr.mxu0 0.0
        %1813 = vmatpush1.xpose.msra.mxu0 0.0
        %1814 = vmatprep.subr.mxu0 0.0
        %1815 = vmatpush1.xpose.msra.mxu0 0.0
        %1816 = vmatprep.subr.mxu0 0.0
        %1817 = vmatpush1.xpose.msra.mxu0 0.0
        %1818 = vmatprep.subr.mxu0 0.0
        %1819 = vmatpush1.xpose.msra.mxu0 0.0
        %1820 = vmatprep.subr.mxu0 0.0
        %1821 = vmatpush1.xpose.msra.mxu0 0.0
        %1822 = vmatprep.subr.mxu0 0.0
        %1823 = vmatpush1.xpose.msra.mxu0 0.0
        %1824 = vmatprep.subr.mxu0 0.0
        %1825 = vmatpush1.xpose.msra.mxu0 0.0
        %1826 = vmatprep.subr.mxu0 0.0
        %1827 = vmatpush1.xpose.msra.mxu0 0.0
        %1828 = vmatprep.subr.mxu0 0.0
        %1829 = vmatpush1.xpose.msra.mxu0 0.0
        %1830 = vmatprep.mubr.f32.mxu0 0.0
        %1831 = vmatmul.mubr.f32.gmra.mrb[0].mxu0 %v1755
        %v1832 = vpop.f32.mrb[0].mxu0
        %v1833 = vadd.f32 0.0, %v1832
        %v1834 = vpop.f32.mrb[0].mxu0
        %1835 = vmatprep.mubr.f32.mxu0 0.0
        %1836 = vmatmul.mubr.f32.gmra.mrb[0].mxu0 %v1758
        %v1837 = vpop.f32.mrb[0].mxu0
        %v1838 = vadd.f32 0.0, %v1837
        %v1839 = vpop.f32.mrb[0].mxu0
        %1840 = vdwg.mxu0
        %v1842 = vsel %vm1753, %v1098, 0
        %v1845 = vsel %vm1753, %v1166, 0
        %v1848 = vsel %vm1753, %v1390, 0
        %v1851 = vsel %vm1753, %v1458, 0
        %1853 = vmatprep.subr.mxu0 0.0
        %1854 = vmatpush1.xpose.msra.mxu0 %v1848
        %1855 = vmatprep.subr.mxu0 0.0
        %1856 = vmatpush1.xpose.msra.mxu0 %v1851
        %1857 = vmatprep.subr.mxu0 0.0
        %1858 = vmatpush1.xpose.msra.mxu0 0.0
        %1859 = vmatprep.subr.mxu0 0.0
        %1860 = vmatpush1.xpose.msra.mxu0 0.0
        %1861 = vmatprep.subr.mxu0 0.0
        %1862 = vmatpush1.xpose.msra.mxu0 0.0
        %1863 = vmatprep.subr.mxu0 0.0
        %1864 = vmatpush1.xpose.msra.mxu0 0.0
        %1865 = vmatprep.subr.mxu0 0.0
        %1866 = vmatpush1.xpose.msra.mxu0 0.0
        %1867 = vmatprep.subr.mxu0 0.0
        %1868 = vmatpush1.xpose.msra.mxu0 0.0
        %1869 = vmatprep.subr.mxu0 0.0
        %1870 = vmatpush1.xpose.msra.mxu0 0.0
        %1871 = vmatprep.subr.mxu0 0.0
        %1872 = vmatpush1.xpose.msra.mxu0 0.0
        %1873 = vmatprep.subr.mxu0 0.0
        %1874 = vmatpush1.xpose.msra.mxu0 0.0
        %1875 = vmatprep.subr.mxu0 0.0
        %1876 = vmatpush1.xpose.msra.mxu0 0.0
        %1877 = vmatprep.subr.mxu0 0.0
        %1878 = vmatpush1.xpose.msra.mxu0 0.0
        %1879 = vmatprep.subr.mxu0 0.0
        %1880 = vmatpush1.xpose.msra.mxu0 0.0
        %1881 = vmatprep.subr.mxu0 0.0
        %1882 = vmatpush1.xpose.msra.mxu0 0.0
        %1883 = vmatprep.subr.mxu0 0.0
        %1884 = vmatpush1.xpose.msra.mxu0 0.0
        %1885 = vmatprep.subr.mxu0 0.0
        %1886 = vmatpush1.xpose.msra.mxu0 0.0
        %1887 = vmatprep.subr.mxu0 0.0
        %1888 = vmatpush1.xpose.msra.mxu0 0.0
        %1889 = vmatprep.subr.mxu0 0.0
        %1890 = vmatpush1.xpose.msra.mxu0 0.0
        %1891 = vmatprep.subr.mxu0 0.0
        %1892 = vmatpush1.xpose.msra.mxu0 0.0
        %1893 = vmatprep.subr.mxu0 0.0
        %1894 = vmatpush1.xpose.msra.mxu0 0.0
        %1895 = vmatprep.subr.mxu0 0.0
        %1896 = vmatpush1.xpose.msra.mxu0 0.0
        %1897 = vmatprep.subr.mxu0 0.0
        %1898 = vmatpush1.xpose.msra.mxu0 0.0
        %1899 = vmatprep.subr.mxu0 0.0
        %1900 = vmatpush1.xpose.msra.mxu0 0.0
        %1901 = vmatprep.subr.mxu0 0.0
        %1902 = vmatpush1.xpose.msra.mxu0 0.0
        %1903 = vmatprep.subr.mxu0 0.0
        %1904 = vmatpush1.xpose.msra.mxu0 0.0
        %1905 = vmatprep.subr.mxu0 0.0
        %1906 = vmatpush1.xpose.msra.mxu0 0.0
        %1907 = vmatprep.subr.mxu0 0.0
        %1908 = vmatpush1.xpose.msra.mxu0 0.0
        %1909 = vmatprep.subr.mxu0 0.0
        %1910 = vmatpush1.xpose.msra.mxu0 0.0
        %1911 = vmatprep.subr.mxu0 0.0
        %1912 = vmatpush1.xpose.msra.mxu0 0.0
        %1913 = vmatprep.subr.mxu0 0.0
        %1914 = vmatpush1.xpose.msra.mxu0 0.0
        %1915 = vmatprep.subr.mxu0 0.0
        %1916 = vmatpush1.xpose.msra.mxu0 0.0
        %1917 = vmatprep.mubr.f32.mxu0 0.0
        %1918 = vmatmul.mubr.f32.gmra.mrb[0].mxu0 %v1842
        %v1919 = vpop.f32.mrb[0].mxu0
        %v1920 = vadd.f32 0.0, %v1919
        %v1921 = vpop.f32.mrb[0].mxu0
        %1922 = vmatprep.mubr.f32.mxu0 0.0
        %1923 = vmatmul.mubr.f32.gmra.mrb[0].mxu0 %v1845
        %v1924 = vpop.f32.mrb[0].mxu0
        %v1925 = vadd.f32 0.0, %v1924
        %v1926 = vpop.f32.mrb[0].mxu0
        %1927 = vdwg.mxu0
        %v1929 = vsel %vm1753, %v1099, 0
        %v1932 = vsel %vm1753, %v1167, 0
        %v1935 = vsel %vm1753, %v1391, 0
        %v1938 = vsel %vm1753, %v1459, 0
        %1940 = vmatprep.subr.mxu0 0.0
        %1941 = vmatpush1.xpose.msra.mxu0 %v1935
        %1942 = vmatprep.subr.mxu0 0.0
        %1943 = vmatpush1.xpose.msra.mxu0 %v1938
        %1944 = vmatprep.subr.mxu0 0.0
        %1945 = vmatpush1.xpose.msra.mxu0 0.0
        %1946 = vmatprep.subr.mxu0 0.0
        %1947 = vmatpush1.xpose.msra.mxu0 0.0
        %1948 = vmatprep.subr.mxu0 0.0
        %1949 = vmatpush1.xpose.msra.mxu0 0.0
        %1950 = vmatprep.subr.mxu0 0.0
        %1951 = vmatpush1.xpose.msra.mxu0 0.0
        %1952 = vmatprep.subr.mxu0 0.0
        %1953 = vmatpush1.xpose.msra.mxu0 0.0
        %1954 = vmatprep.subr.mxu0 0.0
        %1955 = vmatpush1.xpose.msra.mxu0 0.0
        %1956 = vmatprep.subr.mxu0 0.0
        %1957 = vmatpush1.xpose.msra.mxu0 0.0
        %1958 = vmatprep.subr.mxu0 0.0
        %1959 = vmatpush1.xpose.msra.mxu0 0.0
        %1960 = vmatprep.subr.mxu0 0.0
        %1961 = vmatpush1.xpose.msra.mxu0 0.0
        %1962 = vmatprep.subr.mxu0 0.0
        %1963 = vmatpush1.xpose.msra.mxu0 0.0
        %1964 = vmatprep.subr.mxu0 0.0
        %1965 = vmatpush1.xpose.msra.mxu0 0.0
        %1966 = vmatprep.subr.mxu0 0.0
        %1967 = vmatpush1.xpose.msra.mxu0 0.0
        %1968 = vmatprep.subr.mxu0 0.0
        %1969 = vmatpush1.xpose.msra.mxu0 0.0
        %1970 = vmatprep.subr.mxu0 0.0
        %1971 = vmatpush1.xpose.msra.mxu0 0.0
        %1972 = vmatprep.subr.mxu0 0.0
        %1973 = vmatpush1.xpose.msra.mxu0 0.0
        %1974 = vmatprep.subr.mxu0 0.0
        %1975 = vmatpush1.xpose.msra.mxu0 0.0
        %1976 = vmatprep.subr.mxu0 0.0
        %1977 = vmatpush1.xpose.msra.mxu0 0.0
        %1978 = vmatprep.subr.mxu0 0.0
        %1979 = vmatpush1.xpose.msra.mxu0 0.0
        %1980 = vmatprep.subr.mxu0 0.0
        %1981 = vmatpush1.xpose.msra.mxu0 0.0
        %1982 = vmatprep.subr.mxu0 0.0
        %1983 = vmatpush1.xpose.msra.mxu0 0.0
        %1984 = vmatprep.subr.mxu0 0.0
        %1985 = vmatpush1.xpose.msra.mxu0 0.0
        %1986 = vmatprep.subr.mxu0 0.0
        %1987 = vmatpush1.xpose.msra.mxu0 0.0
        %1988 = vmatprep.subr.mxu0 0.0
        %1989 = vmatpush1.xpose.msra.mxu0 0.0
        %1990 = vmatprep.subr.mxu0 0.0
        %1991 = vmatpush1.xpose.msra.mxu0 0.0
        %1992 = vmatprep.subr.mxu0 0.0
        %1993 = vmatpush1.xpose.msra.mxu0 0.0
        %1994 = vmatprep.subr.mxu0 0.0
        %1995 = vmatpush1.xpose.msra.mxu0 0.0
        %1996 = vmatprep.subr.mxu0 0.0
        %1997 = vmatpush1.xpose.msra.mxu0 0.0
        %1998 = vmatprep.subr.mxu0 0.0
        %1999 = vmatpush1.xpose.msra.mxu0 0.0
        %2000 = vmatprep.subr.mxu0 0.0
        %2001 = vmatpush1.xpose.msra.mxu0 0.0
        %2002 = vmatprep.subr.mxu0 0.0
        %2003 = vmatpush1.xpose.msra.mxu0 0.0
        %2004 = vmatprep.mubr.f32.mxu0 0.0
        %2005 = vmatmul.mubr.f32.gmra.mrb[0].mxu0 %v1929
        %v2006 = vpop.f32.mrb[0].mxu0
        %v2007 = vadd.f32 0.0, %v2006
        %v2008 = vpop.f32.mrb[0].mxu0
        %2009 = vmatprep.mubr.f32.mxu0 0.0
        %2010 = vmatmul.mubr.f32.gmra.mrb[0].mxu0 %v1932
        %v2011 = vpop.f32.mrb[0].mxu0
        %v2012 = vadd.f32 0.0, %v2011
        %v2013 = vpop.f32.mrb[0].mxu0
        %2014 = vdwg.mxu0
        %v2016 = vsel %vm1753, %v1100, 0
        %v2019 = vsel %vm1753, %v1168, 0
        %v2022 = vsel %vm1753, %v1392, 0
        %v2025 = vsel %vm1753, %v1460, 0
        %2027 = vmatprep.subr.mxu0 0.0
        %2028 = vmatpush1.xpose.msra.mxu0 %v2022
        %2029 = vmatprep.subr.mxu0 0.0
        %2030 = vmatpush1.xpose.msra.mxu0 %v2025
        %2031 = vmatprep.subr.mxu0 0.0
        %2032 = vmatpush1.xpose.msra.mxu0 0.0
        %2033 = vmatprep.subr.mxu0 0.0
        %2034 = vmatpush1.xpose.msra.mxu0 0.0
        %2035 = vmatprep.subr.mxu0 0.0
        %2036 = vmatpush1.xpose.msra.mxu0 0.0
        %2037 = vmatprep.subr.mxu0 0.0
        %2038 = vmatpush1.xpose.msra.mxu0 0.0
        %2039 = vmatprep.subr.mxu0 0.0
        %2040 = vmatpush1.xpose.msra.mxu0 0.0
        %2041 = vmatprep.subr.mxu0 0.0
        %2042 = vmatpush1.xpose.msra.mxu0 0.0
        %2043 = vmatprep.subr.mxu0 0.0
        %2044 = vmatpush1.xpose.msra.mxu0 0.0
        %2045 = vmatprep.subr.mxu0 0.0
        %2046 = vmatpush1.xpose.msra.mxu0 0.0
        %2047 = vmatprep.subr.mxu0 0.0
        %2048 = vmatpush1.xpose.msra.mxu0 0.0
        %2049 = vmatprep.subr.mxu0 0.0
        %2050 = vmatpush1.xpose.msra.mxu0 0.0
        %2051 = vmatprep.subr.mxu0 0.0
        %2052 = vmatpush1.xpose.msra.mxu0 0.0
        %2053 = vmatprep.subr.mxu0 0.0
        %2054 = vmatpush1.xpose.msra.mxu0 0.0
        %2055 = vmatprep.subr.mxu0 0.0
        %2056 = vmatpush1.xpose.msra.mxu0 0.0
        %2057 = vmatprep.subr.mxu0 0.0
        %2058 = vmatpush1.xpose.msra.mxu0 0.0
        %2059 = vmatprep.subr.mxu0 0.0
        %2060 = vmatpush1.xpose.msra.mxu0 0.0
        %2061 = vmatprep.subr.mxu0 0.0
        %2062 = vmatpush1.xpose.msra.mxu0 0.0
        %2063 = vmatprep.subr.mxu0 0.0
        %2064 = vmatpush1.xpose.msra.mxu0 0.0
        %2065 = vmatprep.subr.mxu0 0.0
        %2066 = vmatpush1.xpose.msra.mxu0 0.0
        %2067 = vmatprep.subr.mxu0 0.0
        %2068 = vmatpush1.xpose.msra.mxu0 0.0
        %2069 = vmatprep.subr.mxu0 0.0
        %2070 = vmatpush1.xpose.msra.mxu0 0.0
        %2071 = vmatprep.subr.mxu0 0.0
        %2072 = vmatpush1.xpose.msra.mxu0 0.0
        %2073 = vmatprep.subr.mxu0 0.0
        %2074 = vmatpush1.xpose.msra.mxu0 0.0
        %2075 = vmatprep.subr.mxu0 0.0
        %2076 = vmatpush1.xpose.msra.mxu0 0.0
        %2077 = vmatprep.subr.mxu0 0.0
        %2078 = vmatpush1.xpose.msra.mxu0 0.0
        %2079 = vmatprep.subr.mxu0 0.0
        %2080 = vmatpush1.xpose.msra.mxu0 0.0
        %2081 = vmatprep.subr.mxu0 0.0
        %2082 = vmatpush1.xpose.msra.mxu0 0.0
        %2083 = vmatprep.subr.mxu0 0.0
        %2084 = vmatpush1.xpose.msra.mxu0 0.0
        %2085 = vmatprep.subr.mxu0 0.0
        %2086 = vmatpush1.xpose.msra.mxu0 0.0
        %2087 = vmatprep.subr.mxu0 0.0
        %2088 = vmatpush1.xpose.msra.mxu0 0.0
        %2089 = vmatprep.subr.mxu0 0.0
        %2090 = vmatpush1.xpose.msra.mxu0 0.0
        %2091 = vmatprep.mubr.f32.mxu0 0.0
        %2092 = vmatmul.mubr.f32.gmra.mrb[0].mxu0 %v2016
        %v2093 = vpop.f32.mrb[0].mxu0
        %v2094 = vadd.f32 0.0, %v2093
        %v2095 = vpop.f32.mrb[0].mxu0
        %2096 = vmatprep.mubr.f32.mxu0 0.0
        %2097 = vmatmul.mubr.f32.gmra.mrb[0].mxu0 %v2019
        %v2098 = vpop.f32.mrb[0].mxu0
        %v2099 = vadd.f32 0.0, %v2098
        %v2100 = vpop.f32.mrb[0].mxu0
        %2101 = vdwg.mxu0
        %v2102 = vmul.f32 %v1833, 0.17677669
        %v2103 = vmul.f32 %v1838, 0.17677669
        %v2104 = vmul.f32 %v1920, 0.17677669
        %v2105 = vmul.f32 %v1925, 0.17677669
        %v2106 = vmul.f32 %v2007, 0.17677669
        %v2107 = vmul.f32 %v2012, 0.17677669
        %v2108 = vmul.f32 %v2094, 0.17677669
        %v2109 = vmul.f32 %v2099, 0.17677669
        %v2110 = vlaneseq
        %v2111 = vshrl.u32 %v2110, 7
        %v2112 = vadd.s32 %v2111, 8
        %v2113 = vlaneseq
        %v2114 = vand.u32 %v2113, 127
        %vm2115 = vcmp.ge.s32.totalorder %v2111, %v2114
        %vm2116 = vcmp.ge.s32.totalorder %v2112, %v2114
        %v2117 = vsel %vm2115, 1, 0
        %v2118 = vsel %vm2116, 1, 0
        %vm2119 = vcmp.eq.s32.totalorder %v2117, 1
        %vm2120 = vcmp.eq.s32.totalorder %v2118, 1
        %v2121 = vsel %vm2119, %v2102, -1e+30
        %v2122 = vsel %vm2120, %v2103, -1e+30
        %v2123 = vsel %vm2119, %v2104, -1e+30
        %v2124 = vsel %vm2120, %v2105, -1e+30
        %v2125 = vsel %vm2119, %v2106, -1e+30
        %v2126 = vsel %vm2120, %v2107, -1e+30
        %v2127 = vsel %vm2119, %v2108, -1e+30
        %v2128 = vsel %vm2120, %v2109, -1e+30
        %vm2129 = vcmask 130048
        %v2130 = vsel %vm2129, %v2121, -inf
        %2131 = vmax.xlane.f32.xlu0 %v2130
        %v2132 = vpop.xlane.xlu0 %2131
        %v2133 = vsel %vm2129, %v2122, -inf
        %2134 = vmax.xlane.f32.xlu0 %v2133
        %v2135 = vpop.xlane.xlu0 %2134
        %v2136 = vsel %vm2129, %v2123, -inf
        %2137 = vmax.xlane.f32.xlu0 %v2136
        %v2138 = vpop.xlane.xlu0 %2137
        %v2139 = vsel %vm2129, %v2124, -inf
        %2140 = vmax.xlane.f32.xlu0 %v2139
        %v2141 = vpop.xlane.xlu0 %2140
        %v2142 = vsel %vm2129, %v2125, -inf
        %2143 = vmax.xlane.f32.xlu0 %v2142
        %v2144 = vpop.xlane.xlu0 %2143
        %v2145 = vsel %vm2129, %v2126, -inf
        %2146 = vmax.xlane.f32.xlu0 %v2145
        %v2147 = vpop.xlane.xlu0 %2146
        %v2148 = vsel %vm2129, %v2127, -inf
        %2149 = vmax.xlane.f32.xlu0 %v2148
        %v2150 = vpop.xlane.xlu0 %2149
        %v2151 = vsel %vm2129, %v2128, -inf
        %2152 = vmax.xlane.f32.xlu0 %v2151
        %v2153 = vpop.xlane.xlu0 %2152
        %v2154 = vsub.f32 %v2121, %v2132
        %v2155 = vsub.f32 %v2122, %v2135
        %v2156 = vsub.f32 %v2123, %v2138
        %v2157 = vsub.f32 %v2124, %v2141
        %v2158 = vsub.f32 %v2125, %v2144
        %v2159 = vsub.f32 %v2126, %v2147
        %v2160 = vsub.f32 %v2127, %v2150
        %v2161 = vsub.f32 %v2128, %v2153
        %v2162 = vmul.f32 %v2154, 1.442695
        %v2163 = vpow.pop %v2162
        %v2164 = vmul.f32 %v2155, 1.442695
        %v2165 = vpow.pop %v2164
        %v2166 = vmul.f32 %v2156, 1.442695
        %v2167 = vpow.pop %v2166
        %v2168 = vmul.f32 %v2157, 1.442695
        %v2169 = vpow.pop %v2168
        %v2170 = vmul.f32 %v2158, 1.442695
        %v2171 = vpow.pop %v2170
        %v2172 = vmul.f32 %v2159, 1.442695
        %v2173 = vpow.pop %v2172
        %v2174 = vmul.f32 %v2160, 1.442695
        %v2175 = vpow.pop %v2174
        %v2176 = vmul.f32 %v2161, 1.442695
        %v2177 = vpow.pop %v2176
        %v2178 = vsel %vm2129, %v2163, 0.0
        %2179 = vadd.xlane.f32.xlu0 %v2178
        %v2180 = vpop.xlane.xlu0 %2179
        %v2181 = vsel %vm2129, %v2165, 0.0
        %2182 = vadd.xlane.f32.xlu0 %v2181
        %v2183 = vpop.xlane.xlu0 %2182
        %v2184 = vsel %vm2129, %v2167, 0.0
        %2185 = vadd.xlane.f32.xlu0 %v2184
        %v2186 = vpop.xlane.xlu0 %2185
        %v2187 = vsel %vm2129, %v2169, 0.0
        %2188 = vadd.xlane.f32.xlu0 %v2187
        %v2189 = vpop.xlane.xlu0 %2188
        %v2190 = vsel %vm2129, %v2171, 0.0
        %2191 = vadd.xlane.f32.xlu0 %v2190
        %v2192 = vpop.xlane.xlu0 %2191
        %v2193 = vsel %vm2129, %v2173, 0.0
        %2194 = vadd.xlane.f32.xlu0 %v2193
        %v2195 = vpop.xlane.xlu0 %2194
        %v2196 = vsel %vm2129, %v2175, 0.0
        %2197 = vadd.xlane.f32.xlu0 %v2196
        %v2198 = vpop.xlane.xlu0 %2197
        %v2199 = vsel %vm2129, %v2177, 0.0
        %2200 = vadd.xlane.f32.xlu0 %v2199
        %v2201 = vpop.xlane.xlu0 %2200
        %v2202 = vrcp.pop %v2180
        %v2203 = vrcp.pop %v2183
        %v2204 = vrcp.pop %v2186
        %v2205 = vrcp.pop %v2189
        %v2206 = vrcp.pop %v2192
        %v2207 = vrcp.pop %v2195
        %v2208 = vrcp.pop %v2198
        %v2209 = vrcp.pop %v2201
        %v2210 = vmul.f32 %v2163, %v2202
        %v2211 = vmul.f32 %v2165, %v2203
        %v2212 = vmul.f32 %v2167, %v2204
        %v2213 = vmul.f32 %v2169, %v2205
        %v2214 = vmul.f32 %v2171, %v2206
        %v2215 = vmul.f32 %v2173, %v2207
        %v2216 = vmul.f32 %v2175, %v2208
        %v2217 = vmul.f32 %v2177, %v2209
        %v2219 = vsel %vm2129, %v2210, 0
        %v2222 = vsel %vm2129, %v2211, 0
        %2224 = vmatprep.subr.mxu0 0.0
        %2225 = vmatpush1.msra.mxu0 %v1681
        %2226 = vmatprep.subr.mxu0 0.0
        %2227 = vmatpush1.msra.mxu0 %v1749
        %2228 = vmatprep.subr.mxu0 0.0
        %2229 = vmatpush1.msra.mxu0 0.0
        %2230 = vmatprep.subr.mxu0 0.0
        %2231 = vmatpush1.msra.mxu0 0.0
        %2232 = vmatprep.subr.mxu0 0.0
        %2233 = vmatpush1.msra.mxu0 0.0
        %2234 = vmatprep.subr.mxu0 0.0
        %2235 = vmatpush1.msra.mxu0 0.0
        %2236 = vmatprep.subr.mxu0 0.0
        %2237 = vmatpush1.msra.mxu0 0.0
        %2238 = vmatprep.subr.mxu0 0.0
        %2239 = vmatpush1.msra.mxu0 0.0
        %2240 = vmatprep.subr.mxu0 0.0
        %2241 = vmatpush1.msra.mxu0 0.0
        %2242 = vmatprep.subr.mxu0 0.0
        %2243 = vmatpush1.msra.mxu0 0.0
        %2244 = vmatprep.subr.mxu0 0.0
        %2245 = vmatpush1.msra.mxu0 0.0
        %2246 = vmatprep.subr.mxu0 0.0
        %2247 = vmatpush1.msra.mxu0 0.0
        %2248 = vmatprep.subr.mxu0 0.0
        %2249 = vmatpush1.msra.mxu0 0.0
        %2250 = vmatprep.subr.mxu0 0.0
        %2251 = vmatpush1.msra.mxu0 0.0
        %2252 = vmatprep.subr.mxu0 0.0
        %2253 = vmatpush1.msra.mxu0 0.0
        %2254 = vmatprep.subr.mxu0 0.0
        %2255 = vmatpush1.msra.mxu0 0.0
        %2256 = vmatprep.subr.mxu0 0.0
        %2257 = vmatpush1.msra.mxu0 0.0
        %2258 = vmatprep.subr.mxu0 0.0
        %2259 = vmatpush1.msra.mxu0 0.0
        %2260 = vmatprep.subr.mxu0 0.0
        %2261 = vmatpush1.msra.mxu0 0.0
        %2262 = vmatprep.subr.mxu0 0.0
        %2263 = vmatpush1.msra.mxu0 0.0
        %2264 = vmatprep.subr.mxu0 0.0
        %2265 = vmatpush1.msra.mxu0 0.0
        %2266 = vmatprep.subr.mxu0 0.0
        %2267 = vmatpush1.msra.mxu0 0.0
        %2268 = vmatprep.subr.mxu0 0.0
        %2269 = vmatpush1.msra.mxu0 0.0
        %2270 = vmatprep.subr.mxu0 0.0
        %2271 = vmatpush1.msra.mxu0 0.0
        %2272 = vmatprep.subr.mxu0 0.0
        %2273 = vmatpush1.msra.mxu0 0.0
        %2274 = vmatprep.subr.mxu0 0.0
        %2275 = vmatpush1.msra.mxu0 0.0
        %2276 = vmatprep.subr.mxu0 0.0
        %2277 = vmatpush1.msra.mxu0 0.0
        %2278 = vmatprep.subr.mxu0 0.0
        %2279 = vmatpush1.msra.mxu0 0.0
        %2280 = vmatprep.subr.mxu0 0.0
        %2281 = vmatpush1.msra.mxu0 0.0
        %2282 = vmatprep.subr.mxu0 0.0
        %2283 = vmatpush1.msra.mxu0 0.0
        %2284 = vmatprep.subr.mxu0 0.0
        %2285 = vmatpush1.msra.mxu0 0.0
        %2286 = vmatprep.subr.mxu0 0.0
        %2287 = vmatpush1.msra.mxu0 0.0
        %2288 = vmatprep.mubr.f32.mxu0 0.0
        %2289 = vmatmul.mubr.f32.gmra.mrb[0].mxu0 %v2219
        %v2290 = vpop.f32.mrb[0].mxu0
        %v2291 = vadd.f32 0.0, %v2290
        %v2292 = vpop.f32.mrb[0].mxu0
        %2293 = vmatprep.mubr.f32.mxu0 0.0
        %2294 = vmatmul.mubr.f32.gmra.mrb[0].mxu0 %v2222
        %v2295 = vpop.f32.mrb[0].mxu0
        %v2296 = vadd.f32 0.0, %v2295
        %v2297 = vpop.f32.mrb[0].mxu0
        %2298 = vdwg.mxu0
        %v2300 = vsel %vm2129, %v2212, 0
        %v2303 = vsel %vm2129, %v2213, 0
        %2305 = vmatprep.subr.mxu0 0.0
        %2306 = vmatpush1.msra.mxu0 %v1682
        %2307 = vmatprep.subr.mxu0 0.0
        %2308 = vmatpush1.msra.mxu0 %v1750
        %2309 = vmatprep.subr.mxu0 0.0
        %2310 = vmatpush1.msra.mxu0 0.0
        %2311 = vmatprep.subr.mxu0 0.0
        %2312 = vmatpush1.msra.mxu0 0.0
        %2313 = vmatprep.subr.mxu0 0.0
        %2314 = vmatpush1.msra.mxu0 0.0
        %2315 = vmatprep.subr.mxu0 0.0
        %2316 = vmatpush1.msra.mxu0 0.0
        %2317 = vmatprep.subr.mxu0 0.0
        %2318 = vmatpush1.msra.mxu0 0.0
        %2319 = vmatprep.subr.mxu0 0.0
        %2320 = vmatpush1.msra.mxu0 0.0
        %2321 = vmatprep.subr.mxu0 0.0
        %2322 = vmatpush1.msra.mxu0 0.0
        %2323 = vmatprep.subr.mxu0 0.0
        %2324 = vmatpush1.msra.mxu0 0.0
        %2325 = vmatprep.subr.mxu0 0.0
        %2326 = vmatpush1.msra.mxu0 0.0
        %2327 = vmatprep.subr.mxu0 0.0
        %2328 = vmatpush1.msra.mxu0 0.0
        %2329 = vmatprep.subr.mxu0 0.0
        %2330 = vmatpush1.msra.mxu0 0.0
        %2331 = vmatprep.subr.mxu0 0.0
        %2332 = vmatpush1.msra.mxu0 0.0
        %2333 = vmatprep.subr.mxu0 0.0
        %2334 = vmatpush1.msra.mxu0 0.0
        %2335 = vmatprep.subr.mxu0 0.0
        %2336 = vmatpush1.msra.mxu0 0.0
        %2337 = vmatprep.subr.mxu0 0.0
        %2338 = vmatpush1.msra.mxu0 0.0
        %2339 = vmatprep.subr.mxu0 0.0
        %2340 = vmatpush1.msra.mxu0 0.0
        %2341 = vmatprep.subr.mxu0 0.0
        %2342 = vmatpush1.msra.mxu0 0.0
        %2343 = vmatprep.subr.mxu0 0.0
        %2344 = vmatpush1.msra.mxu0 0.0
        %2345 = vmatprep.subr.mxu0 0.0
        %2346 = vmatpush1.msra.mxu0 0.0
        %2347 = vmatprep.subr.mxu0 0.0
        %2348 = vmatpush1.msra.mxu0 0.0
        %2349 = vmatprep.subr.mxu0 0.0
        %2350 = vmatpush1.msra.mxu0 0.0
        %2351 = vmatprep.subr.mxu0 0.0
        %2352 = vmatpush1.msra.mxu0 0.0
        %2353 = vmatprep.subr.mxu0 0.0
        %2354 = vmatpush1.msra.mxu0 0.0
        %2355 = vmatprep.subr.mxu0 0.0
        %2356 = vmatpush1.msra.mxu0 0.0
        %2357 = vmatprep.subr.mxu0 0.0
        %2358 = vmatpush1.msra.mxu0 0.0
        %2359 = vmatprep.subr.mxu0 0.0
        %2360 = vmatpush1.msra.mxu0 0.0
        %2361 = vmatprep.subr.mxu0 0.0
        %2362 = vmatpush1.msra.mxu0 0.0
        %2363 = vmatprep.subr.mxu0 0.0
        %2364 = vmatpush1.msra.mxu0 0.0
        %2365 = vmatprep.subr.mxu0 0.0
        %2366 = vmatpush1.msra.mxu0 0.0
        %2367 = vmatprep.subr.mxu0 0.0
        %2368 = vmatpush1.msra.mxu0 0.0
        %2369 = vmatprep.mubr.f32.mxu0 0.0
        %2370 = vmatmul.mubr.f32.gmra.mrb[0].mxu0 %v2300
        %v2371 = vpop.f32.mrb[0].mxu0
        %v2372 = vadd.f32 0.0, %v2371
        %v2373 = vpop.f32.mrb[0].mxu0
        %2374 = vmatprep.mubr.f32.mxu0 0.0
        %2375 = vmatmul.mubr.f32.gmra.mrb[0].mxu0 %v2303
        %v2376 = vpop.f32.mrb[0].mxu0
        %v2377 = vadd.f32 0.0, %v2376
        %v2378 = vpop.f32.mrb[0].mxu0
        %2379 = vdwg.mxu0
        %v2381 = vsel %vm2129, %v2214, 0
        %v2384 = vsel %vm2129, %v2215, 0
        %2386 = vmatprep.subr.mxu0 0.0
        %2387 = vmatpush1.msra.mxu0 %v1683
        %2388 = vmatprep.subr.mxu0 0.0
        %2389 = vmatpush1.msra.mxu0 %v1751
        %2390 = vmatprep.subr.mxu0 0.0
        %2391 = vmatpush1.msra.mxu0 0.0
        %2392 = vmatprep.subr.mxu0 0.0
        %2393 = vmatpush1.msra.mxu0 0.0
        %2394 = vmatprep.subr.mxu0 0.0
        %2395 = vmatpush1.msra.mxu0 0.0
        %2396 = vmatprep.subr.mxu0 0.0
        %2397 = vmatpush1.msra.mxu0 0.0
        %2398 = vmatprep.subr.mxu0 0.0
        %2399 = vmatpush1.msra.mxu0 0.0
        %2400 = vmatprep.subr.mxu0 0.0
        %2401 = vmatpush1.msra.mxu0 0.0
        %2402 = vmatprep.subr.mxu0 0.0
        %2403 = vmatpush1.msra.mxu0 0.0
        %2404 = vmatprep.subr.mxu0 0.0
        %2405 = vmatpush1.msra.mxu0 0.0
        %2406 = vmatprep.subr.mxu0 0.0
        %2407 = vmatpush1.msra.mxu0 0.0
        %2408 = vmatprep.subr.mxu0 0.0
        %2409 = vmatpush1.msra.mxu0 0.0
        %2410 = vmatprep.subr.mxu0 0.0
        %2411 = vmatpush1.msra.mxu0 0.0
        %2412 = vmatprep.subr.mxu0 0.0
        %2413 = vmatpush1.msra.mxu0 0.0
        %2414 = vmatprep.subr.mxu0 0.0
        %2415 = vmatpush1.msra.mxu0 0.0
        %2416 = vmatprep.subr.mxu0 0.0
        %2417 = vmatpush1.msra.mxu0 0.0
        %2418 = vmatprep.subr.mxu0 0.0
        %2419 = vmatpush1.msra.mxu0 0.0
        %2420 = vmatprep.subr.mxu0 0.0
        %2421 = vmatpush1.msra.mxu0 0.0
        %2422 = vmatprep.subr.mxu0 0.0
        %2423 = vmatpush1.msra.mxu0 0.0
        %2424 = vmatprep.subr.mxu0 0.0
        %2425 = vmatpush1.msra.mxu0 0.0
        %2426 = vmatprep.subr.mxu0 0.0
        %2427 = vmatpush1.msra.mxu0 0.0
        %2428 = vmatprep.subr.mxu0 0.0
        %2429 = vmatpush1.msra.mxu0 0.0
        %2430 = vmatprep.subr.mxu0 0.0
        %2431 = vmatpush1.msra.mxu0 0.0
        %2432 = vmatprep.subr.mxu0 0.0
        %2433 = vmatpush1.msra.mxu0 0.0
        %2434 = vmatprep.subr.mxu0 0.0
        %2435 = vmatpush1.msra.mxu0 0.0
        %2436 = vmatprep.subr.mxu0 0.0
        %2437 = vmatpush1.msra.mxu0 0.0
        %2438 = vmatprep.subr.mxu0 0.0
        %2439 = vmatpush1.msra.mxu0 0.0
        %2440 = vmatprep.subr.mxu0 0.0
        %2441 = vmatpush1.msra.mxu0 0.0
        %2442 = vmatprep.subr.mxu0 0.0
        %2443 = vmatpush1.msra.mxu0 0.0
        %2444 = vmatprep.subr.mxu0 0.0
        %2445 = vmatpush1.msra.mxu0 0.0
        %2446 = vmatprep.subr.mxu0 0.0
        %2447 = vmatpush1.msra.mxu0 0.0
        %2448 = vmatprep.subr.mxu0 0.0
        %2449 = vmatpush1.msra.mxu0 0.0
        %2450 = vmatprep.mubr.f32.mxu0 0.0
        %2451 = vmatmul.mubr.f32.gmra.mrb[0].mxu0 %v2381
        %v2452 = vpop.f32.mrb[0].mxu0
        %v2453 = vadd.f32 0.0, %v2452
        %v2454 = vpop.f32.mrb[0].mxu0
        %2455 = vmatprep.mubr.f32.mxu0 0.0
        %2456 = vmatmul.mubr.f32.gmra.mrb[0].mxu0 %v2384
        %v2457 = vpop.f32.mrb[0].mxu0
        %v2458 = vadd.f32 0.0, %v2457
        %v2459 = vpop.f32.mrb[0].mxu0
        %2460 = vdwg.mxu0
        %v2462 = vsel %vm2129, %v2216, 0
        %v2465 = vsel %vm2129, %v2217, 0
        %2467 = vmatprep.subr.mxu0 0.0
        %2468 = vmatpush1.msra.mxu0 %v1684
        %2469 = vmatprep.subr.mxu0 0.0
        %2470 = vmatpush1.msra.mxu0 %v1752
        %2471 = vmatprep.subr.mxu0 0.0
        %2472 = vmatpush1.msra.mxu0 0.0
        %2473 = vmatprep.subr.mxu0 0.0
        %2474 = vmatpush1.msra.mxu0 0.0
        %2475 = vmatprep.subr.mxu0 0.0
        %2476 = vmatpush1.msra.mxu0 0.0
        %2477 = vmatprep.subr.mxu0 0.0
        %2478 = vmatpush1.msra.mxu0 0.0
        %2479 = vmatprep.subr.mxu0 0.0
        %2480 = vmatpush1.msra.mxu0 0.0
        %2481 = vmatprep.subr.mxu0 0.0
        %2482 = vmatpush1.msra.mxu0 0.0
        %2483 = vmatprep.subr.mxu0 0.0
        %2484 = vmatpush1.msra.mxu0 0.0
        %2485 = vmatprep.subr.mxu0 0.0
        %2486 = vmatpush1.msra.mxu0 0.0
        %2487 = vmatprep.subr.mxu0 0.0
        %2488 = vmatpush1.msra.mxu0 0.0
        %2489 = vmatprep.subr.mxu0 0.0
        %2490 = vmatpush1.msra.mxu0 0.0
        %2491 = vmatprep.subr.mxu0 0.0
        %2492 = vmatpush1.msra.mxu0 0.0
        %2493 = vmatprep.subr.mxu0 0.0
        %2494 = vmatpush1.msra.mxu0 0.0
        %2495 = vmatprep.subr.mxu0 0.0
        %2496 = vmatpush1.msra.mxu0 0.0
        %2497 = vmatprep.subr.mxu0 0.0
        %2498 = vmatpush1.msra.mxu0 0.0
        %2499 = vmatprep.subr.mxu0 0.0
        %2500 = vmatpush1.msra.mxu0 0.0
        %2501 = vmatprep.subr.mxu0 0.0
        %2502 = vmatpush1.msra.mxu0 0.0
        %2503 = vmatprep.subr.mxu0 0.0
        %2504 = vmatpush1.msra.mxu0 0.0
        %2505 = vmatprep.subr.mxu0 0.0
        %2506 = vmatpush1.msra.mxu0 0.0
        %2507 = vmatprep.subr.mxu0 0.0
        %2508 = vmatpush1.msra.mxu0 0.0
        %2509 = vmatprep.subr.mxu0 0.0
        %2510 = vmatpush1.msra.mxu0 0.0
        %2511 = vmatprep.subr.mxu0 0.0
        %2512 = vmatpush1.msra.mxu0 0.0
        %2513 = vmatprep.subr.mxu0 0.0
        %2514 = vmatpush1.msra.mxu0 0.0
        %2515 = vmatprep.subr.mxu0 0.0
        %2516 = vmatpush1.msra.mxu0 0.0
        %2517 = vmatprep.subr.mxu0 0.0
        %2518 = vmatpush1.msra.mxu0 0.0
        %2519 = vmatprep.subr.mxu0 0.0
        %2520 = vmatpush1.msra.mxu0 0.0
        %2521 = vmatprep.subr.mxu0 0.0
        %2522 = vmatpush1.msra.mxu0 0.0
        %2523 = vmatprep.subr.mxu0 0.0
        %2524 = vmatpush1.msra.mxu0 0.0
        %2525 = vmatprep.subr.mxu0 0.0
        %2526 = vmatpush1.msra.mxu0 0.0
        %2527 = vmatprep.subr.mxu0 0.0
        %2528 = vmatpush1.msra.mxu0 0.0
        %2529 = vmatprep.subr.mxu0 0.0
        %2530 = vmatpush1.msra.mxu0 0.0
        %2531 = vmatprep.mubr.f32.mxu0 0.0
        %2532 = vmatmul.mubr.f32.gmra.mrb[0].mxu0 %v2462
        %v2533 = vpop.f32.mrb[0].mxu0
        %v2534 = vadd.f32 0.0, %v2533
        %v2535 = vpop.f32.mrb[0].mxu0
        %2536 = vmatprep.mubr.f32.mxu0 0.0
        %2537 = vmatmul.mubr.f32.gmra.mrb[0].mxu0 %v2465
        %v2538 = vpop.f32.mrb[0].mxu0
        %v2539 = vadd.f32 0.0, %v2538
        %v2540 = vpop.f32.mrb[0].mxu0
        %2541 = vdwg.mxu0
        %v2542 = vcombine.low %v2291, %v2453
        %v2543 = vcombine.high %v2291, %v2453
        %v2545 = vunpack.c.l.s4 1983009808
        %v2546 = vunpack.c.0.s8 %v2545
        %v2547 = vlaneseq
        %v2548 = vshrl.u32 %v2547, 7
        %v2549 = vsub.s32 %v2546, %v2548
        %v2550 = vrot.slane %v2542, %v2549
        %v2552 = vunpack.c.l.s4 1983009808
        %v2553 = vunpack.c.0.s8 %v2552
        %v2554 = vlaneseq
        %v2555 = vshrl.u32 %v2554, 7
        %v2556 = vsub.s32 %v2553, %v2555
        %v2557 = vrot.slane %v2543, %v2556
        %v2558 = vcombine.low %v2372, %v2534
        %v2559 = vcombine.high %v2372, %v2534
        %v2561 = vunpack.c.l.s4 1983009808
        %v2562 = vunpack.c.0.s8 %v2561
        %v2563 = vlaneseq
        %v2564 = vshrl.u32 %v2563, 7
        %v2565 = vsub.s32 %v2562, %v2564
        %v2566 = vrot.slane %v2558, %v2565
        %v2568 = vunpack.c.l.s4 1983009808
        %v2569 = vunpack.c.0.s8 %v2568
        %v2570 = vlaneseq
        %v2571 = vshrl.u32 %v2570, 7
        %v2572 = vsub.s32 %v2569, %v2571
        %v2573 = vrot.slane %v2559, %v2572
        %v2574 = vcombine.low %v2550, %v2566
        %v2575 = vcombine.high %v2550, %v2566
        %v2577 = vunpack.c.l.s4 1934713408
        %v2578 = vunpack.c.0.s8 %v2577
        %v2579 = vlaneseq
        %v2580 = vshrl.u32 %v2579, 7
        %v2581 = vsub.s32 %v2578, %v2580
        %v2582 = vrot.slane %v2574, %v2581
        %v2584 = vunpack.c.l.s4 1934713408
        %v2585 = vunpack.c.0.s8 %v2584
        %v2586 = vlaneseq
        %v2587 = vshrl.u32 %v2586, 7
        %v2588 = vsub.s32 %v2585, %v2587
        %v2589 = vrot.slane %v2575, %v2588
        %v2590 = vcombine.low %v2557, %v2573
        %v2591 = vcombine.high %v2557, %v2573
        %v2593 = vunpack.c.l.s4 1934713408
        %v2594 = vunpack.c.0.s8 %v2593
        %v2595 = vlaneseq
        %v2596 = vshrl.u32 %v2595, 7
        %v2597 = vsub.s32 %v2594, %v2596
        %v2598 = vrot.slane %v2590, %v2597
        %v2600 = vunpack.c.l.s4 1934713408
        %v2601 = vunpack.c.0.s8 %v2600
        %v2602 = vlaneseq
        %v2603 = vshrl.u32 %v2602, 7
        %v2604 = vsub.s32 %v2601, %v2603
        %v2605 = vrot.slane %v2591, %v2604
        %v2606 = vcombine.high %v2582, 0.0
        %v2607 = vcombine.high %v2589, 0.0
        %v2608 = vcombine.high %v2598, 0.0
        %v2609 = vcombine.high %v2605, 0.0
        %v2610 = vcombine.low %v2296, %v2458
        %v2611 = vcombine.high %v2296, %v2458
        %v2613 = vunpack.c.l.s4 1983009808
        %v2614 = vunpack.c.0.s8 %v2613
        %v2615 = vlaneseq
        %v2616 = vshrl.u32 %v2615, 7
        %v2617 = vsub.s32 %v2614, %v2616
        %v2618 = vrot.slane %v2610, %v2617
        %v2620 = vunpack.c.l.s4 1983009808
        %v2621 = vunpack.c.0.s8 %v2620
        %v2622 = vlaneseq
        %v2623 = vshrl.u32 %v2622, 7
        %v2624 = vsub.s32 %v2621, %v2623
        %v2625 = vrot.slane %v2611, %v2624
        %v2626 = vcombine.low %v2377, %v2539
        %v2627 = vcombine.high %v2377, %v2539
        %v2629 = vunpack.c.l.s4 1983009808
        %v2630 = vunpack.c.0.s8 %v2629
        %v2631 = vlaneseq
        %v2632 = vshrl.u32 %v2631, 7
        %v2633 = vsub.s32 %v2630, %v2632
        %v2634 = vrot.slane %v2626, %v2633
        %v2636 = vunpack.c.l.s4 1983009808
        %v2637 = vunpack.c.0.s8 %v2636
        %v2638 = vlaneseq
        %v2639 = vshrl.u32 %v2638, 7
        %v2640 = vsub.s32 %v2637, %v2639
        %v2641 = vrot.slane %v2627, %v2640
        %v2642 = vcombine.low %v2618, %v2634
        %v2643 = vcombine.high %v2618, %v2634
        %v2645 = vunpack.c.l.s4 1934713408
        %v2646 = vunpack.c.0.s8 %v2645
        %v2647 = vlaneseq
        %v2648 = vshrl.u32 %v2647, 7
        %v2649 = vsub.s32 %v2646, %v2648
        %v2650 = vrot.slane %v2642, %v2649
        %v2652 = vunpack.c.l.s4 1934713408
        %v2653 = vunpack.c.0.s8 %v2652
        %v2654 = vlaneseq
        %v2655 = vshrl.u32 %v2654, 7
        %v2656 = vsub.s32 %v2653, %v2655
        %v2657 = vrot.slane %v2643, %v2656
        %v2658 = vcombine.low %v2625, %v2641
        %v2659 = vcombine.high %v2625, %v2641
        %v2661 = vunpack.c.l.s4 1934713408
        %v2662 = vunpack.c.0.s8 %v2661
        %v2663 = vlaneseq
        %v2664 = vshrl.u32 %v2663, 7
        %v2665 = vsub.s32 %v2662, %v2664
        %v2666 = vrot.slane %v2658, %v2665
        %v2668 = vunpack.c.l.s4 1934713408
        %v2669 = vunpack.c.0.s8 %v2668
        %v2670 = vlaneseq
        %v2671 = vshrl.u32 %v2670, 7
        %v2672 = vsub.s32 %v2669, %v2671
        %v2673 = vrot.slane %v2659, %v2672
        %v2674 = vcombine.high %v2650, 0.0
        %v2675 = vcombine.high %v2657, 0.0
        %v2676 = vcombine.high %v2666, 0.0
        %v2677 = vcombine.high %v2673, 0.0
        %v2678 = vcombine.low %v2582, %v2589
        %v2680 = vunpack.c.l.s4 1983009808
        %v2681 = vunpack.c.0.s8 %v2680
        %v2682 = vlaneseq
        %v2683 = vshrl.u32 %v2682, 7
        %v2684 = vsub.s32 %v2681, %v2683
        %v2685 = vrot.slane %v2678, %v2684
        %v2686 = vcombine.low %v2606, %v2607
        %v2688 = vunpack.c.l.s4 1983009808
        %v2689 = vunpack.c.0.s8 %v2688
        %v2690 = vlaneseq
        %v2691 = vshrl.u32 %v2690, 7
        %v2692 = vsub.s32 %v2689, %v2691
        %v2693 = vrot.slane %v2686, %v2692
        %v2694 = vcombine.low %v2598, %v2605
        %v2696 = vunpack.c.l.s4 1983009808
        %v2697 = vunpack.c.0.s8 %v2696
        %v2698 = vlaneseq
        %v2699 = vshrl.u32 %v2698, 7
        %v2700 = vsub.s32 %v2697, %v2699
        %v2701 = vrot.slane %v2694, %v2700
        %v2702 = vcombine.low %v2608, %v2609
        %v2704 = vunpack.c.l.s4 1983009808
        %v2705 = vunpack.c.0.s8 %v2704
        %v2706 = vlaneseq
        %v2707 = vshrl.u32 %v2706, 7
        %v2708 = vsub.s32 %v2705, %v2707
        %v2709 = vrot.slane %v2702, %v2708
        %v2710 = vcombine.low %v2685, %v2693
        %v2711 = vcombine.high %v2685, %v2693
        %v2713 = vunpack.c.l.s4 1934713408
        %v2714 = vunpack.c.0.s8 %v2713
        %v2715 = vlaneseq
        %v2716 = vshrl.u32 %v2715, 7
        %v2717 = vsub.s32 %v2714, %v2716
        %v2718 = vrot.slane %v2710, %v2717
        %v2720 = vunpack.c.l.s4 1934713408
        %v2721 = vunpack.c.0.s8 %v2720
        %v2722 = vlaneseq
        %v2723 = vshrl.u32 %v2722, 7
        %v2724 = vsub.s32 %v2721, %v2723
        %v2725 = vrot.slane %v2711, %v2724
        %v2726 = vcombine.low %v2701, %v2709
        %v2727 = vcombine.high %v2701, %v2709
        %v2729 = vunpack.c.l.s4 1934713408
        %v2730 = vunpack.c.0.s8 %v2729
        %v2731 = vlaneseq
        %v2732 = vshrl.u32 %v2731, 7
        %v2733 = vsub.s32 %v2730, %v2732
        %v2734 = vrot.slane %v2726, %v2733
        %v2736 = vunpack.c.l.s4 1934713408
        %v2737 = vunpack.c.0.s8 %v2736
        %v2738 = vlaneseq
        %v2739 = vshrl.u32 %v2738, 7
        %v2740 = vsub.s32 %v2737, %v2739
        %v2741 = vrot.slane %v2727, %v2740
        %v2742 = vcombine.low %v2718, %v2734
        %v2743 = vcombine.high %v2718, %v2734
        %v2744 = vcombine.low %v2725, %v2741
        %v2745 = vcombine.high %v2725, %v2741
        %v2746 = vcombine.low %v2650, %v2657
        %v2748 = vunpack.c.l.s4 1983009808
        %v2749 = vunpack.c.0.s8 %v2748
        %v2750 = vlaneseq
        %v2751 = vshrl.u32 %v2750, 7
        %v2752 = vsub.s32 %v2749, %v2751
        %v2753 = vrot.slane %v2746, %v2752
        %v2754 = vcombine.low %v2674, %v2675
        %v2756 = vunpack.c.l.s4 1983009808
        %v2757 = vunpack.c.0.s8 %v2756
        %v2758 = vlaneseq
        %v2759 = vshrl.u32 %v2758, 7
        %v2760 = vsub.s32 %v2757, %v2759
        %v2761 = vrot.slane %v2754, %v2760
        %v2762 = vcombine.low %v2666, %v2673
        %v2764 = vunpack.c.l.s4 1983009808
        %v2765 = vunpack.c.0.s8 %v2764
        %v2766 = vlaneseq
        %v2767 = vshrl.u32 %v2766, 7
        %v2768 = vsub.s32 %v2765, %v2767
        %v2769 = vrot.slane %v2762, %v2768
        %v2770 = vcombine.low %v2676, %v2677
        %v2772 = vunpack.c.l.s4 1983009808
        %v2773 = vunpack.c.0.s8 %v2772
        %v2774 = vlaneseq
        %v2775 = vshrl.u32 %v2774, 7
        %v2776 = vsub.s32 %v2773, %v2775
        %v2777 = vrot.slane %v2770, %v2776
        %v2778 = vcombine.low %v2753, %v2761
        %v2779 = vcombine.high %v2753, %v2761
        %v2781 = vunpack.c.l.s4 1934713408
        %v2782 = vunpack.c.0.s8 %v2781
        %v2783 = vlaneseq
        %v2784 = vshrl.u32 %v2783, 7
        %v2785 = vsub.s32 %v2782, %v2784
        %v2786 = vrot.slane %v2778, %v2785
        %v2788 = vunpack.c.l.s4 1934713408
        %v2789 = vunpack.c.0.s8 %v2788
        %v2790 = vlaneseq
        %v2791 = vshrl.u32 %v2790, 7
        %v2792 = vsub.s32 %v2789, %v2791
        %v2793 = vrot.slane %v2779, %v2792
        %v2794 = vcombine.low %v2769, %v2777
        %v2795 = vcombine.high %v2769, %v2777
        %v2797 = vunpack.c.l.s4 1934713408
        %v2798 = vunpack.c.0.s8 %v2797
        %v2799 = vlaneseq
        %v2800 = vshrl.u32 %v2799, 7
        %v2801 = vsub.s32 %v2798, %v2800
        %v2802 = vrot.slane %v2794, %v2801
        %v2804 = vunpack.c.l.s4 1934713408
        %v2805 = vunpack.c.0.s8 %v2804
        %v2806 = vlaneseq
        %v2807 = vshrl.u32 %v2806, 7
        %v2808 = vsub.s32 %v2805, %v2807
        %v2809 = vrot.slane %v2795, %v2808
        %v2810 = vcombine.low %v2786, %v2802
        %v2811 = vcombine.high %v2786, %v2802
        %v2812 = vcombine.low %v2793, %v2809
        %v2813 = vcombine.high %v2793, %v2809
        %2816 = vrot.lane.b32.xlu0 %v2743, 32
        %v2817 = vpop.permute.xlu0 %2816
        %2818 = vrot.lane.b32.xlu0 %v2811, 32
        %v2819 = vpop.permute.xlu0 %2818
        %2824 = vrot.lane.b32.xlu0 %v2744, 64
        %v2825 = vpop.permute.xlu0 %2824
        %2826 = vrot.lane.b32.xlu0 %v2812, 64
        %v2827 = vpop.permute.xlu0 %2826
        %2832 = vrot.lane.b32.xlu0 %v2745, 96
        %v2833 = vpop.permute.xlu0 %2832
        %2834 = vrot.lane.b32.xlu0 %v2813, 96
        %v2835 = vpop.permute.xlu0 %2834
        %v2838 = vsel %vm1753, %v2742, %v2817
        %v2839 = vsel %vm1753, %v2810, %v2819
        %vm2840 = vcmask 523264
        %v2841 = vsel %vm2840, %v2838, %v2825
        %v2842 = vsel %vm2840, %v2839, %v2827
        %vm2843 = vcmask 785408
        %v2844 = vsel %vm2843, %v2841, %v2833
        %v2845 = vsel %vm2843, %v2842, %v2835
        %v2846 = vld [vmem:[#allocation10] sm:$0xff]
        %v2847 = vld [vmem:[#allocation10 + $0x8] sm:$0xff]
        %v2848 = vld [vmem:[#allocation10 + $0x10] sm:$0xff]
        %v2849 = vld [vmem:[#allocation10 + $0x18] sm:$0xff]
        %v2850 = vld [vmem:[#allocation10 + $0x20] sm:$0xff]
        %v2851 = vld [vmem:[#allocation10 + $0x28] sm:$0xff]
        %v2852 = vld [vmem:[#allocation10 + $0x30] sm:$0xff]
        %v2853 = vld [vmem:[#allocation10 + $0x38] sm:$0xff]
        %v2854 = vld [vmem:[#allocation10 + $0x40] sm:$0xff]
        %v2855 = vld [vmem:[#allocation10 + $0x48] sm:$0xff]
        %v2856 = vld [vmem:[#allocation10 + $0x50] sm:$0xff]
        %v2857 = vld [vmem:[#allocation10 + $0x58] sm:$0xff]
        %v2858 = vld [vmem:[#allocation10 + $0x60] sm:$0xff]
        %v2859 = vld [vmem:[#allocation10 + $0x68] sm:$0xff]
        %v2860 = vld [vmem:[#allocation10 + $0x70] sm:$0xff]
        %v2861 = vld [vmem:[#allocation10 + $0x78] sm:$0xff]
        %v2862 = vld [vmem:[%s5] sm:$0x1]
        %v2864 = vlaneseq
        %v2865 = vshrl.u32 %v2864, 7
        %v2866 = vsub.s32 0, %v2865
        %v2867 = vrot.slane %v2862, %v2866
        %2869 = vmatprep.subr.mxu0 0.0
        %2870 = vmatpush1.msra.mxu0 %v2846
        %2871 = vmatprep.subr.mxu0 0.0
        %2872 = vmatpush1.msra.mxu0 %v2847
        %2873 = vmatprep.subr.mxu0 0.0
        %2874 = vmatpush1.msra.mxu0 %v2848
        %2875 = vmatprep.subr.mxu0 0.0
        %2876 = vmatpush1.msra.mxu0 %v2849
        %2877 = vmatprep.subr.mxu0 0.0
        %2878 = vmatpush1.msra.mxu0 %v2850
        %2879 = vmatprep.subr.mxu0 0.0
        %2880 = vmatpush1.msra.mxu0 %v2851
        %2881 = vmatprep.subr.mxu0 0.0
        %2882 = vmatpush1.msra.mxu0 %v2852
        %2883 = vmatprep.subr.mxu0 0.0
        %2884 = vmatpush1.msra.mxu0 %v2853
        %2885 = vmatprep.subr.mxu0 0.0
        %2886 = vmatpush1.msra.mxu0 %v2854
        %2887 = vmatprep.subr.mxu0 0.0
        %2888 = vmatpush1.msra.mxu0 %v2855
        %2889 = vmatprep.subr.mxu0 0.0
        %2890 = vmatpush1.msra.mxu0 %v2856
        %2891 = vmatprep.subr.mxu0 0.0
        %2892 = vmatpush1.msra.mxu0 %v2857
        %2893 = vmatprep.subr.mxu0 0.0
        %2894 = vmatpush1.msra.mxu0 %v2858
        %2895 = vmatprep.subr.mxu0 0.0
        %2896 = vmatpush1.msra.mxu0 %v2859
        %2897 = vmatprep.subr.mxu0 0.0
        %2898 = vmatpush1.msra.mxu0 %v2860
        %2899 = vmatprep.subr.mxu0 0.0
        %2900 = vmatpush1.msra.mxu0 %v2861
        %2901 = vmatprep.subr.mxu0 0.0
        %2902 = vmatpush1.msra.mxu0 0.0
        %2903 = vmatprep.subr.mxu0 0.0
        %2904 = vmatpush1.msra.mxu0 0.0
        %2905 = vmatprep.subr.mxu0 0.0
        %2906 = vmatpush1.msra.mxu0 0.0
        %2907 = vmatprep.subr.mxu0 0.0
        %2908 = vmatpush1.msra.mxu0 0.0
        %2909 = vmatprep.subr.mxu0 0.0
        %2910 = vmatpush1.msra.mxu0 0.0
        %2911 = vmatprep.subr.mxu0 0.0
        %2912 = vmatpush1.msra.mxu0 0.0
        %2913 = vmatprep.subr.mxu0 0.0
        %2914 = vmatpush1.msra.mxu0 0.0
        %2915 = vmatprep.subr.mxu0 0.0
        %2916 = vmatpush1.msra.mxu0 0.0
        %2917 = vmatprep.subr.mxu0 0.0
        %2918 = vmatpush1.msra.mxu0 0.0
        %2919 = vmatprep.subr.mxu0 0.0
        %2920 = vmatpush1.msra.mxu0 0.0
        %2921 = vmatprep.subr.mxu0 0.0
        %2922 = vmatpush1.msra.mxu0 0.0
        %2923 = vmatprep.subr.mxu0 0.0
        %2924 = vmatpush1.msra.mxu0 0.0
        %2925 = vmatprep.subr.mxu0 0.0
        %2926 = vmatpush1.msra.mxu0 0.0
        %2927 = vmatprep.subr.mxu0 0.0
        %2928 = vmatpush1.msra.mxu0 0.0
        %2929 = vmatprep.subr.mxu0 0.0
        %2930 = vmatpush1.msra.mxu0 0.0
        %2931 = vmatprep.subr.mxu0 0.0
        %2932 = vmatpush1.msra.mxu0 0.0
        %2933 = vmatprep.mubr.f32.mxu0 0.0
        %2934 = vmatmul.mubr.f32.gmra.mrb[0].mxu0 %v2844
        %v2935 = vpop.f32.mrb[0].mxu0
        %v2936 = vadd.f32 %v2867, %v2935
        %v2937 = vpop.f32.mrb[0].mxu0
        %2938 = vmatprep.mubr.f32.mxu0 0.0
        %2939 = vmatmul.mubr.f32.gmra.mrb[0].mxu0 %v2845
        %v2940 = vpop.f32.mrb[0].mxu0
        %v2941 = vadd.f32 %v2867, %v2940
        %v2942 = vpop.f32.mrb[0].mxu0
        %2943 = vdwg.mxu0
        %v2944 = vadd.f32 %v600, %v2936
        %v2945 = vadd.f32 %v601, %v2941
        %v2946 = vld [vmem:[%s8] sm:$0x1]
        %v2947 = vld [vmem:[%s9] sm:$0x1]
        %2948 = vadd.xlane.f32.xlu0 %v2944
        %v2949 = vpop.xlane.xlu0 %2948
        %2950 = vadd.xlane.f32.xlu0 %v2945
        %v2951 = vpop.xlane.xlu0 %2950
        %v2952 = vmul.f32 %v2944, %v2944
        %v2953 = vmul.f32 %v2945, %v2945
        %2954 = vadd.xlane.f32.xlu0 %v2952
        %v2955 = vpop.xlane.xlu0 %2954
        %2956 = vadd.xlane.f32.xlu0 %v2953
        %v2957 = vpop.xlane.xlu0 %2956
        %v2958 = vmul.f32 %v2949, %v614
        %v2959 = vmul.f32 %v2951, %v614
        %v2960 = vmul.f32 %v2955, %v614
        %v2961 = vmul.f32 %v2957, %v614
        %v2962 = vmul.f32 %v2958, %v2958
        %v2963 = vmul.f32 %v2959, %v2959
        %v2964 = vsub.f32 %v2960, %v2962
        %v2965 = vsub.f32 %v2961, %v2963
        %v2966 = vsub.f32 %v2944, %v2958
        %v2967 = vsub.f32 %v2945, %v2959
        %v2968 = vadd.f32 %v2964, 1e-05
        %v2969 = vadd.f32 %v2965, 1e-05
        %v2970 = vrsqrt.pop %v2968
        %v2971 = vrsqrt.pop %v2969
        %v2972 = vmul.f32 %v2966, %v2970
        %v2973 = vmul.f32 %v2967, %v2971
        %v2975 = vlaneseq
        %v2976 = vshrl.u32 %v2975, 7
        %v2977 = vsub.s32 0, %v2976
        %v2978 = vrot.slane %v2946, %v2977
        %v2980 = vmul.f32 %v2972, %v2978
        %v2981 = vmul.f32 %v2973, %v2978
        %v2983 = vlaneseq
        %v2984 = vshrl.u32 %v2983, 7
        %v2985 = vsub.s32 0, %v2984
        %v2986 = vrot.slane %v2947, %v2985
        %v2988 = vadd.f32 %v2980, %v2986
        %v2989 = vadd.f32 %v2981, %v2986
        %v2990 = vld [vmem:[#allocation11] sm:$0xff]
        %v2991 = vld [vmem:[#allocation11 + $0x8] sm:$0xff]
        %v2992 = vld [vmem:[#allocation11 + $0x10] sm:$0xff]
        %v2993 = vld [vmem:[#allocation11 + $0x18] sm:$0xff]
        %v2994 = vld [vmem:[#allocation11 + $0x20] sm:$0xff]
        %v2995 = vld [vmem:[#allocation11 + $0x28] sm:$0xff]
        %v2996 = vld [vmem:[#allocation11 + $0x30] sm:$0xff]
        %v2997 = vld [vmem:[#allocation11 + $0x38] sm:$0xff]
        %v2998 = vld [vmem:[#allocation11 + $0x40] sm:$0xff]
        %v2999 = vld [vmem:[#allocation11 + $0x48] sm:$0xff]
        %v3000 = vld [vmem:[#allocation11 + $0x50] sm:$0xff]
        %v3001 = vld [vmem:[#allocation11 + $0x58] sm:$0xff]
        %v3002 = vld [vmem:[#allocation11 + $0x60] sm:$0xff]
        %v3003 = vld [vmem:[#allocation11 + $0x68] sm:$0xff]
        %v3004 = vld [vmem:[#allocation11 + $0x70] sm:$0xff]
        %v3005 = vld [vmem:[#allocation11 + $0x78] sm:$0xff]
        %v3006 = vld [vmem:[#allocation11 + $0x80] sm:$0xff]
        %v3007 = vld [vmem:[#allocation11 + $0x88] sm:$0xff]
        %v3008 = vld [vmem:[#allocation11 + $0x90] sm:$0xff]
        %v3009 = vld [vmem:[#allocation11 + $0x98] sm:$0xff]
        %v3010 = vld [vmem:[#allocation11 + $0xa0] sm:$0xff]
        %v3011 = vld [vmem:[#allocation11 + $0xa8] sm:$0xff]
        %v3012 = vld [vmem:[#allocation11 + $0xb0] sm:$0xff]
        %v3013 = vld [vmem:[#allocation11 + $0xb8] sm:$0xff]
        %v3014 = vld [vmem:[#allocation11 + $0xc0] sm:$0xff]
        %v3015 = vld [vmem:[#allocation11 + $0xc8] sm:$0xff]
        %v3016 = vld [vmem:[#allocation11 + $0xd0] sm:$0xff]
        %v3017 = vld [vmem:[#allocation11 + $0xd8] sm:$0xff]
        %v3018 = vld [vmem:[#allocation11 + $0xe0] sm:$0xff]
        %v3019 = vld [vmem:[#allocation11 + $0xe8] sm:$0xff]
        %v3020 = vld [vmem:[#allocation11 + $0xf0] sm:$0xff]
        %v3021 = vld [vmem:[#allocation11 + $0xf8] sm:$0xff]
        %v3022 = vld [vmem:[#allocation11 + $0x100] sm:$0xff]
        %v3023 = vld [vmem:[#allocation11 + $0x108] sm:$0xff]
        %v3024 = vld [vmem:[#allocation11 + $0x110] sm:$0xff]
        %v3025 = vld [vmem:[#allocation11 + $0x118] sm:$0xff]
        %v3026 = vld [vmem:[#allocation11 + $0x120] sm:$0xff]
        %v3027 = vld [vmem:[#allocation11 + $0x128] sm:$0xff]
        %v3028 = vld [vmem:[#allocation11 + $0x130] sm:$0xff]
        %v3029 = vld [vmem:[#allocation11 + $0x138] sm:$0xff]
        %v3030 = vld [vmem:[#allocation11 + $0x140] sm:$0xff]
        %v3031 = vld [vmem:[#allocation11 + $0x148] sm:$0xff]
        %v3032 = vld [vmem:[#allocation11 + $0x150] sm:$0xff]
        %v3033 = vld [vmem:[#allocation11 + $0x158] sm:$0xff]
        %v3034 = vld [vmem:[#allocation11 + $0x160] sm:$0xff]
        %v3035 = vld [vmem:[#allocation11 + $0x168] sm:$0xff]
        %v3036 = vld [vmem:[#allocation11 + $0x170] sm:$0xff]
        %v3037 = vld [vmem:[#allocation11 + $0x178] sm:$0xff]
        %v3038 = vld [vmem:[#allocation11 + $0x180] sm:$0xff]
        %v3039 = vld [vmem:[#allocation11 + $0x188] sm:$0xff]
        %v3040 = vld [vmem:[#allocation11 + $0x190] sm:$0xff]
        %v3041 = vld [vmem:[#allocation11 + $0x198] sm:$0xff]
        %v3042 = vld [vmem:[#allocation11 + $0x1a0] sm:$0xff]
        %v3043 = vld [vmem:[#allocation11 + $0x1a8] sm:$0xff]
        %v3044 = vld [vmem:[#allocation11 + $0x1b0] sm:$0xff]
        %v3045 = vld [vmem:[#allocation11 + $0x1b8] sm:$0xff]
        %v3046 = vld [vmem:[#allocation11 + $0x1c0] sm:$0xff]
        %v3047 = vld [vmem:[#allocation11 + $0x1c8] sm:$0xff]
        %v3048 = vld [vmem:[#allocation11 + $0x1d0] sm:$0xff]
        %v3049 = vld [vmem:[#allocation11 + $0x1d8] sm:$0xff]
        %v3050 = vld [vmem:[#allocation11 + $0x1e0] sm:$0xff]
        %v3051 = vld [vmem:[#allocation11 + $0x1e8] sm:$0xff]
        %v3052 = vld [vmem:[#allocation11 + $0x1f0] sm:$0xff]
        %v3053 = vld [vmem:[#allocation11 + $0x1f8] sm:$0xff]
        %v3054 = vld [vmem:[%s11] sm:$0xf]
        %v3056 = vlaneseq
        %v3057 = vshrl.u32 %v3056, 7
        %v3058 = vsub.s32 0, %v3057
        %v3059 = vrot.slane %v3054, %v3058
        %v3060 = vlaneseq
        %v3061 = vshrl.u32 %v3060, 7
        %v3062 = vsub.s32 1, %v3061
        %v3063 = vrot.slane %v3054, %v3062
        %v3064 = vlaneseq
        %v3065 = vshrl.u32 %v3064, 7
        %v3066 = vsub.s32 2, %v3065
        %v3067 = vrot.slane %v3054, %v3066
        %v3068 = vlaneseq
        %v3069 = vshrl.u32 %v3068, 7
        %v3070 = vsub.s32 3, %v3069
        %v3071 = vrot.slane %v3054, %v3070
        %3076 = vmatprep.subr.mxu0 %v2991
        %3077 = vmatpush1.msra.mxu0 %v2990
        %3078 = vmatprep.subr.mxu0 %v2995
        %3079 = vmatpush1.msra.mxu0 %v2994
        %3080 = vmatprep.subr.mxu0 %v2999
        %3081 = vmatpush1.msra.mxu0 %v2998
        %3082 = vmatprep.subr.mxu0 %v3003
        %3083 = vmatpush1.msra.mxu0 %v3002
        %3084 = vmatprep.subr.mxu0 %v3007
        %3085 = vmatpush1.msra.mxu0 %v3006
        %3086 = vmatprep.subr.mxu0 %v3011
        %3087 = vmatpush1.msra.mxu0 %v3010
        %3088 = vmatprep.subr.mxu0 %v3015
        %3089 = vmatpush1.msra.mxu0 %v3014
        %3090 = vmatprep.subr.mxu0 %v3019
        %3091 = vmatpush1.msra.mxu0 %v3018
        %3092 = vmatprep.subr.mxu0 %v3023
        %3093 = vmatpush1.msra.mxu0 %v3022
        %3094 = vmatprep.subr.mxu0 %v3027
        %3095 = vmatpush1.msra.mxu0 %v3026
        %3096 = vmatprep.subr.mxu0 %v3031
        %3097 = vmatpush1.msra.mxu0 %v3030
        %3098 = vmatprep.subr.mxu0 %v3035
        %3099 = vmatpush1.msra.mxu0 %v3034
        %3100 = vmatprep.subr.mxu0 %v3039
        %3101 = vmatpush1.msra.mxu0 %v3038
        %3102 = vmatprep.subr.mxu0 %v3043
        %3103 = vmatpush1.msra.mxu0 %v3042
        %3104 = vmatprep.subr.mxu0 %v3047
        %3105 = vmatpush1.msra.mxu0 %v3046
        %3106 = vmatprep.subr.mxu0 %v3051
        %3107 = vmatpush1.msra.mxu0 %v3050
        %3108 = vmatprep.subr.mxu0 0.0
        %3109 = vmatpush1.msra.mxu0 0.0
        %3110 = vmatprep.subr.mxu0 0.0
        %3111 = vmatpush1.msra.mxu0 0.0
        %3112 = vmatprep.subr.mxu0 0.0
        %3113 = vmatpush1.msra.mxu0 0.0
        %3114 = vmatprep.subr.mxu0 0.0
        %3115 = vmatpush1.msra.mxu0 0.0
        %3116 = vmatprep.subr.mxu0 0.0
        %3117 = vmatpush1.msra.mxu0 0.0
        %3118 = vmatprep.subr.mxu0 0.0
        %3119 = vmatpush1.msra.mxu0 0.0
        %3120 = vmatprep.subr.mxu0 0.0
        %3121 = vmatpush1.msra.mxu0 0.0
        %3122 = vmatprep.subr.mxu0 0.0
        %3123 = vmatpush1.msra.mxu0 0.0
        %3124 = vmatprep.subr.mxu0 0.0
        %3125 = vmatpush1.msra.mxu0 0.0
        %3126 = vmatprep.subr.mxu0 0.0
        %3127 = vmatpush1.msra.mxu0 0.0
        %3128 = vmatprep.subr.mxu0 0.0
        %3129 = vmatpush1.msra.mxu0 0.0
        %3130 = vmatprep.subr.mxu0 0.0
        %3131 = vmatpush1.msra.mxu0 0.0
        %3132 = vmatprep.subr.mxu0 0.0
        %3133 = vmatpush1.msra.mxu0 0.0
        %3134 = vmatprep.subr.mxu0 0.0
        %3135 = vmatpush1.msra.mxu0 0.0
        %3136 = vmatprep.subr.mxu0 0.0
        %3137 = vmatpush1.msra.mxu0 0.0
        %3138 = vmatprep.subr.mxu0 0.0
        %3139 = vmatpush1.msra.mxu0 0.0
        %3140 = vmatprep.mubr.f32.mxu0 0.0
        %3141 = vmatmul.mubr.f32.gmra.mrb[0].mxu0 %v2988
        %v3142 = vpop.f32.mrb[0].mxu0
        %v3143 = vadd.f32 %v3059, %v3142
        %v3144 = vpop.f32.mrb[0].mxu0
        %v3145 = vadd.f32 %v3063, %v3144
        %3146 = vmatprep.mubr.f32.mxu0 0.0
        %3147 = vmatmul.mubr.f32.gmra.mrb[0].mxu0 %v2989
        %v3148 = vpop.f32.mrb[0].mxu0
        %v3149 = vadd.f32 %v3059, %v3148
        %v3150 = vpop.f32.mrb[0].mxu0
        %v3151 = vadd.f32 %v3063, %v3150
        %3152 = vdwg.mxu0
        %3153 = vmatprep.subr.mxu0 %v2993
        %3154 = vmatpush1.msra.mxu0 %v2992
        %3155 = vmatprep.subr.mxu0 %v2997
        %3156 = vmatpush1.msra.mxu0 %v2996
        %3157 = vmatprep.subr.mxu0 %v3001
        %3158 = vmatpush1.msra.mxu0 %v3000
        %3159 = vmatprep.subr.mxu0 %v3005
        %3160 = vmatpush1.msra.mxu0 %v3004
        %3161 = vmatprep.subr.mxu0 %v3009
        %3162 = vmatpush1.msra.mxu0 %v3008
        %3163 = vmatprep.subr.mxu0 %v3013
        %3164 = vmatpush1.msra.mxu0 %v3012
        %3165 = vmatprep.subr.mxu0 %v3017
        %3166 = vmatpush1.msra.mxu0 %v3016
        %3167 = vmatprep.subr.mxu0 %v3021
        %3168 = vmatpush1.msra.mxu0 %v3020
        %3169 = vmatprep.subr.mxu0 %v3025
        %3170 = vmatpush1.msra.mxu0 %v3024
        %3171 = vmatprep.subr.mxu0 %v3029
        %3172 = vmatpush1.msra.mxu0 %v3028
        %3173 = vmatprep.subr.mxu0 %v3033
        %3174 = vmatpush1.msra.mxu0 %v3032
        %3175 = vmatprep.subr.mxu0 %v3037
        %3176 = vmatpush1.msra.mxu0 %v3036
        %3177 = vmatprep.subr.mxu0 %v3041
        %3178 = vmatpush1.msra.mxu0 %v3040
        %3179 = vmatprep.subr.mxu0 %v3045
        %3180 = vmatpush1.msra.mxu0 %v3044
        %3181 = vmatprep.subr.mxu0 %v3049
        %3182 = vmatpush1.msra.mxu0 %v3048
        %3183 = vmatprep.subr.mxu0 %v3053
        %3184 = vmatpush1.msra.mxu0 %v3052
        %3185 = vmatprep.subr.mxu0 0.0
        %3186 = vmatpush1.msra.mxu0 0.0
        %3187 = vmatprep.subr.mxu0 0.0
        %3188 = vmatpush1.msra.mxu0 0.0
        %3189 = vmatprep.subr.mxu0 0.0
        %3190 = vmatpush1.msra.mxu0 0.0
        %3191 = vmatprep.subr.mxu0 0.0
        %3192 = vmatpush1.msra.mxu0 0.0
        %3193 = vmatprep.subr.mxu0 0.0
        %3194 = vmatpush1.msra.mxu0 0.0
        %3195 = vmatprep.subr.mxu0 0.0
        %3196 = vmatpush1.msra.mxu0 0.0
        %3197 = vmatprep.subr.mxu0 0.0
        %3198 = vmatpush1.msra.mxu0 0.0
        %3199 = vmatprep.subr.mxu0 0.0
        %3200 = vmatpush1.msra.mxu0 0.0
        %3201 = vmatprep.subr.mxu0 0.0
        %3202 = vmatpush1.msra.mxu0 0.0
        %3203 = vmatprep.subr.mxu0 0.0
        %3204 = vmatpush1.msra.mxu0 0.0
        %3205 = vmatprep.subr.mxu0 0.0
        %3206 = vmatpush1.msra.mxu0 0.0
        %3207 = vmatprep.subr.mxu0 0.0
        %3208 = vmatpush1.msra.mxu0 0.0
        %3209 = vmatprep.subr.mxu0 0.0
        %3210 = vmatpush1.msra.mxu0 0.0
        %3211 = vmatprep.subr.mxu0 0.0
        %3212 = vmatpush1.msra.mxu0 0.0
        %3213 = vmatprep.subr.mxu0 0.0
        %3214 = vmatpush1.msra.mxu0 0.0
        %3215 = vmatprep.subr.mxu0 0.0
        %3216 = vmatpush1.msra.mxu0 0.0
        %3217 = vmatprep.mubr.f32.mxu0 0.0
        %3218 = vmatmul.mubr.f32.gmra.mrb[0].mxu0 %v2988
        %v3219 = vpop.f32.mrb[0].mxu0
        %v3220 = vadd.f32 %v3067, %v3219
        %v3221 = vpop.f32.mrb[0].mxu0
        %v3222 = vadd.f32 %v3071, %v3221
        %3223 = vmatprep.mubr.f32.mxu0 0.0
        %3224 = vmatmul.mubr.f32.gmra.mrb[0].mxu0 %v2989
        %v3225 = vpop.f32.mrb[0].mxu0
        %v3226 = vadd.f32 %v3067, %v3225
        %v3227 = vpop.f32.mrb[0].mxu0
        %v3228 = vadd.f32 %v3071, %v3227
        %3229 = vdwg.mxu0
        %v3230 = vmax.f32 %v3143, 0.0
        %v3231 = vmax.f32 %v3145, 0.0
        %v3232 = vmax.f32 %v3220, 0.0
        %v3233 = vmax.f32 %v3222, 0.0
        %v3234 = vmax.f32 %v3149, 0.0
        %v3235 = vmax.f32 %v3151, 0.0
        %v3236 = vmax.f32 %v3226, 0.0
        %v3237 = vmax.f32 %v3228, 0.0
        %v3238 = vld [vmem:[#allocation13] sm:$0xff]
        %v3239 = vld [vmem:[#allocation13 + $0x8] sm:$0xff]
        %v3240 = vld [vmem:[#allocation13 + $0x10] sm:$0xff]
        %v3241 = vld [vmem:[#allocation13 + $0x18] sm:$0xff]
        %v3242 = vld [vmem:[#allocation13 + $0x20] sm:$0xff]
        %v3243 = vld [vmem:[#allocation13 + $0x28] sm:$0xff]
        %v3244 = vld [vmem:[#allocation13 + $0x30] sm:$0xff]
        %v3245 = vld [vmem:[#allocation13 + $0x38] sm:$0xff]
        %v3246 = vld [vmem:[#allocation13 + $0x40] sm:$0xff]
        %v3247 = vld [vmem:[#allocation13 + $0x48] sm:$0xff]
        %v3248 = vld [vmem:[#allocation13 + $0x50] sm:$0xff]
        %v3249 = vld [vmem:[#allocation13 + $0x58] sm:$0xff]
        %v3250 = vld [vmem:[#allocation13 + $0x60] sm:$0xff]
        %v3251 = vld [vmem:[#allocation13 + $0x68] sm:$0xff]
        %v3252 = vld [vmem:[#allocation13 + $0x70] sm:$0xff]
        %v3253 = vld [vmem:[#allocation13 + $0x78] sm:$0xff]
        %v3254 = vld [vmem:[#allocation13 + $0x80] sm:$0xff]
        %v3255 = vld [vmem:[#allocation13 + $0x88] sm:$0xff]
        %v3256 = vld [vmem:[#allocation13 + $0x90] sm:$0xff]
        %v3257 = vld [vmem:[#allocation13 + $0x98] sm:$0xff]
        %v3258 = vld [vmem:[#allocation13 + $0xa0] sm:$0xff]
        %v3259 = vld [vmem:[#allocation13 + $0xa8] sm:$0xff]
        %v3260 = vld [vmem:[#allocation13 + $0xb0] sm:$0xff]
        %v3261 = vld [vmem:[#allocation13 + $0xb8] sm:$0xff]
        %v3262 = vld [vmem:[#allocation13 + $0xc0] sm:$0xff]
        %v3263 = vld [vmem:[#allocation13 + $0xc8] sm:$0xff]
        %v3264 = vld [vmem:[#allocation13 + $0xd0] sm:$0xff]
        %v3265 = vld [vmem:[#allocation13 + $0xd8] sm:$0xff]
        %v3266 = vld [vmem:[#allocation13 + $0xe0] sm:$0xff]
        %v3267 = vld [vmem:[#allocation13 + $0xe8] sm:$0xff]
        %v3268 = vld [vmem:[#allocation13 + $0xf0] sm:$0xff]
        %v3269 = vld [vmem:[#allocation13 + $0xf8] sm:$0xff]
        %v3270 = vld [vmem:[#allocation13 + $0x100] sm:$0xff]
        %v3271 = vld [vmem:[#allocation13 + $0x108] sm:$0xff]
        %v3272 = vld [vmem:[#allocation13 + $0x110] sm:$0xff]
        %v3273 = vld [vmem:[#allocation13 + $0x118] sm:$0xff]
        %v3274 = vld [vmem:[#allocation13 + $0x120] sm:$0xff]
        %v3275 = vld [vmem:[#allocation13 + $0x128] sm:$0xff]
        %v3276 = vld [vmem:[#allocation13 + $0x130] sm:$0xff]
        %v3277 = vld [vmem:[#allocation13 + $0x138] sm:$0xff]
        %v3278 = vld [vmem:[#allocation13 + $0x140] sm:$0xff]
        %v3279 = vld [vmem:[#allocation13 + $0x148] sm:$0xff]
        %v3280 = vld [vmem:[#allocation13 + $0x150] sm:$0xff]
        %v3281 = vld [vmem:[#allocation13 + $0x158] sm:$0xff]
        %v3282 = vld [vmem:[#allocation13 + $0x160] sm:$0xff]
        %v3283 = vld [vmem:[#allocation13 + $0x168] sm:$0xff]
        %v3284 = vld [vmem:[#allocation13 + $0x170] sm:$0xff]
        %v3285 = vld [vmem:[#allocation13 + $0x178] sm:$0xff]
        %v3286 = vld [vmem:[#allocation13 + $0x180] sm:$0xff]
        %v3287 = vld [vmem:[#allocation13 + $0x188] sm:$0xff]
        %v3288 = vld [vmem:[#allocation13 + $0x190] sm:$0xff]
        %v3289 = vld [vmem:[#allocation13 + $0x198] sm:$0xff]
        %v3290 = vld [vmem:[#allocation13 + $0x1a0] sm:$0xff]
        %v3291 = vld [vmem:[#allocation13 + $0x1a8] sm:$0xff]
        %v3292 = vld [vmem:[#allocation13 + $0x1b0] sm:$0xff]
        %v3293 = vld [vmem:[#allocation13 + $0x1b8] sm:$0xff]
        %v3294 = vld [vmem:[#allocation13 + $0x1c0] sm:$0xff]
        %v3295 = vld [vmem:[#allocation13 + $0x1c8] sm:$0xff]
        %v3296 = vld [vmem:[#allocation13 + $0x1d0] sm:$0xff]
        %v3297 = vld [vmem:[#allocation13 + $0x1d8] sm:$0xff]
        %v3298 = vld [vmem:[#allocation13 + $0x1e0] sm:$0xff]
        %v3299 = vld [vmem:[#allocation13 + $0x1e8] sm:$0xff]
        %v3300 = vld [vmem:[#allocation13 + $0x1f0] sm:$0xff]
        %v3301 = vld [vmem:[#allocation13 + $0x1f8] sm:$0xff]
        %v3302 = vld [vmem:[%s13] sm:$0x1]
        %v3304 = vlaneseq
        %v3305 = vshrl.u32 %v3304, 7
        %v3306 = vsub.s32 0, %v3305
        %v3307 = vrot.slane %v3302, %v3306
        %3309 = vmatprep.subr.mxu0 0.0
        %3310 = vmatpush1.msra.mxu0 %v3238
        %3311 = vmatprep.subr.mxu0 0.0
        %3312 = vmatpush1.msra.mxu0 %v3239
        %3313 = vmatprep.subr.mxu0 0.0
        %3314 = vmatpush1.msra.mxu0 %v3240
        %3315 = vmatprep.subr.mxu0 0.0
        %3316 = vmatpush1.msra.mxu0 %v3241
        %3317 = vmatprep.subr.mxu0 0.0
        %3318 = vmatpush1.msra.mxu0 %v3242
        %3319 = vmatprep.subr.mxu0 0.0
        %3320 = vmatpush1.msra.mxu0 %v3243
        %3321 = vmatprep.subr.mxu0 0.0
        %3322 = vmatpush1.msra.mxu0 %v3244
        %3323 = vmatprep.subr.mxu0 0.0
        %3324 = vmatpush1.msra.mxu0 %v3245
        %3325 = vmatprep.subr.mxu0 0.0
        %3326 = vmatpush1.msra.mxu0 %v3246
        %3327 = vmatprep.subr.mxu0 0.0
        %3328 = vmatpush1.msra.mxu0 %v3247
        %3329 = vmatprep.subr.mxu0 0.0
        %3330 = vmatpush1.msra.mxu0 %v3248
        %3331 = vmatprep.subr.mxu0 0.0
        %3332 = vmatpush1.msra.mxu0 %v3249
        %3333 = vmatprep.subr.mxu0 0.0
        %3334 = vmatpush1.msra.mxu0 %v3250
        %3335 = vmatprep.subr.mxu0 0.0
        %3336 = vmatpush1.msra.mxu0 %v3251
        %3337 = vmatprep.subr.mxu0 0.0
        %3338 = vmatpush1.msra.mxu0 %v3252
        %3339 = vmatprep.subr.mxu0 0.0
        %3340 = vmatpush1.msra.mxu0 %v3253
        %3341 = vmatprep.subr.mxu0 0.0
        %3342 = vmatpush1.msra.mxu0 %v3254
        %3343 = vmatprep.subr.mxu0 0.0
        %3344 = vmatpush1.msra.mxu0 %v3255
        %3345 = vmatprep.subr.mxu0 0.0
        %3346 = vmatpush1.msra.mxu0 %v3256
        %3347 = vmatprep.subr.mxu0 0.0
        %3348 = vmatpush1.msra.mxu0 %v3257
        %3349 = vmatprep.subr.mxu0 0.0
        %3350 = vmatpush1.msra.mxu0 %v3258
        %3351 = vmatprep.subr.mxu0 0.0
        %3352 = vmatpush1.msra.mxu0 %v3259
        %3353 = vmatprep.subr.mxu0 0.0
        %3354 = vmatpush1.msra.mxu0 %v3260
        %3355 = vmatprep.subr.mxu0 0.0
        %3356 = vmatpush1.msra.mxu0 %v3261
        %3357 = vmatprep.subr.mxu0 0.0
        %3358 = vmatpush1.msra.mxu0 %v3262
        %3359 = vmatprep.subr.mxu0 0.0
        %3360 = vmatpush1.msra.mxu0 %v3263
        %3361 = vmatprep.subr.mxu0 0.0
        %3362 = vmatpush1.msra.mxu0 %v3264
        %3363 = vmatprep.subr.mxu0 0.0
        %3364 = vmatpush1.msra.mxu0 %v3265
        %3365 = vmatprep.subr.mxu0 0.0
        %3366 = vmatpush1.msra.mxu0 %v3266
        %3367 = vmatprep.subr.mxu0 0.0
        %3368 = vmatpush1.msra.mxu0 %v3267
        %3369 = vmatprep.subr.mxu0 0.0
        %3370 = vmatpush1.msra.mxu0 %v3268
        %3371 = vmatprep.subr.mxu0 0.0
        %3372 = vmatpush1.msra.mxu0 %v3269
        %3373 = vmatprep.mubr.f32.mxu0 %v3231
        %3374 = vmatmul.mubr.f32.gmra.mrb[0].mxu0 %v3230
        %v3375 = vpop.f32.mrb[0].mxu0
        %v3376 = vadd.f32 %v3307, %v3375
        %v3377 = vpop.f32.mrb[0].mxu0
        %3378 = vmatprep.mubr.f32.mxu0 %v3235
        %3379 = vmatmul.mubr.f32.gmra.mrb[0].mxu0 %v3234
        %v3380 = vpop.f32.mrb[0].mxu0
        %v3381 = vadd.f32 %v3307, %v3380
        %v3382 = vpop.f32.mrb[0].mxu0
        %3383 = vdwg.mxu0
        %3384 = vmatprep.subr.mxu0 0.0
        %3385 = vmatpush1.msra.mxu0 %v3270
        %3386 = vmatprep.subr.mxu0 0.0
        %3387 = vmatpush1.msra.mxu0 %v3271
        %3388 = vmatprep.subr.mxu0 0.0
        %3389 = vmatpush1.msra.mxu0 %v3272
        %3390 = vmatprep.subr.mxu0 0.0
        %3391 = vmatpush1.msra.mxu0 %v3273
        %3392 = vmatprep.subr.mxu0 0.0
        %3393 = vmatpush1.msra.mxu0 %v3274
        %3394 = vmatprep.subr.mxu0 0.0
        %3395 = vmatpush1.msra.mxu0 %v3275
        %3396 = vmatprep.subr.mxu0 0.0
        %3397 = vmatpush1.msra.mxu0 %v3276
        %3398 = vmatprep.subr.mxu0 0.0
        %3399 = vmatpush1.msra.mxu0 %v3277
        %3400 = vmatprep.subr.mxu0 0.0
        %3401 = vmatpush1.msra.mxu0 %v3278
        %3402 = vmatprep.subr.mxu0 0.0
        %3403 = vmatpush1.msra.mxu0 %v3279
        %3404 = vmatprep.subr.mxu0 0.0
        %3405 = vmatpush1.msra.mxu0 %v3280
        %3406 = vmatprep.subr.mxu0 0.0
        %3407 = vmatpush1.msra.mxu0 %v3281
        %3408 = vmatprep.subr.mxu0 0.0
        %3409 = vmatpush1.msra.mxu0 %v3282
        %3410 = vmatprep.subr.mxu0 0.0
        %3411 = vmatpush1.msra.mxu0 %v3283
        %3412 = vmatprep.subr.mxu0 0.0
        %3413 = vmatpush1.msra.mxu0 %v3284
        %3414 = vmatprep.subr.mxu0 0.0
        %3415 = vmatpush1.msra.mxu0 %v3285
        %3416 = vmatprep.subr.mxu0 0.0
        %3417 = vmatpush1.msra.mxu0 %v3286
        %3418 = vmatprep.subr.mxu0 0.0
        %3419 = vmatpush1.msra.mxu0 %v3287
        %3420 = vmatprep.subr.mxu0 0.0
        %3421 = vmatpush1.msra.mxu0 %v3288
        %3422 = vmatprep.subr.mxu0 0.0
        %3423 = vmatpush1.msra.mxu0 %v3289
        %3424 = vmatprep.subr.mxu0 0.0
        %3425 = vmatpush1.msra.mxu0 %v3290
        %3426 = vmatprep.subr.mxu0 0.0
        %3427 = vmatpush1.msra.mxu0 %v3291
        %3428 = vmatprep.subr.mxu0 0.0
        %3429 = vmatpush1.msra.mxu0 %v3292
        %3430 = vmatprep.subr.mxu0 0.0
        %3431 = vmatpush1.msra.mxu0 %v3293
        %3432 = vmatprep.subr.mxu0 0.0
        %3433 = vmatpush1.msra.mxu0 %v3294
        %3434 = vmatprep.subr.mxu0 0.0
        %3435 = vmatpush1.msra.mxu0 %v3295
        %3436 = vmatprep.subr.mxu0 0.0
        %3437 = vmatpush1.msra.mxu0 %v3296
        %3438 = vmatprep.subr.mxu0 0.0
        %3439 = vmatpush1.msra.mxu0 %v3297
        %3440 = vmatprep.subr.mxu0 0.0
        %3441 = vmatpush1.msra.mxu0 %v3298
        %3442 = vmatprep.subr.mxu0 0.0
        %3443 = vmatpush1.msra.mxu0 %v3299
        %3444 = vmatprep.subr.mxu0 0.0
        %3445 = vmatpush1.msra.mxu0 %v3300
        %3446 = vmatprep.subr.mxu0 0.0
        %3447 = vmatpush1.msra.mxu0 %v3301
        %3448 = vmatprep.mubr.f32.mxu0 %v3233
        %3449 = vmatmul.mubr.f32.gmra.mrb[0].mxu0 %v3232
        %v3450 = vpop.f32.mrb[0].mxu0
        %v3451 = vadd.f32 %v3376, %v3450
        %v3452 = vpop.f32.mrb[0].mxu0
        %3453 = vmatprep.mubr.f32.mxu0 %v3237
        %3454 = vmatmul.mubr.f32.gmra.mrb[0].mxu0 %v3236
        %v3455 = vpop.f32.mrb[0].mxu0
        %v3456 = vadd.f32 %v3381, %v3455
        %v3457 = vpop.f32.mrb[0].mxu0
        %3458 = vdwg.mxu0
        %v3459 = vadd.f32 %v2944, %v3451
        %v3460 = vadd.f32 %v2945, %v3456
        %3461 = vst [vmem:[%s597] sm:$0xff] %v3459
        %3462 = vst [vmem:[%s597 + $0x8] sm:$0xff] %v3460
        %s3463 = sand.u32 %s348, 1
        %s3464 = scalar_lea.sflag [#allocation4], %s3463
        %s3465 = sand.u32 %s348, 1
        %s3466 = smul.addr %s3465, 16
        %s3467 = scalar_lea.vmem [#allocation14], %s3466
        // Predicated region
        $region105: #{tpu_custom_call.1} parent=75 // pred_check
          %p3468 = pneg %p358
        $region106: #{tpu_custom_call.1} parent=75 // pred_check_branch
          %3470 = sbr.rel (%p3468) target = $region108
        $region107: #{tpu_custom_call.1} parent=75 // pred_region
          %s3472 = ssub.s32 256, 256
          %3473 = vsyncadd %s3464, %s3472
          %s3474 = smul.addr %s36, 2
          %s3475 = smul.addr %s3474, 128
          %s3476 = scalar_lea.hbm %s14, %s3475
          %s3477 = sshll.u32 %s3467, 4
          %s3478 = int_to_ptr.vmem [resolvable:$true] %s3477
          %3483 = dma.vmem_to_hbm [thread:$0]  %s3478, 256, %s3476, %s3464, 128, 128, 8
        $region108: #{tpu_custom_call.1} parent=75 // pred_fallthru
          _
      $region76: #{tpu_custom_call.1} parent=5 // pred_fallthru
        _
      %p3484 = scmp.le.s32.totalorder 2, %s31
      // Predicated region
      $region109: #{tpu_custom_call.1} parent=5 // pred_check
        %p3485 = pneg %p3484
      $region110: #{tpu_custom_call.1} parent=5 // pred_check_branch
        %3487 = sbr.rel (%p3485) target = $region112
      $region111: #{tpu_custom_call.1} parent=5 // pred_region
        %s3488 = ssub.s32 %s31, 2
        // Predicated region
        $region113: #{tpu_custom_call.1} parent=111 // pred_check
          %p3489 = pneg %p364
        $region114: #{tpu_custom_call.1} parent=111 // pred_check_branch
          %3491 = sbr.rel (%p3489) target = $region116
        $region115: #{tpu_custom_call.1} parent=111 // pred_region
          %s3492 = sand.u32 %s349, 1
          %s3493 = scalar_lea.sflag [#allocation4], %s3492
          %s3494 = sand.u32 %s349, 1
          %s3495 = smul.addr %s3494, 16
          %s3496 = scalar_lea.vmem [#allocation14], %s3495
          %3497 = dma.done %s3493, 256
        $region116: #{tpu_custom_call.1} parent=111 // pred_fallthru
          _
      $region112: #{tpu_custom_call.1} parent=5 // pred_fallthru
        _
    $region6: #{tpu_custom_call.1} parent=1 // loop_footer
      %s35 = sadd.s32 1, %s31
    $region7: #{tpu_custom_call.1} parent=1 // loop_footer_branch
      %30 = sbr.rel target = $region3
    $region8: #{tpu_custom_call.1} parent=1 // loop_exit
      _
    %3498 = vsyncpa [#allocation3], 1
    %s3499 = scalar_lea.sflag [#allocation3], 1
    %3500 = vsyncpa %s3499, 1
    %3501 = vsyncpa [#allocation6], 1
    %s3502 = scalar_lea.sflag [#allocation6], 1
    %3503 = vsyncpa %s3502, 1
    %3504 = vsyncpa [#allocation9], 1
    %3505 = vsyncpa [#allocation12], 1
    %3506 = vsyncpa [#allocation4], 1
    %s3507 = scalar_lea.sflag [#allocation4], 1
    %3508 = vsyncpa %s3507, 1

// kernel: tpu_custom_call.1
$region0: #{tpu_custom_call.1}
  #allocation0 [shape = 'u32[]', space=smem, size = 0x4, offset = 0x4, fixed_abs, tag = 'smem constant byte address 0x4 - core index']
  #allocation1 [shape = 'u32[144,128]{1,0:T(1,128)}', space=vmem, size = 0x12000, scoped, tag = 'internal scratch']
  %s0 = inlined_call_operand.hbm [shape: f32[2,16,128], index: 0, kind: input, shape index: {}]
  %s1 = inlined_call_operand.hbm [shape: f32[2,16,128], index: 1, kind: input, shape index: {}]
  %s2 = inlined_call_operand.hbm [shape: f32[128,128], index: 2, kind: input, shape index: {}]
  %s3 = inlined_call_operand.hbm [shape: f32[128,256], index: 3, kind: input, shape index: {}]
  %s4 = inlined_call_operand.hbm [shape: f32[128,128], index: 4, kind: input, shape index: {}]
  %s5 = inlined_call_operand.vmem [shape: f32[1,128], index: 5, kind: input, shape index: {}]
  %s6 = inlined_call_operand.vmem [shape: f32[1,128], index: 6, kind: input, shape index: {}]
  %s7 = inlined_call_operand.vmem [shape: f32[1,128], index: 7, kind: input, shape index: {}]
  %s8 = inlined_call_operand.vmem [shape: f32[1,128], index: 8, kind: input, shape index: {}]
  %s9 = inlined_call_operand.vmem [shape: f32[1,128], index: 9, kind: input, shape index: {}]
  %s10 = inlined_call_operand.hbm [shape: f32[128,512], index: 10, kind: input, shape index: {}]
  %s11 = inlined_call_operand.vmem [shape: f32[1,512], index: 11, kind: input, shape index: {}]
  %s12 = inlined_call_operand.hbm [shape: f32[512,128], index: 12, kind: input, shape index: {}]
  %s13 = inlined_call_operand.vmem [shape: f32[1,128], index: 13, kind: input, shape index: {}]
  %s14 = inlined_call_operand.hbm [shape: f32[2,16,128], index: 14, kind: output, shape index: {}]
  %s15 = sld [smem:[#allocation0]]
  $region117: #{tpu_custom_call.1} parent=0
    _
  %s17 = ssub.s32 1, %s15
  %s18 = scalar_select 0, %s17, %s15
  $region1: #{tpu_custom_call.1} parent=0
    #allocation2 [shape = 'u8[16384]{0}', space=vmem, size = 0x4000, scoped, tag = 'input window, operand 0']
    #allocation3 [shape = 's32[2]{0}', space=sflag, size = 0x8, scoped, tag = 'scoped memory for tpu_custom_call.1']
    #allocation4 [shape = 's32[2]{0}', space=sflag, size = 0x8, scoped, tag = 'scoped memory for tpu_custom_call.1']
    #allocation5 [shape = 'u8[16384]{0}', space=vmem, size = 0x4000, scoped, tag = 'input window, operand 1']
    #allocation6 [shape = 's32[2]{0}', space=sflag, size = 0x8, scoped, tag = 'scoped memory for tpu_custom_call.1']
    #allocation7 [shape = 'u8[65536]{0}', space=vmem, size = 0x10000, scoped, tag = 'input window, operand 2, single buffered']
    #allocation8 [shape = 'u8[131072]{0}', space=vmem, size = 0x20000, scoped, tag = 'input window, operand 3, single buffered']
    #allocation9 [shape = 's32[1]{0}', space=sflag, size = 0x4, scoped, tag = 'scoped memory for tpu_custom_call.1']
    #allocation10 [shape = 'u8[65536]{0}', space=vmem, size = 0x10000, scoped, tag = 'input window, operand 4, single buffered']
    #allocation11 [shape = 'u8[262144]{0}', space=vmem, size = 0x40000, scoped, tag = 'input window, operand 10, single buffered']
    #allocation12 [shape = 's32[1]{0}', space=sflag, size = 0x4, scoped, tag = 'scoped memory for tpu_custom_call.1']
    #allocation13 [shape = 'u8[262144]{0}', space=vmem, size = 0x40000, scoped, tag = 'input window, operand 12, single buffered']
    #allocation14 [shape = 'u8[16384]{0}', space=vmem, size = 0x4000, scoped, tag = 'output window, operand 0']
    %19 = vsyncpa [#allocation3], 0
    %s20 = scalar_lea.sflag [#allocation3], 1
    %21 = vsyncpa %s20, 0
    %22 = vsyncpa [#allocation6], 0
    %s23 = scalar_lea.sflag [#allocation6], 1
    %24 = vsyncpa %s23, 0
    %25 = vsyncpa [#allocation9], 0
    %26 = vsyncpa [#allocation12], 0
    %27 = vsyncpa [#allocation4], 0
    %s28 = scalar_lea.sflag [#allocation4], 1
    %29 = vsyncpa %s28, 0
    loop: start=0, step=1, limit=4
    $region2: #{tpu_custom_call.1} parent=1 // loop_pre_header
      _
    $region3: #{tpu_custom_call.1} parent=1 // loop_header
      %s31 = sphi 0, %s35
      %p32 = scmp.ge.s32.totalorder %s31, 4
      %s41 = sphi 0, %s43
      %s44 = sphi 0, %s41
      %s45 = sphi 0, %s44
      %s61 = sphi 0, %s45
      %s67 = sphi 0, %s69
      %s70 = sphi 0, %s67
      %s71 = sphi 0, %s70
      %s87 = sphi 0, %s71
      %s91 = sphi 0, %s91
      %s93 = sphi 0, %s91
      %s94 = sphi 0, %s93
      %s108 = sphi 0, %s94
      %s112 = sphi 0, %s112
      %s114 = sphi 0, %s112
      %s115 = sphi 0, %s114
      %s129 = sphi 0, %s115
      %s133 = sphi 0, %s133
      %s135 = sphi 0, %s133
      %s136 = sphi 0, %s135
      %s150 = sphi 0, %s136
      %s154 = sphi 0, %s154
      %s156 = sphi 0, %s154
      %s157 = sphi 0, %s156
      %s171 = sphi 0, %s157
      %s175 = sphi 0, %s175
      %s177 = sphi 0, %s175
      %s178 = sphi 0, %s177
      %s192 = sphi 0, %s178
      %s196 = sphi 0, %s196
      %s198 = sphi 0, %s196
      %s199 = sphi 0, %s198
      %s213 = sphi 0, %s199
      %s217 = sphi 0, %s217
      %s219 = sphi 0, %s217
      %s220 = sphi 0, %s219
      %s234 = sphi 0, %s220
      %s238 = sphi 0, %s238
      %s240 = sphi 0, %s238
      %s241 = sphi 0, %s240
      %s255 = sphi 0, %s241
      %s259 = sphi 0, %s259
      %s261 = sphi 0, %s259
      %s262 = sphi 0, %s261
      %s276 = sphi 0, %s262
      %s280 = sphi 0, %s280
      %s282 = sphi 0, %s280
      %s283 = sphi 0, %s282
      %s297 = sphi 0, %s283
      %s301 = sphi 0, %s301
      %s303 = sphi 0, %s301
      %s304 = sphi 0, %s303
      %s318 = sphi 0, %s304
      %s322 = sphi 0, %s322
      %s324 = sphi 0, %s322
      %s325 = sphi 0, %s324
      %s339 = sphi 0, %s325
      %s345 = sphi 0, %s347
      %s348 = sphi 0, %s345
      %s349 = sphi 0, %s348
      %s365 = sphi 0, %s349
    $region4: #{tpu_custom_call.1} parent=1 // loop_header_branch
      %34 = sbr.rel (%p32) target = $region8
    $region5: #{tpu_custom_call.1} parent=1 // loop_body
      %s36 = ssub.s32 %s31, 1
      %s37 = ssub.s32 %s31, 2
      %s38 = sadd.s32 %s31, 1
      %s39 = ssub.s32 %s31, %s38
      %p40 = scmp.eq.s32.totalorder %s39, 0
      %s42 = sadd.s32 %s41, 1
      %s43 = scalar_select %p40, %s41, %s42
      %p46 = pneg %p40
      %p47 = scmp.eq.s32.totalorder %s31, 1
      %p48 = por %p46, %p47
      %p49 = scmp.ne.s32.totalorder %s41, %s44
      %p50 = scmp.eq.s32.totalorder %s31, 0
      %p51 = por %p49, %p50
      %p52 = scmp.ne.s32.totalorder %s41, %s44
      %p53 = scmp.eq.s32.totalorder %s36, 1
      %p54 = por %p52, %p53
      %p55 = scmp.ne.s32.totalorder %s44, %s45
      %p56 = scmp.eq.s32.totalorder %s36, 0
      %p57 = por %p55, %p56
      %p58 = scmp.ne.s32.totalorder %s44, %s45
      %p59 = scmp.eq.s32.totalorder %s37, 1
      %p60 = por %p58, %p59
      %p62 = scmp.ne.s32.totalorder %s45, %s61
      %p63 = scmp.eq.s32.totalorder %s37, 0
      %p64 = por %p62, %p63
      %s65 = ssub.s32 %s31, %s38
      %p66 = scmp.eq.s32.totalorder %s65, 0
      %s68 = sadd.s32 %s67, 1
      %s69 = scalar_select %p66, %s67, %s68
      %p72 = pneg %p66
      %p73 = scmp.eq.s32.totalorder %s31, 1
      %p74 = por %p72, %p73
      %p75 = scmp.ne.s32.totalorder %s67, %s70
      %p76 = scmp.eq.s32.totalorder %s31, 0
      %p77 = por %p75, %p76
      %p78 = scmp.ne.s32.totalorder %s67, %s70
      %p79 = scmp.eq.s32.totalorder %s36, 1
      %p80 = por %p78, %p79
      %p81 = scmp.ne.s32.totalorder %s70, %s71
      %p82 = scmp.eq.s32.totalorder %s36, 0
      %p83 = por %p81, %p82
      %p84 = scmp.ne.s32.totalorder %s70, %s71
      %p85 = scmp.eq.s32.totalorder %s37, 1
      %p86 = por %p84, %p85
      %p88 = scmp.ne.s32.totalorder %s71, %s87
      %p89 = scmp.eq.s32.totalorder %s37, 0
      %p90 = por %p88, %p89
      %s92 = sadd.s32 %s91, 1
      %p95 = scmp.eq.s32.totalorder %s31, 1
      %p96 = scmp.ne.s32.totalorder %s91, %s93
      %p97 = scmp.eq.s32.totalorder %s31, 0
      %p98 = por %p96, %p97
      %p99 = scmp.ne.s32.totalorder %s91, %s93
      %p100 = scmp.eq.s32.totalorder %s36, 1
      %p101 = por %p99, %p100
      %p102 = scmp.ne.s32.totalorder %s93, %s94
      %p103 = scmp.eq.s32.totalorder %s36, 0
      %p104 = por %p102, %p103
      %p105 = scmp.ne.s32.totalorder %s93, %s94
      %p106 = scmp.eq.s32.totalorder %s37, 1
      %p107 = por %p105, %p106
      %p109 = scmp.ne.s32.totalorder %s94, %s108
      %p110 = scmp.eq.s32.totalorder %s37, 0
      %p111 = por %p109, %p110
      %s113 = sadd.s32 %s112, 1
      %p116 = scmp.eq.s32.totalorder %s31, 1
      %p117 = scmp.ne.s32.totalorder %s112, %s114
      %p118 = scmp.eq.s32.totalorder %s31, 0
      %p119 = por %p117, %p118
      %p120 = scmp.ne.s32.totalorder %s112, %s114
      %p121 = scmp.eq.s32.totalorder %s36, 1
      %p122 = por %p120, %p121
      %p123 = scmp.ne.s32.totalorder %s114, %s115
      %p124 = scmp.eq.s32.totalorder %s36, 0
      %p125 = por %p123, %p124
      %p126 = scmp.ne.s32.totalorder %s114, %s115
      %p127 = scmp.eq.s32.totalorder %s37, 1
      %p128 = por %p126, %p127
      %p130 = scmp.ne.s32.totalorder %s115, %s129
      %p131 = scmp.eq.s32.totalorder %s37, 0
      %p132 = por %p130, %p131
      %s134 = sadd.s32 %s133, 1
      %p137 = scmp.eq.s32.totalorder %s31, 1
      %p138 = scmp.ne.s32.totalorder %s133, %s135
      %p139 = scmp.eq.s32.totalorder %s31, 0
      %p140 = por %p138, %p139
      %p141 = scmp.ne.s32.totalorder %s133, %s135
      %p142 = scmp.eq.s32.totalorder %s36, 1
      %p143 = por %p141, %p142
      %p144 = scmp.ne.s32.totalorder %s135, %s136
      %p145 = scmp.eq.s32.totalorder %s36, 0
      %p146 = por %p144, %p145
      %p147 = scmp.ne.s32.totalorder %s135, %s136
      %p148 = scmp.eq.s32.totalorder %s37, 1
      %p149 = por %p147, %p148
      %p151 = scmp.ne.s32.totalorder %s136, %s150
      %p152 = scmp.eq.s32.totalorder %s37, 0
      %p153 = por %p151, %p152
      %s155 = sadd.s32 %s154, 1
      %p158 = scmp.eq.s32.totalorder %s31, 1
      %p159 = scmp.ne.s32.totalorder %s154, %s156
      %p160 = scmp.eq.s32.totalorder %s31, 0
      %p161 = por %p159, %p160
      %p162 = scmp.ne.s32.totalorder %s154, %s156
      %p163 = scmp.eq.s32.totalorder %s36, 1
      %p164 = por %p162, %p163
      %p165 = scmp.ne.s32.totalorder %s156, %s157
      %p166 = scmp.eq.s32.totalorder %s36, 0
      %p167 = por %p165, %p166
      %p168 = scmp.ne.s32.totalorder %s156, %s157
      %p169 = scmp.eq.s32.totalorder %s37, 1
      %p170 = por %p168, %p169
      %p172 = scmp.ne.s32.totalorder %s157, %s171
      %p173 = scmp.eq.s32.totalorder %s37, 0
      %p174 = por %p172, %p173
      %s176 = sadd.s32 %s175, 1
      %p179 = scmp.eq.s32.totalorder %s31, 1
      %p180 = scmp.ne.s32.totalorder %s175, %s177
      %p181 = scmp.eq.s32.totalorder %s31, 0
      %p182 = por %p180, %p181
      %p183 = scmp.ne.s32.totalorder %s175, %s177
      %p184 = scmp.eq.s32.totalorder %s36, 1
      %p185 = por %p183, %p184
      %p186 = scmp.ne.s32.totalorder %s177, %s178
      %p187 = scmp.eq.s32.totalorder %s36, 0
      %p188 = por %p186, %p187
      %p189 = scmp.ne.s32.totalorder %s177, %s178
      %p190 = scmp.eq.s32.totalorder %s37, 1
      %p191 = por %p189, %p190
      %p193 = scmp.ne.s32.totalorder %s178, %s192
      %p194 = scmp.eq.s32.totalorder %s37, 0
      %p195 = por %p193, %p194
      %s197 = sadd.s32 %s196, 1
      %p200 = scmp.eq.s32.totalorder %s31, 1
      %p201 = scmp.ne.s32.totalorder %s196, %s198
      %p202 = scmp.eq.s32.totalorder %s31, 0
      %p203 = por %p201, %p202
      %p204 = scmp.ne.s32.totalorder %s196, %s198
      %p205 = scmp.eq.s32.totalorder %s36, 1
      %p206 = por %p204, %p205
      %p207 = scmp.ne.s32.totalorder %s198, %s199
      %p208 = scmp.eq.s32.totalorder %s36, 0
      %p209 = por %p207, %p208
      %p210 = scmp.ne.s32.totalorder %s198, %s199
      %p211 = scmp.eq.s32.totalorder %s37, 1
      %p212 = por %p210, %p211
      %p214 = scmp.ne.s32.totalorder %s199, %s213
      %p215 = scmp.eq.s32.totalorder %s37, 0
      %p216 = por %p214, %p215
      %s218 = sadd.s32 %s217, 1
      %p221 = scmp.eq.s32.totalorder %s31, 1
      %p222 = scmp.ne.s32.totalorder %s217, %s219
      %p223 = scmp.eq.s32.totalorder %s31, 0
      %p224 = por %p222, %p223
      %p225 = scmp.ne.s32.totalorder %s217, %s219
      %p226 = scmp.eq.s32.totalorder %s36, 1
      %p227 = por %p225, %p226
      %p228 = scmp.ne.s32.totalorder %s219, %s220
      %p229 = scmp.eq.s32.totalorder %s36, 0
      %p230 = por %p228, %p229
      %p231 = scmp.ne.s32.totalorder %s219, %s220
      %p232 = scmp.eq.s32.totalorder %s37, 1
      %p233 = por %p231, %p232
      %p235 = scmp.ne.s32.totalorder %s220, %s234
      %p236 = scmp.eq.s32.totalorder %s37, 0
      %p237 = por %p235, %p236
      %s239 = sadd.s32 %s238, 1
      %p242 = scmp.eq.s32.totalorder %s31, 1
      %p243 = scmp.ne.s32.totalorder %s238, %s240
      %p244 = scmp.eq.s32.totalorder %s31, 0
      %p245 = por %p243, %p244
      %p246 = scmp.ne.s32.totalorder %s238, %s240
      %p247 = scmp.eq.s32.totalorder %s36, 1
      %p248 = por %p246, %p247
      %p249 = scmp.ne.s32.totalorder %s240, %s241
      %p250 = scmp.eq.s32.totalorder %s36, 0
      %p251 = por %p249, %p250
      %p252 = scmp.ne.s32.totalorder %s240, %s241
      %p253 = scmp.eq.s32.totalorder %s37, 1
      %p254 = por %p252, %p253
      %p256 = scmp.ne.s32.totalorder %s241, %s255
      %p257 = scmp.eq.s32.totalorder %s37, 0
      %p258 = por %p256, %p257
      %s260 = sadd.s32 %s259, 1
      %p263 = scmp.eq.s32.totalorder %s31, 1
      %p264 = scmp.ne.s32.totalorder %s259, %s261
      %p265 = scmp.eq.s32.totalorder %s31, 0
      %p266 = por %p264, %p265
      %p267 = scmp.ne.s32.totalorder %s259, %s261
      %p268 = scmp.eq.s32.totalorder %s36, 1
      %p269 = por %p267, %p268
      %p270 = scmp.ne.s32.totalorder %s261, %s262
      %p271 = scmp.eq.s32.totalorder %s36, 0
      %p272 = por %p270, %p271
      %p273 = scmp.ne.s32.totalorder %s261, %s262
      %p274 = scmp.eq.s32.totalorder %s37, 1
      %p275 = por %p273, %p274
      %p277 = scmp.ne.s32.totalorder %s262, %s276
      %p278 = scmp.eq.s32.totalorder %s37, 0
      %p279 = por %p277, %p278
      %s281 = sadd.s32 %s280, 1
      %p284 = scmp.eq.s32.totalorder %s31, 1
      %p285 = scmp.ne.s32.totalorder %s280, %s282
      %p286 = scmp.eq.s32.totalorder %s31, 0
      %p287 = por %p285, %p286
      %p288 = scmp.ne.s32.totalorder %s280, %s282
      %p289 = scmp.eq.s32.totalorder %s36, 1
      %p290 = por %p288, %p289
      %p291 = scmp.ne.s32.totalorder %s282, %s283
      %p292 = scmp.eq.s32.totalorder %s36, 0
      %p293 = por %p291, %p292
      %p294 = scmp.ne.s32.totalorder %s282, %s283
      %p295 = scmp.eq.s32.totalorder %s37, 1
      %p296 = por %p294, %p295
      %p298 = scmp.ne.s32.totalorder %s283, %s297
      %p299 = scmp.eq.s32.totalorder %s37, 0
      %p300 = por %p298, %p299
      %s302 = sadd.s32 %s301, 1
      %p305 = scmp.eq.s32.totalorder %s31, 1
      %p306 = scmp.ne.s32.totalorder %s301, %s303
      %p307 = scmp.eq.s32.totalorder %s31, 0
      %p308 = por %p306, %p307
      %p309 = scmp.ne.s32.totalorder %s301, %s303
      %p310 = scmp.eq.s32.totalorder %s36, 1
      %p311 = por %p309, %p310
      %p312 = scmp.ne.s32.totalorder %s303, %s304
      %p313 = scmp.eq.s32.totalorder %s36, 0
      %p314 = por %p312, %p313
      %p315 = scmp.ne.s32.totalorder %s303, %s304
      %p316 = scmp.eq.s32.totalorder %s37, 1
      %p317 = por %p315, %p316
      %p319 = scmp.ne.s32.totalorder %s304, %s318
      %p320 = scmp.eq.s32.totalorder %s37, 0
      %p321 = por %p319, %p320
      %s323 = sadd.s32 %s322, 1
      %p326 = scmp.eq.s32.totalorder %s31, 1
      %p327 = scmp.ne.s32.totalorder %s322, %s324
      %p328 = scmp.eq.s32.totalorder %s31, 0
      %p329 = por %p327, %p328
      %p330 = scmp.ne.s32.totalorder %s322, %s324
      %p331 = scmp.eq.s32.totalorder %s36, 1
      %p332 = por %p330, %p331
      %p333 = scmp.ne.s32.totalorder %s324, %s325
      %p334 = scmp.eq.s32.totalorder %s36, 0
      %p335 = por %p333, %p334
      %p336 = scmp.ne.s32.totalorder %s324, %s325
      %p337 = scmp.eq.s32.totalorder %s37, 1
      %p338 = por %p336, %p337
      %p340 = scmp.ne.s32.totalorder %s325, %s339
      %p341 = scmp.eq.s32.totalorder %s37, 0
      %p342 = por %p340, %p341
      %s343 = ssub.s32 %s31, %s38
      %p344 = scmp.eq.s32.totalorder %s343, 0
      %s346 = sadd.s32 %s345, 1
      %s347 = scalar_select %p344, %s345, %s346
      %p350 = pneg %p344
      %p351 = scmp.eq.s32.totalorder %s31, 1
      %p352 = por %p350, %p351
      %p353 = scmp.ne.s32.totalorder %s345, %s348
      %p354 = scmp.eq.s32.totalorder %s31, 0
      %p355 = por %p353, %p354
      %p356 = scmp.ne.s32.totalorder %s345, %s348
      %p357 = scmp.eq.s32.totalorder %s36, 1
      %p358 = por %p356, %p357
      %p359 = scmp.ne.s32.totalorder %s348, %s349
      %p360 = scmp.eq.s32.totalorder %s36, 0
      %p361 = por %p359, %p360
      %p362 = scmp.ne.s32.totalorder %s348, %s349
      %p363 = scmp.eq.s32.totalorder %s37, 1
      %p364 = por %p362, %p363
      %p366 = scmp.ne.s32.totalorder %s349, %s365
      %p367 = scmp.eq.s32.totalorder %s37, 0
      %p368 = por %p366, %p367
      %p369 = scmp.le.s32.totalorder 1, %s31
      %p370 = scmp.lt.s32.totalorder %s31, 3
      %p371 = pnand %p369, %p370
      %p372 = pneg %p371
      // Predicated region
      $region9: #{tpu_custom_call.1} parent=5 // pred_check
        _
      $region10: #{tpu_custom_call.1} parent=5 // pred_check_branch
        %374 = sbr.rel (%p371) target = $region12
      $region11: #{tpu_custom_call.1} parent=5 // pred_region
        %s375 = ssub.s32 %s31, 1
        // Predicated region
        $region13: #{tpu_custom_call.1} parent=11 // pred_check
          %p376 = pneg %p104
        $region14: #{tpu_custom_call.1} parent=11 // pred_check_branch
          %378 = sbr.rel (%p376) target = $region16
        $region15: #{tpu_custom_call.1} parent=11 // pred_region
          %s380 = ssub.s32 2048, 2048
          %381 = vsyncadd [#allocation6], %s380
          %s382 = sshll.u32 [#allocation7], 4
          %s383 = int_to_ptr.vmem [resolvable:$true] %s382
          %388 = dma.hbm_to_vmem [thread:$0]  %s2, 2048, %s383, [#allocation6], 128, 128, 8
        $region16: #{tpu_custom_call.1} parent=11 // pred_fallthru
          _
        // Predicated region
        $region17: #{tpu_custom_call.1} parent=11 // pred_check
          %p389 = pneg %p125
        $region18: #{tpu_custom_call.1} parent=11 // pred_check_branch
          %391 = sbr.rel (%p389) target = $region20
        $region19: #{tpu_custom_call.1} parent=11 // pred_region
          %s393 = ssub.s32 4096, 4096
          %394 = vsyncadd [#allocation9], %s393
          %s395 = sshll.u32 [#allocation8], 4
          %s396 = int_to_ptr.vmem [resolvable:$true] %s395
          %401 = dma.hbm_to_vmem [thread:$0]  %s3, 4096, %s396, [#allocation9], 256, 256, 16
        $region20: #{tpu_custom_call.1} parent=11 // pred_fallthru
          _
        // Predicated region
        $region21: #{tpu_custom_call.1} parent=11 // pred_check
          %p402 = pneg %p146
        $region22: #{tpu_custom_call.1} parent=11 // pred_check_branch
          %404 = sbr.rel (%p402) target = $region24
        $region23: #{tpu_custom_call.1} parent=11 // pred_region
          %s406 = ssub.s32 2048, 2048
          %407 = vsyncadd [#allocation9], %s406
          %s408 = sshll.u32 [#allocation10], 4
          %s409 = int_to_ptr.vmem [resolvable:$true] %s408
          %414 = dma.hbm_to_vmem [thread:$0]  %s4, 2048, %s409, [#allocation9], 128, 128, 8
        $region24: #{tpu_custom_call.1} parent=11 // pred_fallthru
          _
        // Predicated region
        $region25: #{tpu_custom_call.1} parent=11 // pred_check
          %p415 = pneg %p167
        $region26: #{tpu_custom_call.1} parent=11 // pred_check_branch
          %417 = sbr.rel (%p415) target = $region28
        $region27: #{tpu_custom_call.1} parent=11 // pred_region
          _
        $region28: #{tpu_custom_call.1} parent=11 // pred_fallthru
          _
        // Predicated region
        $region29: #{tpu_custom_call.1} parent=11 // pred_check
          %p418 = pneg %p188
        $region30: #{tpu_custom_call.1} parent=11 // pred_check_branch
          %420 = sbr.rel (%p418) target = $region32
        $region31: #{tpu_custom_call.1} parent=11 // pred_region
          _
        $region32: #{tpu_custom_call.1} parent=11 // pred_fallthru
          _
        // Predicated region
        $region33: #{tpu_custom_call.1} parent=11 // pred_check
          %p421 = pneg %p209
        $region34: #{tpu_custom_call.1} parent=11 // pred_check_branch
          %423 = sbr.rel (%p421) target = $region36
        $region35: #{tpu_custom_call.1} parent=11 // pred_region
          _
        $region36: #{tpu_custom_call.1} parent=11 // pred_fallthru
          _
        // Predicated region
        $region37: #{tpu_custom_call.1} parent=11 // pred_check
          %p424 = pneg %p230
        $region38: #{tpu_custom_call.1} parent=11 // pred_check_branch
          %426 = sbr.rel (%p424) target = $region40
        $region39: #{tpu_custom_call.1} parent=11 // pred_region
          _
        $region40: #{tpu_custom_call.1} parent=11 // pred_fallthru
          _
        // Predicated region
        $region41: #{tpu_custom_call.1} parent=11 // pred_check
          %p427 = pneg %p251
        $region42: #{tpu_custom_call.1} parent=11 // pred_check_branch
          %429 = sbr.rel (%p427) target = $region44
        $region43: #{tpu_custom_call.1} parent=11 // pred_region
          _
        $region44: #{tpu_custom_call.1} parent=11 // pred_fallthru
          _
        // Predicated region
        $region45: #{tpu_custom_call.1} parent=11 // pred_check
          %p430 = pneg %p272
        $region46: #{tpu_custom_call.1} parent=11 // pred_check_branch
          %432 = sbr.rel (%p430) target = $region48
        $region47: #{tpu_custom_call.1} parent=11 // pred_region
          %s434 = ssub.s32 8192, 8192
          %435 = vsyncadd [#allocation12], %s434
          %s436 = sshll.u32 [#allocation11], 4
          %s437 = int_to_ptr.vmem [resolvable:$true] %s436
          %442 = dma.hbm_to_vmem [thread:$0]  %s10, 8192, %s437, [#allocation12], 512, 512, 32
        $region48: #{tpu_custom_call.1} parent=11 // pred_fallthru
          _
        // Predicated region
        $region49: #{tpu_custom_call.1} parent=11 // pred_check
          %p443 = pneg %p293
        $region50: #{tpu_custom_call.1} parent=11 // pred_check_branch
          %445 = sbr.rel (%p443) target = $region52
        $region51: #{tpu_custom_call.1} parent=11 // pred_region
          _
        $region52: #{tpu_custom_call.1} parent=11 // pred_fallthru
          _
        // Predicated region
        $region53: #{tpu_custom_call.1} parent=11 // pred_check
          %p446 = pneg %p314
        $region54: #{tpu_custom_call.1} parent=11 // pred_check_branch
          %448 = sbr.rel (%p446) target = $region56
        $region55: #{tpu_custom_call.1} parent=11 // pred_region
          %s450 = ssub.s32 8192, 8192
          %451 = vsyncadd [#allocation12], %s450
          %s452 = sshll.u32 [#allocation13], 4
          %s453 = int_to_ptr.vmem [resolvable:$true] %s452
          %458 = dma.hbm_to_vmem [thread:$0]  %s12, 8192, %s453, [#allocation12], 128, 128, 8
        $region56: #{tpu_custom_call.1} parent=11 // pred_fallthru
          _
        // Predicated region
        $region57: #{tpu_custom_call.1} parent=11 // pred_check
          %p459 = pneg %p335
        $region58: #{tpu_custom_call.1} parent=11 // pred_check_branch
          %461 = sbr.rel (%p459) target = $region60
        $region59: #{tpu_custom_call.1} parent=11 // pred_region
          _
        $region60: #{tpu_custom_call.1} parent=11 // pred_fallthru
          _
      $region12: #{tpu_custom_call.1} parent=5 // pred_fallthru
        _
      %p462 = scmp.lt.s32.totalorder %s31, 2
      // Predicated region
      $region61: #{tpu_custom_call.1} parent=5 // pred_check
        %p463 = pneg %p462
      $region62: #{tpu_custom_call.1} parent=5 // pred_check_branch
        %465 = sbr.rel (%p463) target = $region64
      $region63: #{tpu_custom_call.1} parent=5 // pred_region
        // Predicated region
        $region65: #{tpu_custom_call.1} parent=63 // pred_check
          %p466 = pneg %p51
        $region66: #{tpu_custom_call.1} parent=63 // pred_check_branch
          %468 = sbr.rel (%p466) target = $region68
        $region67: #{tpu_custom_call.1} parent=63 // pred_region
          %s469 = sand.u32 %s41, 1
          %s470 = scalar_lea.sflag [#allocation3], %s469
          %s471 = sand.u32 %s41, 1
          %s472 = smul.addr %s471, 16
          %s473 = scalar_lea.vmem [#allocation2], %s472
          %s475 = ssub.s32 256, 256
          %476 = vsyncadd %s470, %s475
          %s477 = smul.addr %s31, 2
          %s478 = smul.addr %s477, 128
          %s479 = scalar_lea.hbm %s0, %s478
          %s480 = sshll.u32 %s473, 4
          %s481 = int_to_ptr.vmem [resolvable:$true] %s480
          %486 = dma.hbm_to_vmem [thread:$0]  %s479, 256, %s481, %s470, 128, 128, 8
        $region68: #{tpu_custom_call.1} parent=63 // pred_fallthru
          _
        // Predicated region
        $region69: #{tpu_custom_call.1} parent=63 // pred_check
          %p487 = pneg %p77
        $region70: #{tpu_custom_call.1} parent=63 // pred_check_branch
          %489 = sbr.rel (%p487) target = $region72
        $region71: #{tpu_custom_call.1} parent=63 // pred_region
          %s490 = sand.u32 %s31, 1
          %s491 = scalar_lea.sflag [#allocation6], %s490
          %s492 = sand.u32 %s67, 1
          %s493 = smul.addr %s492, 16
          %s494 = scalar_lea.vmem [#allocation5], %s493
          %s496 = ssub.s32 256, 256
          %497 = vsyncadd %s491, %s496
          %s498 = smul.addr %s31, 2
          %s499 = smul.addr %s498, 128
          %s500 = scalar_lea.hbm %s1, %s499
          %s501 = sshll.u32 %s494, 4
          %s502 = int_to_ptr.vmem [resolvable:$true] %s501
          %507 = dma.hbm_to_vmem [thread:$0]  %s500, 256, %s502, %s491, 128, 128, 8
        $region72: #{tpu_custom_call.1} parent=63 // pred_fallthru
          _
      $region64: #{tpu_custom_call.1} parent=5 // pred_fallthru
        _
      %p508 = scmp.le.s32.totalorder 1, %s31
      %p509 = scmp.lt.s32.totalorder %s31, 3
      %p510 = pnand %p508, %p509
      %p511 = pneg %p510
      // Predicated region
      $region73: #{tpu_custom_call.1} parent=5 // pred_check
        _
      $region74: #{tpu_custom_call.1} parent=5 // pred_check_branch
        %513 = sbr.rel (%p510) target = $region76
      $region75: #{tpu_custom_call.1} parent=5 // pred_region
        %s514 = ssub.s32 %s31, 1
        %s515 = sand.u32 %s44, 1
        %s516 = scalar_lea.sflag [#allocation3], %s515
        %s517 = sand.u32 %s44, 1
        %s518 = smul.addr %s517, 16
        %s519 = scalar_lea.vmem [#allocation2], %s518
        // Predicated region
        $region77: #{tpu_custom_call.1} parent=75 // pred_check
          %p520 = pneg %p57
        $region78: #{tpu_custom_call.1} parent=75 // pred_check_branch
          %522 = sbr.rel (%p520) target = $region80
        $region79: #{tpu_custom_call.1} parent=75 // pred_region
          %523 = dma.done %s516, 256
        $region80: #{tpu_custom_call.1} parent=75 // pred_fallthru
          _
        %s524 = sand.u32 %s36, 1
        %s525 = scalar_lea.sflag [#allocation6], %s524
        %s526 = sand.u32 %s70, 1
        %s527 = smul.addr %s526, 16
        %s528 = scalar_lea.vmem [#allocation5], %s527
        // Predicated region
        $region81: #{tpu_custom_call.1} parent=75 // pred_check
          %p529 = pneg %p83
        $region82: #{tpu_custom_call.1} parent=75 // pred_check_branch
          %531 = sbr.rel (%p529) target = $region84
        $region83: #{tpu_custom_call.1} parent=75 // pred_region
          %532 = dma.done %s525, 256
        $region84: #{tpu_custom_call.1} parent=75 // pred_fallthru
          _
        // Predicated region
        $region85: #{tpu_custom_call.1} parent=75 // pred_check
          %p533 = pneg %p104
        $region86: #{tpu_custom_call.1} parent=75 // pred_check_branch
          %535 = sbr.rel (%p533) target = $region88
        $region87: #{tpu_custom_call.1} parent=75 // pred_region
          %536 = dma.done [#allocation6], 2048
        $region88: #{tpu_custom_call.1} parent=75 // pred_fallthru
          _
        // Predicated region
        $region89: #{tpu_custom_call.1} parent=75 // pred_check
          %p537 = pneg %p125
        $region90: #{tpu_custom_call.1} parent=75 // pred_check_branch
          %539 = sbr.rel (%p537) target = $region92
        $region91: #{tpu_custom_call.1} parent=75 // pred_region
          %540 = dma.done [#allocation9], 4096
        $region92: #{tpu_custom_call.1} parent=75 // pred_fallthru
          _
        // Predicated region
        $region93: #{tpu_custom_call.1} parent=75 // pred_check
          %p541 = pneg %p146
        $region94: #{tpu_custom_call.1} parent=75 // pred_check_branch
          %543 = sbr.rel (%p541) target = $region96
        $region95: #{tpu_custom_call.1} parent=75 // pred_region
          %544 = dma.done [#allocation9], 2048
        $region96: #{tpu_custom_call.1} parent=75 // pred_fallthru
          _
        // Predicated region
        $region97: #{tpu_custom_call.1} parent=75 // pred_check
          %p545 = pneg %p272
        $region98: #{tpu_custom_call.1} parent=75 // pred_check_branch
          %547 = sbr.rel (%p545) target = $region100
        $region99: #{tpu_custom_call.1} parent=75 // pred_region
          %548 = dma.done [#allocation12], 8192
        $region100: #{tpu_custom_call.1} parent=75 // pred_fallthru
          _
        // Predicated region
        $region101: #{tpu_custom_call.1} parent=75 // pred_check
          %p549 = pneg %p314
        $region102: #{tpu_custom_call.1} parent=75 // pred_check_branch
          %551 = sbr.rel (%p549) target = $region104
        $region103: #{tpu_custom_call.1} parent=75 // pred_region
          %552 = dma.done [#allocation12], 8192
        $region104: #{tpu_custom_call.1} parent=75 // pred_fallthru
          _
        %s553 = sand.u32 %s44, 1
        %s554 = scalar_lea.sflag [#allocation3], %s553
        %s555 = sand.u32 %s44, 1
        %s556 = smul.addr %s555, 16
        %s557 = scalar_lea.vmem [#allocation2], %s556
        %p558 = pneg %p57
        %p559 = pneg %p54
        %s560 = sand.u32 %s36, 1
        %s561 = scalar_lea.sflag [#allocation6], %s560
        %s562 = sand.u32 %s70, 1
        %s563 = smul.addr %s562, 16
        %s564 = scalar_lea.vmem [#allocation5], %s563
        %p565 = pneg %p83
        %p566 = pneg %p80
        %p567 = pneg %p104
        %p568 = pneg %p101
        %p569 = pneg %p125
        %p570 = pneg %p122
        %p571 = pneg %p146
        %p572 = pneg %p143
        %p573 = pneg %p167
        %p574 = pneg %p164
        %p575 = pneg %p188
        %p576 = pneg %p185
        %p577 = pneg %p209
        %p578 = pneg %p206
        %p579 = pneg %p230
        %p580 = pneg %p227
        %p581 = pneg %p251
        %p582 = pneg %p248
        %p583 = pneg %p272
        %p584 = pneg %p269
        %p585 = pneg %p293
        %p586 = pneg %p290
        %p587 = pneg %p314
        %p588 = pneg %p311
        %p589 = pneg %p335
        %p590 = pneg %p332
        %p591 = pneg %p361
        %p592 = pneg %p358
        %s593 = sand.u32 %s348, 1
        %s594 = scalar_lea.sflag [#allocation4], %s593
        %s595 = sand.u32 %s348, 1
        %s596 = smul.addr %s595, 16
        %s597 = scalar_lea.vmem [#allocation14], %s596
        %v598 = vld [vmem:[%s519] sm:$0xff]
        %v599 = vld [vmem:[%s519 + $0x8] sm:$0xff]
        %v600 = vld [vmem:[%s528] sm:$0xff]
        %v601 = vld [vmem:[%s528 + $0x8] sm:$0xff]
        %v602 = vld [vmem:[%s6] sm:$0x1]
        %v603 = vld [vmem:[%s7] sm:$0x1]
        %604 = vadd.xlane.f32.xlu0 %v598
        %v605 = vpop.xlane.xlu0 %604
        %606 = vadd.xlane.f32.xlu0 %v599
        %v607 = vpop.xlane.xlu0 %606
        %v608 = vmul.f32 %v598, %v598
        %v609 = vmul.f32 %v599, %v599
        %610 = vadd.xlane.f32.xlu0 %v608
        %v611 = vpop.xlane.xlu0 %610
        %612 = vadd.xlane.f32.xlu0 %v609
        %v613 = vpop.xlane.xlu0 %612
        %v614 = vrcp.pop 128.0
        %v615 = vmul.f32 %v605, %v614
        %v616 = vmul.f32 %v607, %v614
        %v617 = vmul.f32 %v611, %v614
        %v618 = vmul.f32 %v613, %v614
        %v619 = vmul.f32 %v615, %v615
        %v620 = vmul.f32 %v616, %v616
        %v621 = vsub.f32 %v617, %v619
        %v622 = vsub.f32 %v618, %v620
        %v623 = vsub.f32 %v598, %v615
        %v624 = vsub.f32 %v599, %v616
        %v625 = vadd.f32 %v621, 1e-05
        %v626 = vadd.f32 %v622, 1e-05
        %v627 = vrsqrt.pop %v625
        %v628 = vrsqrt.pop %v626
        %v629 = vmul.f32 %v623, %v627
        %v630 = vmul.f32 %v624, %v628
        %v632 = vlaneseq
        %v633 = vshrl.u32 %v632, 7
        %v634 = vsub.s32 0, %v633
        %v635 = vrot.slane %v602, %v634
        %v637 = vmul.f32 %v629, %v635
        %v638 = vmul.f32 %v630, %v635
        %v640 = vlaneseq
        %v641 = vshrl.u32 %v640, 7
        %v642 = vsub.s32 0, %v641
        %v643 = vrot.slane %v603, %v642
        %v645 = vadd.f32 %v637, %v643
        %v646 = vadd.f32 %v638, %v643
        %647 = vadd.xlane.f32.xlu0 %v600
        %v648 = vpop.xlane.xlu0 %647
        %649 = vadd.xlane.f32.xlu0 %v601
        %v650 = vpop.xlane.xlu0 %649
        %v651 = vmul.f32 %v600, %v600
        %v652 = vmul.f32 %v601, %v601
        %653 = vadd.xlane.f32.xlu0 %v651
        %v654 = vpop.xlane.xlu0 %653
        %655 = vadd.xlane.f32.xlu0 %v652
        %v656 = vpop.xlane.xlu0 %655
        %v657 = vmul.f32 %v648, %v614
        %v658 = vmul.f32 %v650, %v614
        %v659 = vmul.f32 %v654, %v614
        %v660 = vmul.f32 %v656, %v614
        %v661 = vmul.f32 %v657, %v657
        %v662 = vmul.f32 %v658, %v658
        %v663 = vsub.f32 %v659, %v661
        %v664 = vsub.f32 %v660, %v662
        %v665 = vsub.f32 %v600, %v657
        %v666 = vsub.f32 %v601, %v658
        %v667 = vadd.f32 %v663, 1e-05
        %v668 = vadd.f32 %v664, 1e-05
        %v669 = vrsqrt.pop %v667
        %v670 = vrsqrt.pop %v668
        %v671 = vmul.f32 %v665, %v669
        %v672 = vmul.f32 %v666, %v670
        %v673 = vmul.f32 %v671, %v635
        %v674 = vmul.f32 %v672, %v635
        %v675 = vadd.f32 %v673, %v643
        %v676 = vadd.f32 %v674, %v643
        %v677 = vld [vmem:[#allocation7] sm:$0xff]
        %v678 = vld [vmem:[#allocation7 + $0x8] sm:$0xff]
        %v679 = vld [vmem:[#allocation7 + $0x10] sm:$0xff]
        %v680 = vld [vmem:[#allocation7 + $0x18] sm:$0xff]
        %v681 = vld [vmem:[#allocation7 + $0x20] sm:$0xff]
        %v682 = vld [vmem:[#allocation7 + $0x28] sm:$0xff]
        %v683 = vld [vmem:[#allocation7 + $0x30] sm:$0xff]
        %v684 = vld [vmem:[#allocation7 + $0x38] sm:$0xff]
        %v685 = vld [vmem:[#allocation7 + $0x40] sm:$0xff]
        %v686 = vld [vmem:[#allocation7 + $0x48] sm:$0xff]
        %v687 = vld [vmem:[#allocation7 + $0x50] sm:$0xff]
        %v688 = vld [vmem:[#allocation7 + $0x58] sm:$0xff]
        %v689 = vld [vmem:[#allocation7 + $0x60] sm:$0xff]
        %v690 = vld [vmem:[#allocation7 + $0x68] sm:$0xff]
        %v691 = vld [vmem:[#allocation7 + $0x70] sm:$0xff]
        %v692 = vld [vmem:[#allocation7 + $0x78] sm:$0xff]
        %693 = vmatprep.subr.mxu0 0.0
        %694 = vmatpush1.msra.mxu0 %v677
        %695 = vmatprep.subr.mxu0 0.0
        %696 = vmatpush1.msra.mxu0 %v678
        %697 = vmatprep.subr.mxu0 0.0
        %698 = vmatpush1.msra.mxu0 %v679
        %699 = vmatprep.subr.mxu0 0.0
        %700 = vmatpush1.msra.mxu0 %v680
        %701 = vmatprep.subr.mxu0 0.0
        %702 = vmatpush1.msra.mxu0 %v681
        %703 = vmatprep.subr.mxu0 0.0
        %704 = vmatpush1.msra.mxu0 %v682
        %705 = vmatprep.subr.mxu0 0.0
        %706 = vmatpush1.msra.mxu0 %v683
        %707 = vmatprep.subr.mxu0 0.0
        %708 = vmatpush1.msra.mxu0 %v684
        %709 = vmatprep.subr.mxu0 0.0
        %710 = vmatpush1.msra.mxu0 %v685
        %711 = vmatprep.subr.mxu0 0.0
        %712 = vmatpush1.msra.mxu0 %v686
        %713 = vmatprep.subr.mxu0 0.0
        %714 = vmatpush1.msra.mxu0 %v687
        %715 = vmatprep.subr.mxu0 0.0
        %716 = vmatpush1.msra.mxu0 %v688
        %717 = vmatprep.subr.mxu0 0.0
        %718 = vmatpush1.msra.mxu0 %v689
        %719 = vmatprep.subr.mxu0 0.0
        %720 = vmatpush1.msra.mxu0 %v690
        %721 = vmatprep.subr.mxu0 0.0
        %722 = vmatpush1.msra.mxu0 %v691
        %723 = vmatprep.subr.mxu0 0.0
        %724 = vmatpush1.msra.mxu0 %v692
        %725 = vmatprep.subr.mxu0 0.0
        %726 = vmatpush1.msra.mxu0 0.0
        %727 = vmatprep.subr.mxu0 0.0
        %728 = vmatpush1.msra.mxu0 0.0
        %729 = vmatprep.subr.mxu0 0.0
        %730 = vmatpush1.msra.mxu0 0.0
        %731 = vmatprep.subr.mxu0 0.0
        %732 = vmatpush1.msra.mxu0 0.0
        %733 = vmatprep.subr.mxu0 0.0
        %734 = vmatpush1.msra.mxu0 0.0
        %735 = vmatprep.subr.mxu0 0.0
        %736 = vmatpush1.msra.mxu0 0.0
        %737 = vmatprep.subr.mxu0 0.0
        %738 = vmatpush1.msra.mxu0 0.0
        %739 = vmatprep.subr.mxu0 0.0
        %740 = vmatpush1.msra.mxu0 0.0
        %741 = vmatprep.subr.mxu0 0.0
        %742 = vmatpush1.msra.mxu0 0.0
        %743 = vmatprep.subr.mxu0 0.0
        %744 = vmatpush1.msra.mxu0 0.0
        %745 = vmatprep.subr.mxu0 0.0
        %746 = vmatpush1.msra.mxu0 0.0
        %747 = vmatprep.subr.mxu0 0.0
        %748 = vmatpush1.msra.mxu0 0.0
        %749 = vmatprep.subr.mxu0 0.0
        %750 = vmatpush1.msra.mxu0 0.0
        %751 = vmatprep.subr.mxu0 0.0
        %752 = vmatpush1.msra.mxu0 0.0
        %753 = vmatprep.subr.mxu0 0.0
        %754 = vmatpush1.msra.mxu0 0.0
        %755 = vmatprep.subr.mxu0 0.0
        %756 = vmatpush1.msra.mxu0 0.0
        %757 = vmatprep.mubr.f32.mxu0 0.0
        %758 = vmatmul.mubr.f32.gmra.mrb[0].mxu0 %v675
        %v759 = vpop.f32.mrb[0].mxu0
        %v760 = vadd.f32 0.0, %v759
        %v761 = vpop.f32.mrb[0].mxu0
        %762 = vmatprep.mubr.f32.mxu0 0.0
        %763 = vmatmul.mubr.f32.gmra.mrb[0].mxu0 %v676
        %v764 = vpop.f32.mrb[0].mxu0
        %v765 = vadd.f32 0.0, %v764
        %v766 = vpop.f32.mrb[0].mxu0
        %767 = vdwg.mxu0
        %v768 = vld [vmem:[#allocation8] sm:$0xff]
        %v769 = vld [vmem:[#allocation8 + $0x8] sm:$0xff]
        %v770 = vld [vmem:[#allocation8 + $0x10] sm:$0xff]
        %v771 = vld [vmem:[#allocation8 + $0x18] sm:$0xff]
        %v772 = vld [vmem:[#allocation8 + $0x20] sm:$0xff]
        %v773 = vld [vmem:[#allocation8 + $0x28] sm:$0xff]
        %v774 = vld [vmem:[#allocation8 + $0x30] sm:$0xff]
        %v775 = vld [vmem:[#allocation8 + $0x38] sm:$0xff]
        %v776 = vld [vmem:[#allocation8 + $0x40] sm:$0xff]
        %v777 = vld [vmem:[#allocation8 + $0x48] sm:$0xff]
        %v778 = vld [vmem:[#allocation8 + $0x50] sm:$0xff]
        %v779 = vld [vmem:[#allocation8 + $0x58] sm:$0xff]
        %v780 = vld [vmem:[#allocation8 + $0x60] sm:$0xff]
        %v781 = vld [vmem:[#allocation8 + $0x68] sm:$0xff]
        %v782 = vld [vmem:[#allocation8 + $0x70] sm:$0xff]
        %v783 = vld [vmem:[#allocation8 + $0x78] sm:$0xff]
        %v784 = vld [vmem:[#allocation8 + $0x80] sm:$0xff]
        %v785 = vld [vmem:[#allocation8 + $0x88] sm:$0xff]
        %v786 = vld [vmem:[#allocation8 + $0x90] sm:$0xff]
        %v787 = vld [vmem:[#allocation8 + $0x98] sm:$0xff]
        %v788 = vld [vmem:[#allocation8 + $0xa0] sm:$0xff]
        %v789 = vld [vmem:[#allocation8 + $0xa8] sm:$0xff]
        %v790 = vld [vmem:[#allocation8 + $0xb0] sm:$0xff]
        %v791 = vld [vmem:[#allocation8 + $0xb8] sm:$0xff]
        %v792 = vld [vmem:[#allocation8 + $0xc0] sm:$0xff]
        %v793 = vld [vmem:[#allocation8 + $0xc8] sm:$0xff]
        %v794 = vld [vmem:[#allocation8 + $0xd0] sm:$0xff]
        %v795 = vld [vmem:[#allocation8 + $0xd8] sm:$0xff]
        %v796 = vld [vmem:[#allocation8 + $0xe0] sm:$0xff]
        %v797 = vld [vmem:[#allocation8 + $0xe8] sm:$0xff]
        %v798 = vld [vmem:[#allocation8 + $0xf0] sm:$0xff]
        %v799 = vld [vmem:[#allocation8 + $0xf8] sm:$0xff]
        %800 = vmatprep.subr.mxu0 %v769
        %801 = vmatpush1.msra.mxu0 %v768
        %802 = vmatprep.subr.mxu0 %v771
        %803 = vmatpush1.msra.mxu0 %v770
        %804 = vmatprep.subr.mxu0 %v773
        %805 = vmatpush1.msra.mxu0 %v772
        %806 = vmatprep.subr.mxu0 %v775
        %807 = vmatpush1.msra.mxu0 %v774
        %808 = vmatprep.subr.mxu0 %v777
        %809 = vmatpush1.msra.mxu0 %v776
        %810 = vmatprep.subr.mxu0 %v779
        %811 = vmatpush1.msra.mxu0 %v778
        %812 = vmatprep.subr.mxu0 %v781
        %813 = vmatpush1.msra.mxu0 %v780
        %814 = vmatprep.subr.mxu0 %v783
        %815 = vmatpush1.msra.mxu0 %v782
        %816 = vmatprep.subr.mxu0 %v785
        %817 = vmatpush1.msra.mxu0 %v784
        %818 = vmatprep.subr.mxu0 %v787
        %819 = vmatpush1.msra.mxu0 %v786
        %820 = vmatprep.subr.mxu0 %v789
        %821 = vmatpush1.msra.mxu0 %v788
        %822 = vmatprep.subr.mxu0 %v791
        %823 = vmatpush1.msra.mxu0 %v790
        %824 = vmatprep.subr.mxu0 %v793
        %825 = vmatpush1.msra.mxu0 %v792
        %826 = vmatprep.subr.mxu0 %v795
        %827 = vmatpush1.msra.mxu0 %v794
        %828 = vmatprep.subr.mxu0 %v797
        %829 = vmatpush1.msra.mxu0 %v796
        %830 = vmatprep.subr.mxu0 %v799
        %831 = vmatpush1.msra.mxu0 %v798
        %832 = vmatprep.subr.mxu0 0.0
        %833 = vmatpush1.msra.mxu0 0.0
        %834 = vmatprep.subr.mxu0 0.0
        %835 = vmatpush1.msra.mxu0 0.0
        %836 = vmatprep.subr.mxu0 0.0
        %837 = vmatpush1.msra.mxu0 0.0
        %838 = vmatprep.subr.mxu0 0.0
        %839 = vmatpush1.msra.mxu0 0.0
        %840 = vmatprep.subr.mxu0 0.0
        %841 = vmatpush1.msra.mxu0 0.0
        %842 = vmatprep.subr.mxu0 0.0
        %843 = vmatpush1.msra.mxu0 0.0
        %844 = vmatprep.subr.mxu0 0.0
        %845 = vmatpush1.msra.mxu0 0.0
        %846 = vmatprep.subr.mxu0 0.0
        %847 = vmatpush1.msra.mxu0 0.0
        %848 = vmatprep.subr.mxu0 0.0
        %849 = vmatpush1.msra.mxu0 0.0
        %850 = vmatprep.subr.mxu0 0.0
        %851 = vmatpush1.msra.mxu0 0.0
        %852 = vmatprep.subr.mxu0 0.0
        %853 = vmatpush1.msra.mxu0 0.0
        %854 = vmatprep.subr.mxu0 0.0
        %855 = vmatpush1.msra.mxu0 0.0
        %856 = vmatprep.subr.mxu0 0.0
        %857 = vmatpush1.msra.mxu0 0.0
        %858 = vmatprep.subr.mxu0 0.0
        %859 = vmatpush1.msra.mxu0 0.0
        %860 = vmatprep.subr.mxu0 0.0
        %861 = vmatpush1.msra.mxu0 0.0
        %862 = vmatprep.subr.mxu0 0.0
        %863 = vmatpush1.msra.mxu0 0.0
        %864 = vmatprep.mubr.f32.mxu0 0.0
        %865 = vmatmul.mubr.f32.gmra.mrb[0].mxu0 %v645
        %v866 = vpop.f32.mrb[0].mxu0
        %v867 = vadd.f32 0.0, %v866
        %v868 = vpop.f32.mrb[0].mxu0
        %v869 = vadd.f32 0.0, %v868
        %870 = vmatprep.mubr.f32.mxu0 0.0
        %871 = vmatmul.mubr.f32.gmra.mrb[0].mxu0 %v646
        %v872 = vpop.f32.mrb[0].mxu0
        %v873 = vadd.f32 0.0, %v872
        %v874 = vpop.f32.mrb[0].mxu0
        %v875 = vadd.f32 0.0, %v874
        %876 = vdwg.mxu0
        %879 = vrot.lane.b32.xlu0 %v760, 96
        %v880 = vpop.permute.xlu0 %879
        %881 = vrot.lane.b32.xlu0 %v765, 96
        %v882 = vpop.permute.xlu0 %881
        %885 = vrot.lane.b32.xlu0 %v760, 64
        %v886 = vpop.permute.xlu0 %885
        %887 = vrot.lane.b32.xlu0 %v765, 64
        %v888 = vpop.permute.xlu0 %887
        %891 = vrot.lane.b32.xlu0 %v760, 32
        %v892 = vpop.permute.xlu0 %891
        %893 = vrot.lane.b32.xlu0 %v765, 32
        %v894 = vpop.permute.xlu0 %893
        %v897 = vcombine.low %v760, %v886
        %v898 = vcombine.high %v760, %v886
        %v900 = vunpack.c.l.s4 1983009808
        %v901 = vunpack.c.0.s8 %v900
        %v902 = vlaneseq
        %v903 = vshrl.u32 %v902, 7
        %v904 = vsub.s32 %v901, %v903
        %v905 = vrot.slane %v897, %v904
        %v907 = vunpack.c.l.s4 1983009808
        %v908 = vunpack.c.0.s8 %v907
        %v909 = vlaneseq
        %v910 = vshrl.u32 %v909, 7
        %v911 = vsub.s32 %v908, %v910
        %v912 = vrot.slane %v898, %v911
        %v913 = vcombine.low %v880, %v892
        %v914 = vcombine.high %v880, %v892
        %v916 = vunpack.c.l.s4 1983009808
        %v917 = vunpack.c.0.s8 %v916
        %v918 = vlaneseq
        %v919 = vshrl.u32 %v918, 7
        %v920 = vsub.s32 %v917, %v919
        %v921 = vrot.slane %v913, %v920
        %v923 = vunpack.c.l.s4 1983009808
        %v924 = vunpack.c.0.s8 %v923
        %v925 = vlaneseq
        %v926 = vshrl.u32 %v925, 7
        %v927 = vsub.s32 %v924, %v926
        %v928 = vrot.slane %v914, %v927
        %v929 = vcombine.low %v905, %v921
        %v930 = vcombine.high %v905, %v921
        %v932 = vunpack.c.l.s4 1934713408
        %v933 = vunpack.c.0.s8 %v932
        %v934 = vlaneseq
        %v935 = vshrl.u32 %v934, 7
        %v936 = vsub.s32 %v933, %v935
        %v937 = vrot.slane %v929, %v936
        %v939 = vunpack.c.l.s4 1934713408
        %v940 = vunpack.c.0.s8 %v939
        %v941 = vlaneseq
        %v942 = vshrl.u32 %v941, 7
        %v943 = vsub.s32 %v940, %v942
        %v944 = vrot.slane %v930, %v943
        %v945 = vcombine.low %v912, %v928
        %v946 = vcombine.high %v912, %v928
        %v948 = vunpack.c.l.s4 1934713408
        %v949 = vunpack.c.0.s8 %v948
        %v950 = vlaneseq
        %v951 = vshrl.u32 %v950, 7
        %v952 = vsub.s32 %v949, %v951
        %v953 = vrot.slane %v945, %v952
        %v955 = vunpack.c.l.s4 1934713408
        %v956 = vunpack.c.0.s8 %v955
        %v957 = vlaneseq
        %v958 = vshrl.u32 %v957, 7
        %v959 = vsub.s32 %v956, %v958
        %v960 = vrot.slane %v946, %v959
        %v961 = vcombine.high %v937, 0.0
        %v962 = vcombine.high %v944, 0.0
        %v963 = vcombine.high %v953, 0.0
        %v964 = vcombine.high %v960, 0.0
        %v965 = vcombine.low %v765, %v888
        %v966 = vcombine.high %v765, %v888
        %v968 = vunpack.c.l.s4 1983009808
        %v969 = vunpack.c.0.s8 %v968
        %v970 = vlaneseq
        %v971 = vshrl.u32 %v970, 7
        %v972 = vsub.s32 %v969, %v971
        %v973 = vrot.slane %v965, %v972
        %v975 = vunpack.c.l.s4 1983009808
        %v976 = vunpack.c.0.s8 %v975
        %v977 = vlaneseq
        %v978 = vshrl.u32 %v977, 7
        %v979 = vsub.s32 %v976, %v978
        %v980 = vrot.slane %v966, %v979
        %v981 = vcombine.low %v882, %v894
        %v982 = vcombine.high %v882, %v894
        %v984 = vunpack.c.l.s4 1983009808
        %v985 = vunpack.c.0.s8 %v984
        %v986 = vlaneseq
        %v987 = vshrl.u32 %v986, 7
        %v988 = vsub.s32 %v985, %v987
        %v989 = vrot.slane %v981, %v988
        %v991 = vunpack.c.l.s4 1983009808
        %v992 = vunpack.c.0.s8 %v991
        %v993 = vlaneseq
        %v994 = vshrl.u32 %v993, 7
        %v995 = vsub.s32 %v992, %v994
        %v996 = vrot.slane %v982, %v995
        %v997 = vcombine.low %v973, %v989
        %v998 = vcombine.high %v973, %v989
        %v1000 = vunpack.c.l.s4 1934713408
        %v1001 = vunpack.c.0.s8 %v1000
        %v1002 = vlaneseq
        %v1003 = vshrl.u32 %v1002, 7
        %v1004 = vsub.s32 %v1001, %v1003
        %v1005 = vrot.slane %v997, %v1004
        %v1007 = vunpack.c.l.s4 1934713408
        %v1008 = vunpack.c.0.s8 %v1007
        %v1009 = vlaneseq
        %v1010 = vshrl.u32 %v1009, 7
        %v1011 = vsub.s32 %v1008, %v1010
        %v1012 = vrot.slane %v998, %v1011
        %v1013 = vcombine.low %v980, %v996
        %v1014 = vcombine.high %v980, %v996
        %v1016 = vunpack.c.l.s4 1934713408
        %v1017 = vunpack.c.0.s8 %v1016
        %v1018 = vlaneseq
        %v1019 = vshrl.u32 %v1018, 7
        %v1020 = vsub.s32 %v1017, %v1019
        %v1021 = vrot.slane %v1013, %v1020
        %v1023 = vunpack.c.l.s4 1934713408
        %v1024 = vunpack.c.0.s8 %v1023
        %v1025 = vlaneseq
        %v1026 = vshrl.u32 %v1025, 7
        %v1027 = vsub.s32 %v1024, %v1026
        %v1028 = vrot.slane %v1014, %v1027
        %v1029 = vcombine.high %v1005, 0.0
        %v1030 = vcombine.high %v1012, 0.0
        %v1031 = vcombine.high %v1021, 0.0
        %v1032 = vcombine.high %v1028, 0.0
        %v1033 = vcombine.low %v937, %v944
        %v1035 = vunpack.c.l.s4 1983009808
        %v1036 = vunpack.c.0.s8 %v1035
        %v1037 = vlaneseq
        %v1038 = vshrl.u32 %v1037, 7
        %v1039 = vsub.s32 %v1036, %v1038
        %v1040 = vrot.slane %v1033, %v1039
        %v1041 = vcombine.low %v961, %v962
        %v1043 = vunpack.c.l.s4 1983009808
        %v1044 = vunpack.c.0.s8 %v1043
        %v1045 = vlaneseq
        %v1046 = vshrl.u32 %v1045, 7
        %v1047 = vsub.s32 %v1044, %v1046
        %v1048 = vrot.slane %v1041, %v1047
        %v1049 = vcombine.low %v953, %v960
        %v1051 = vunpack.c.l.s4 1983009808
        %v1052 = vunpack.c.0.s8 %v1051
        %v1053 = vlaneseq
        %v1054 = vshrl.u32 %v1053, 7
        %v1055 = vsub.s32 %v1052, %v1054
        %v1056 = vrot.slane %v1049, %v1055
        %v1057 = vcombine.low %v963, %v964
        %v1059 = vunpack.c.l.s4 1983009808
        %v1060 = vunpack.c.0.s8 %v1059
        %v1061 = vlaneseq
        %v1062 = vshrl.u32 %v1061, 7
        %v1063 = vsub.s32 %v1060, %v1062
        %v1064 = vrot.slane %v1057, %v1063
        %v1065 = vcombine.low %v1040, %v1048
        %v1066 = vcombine.high %v1040, %v1048
        %v1068 = vunpack.c.l.s4 1934713408
        %v1069 = vunpack.c.0.s8 %v1068
        %v1070 = vlaneseq
        %v1071 = vshrl.u32 %v1070, 7
        %v1072 = vsub.s32 %v1069, %v1071
        %v1073 = vrot.slane %v1065, %v1072
        %v1075 = vunpack.c.l.s4 1934713408
        %v1076 = vunpack.c.0.s8 %v1075
        %v1077 = vlaneseq
        %v1078 = vshrl.u32 %v1077, 7
        %v1079 = vsub.s32 %v1076, %v1078
        %v1080 = vrot.slane %v1066, %v1079
        %v1081 = vcombine.low %v1056, %v1064
        %v1082 = vcombine.high %v1056, %v1064
        %v1084 = vunpack.c.l.s4 1934713408
        %v1085 = vunpack.c.0.s8 %v1084
        %v1086 = vlaneseq
        %v1087 = vshrl.u32 %v1086, 7
        %v1088 = vsub.s32 %v1085, %v1087
        %v1089 = vrot.slane %v1081, %v1088
        %v1091 = vunpack.c.l.s4 1934713408
        %v1092 = vunpack.c.0.s8 %v1091
        %v1093 = vlaneseq
        %v1094 = vshrl.u32 %v1093, 7
        %v1095 = vsub.s32 %v1092, %v1094
        %v1096 = vrot.slane %v1082, %v1095
        %v1097 = vcombine.low %v1073, %v1089
        %v1098 = vcombine.high %v1073, %v1089
        %v1099 = vcombine.low %v1080, %v1096
        %v1100 = vcombine.high %v1080, %v1096
        %v1101 = vcombine.low %v1005, %v1012
        %v1103 = vunpack.c.l.s4 1983009808
        %v1104 = vunpack.c.0.s8 %v1103
        %v1105 = vlaneseq
        %v1106 = vshrl.u32 %v1105, 7
        %v1107 = vsub.s32 %v1104, %v1106
        %v1108 = vrot.slane %v1101, %v1107
        %v1109 = vcombine.low %v1029, %v1030
        %v1111 = vunpack.c.l.s4 1983009808
        %v1112 = vunpack.c.0.s8 %v1111
        %v1113 = vlaneseq
        %v1114 = vshrl.u32 %v1113, 7
        %v1115 = vsub.s32 %v1112, %v1114
        %v1116 = vrot.slane %v1109, %v1115
        %v1117 = vcombine.low %v1021, %v1028
        %v1119 = vunpack.c.l.s4 1983009808
        %v1120 = vunpack.c.0.s8 %v1119
        %v1121 = vlaneseq
        %v1122 = vshrl.u32 %v1121, 7
        %v1123 = vsub.s32 %v1120, %v1122
        %v1124 = vrot.slane %v1117, %v1123
        %v1125 = vcombine.low %v1031, %v1032
        %v1127 = vunpack.c.l.s4 1983009808
        %v1128 = vunpack.c.0.s8 %v1127
        %v1129 = vlaneseq
        %v1130 = vshrl.u32 %v1129, 7
        %v1131 = vsub.s32 %v1128, %v1130
        %v1132 = vrot.slane %v1125, %v1131
        %v1133 = vcombine.low %v1108, %v1116
        %v1134 = vcombine.high %v1108, %v1116
        %v1136 = vunpack.c.l.s4 1934713408
        %v1137 = vunpack.c.0.s8 %v1136
        %v1138 = vlaneseq
        %v1139 = vshrl.u32 %v1138, 7
        %v1140 = vsub.s32 %v1137, %v1139
        %v1141 = vrot.slane %v1133, %v1140
        %v1143 = vunpack.c.l.s4 1934713408
        %v1144 = vunpack.c.0.s8 %v1143
        %v1145 = vlaneseq
        %v1146 = vshrl.u32 %v1145, 7
        %v1147 = vsub.s32 %v1144, %v1146
        %v1148 = vrot.slane %v1134, %v1147
        %v1149 = vcombine.low %v1124, %v1132
        %v1150 = vcombine.high %v1124, %v1132
        %v1152 = vunpack.c.l.s4 1934713408
        %v1153 = vunpack.c.0.s8 %v1152
        %v1154 = vlaneseq
        %v1155 = vshrl.u32 %v1154, 7
        %v1156 = vsub.s32 %v1153, %v1155
        %v1157 = vrot.slane %v1149, %v1156
        %v1159 = vunpack.c.l.s4 1934713408
        %v1160 = vunpack.c.0.s8 %v1159
        %v1161 = vlaneseq
        %v1162 = vshrl.u32 %v1161, 7
        %v1163 = vsub.s32 %v1160, %v1162
        %v1164 = vrot.slane %v1150, %v1163
        %v1165 = vcombine.low %v1141, %v1157
        %v1166 = vcombine.high %v1141, %v1157
        %v1167 = vcombine.low %v1148, %v1164
        %v1168 = vcombine.high %v1148, %v1164
        %1171 = vrot.lane.b32.xlu0 %v867, 96
        %v1172 = vpop.permute.xlu0 %1171
        %1173 = vrot.lane.b32.xlu0 %v873, 96
        %v1174 = vpop.permute.xlu0 %1173
        %1177 = vrot.lane.b32.xlu0 %v867, 64
        %v1178 = vpop.permute.xlu0 %1177
        %1179 = vrot.lane.b32.xlu0 %v873, 64
        %v1180 = vpop.permute.xlu0 %1179
        %1183 = vrot.lane.b32.xlu0 %v867, 32
        %v1184 = vpop.permute.xlu0 %1183
        %1185 = vrot.lane.b32.xlu0 %v873, 32
        %v1186 = vpop.permute.xlu0 %1185
        %v1189 = vcombine.low %v867, %v1178
        %v1190 = vcombine.high %v867, %v1178
        %v1192 = vunpack.c.l.s4 1983009808
        %v1193 = vunpack.c.0.s8 %v1192
        %v1194 = vlaneseq
        %v1195 = vshrl.u32 %v1194, 7
        %v1196 = vsub.s32 %v1193, %v1195
        %v1197 = vrot.slane %v1189, %v1196
        %v1199 = vunpack.c.l.s4 1983009808
        %v1200 = vunpack.c.0.s8 %v1199
        %v1201 = vlaneseq
        %v1202 = vshrl.u32 %v1201, 7
        %v1203 = vsub.s32 %v1200, %v1202
        %v1204 = vrot.slane %v1190, %v1203
        %v1205 = vcombine.low %v1172, %v1184
        %v1206 = vcombine.high %v1172, %v1184
        %v1208 = vunpack.c.l.s4 1983009808
        %v1209 = vunpack.c.0.s8 %v1208
        %v1210 = vlaneseq
        %v1211 = vshrl.u32 %v1210, 7
        %v1212 = vsub.s32 %v1209, %v1211
        %v1213 = vrot.slane %v1205, %v1212
        %v1215 = vunpack.c.l.s4 1983009808
        %v1216 = vunpack.c.0.s8 %v1215
        %v1217 = vlaneseq
        %v1218 = vshrl.u32 %v1217, 7
        %v1219 = vsub.s32 %v1216, %v1218
        %v1220 = vrot.slane %v1206, %v1219
        %v1221 = vcombine.low %v1197, %v1213
        %v1222 = vcombine.high %v1197, %v1213
        %v1224 = vunpack.c.l.s4 1934713408
        %v1225 = vunpack.c.0.s8 %v1224
        %v1226 = vlaneseq
        %v1227 = vshrl.u32 %v1226, 7
        %v1228 = vsub.s32 %v1225, %v1227
        %v1229 = vrot.slane %v1221, %v1228
        %v1231 = vunpack.c.l.s4 1934713408
        %v1232 = vunpack.c.0.s8 %v1231
        %v1233 = vlaneseq
        %v1234 = vshrl.u32 %v1233, 7
        %v1235 = vsub.s32 %v1232, %v1234
        %v1236 = vrot.slane %v1222, %v1235
        %v1237 = vcombine.low %v1204, %v1220
        %v1238 = vcombine.high %v1204, %v1220
        %v1240 = vunpack.c.l.s4 1934713408
        %v1241 = vunpack.c.0.s8 %v1240
        %v1242 = vlaneseq
        %v1243 = vshrl.u32 %v1242, 7
        %v1244 = vsub.s32 %v1241, %v1243
        %v1245 = vrot.slane %v1237, %v1244
        %v1247 = vunpack.c.l.s4 1934713408
        %v1248 = vunpack.c.0.s8 %v1247
        %v1249 = vlaneseq
        %v1250 = vshrl.u32 %v1249, 7
        %v1251 = vsub.s32 %v1248, %v1250
        %v1252 = vrot.slane %v1238, %v1251
        %v1253 = vcombine.high %v1229, 0.0
        %v1254 = vcombine.high %v1236, 0.0
        %v1255 = vcombine.high %v1245, 0.0
        %v1256 = vcombine.high %v1252, 0.0
        %v1257 = vcombine.low %v873, %v1180
        %v1258 = vcombine.high %v873, %v1180
        %v1260 = vunpack.c.l.s4 1983009808
        %v1261 = vunpack.c.0.s8 %v1260
        %v1262 = vlaneseq
        %v1263 = vshrl.u32 %v1262, 7
        %v1264 = vsub.s32 %v1261, %v1263
        %v1265 = vrot.slane %v1257, %v1264
        %v1267 = vunpack.c.l.s4 1983009808
        %v1268 = vunpack.c.0.s8 %v1267
        %v1269 = vlaneseq
        %v1270 = vshrl.u32 %v1269, 7
        %v1271 = vsub.s32 %v1268, %v1270
        %v1272 = vrot.slane %v1258, %v1271
        %v1273 = vcombine.low %v1174, %v1186
        %v1274 = vcombine.high %v1174, %v1186
        %v1276 = vunpack.c.l.s4 1983009808
        %v1277 = vunpack.c.0.s8 %v1276
        %v1278 = vlaneseq
        %v1279 = vshrl.u32 %v1278, 7
        %v1280 = vsub.s32 %v1277, %v1279
        %v1281 = vrot.slane %v1273, %v1280
        %v1283 = vunpack.c.l.s4 1983009808
        %v1284 = vunpack.c.0.s8 %v1283
        %v1285 = vlaneseq
        %v1286 = vshrl.u32 %v1285, 7
        %v1287 = vsub.s32 %v1284, %v1286
        %v1288 = vrot.slane %v1274, %v1287
        %v1289 = vcombine.low %v1265, %v1281
        %v1290 = vcombine.high %v1265, %v1281
        %v1292 = vunpack.c.l.s4 1934713408
        %v1293 = vunpack.c.0.s8 %v1292
        %v1294 = vlaneseq
        %v1295 = vshrl.u32 %v1294, 7
        %v1296 = vsub.s32 %v1293, %v1295
        %v1297 = vrot.slane %v1289, %v1296
        %v1299 = vunpack.c.l.s4 1934713408
        %v1300 = vunpack.c.0.s8 %v1299
        %v1301 = vlaneseq
        %v1302 = vshrl.u32 %v1301, 7
        %v1303 = vsub.s32 %v1300, %v1302
        %v1304 = vrot.slane %v1290, %v1303
        %v1305 = vcombine.low %v1272, %v1288
        %v1306 = vcombine.high %v1272, %v1288
        %v1308 = vunpack.c.l.s4 1934713408
        %v1309 = vunpack.c.0.s8 %v1308
        %v1310 = vlaneseq
        %v1311 = vshrl.u32 %v1310, 7
        %v1312 = vsub.s32 %v1309, %v1311
        %v1313 = vrot.slane %v1305, %v1312
        %v1315 = vunpack.c.l.s4 1934713408
        %v1316 = vunpack.c.0.s8 %v1315
        %v1317 = vlaneseq
        %v1318 = vshrl.u32 %v1317, 7
        %v1319 = vsub.s32 %v1316, %v1318
        %v1320 = vrot.slane %v1306, %v1319
        %v1321 = vcombine.high %v1297, 0.0
        %v1322 = vcombine.high %v1304, 0.0
        %v1323 = vcombine.high %v1313, 0.0
        %v1324 = vcombine.high %v1320, 0.0
        %v1325 = vcombine.low %v1229, %v1236
        %v1327 = vunpack.c.l.s4 1983009808
        %v1328 = vunpack.c.0.s8 %v1327
        %v1329 = vlaneseq
        %v1330 = vshrl.u32 %v1329, 7
        %v1331 = vsub.s32 %v1328, %v1330
        %v1332 = vrot.slane %v1325, %v1331
        %v1333 = vcombine.low %v1253, %v1254
        %v1335 = vunpack.c.l.s4 1983009808
        %v1336 = vunpack.c.0.s8 %v1335
        %v1337 = vlaneseq
        %v1338 = vshrl.u32 %v1337, 7
        %v1339 = vsub.s32 %v1336, %v1338
        %v1340 = vrot.slane %v1333, %v1339
        %v1341 = vcombine.low %v1245, %v1252
        %v1343 = vunpack.c.l.s4 1983009808
        %v1344 = vunpack.c.0.s8 %v1343
        %v1345 = vlaneseq
        %v1346 = vshrl.u32 %v1345, 7
        %v1347 = vsub.s32 %v1344, %v1346
        %v1348 = vrot.slane %v1341, %v1347
        %v1349 = vcombine.low %v1255, %v1256
        %v1351 = vunpack.c.l.s4 1983009808
        %v1352 = vunpack.c.0.s8 %v1351
        %v1353 = vlaneseq
        %v1354 = vshrl.u32 %v1353, 7
        %v1355 = vsub.s32 %v1352, %v1354
        %v1356 = vrot.slane %v1349, %v1355
        %v1357 = vcombine.low %v1332, %v1340
        %v1358 = vcombine.high %v1332, %v1340
        %v1360 = vunpack.c.l.s4 1934713408
        %v1361 = vunpack.c.0.s8 %v1360
        %v1362 = vlaneseq
        %v1363 = vshrl.u32 %v1362, 7
        %v1364 = vsub.s32 %v1361, %v1363
        %v1365 = vrot.slane %v1357, %v1364
        %v1367 = vunpack.c.l.s4 1934713408
        %v1368 = vunpack.c.0.s8 %v1367
        %v1369 = vlaneseq
        %v1370 = vshrl.u32 %v1369, 7
        %v1371 = vsub.s32 %v1368, %v1370
        %v1372 = vrot.slane %v1358, %v1371
        %v1373 = vcombine.low %v1348, %v1356
        %v1374 = vcombine.high %v1348, %v1356
        %v1376 = vunpack.c.l.s4 1934713408
        %v1377 = vunpack.c.0.s8 %v1376
        %v1378 = vlaneseq
        %v1379 = vshrl.u32 %v1378, 7
        %v1380 = vsub.s32 %v1377, %v1379
        %v1381 = vrot.slane %v1373, %v1380
        %v1383 = vunpack.c.l.s4 1934713408
        %v1384 = vunpack.c.0.s8 %v1383
        %v1385 = vlaneseq
        %v1386 = vshrl.u32 %v1385, 7
        %v1387 = vsub.s32 %v1384, %v1386
        %v1388 = vrot.slane %v1374, %v1387
        %v1389 = vcombine.low %v1365, %v1381
        %v1390 = vcombine.high %v1365, %v1381
        %v1391 = vcombine.low %v1372, %v1388
        %v1392 = vcombine.high %v1372, %v1388
        %v1393 = vcombine.low %v1297, %v1304
        %v1395 = vunpack.c.l.s4 1983009808
        %v1396 = vunpack.c.0.s8 %v1395
        %v1397 = vlaneseq
        %v1398 = vshrl.u32 %v1397, 7
        %v1399 = vsub.s32 %v1396, %v1398
        %v1400 = vrot.slane %v1393, %v1399
        %v1401 = vcombine.low %v1321, %v1322
        %v1403 = vunpack.c.l.s4 1983009808
        %v1404 = vunpack.c.0.s8 %v1403
        %v1405 = vlaneseq
        %v1406 = vshrl.u32 %v1405, 7
        %v1407 = vsub.s32 %v1404, %v1406
        %v1408 = vrot.slane %v1401, %v1407
        %v1409 = vcombine.low %v1313, %v1320
        %v1411 = vunpack.c.l.s4 1983009808
        %v1412 = vunpack.c.0.s8 %v1411
        %v1413 = vlaneseq
        %v1414 = vshrl.u32 %v1413, 7
        %v1415 = vsub.s32 %v1412, %v1414
        %v1416 = vrot.slane %v1409, %v1415
        %v1417 = vcombine.low %v1323, %v1324
        %v1419 = vunpack.c.l.s4 1983009808
        %v1420 = vunpack.c.0.s8 %v1419
        %v1421 = vlaneseq
        %v1422 = vshrl.u32 %v1421, 7
        %v1423 = vsub.s32 %v1420, %v1422
        %v1424 = vrot.slane %v1417, %v1423
        %v1425 = vcombine.low %v1400, %v1408
        %v1426 = vcombine.high %v1400, %v1408
        %v1428 = vunpack.c.l.s4 1934713408
        %v1429 = vunpack.c.0.s8 %v1428
        %v1430 = vlaneseq
        %v1431 = vshrl.u32 %v1430, 7
        %v1432 = vsub.s32 %v1429, %v1431
        %v1433 = vrot.slane %v1425, %v1432
        %v1435 = vunpack.c.l.s4 1934713408
        %v1436 = vunpack.c.0.s8 %v1435
        %v1437 = vlaneseq
        %v1438 = vshrl.u32 %v1437, 7
        %v1439 = vsub.s32 %v1436, %v1438
        %v1440 = vrot.slane %v1426, %v1439
        %v1441 = vcombine.low %v1416, %v1424
        %v1442 = vcombine.high %v1416, %v1424
        %v1444 = vunpack.c.l.s4 1934713408
        %v1445 = vunpack.c.0.s8 %v1444
        %v1446 = vlaneseq
        %v1447 = vshrl.u32 %v1446, 7
        %v1448 = vsub.s32 %v1445, %v1447
        %v1449 = vrot.slane %v1441, %v1448
        %v1451 = vunpack.c.l.s4 1934713408
        %v1452 = vunpack.c.0.s8 %v1451
        %v1453 = vlaneseq
        %v1454 = vshrl.u32 %v1453, 7
        %v1455 = vsub.s32 %v1452, %v1454
        %v1456 = vrot.slane %v1442, %v1455
        %v1457 = vcombine.low %v1433, %v1449
        %v1458 = vcombine.high %v1433, %v1449
        %v1459 = vcombine.low %v1440, %v1456
        %v1460 = vcombine.high %v1440, %v1456
        %1463 = vrot.lane.b32.xlu0 %v869, 96
        %v1464 = vpop.permute.xlu0 %1463
        %1465 = vrot.lane.b32.xlu0 %v875, 96
        %v1466 = vpop.permute.xlu0 %1465
        %1469 = vrot.lane.b32.xlu0 %v869, 64
        %v1470 = vpop.permute.xlu0 %1469
        %1471 = vrot.lane.b32.xlu0 %v875, 64
        %v1472 = vpop.permute.xlu0 %1471
        %1475 = vrot.lane.b32.xlu0 %v869, 32
        %v1476 = vpop.permute.xlu0 %1475
        %1477 = vrot.lane.b32.xlu0 %v875, 32
        %v1478 = vpop.permute.xlu0 %1477
        %v1481 = vcombine.low %v869, %v1470
        %v1482 = vcombine.high %v869, %v1470
        %v1484 = vunpack.c.l.s4 1983009808
        %v1485 = vunpack.c.0.s8 %v1484
        %v1486 = vlaneseq
        %v1487 = vshrl.u32 %v1486, 7
        %v1488 = vsub.s32 %v1485, %v1487
        %v1489 = vrot.slane %v1481, %v1488
        %v1491 = vunpack.c.l.s4 1983009808
        %v1492 = vunpack.c.0.s8 %v1491
        %v1493 = vlaneseq
        %v1494 = vshrl.u32 %v1493, 7
        %v1495 = vsub.s32 %v1492, %v1494
        %v1496 = vrot.slane %v1482, %v1495
        %v1497 = vcombine.low %v1464, %v1476
        %v1498 = vcombine.high %v1464, %v1476
        %v1500 = vunpack.c.l.s4 1983009808
        %v1501 = vunpack.c.0.s8 %v1500
        %v1502 = vlaneseq
        %v1503 = vshrl.u32 %v1502, 7
        %v1504 = vsub.s32 %v1501, %v1503
        %v1505 = vrot.slane %v1497, %v1504
        %v1507 = vunpack.c.l.s4 1983009808
        %v1508 = vunpack.c.0.s8 %v1507
        %v1509 = vlaneseq
        %v1510 = vshrl.u32 %v1509, 7
        %v1511 = vsub.s32 %v1508, %v1510
        %v1512 = vrot.slane %v1498, %v1511
        %v1513 = vcombine.low %v1489, %v1505
        %v1514 = vcombine.high %v1489, %v1505
        %v1516 = vunpack.c.l.s4 1934713408
        %v1517 = vunpack.c.0.s8 %v1516
        %v1518 = vlaneseq
        %v1519 = vshrl.u32 %v1518, 7
        %v1520 = vsub.s32 %v1517, %v1519
        %v1521 = vrot.slane %v1513, %v1520
        %v1523 = vunpack.c.l.s4 1934713408
        %v1524 = vunpack.c.0.s8 %v1523
        %v1525 = vlaneseq
        %v1526 = vshrl.u32 %v1525, 7
        %v1527 = vsub.s32 %v1524, %v1526
        %v1528 = vrot.slane %v1514, %v1527
        %v1529 = vcombine.low %v1496, %v1512
        %v1530 = vcombine.high %v1496, %v1512
        %v1532 = vunpack.c.l.s4 1934713408
        %v1533 = vunpack.c.0.s8 %v1532
        %v1534 = vlaneseq
        %v1535 = vshrl.u32 %v1534, 7
        %v1536 = vsub.s32 %v1533, %v1535
        %v1537 = vrot.slane %v1529, %v1536
        %v1539 = vunpack.c.l.s4 1934713408
        %v1540 = vunpack.c.0.s8 %v1539
        %v1541 = vlaneseq
        %v1542 = vshrl.u32 %v1541, 7
        %v1543 = vsub.s32 %v1540, %v1542
        %v1544 = vrot.slane %v1530, %v1543
        %v1545 = vcombine.high %v1521, 0.0
        %v1546 = vcombine.high %v1528, 0.0
        %v1547 = vcombine.high %v1537, 0.0
        %v1548 = vcombine.high %v1544, 0.0
        %v1549 = vcombine.low %v875, %v1472
        %v1550 = vcombine.high %v875, %v1472
        %v1552 = vunpack.c.l.s4 1983009808
        %v1553 = vunpack.c.0.s8 %v1552
        %v1554 = vlaneseq
        %v1555 = vshrl.u32 %v1554, 7
        %v1556 = vsub.s32 %v1553, %v1555
        %v1557 = vrot.slane %v1549, %v1556
        %v1559 = vunpack.c.l.s4 1983009808
        %v1560 = vunpack.c.0.s8 %v1559
        %v1561 = vlaneseq
        %v1562 = vshrl.u32 %v1561, 7
        %v1563 = vsub.s32 %v1560, %v1562
        %v1564 = vrot.slane %v1550, %v1563
        %v1565 = vcombine.low %v1466, %v1478
        %v1566 = vcombine.high %v1466, %v1478
        %v1568 = vunpack.c.l.s4 1983009808
        %v1569 = vunpack.c.0.s8 %v1568
        %v1570 = vlaneseq
        %v1571 = vshrl.u32 %v1570, 7
        %v1572 = vsub.s32 %v1569, %v1571
        %v1573 = vrot.slane %v1565, %v1572
        %v1575 = vunpack.c.l.s4 1983009808
        %v1576 = vunpack.c.0.s8 %v1575
        %v1577 = vlaneseq
        %v1578 = vshrl.u32 %v1577, 7
        %v1579 = vsub.s32 %v1576, %v1578
        %v1580 = vrot.slane %v1566, %v1579
        %v1581 = vcombine.low %v1557, %v1573
        %v1582 = vcombine.high %v1557, %v1573
        %v1584 = vunpack.c.l.s4 1934713408
        %v1585 = vunpack.c.0.s8 %v1584
        %v1586 = vlaneseq
        %v1587 = vshrl.u32 %v1586, 7
        %v1588 = vsub.s32 %v1585, %v1587
        %v1589 = vrot.slane %v1581, %v1588
        %v1591 = vunpack.c.l.s4 1934713408
        %v1592 = vunpack.c.0.s8 %v1591
        %v1593 = vlaneseq
        %v1594 = vshrl.u32 %v1593, 7
        %v1595 = vsub.s32 %v1592, %v1594
        %v1596 = vrot.slane %v1582, %v1595
        %v1597 = vcombine.low %v1564, %v1580
        %v1598 = vcombine.high %v1564, %v1580
        %v1600 = vunpack.c.l.s4 1934713408
        %v1601 = vunpack.c.0.s8 %v1600
        %v1602 = vlaneseq
        %v1603 = vshrl.u32 %v1602, 7
        %v1604 = vsub.s32 %v1601, %v1603
        %v1605 = vrot.slane %v1597, %v1604
        %v1607 = vunpack.c.l.s4 1934713408
        %v1608 = vunpack.c.0.s8 %v1607
        %v1609 = vlaneseq
        %v1610 = vshrl.u32 %v1609, 7
        %v1611 = vsub.s32 %v1608, %v1610
        %v1612 = vrot.slane %v1598, %v1611
        %v1613 = vcombine.high %v1589, 0.0
        %v1614 = vcombine.high %v1596, 0.0
        %v1615 = vcombine.high %v1605, 0.0
        %v1616 = vcombine.high %v1612, 0.0
        %v1617 = vcombine.low %v1521, %v1528
        %v1619 = vunpack.c.l.s4 1983009808
        %v1620 = vunpack.c.0.s8 %v1619
        %v1621 = vlaneseq
        %v1622 = vshrl.u32 %v1621, 7
        %v1623 = vsub.s32 %v1620, %v1622
        %v1624 = vrot.slane %v1617, %v1623
        %v1625 = vcombine.low %v1545, %v1546
        %v1627 = vunpack.c.l.s4 1983009808
        %v1628 = vunpack.c.0.s8 %v1627
        %v1629 = vlaneseq
        %v1630 = vshrl.u32 %v1629, 7
        %v1631 = vsub.s32 %v1628, %v1630
        %v1632 = vrot.slane %v1625, %v1631
        %v1633 = vcombine.low %v1537, %v1544
        %v1635 = vunpack.c.l.s4 1983009808
        %v1636 = vunpack.c.0.s8 %v1635
        %v1637 = vlaneseq
        %v1638 = vshrl.u32 %v1637, 7
        %v1639 = vsub.s32 %v1636, %v1638
        %v1640 = vrot.slane %v1633, %v1639
        %v1641 = vcombine.low %v1547, %v1548
        %v1643 = vunpack.c.l.s4 1983009808
        %v1644 = vunpack.c.0.s8 %v1643
        %v1645 = vlaneseq
        %v1646 = vshrl.u32 %v1645, 7
        %v1647 = vsub.s32 %v1644, %v1646
        %v1648 = vrot.slane %v1641, %v1647
        %v1649 = vcombine.low %v1624, %v1632
        %v1650 = vcombine.high %v1624, %v1632
        %v1652 = vunpack.c.l.s4 1934713408
        %v1653 = vunpack.c.0.s8 %v1652
        %v1654 = vlaneseq
        %v1655 = vshrl.u32 %v1654, 7
        %v1656 = vsub.s32 %v1653, %v1655
        %v1657 = vrot.slane %v1649, %v1656
        %v1659 = vunpack.c.l.s4 1934713408
        %v1660 = vunpack.c.0.s8 %v1659
        %v1661 = vlaneseq
        %v1662 = vshrl.u32 %v1661, 7
        %v1663 = vsub.s32 %v1660, %v1662
        %v1664 = vrot.slane %v1650, %v1663
        %v1665 = vcombine.low %v1640, %v1648
        %v1666 = vcombine.high %v1640, %v1648
        %v1668 = vunpack.c.l.s4 1934713408
        %v1669 = vunpack.c.0.s8 %v1668
        %v1670 = vlaneseq
        %v1671 = vshrl.u32 %v1670, 7
        %v1672 = vsub.s32 %v1669, %v1671
        %v1673 = vrot.slane %v1665, %v1672
        %v1675 = vunpack.c.l.s4 1934713408
        %v1676 = vunpack.c.0.s8 %v1675
        %v1677 = vlaneseq
        %v1678 = vshrl.u32 %v1677, 7
        %v1679 = vsub.s32 %v1676, %v1678
        %v1680 = vrot.slane %v1666, %v1679
        %v1681 = vcombine.low %v1657, %v1673
        %v1682 = vcombine.high %v1657, %v1673
        %v1683 = vcombine.low %v1664, %v1680
        %v1684 = vcombine.high %v1664, %v1680
        %v1685 = vcombine.low %v1589, %v1596
        %v1687 = vunpack.c.l.s4 1983009808
        %v1688 = vunpack.c.0.s8 %v1687
        %v1689 = vlaneseq
        %v1690 = vshrl.u32 %v1689, 7
        %v1691 = vsub.s32 %v1688, %v1690
        %v1692 = vrot.slane %v1685, %v1691
        %v1693 = vcombine.low %v1613, %v1614
        %v1695 = vunpack.c.l.s4 1983009808
        %v1696 = vunpack.c.0.s8 %v1695
        %v1697 = vlaneseq
        %v1698 = vshrl.u32 %v1697, 7
        %v1699 = vsub.s32 %v1696, %v1698
        %v1700 = vrot.slane %v1693, %v1699
        %v1701 = vcombine.low %v1605, %v1612
        %v1703 = vunpack.c.l.s4 1983009808
        %v1704 = vunpack.c.0.s8 %v1703
        %v1705 = vlaneseq
        %v1706 = vshrl.u32 %v1705, 7
        %v1707 = vsub.s32 %v1704, %v1706
        %v1708 = vrot.slane %v1701, %v1707
        %v1709 = vcombine.low %v1615, %v1616
        %v1711 = vunpack.c.l.s4 1983009808
        %v1712 = vunpack.c.0.s8 %v1711
        %v1713 = vlaneseq
        %v1714 = vshrl.u32 %v1713, 7
        %v1715 = vsub.s32 %v1712, %v1714
        %v1716 = vrot.slane %v1709, %v1715
        %v1717 = vcombine.low %v1692, %v1700
        %v1718 = vcombine.high %v1692, %v1700
        %v1720 = vunpack.c.l.s4 1934713408
        %v1721 = vunpack.c.0.s8 %v1720
        %v1722 = vlaneseq
        %v1723 = vshrl.u32 %v1722, 7
        %v1724 = vsub.s32 %v1721, %v1723
        %v1725 = vrot.slane %v1717, %v1724
        %v1727 = vunpack.c.l.s4 1934713408
        %v1728 = vunpack.c.0.s8 %v1727
        %v1729 = vlaneseq
        %v1730 = vshrl.u32 %v1729, 7
        %v1731 = vsub.s32 %v1728, %v1730
        %v1732 = vrot.slane %v1718, %v1731
        %v1733 = vcombine.low %v1708, %v1716
        %v1734 = vcombine.high %v1708, %v1716
        %v1736 = vunpack.c.l.s4 1934713408
        %v1737 = vunpack.c.0.s8 %v1736
        %v1738 = vlaneseq
        %v1739 = vshrl.u32 %v1738, 7
        %v1740 = vsub.s32 %v1737, %v1739
        %v1741 = vrot.slane %v1733, %v1740
        %v1743 = vunpack.c.l.s4 1934713408
        %v1744 = vunpack.c.0.s8 %v1743
        %v1745 = vlaneseq
        %v1746 = vshrl.u32 %v1745, 7
        %v1747 = vsub.s32 %v1744, %v1746
        %v1748 = vrot.slane %v1734, %v1747
        %v1749 = vcombine.low %v1725, %v1741
        %v1750 = vcombine.high %v1725, %v1741
        %v1751 = vcombine.low %v1732, %v1748
        %v1752 = vcombine.high %v1732, %v1748
        %vm1753 = vcmask 261120
        %v1755 = vsel %vm1753, %v1097, 0
        %v1758 = vsel %vm1753, %v1165, 0
        %v1761 = vsel %vm1753, %v1389, 0
        %v1764 = vsel %vm1753, %v1457, 0
        %1766 = vmatprep.subr.mxu0 0.0
        %1767 = vmatpush1.xpose.msra.mxu0 %v1761
        %1768 = vmatprep.subr.mxu0 0.0
        %1769 = vmatpush1.xpose.msra.mxu0 %v1764
        %1770 = vmatprep.subr.mxu0 0.0
        %1771 = vmatpush1.xpose.msra.mxu0 0.0
        %1772 = vmatprep.subr.mxu0 0.0
        %1773 = vmatpush1.xpose.msra.mxu0 0.0
        %1774 = vmatprep.subr.mxu0 0.0
        %1775 = vmatpush1.xpose.msra.mxu0 0.0
        %1776 = vmatprep.subr.mxu0 0.0
        %1777 = vmatpush1.xpose.msra.mxu0 0.0
        %1778 = vmatprep.subr.mxu0 0.0
        %1779 = vmatpush1.xpose.msra.mxu0 0.0
        %1780 = vmatprep.subr.mxu0 0.0
        %1781 = vmatpush1.xpose.msra.mxu0 0.0
        %1782 = vmatprep.subr.mxu0 0.0
        %1783 = vmatpush1.xpose.msra.mxu0 0.0
        %1784 = vmatprep.subr.mxu0 0.0
        %1785 = vmatpush1.xpose.msra.mxu0 0.0
        %1786 = vmatprep.subr.mxu0 0.0
        %1787 = vmatpush1.xpose.msra.mxu0 0.0
        %1788 = vmatprep.subr.mxu0 0.0
        %1789 = vmatpush1.xpose.msra.mxu0 0.0
        %1790 = vmatprep.subr.mxu0 0.0
        %1791 = vmatpush1.xpose.msra.mxu0 0.0
        %1792 = vmatprep.subr.mxu0 0.0
        %1793 = vmatpush1.xpose.msra.mxu0 0.0
        %1794 = vmatprep.subr.mxu0 0.0
        %1795 = vmatpush1.xpose.msra.mxu0 0.0
        %1796 = vmatprep.subr.mxu0 0.0
        %1797 = vmatpush1.xpose.msra.mxu0 0.0
        %1798 = vmatprep.subr.mxu0 0.0
        %1799 = vmatpush1.xpose.msra.mxu0 0.0
        %1800 = vmatprep.subr.mxu0 0.0
        %1801 = vmatpush1.xpose.msra.mxu0 0.0
        %1802 = vmatprep.subr.mxu0 0.0
        %1803 = vmatpush1.xpose.msra.mxu0 0.0
        %1804 = vmatprep.subr.mxu0 0.0
        %1805 = vmatpush1.xpose.msra.mxu0 0.0
        %1806 = vmatprep.subr.mxu0 0.0
        %1807 = vmatpush1.xpose.msra.mxu0 0.0
        %1808 = vmatprep.subr.mxu0 0.0
        %1809 = vmatpush1.xpose.msra.mxu0 0.0
        %1810 = vmatprep.subr.mxu0 0.0
        %1811 = vmatpush1.xpose.msra.mxu0 0.0
        %1812 = vmatprep.subr.mxu0 0.0
        %1813 = vmatpush1.xpose.msra.mxu0 0.0
        %1814 = vmatprep.subr.mxu0 0.0
        %1815 = vmatpush1.xpose.msra.mxu0 0.0
        %1816 = vmatprep.subr.mxu0 0.0
        %1817 = vmatpush1.xpose.msra.mxu0 0.0
        %1818 = vmatprep.subr.mxu0 0.0
        %1819 = vmatpush1.xpose.msra.mxu0 0.0
        %1820 = vmatprep.subr.mxu0 0.0
        %1821 = vmatpush1.xpose.msra.mxu0 0.0
        %1822 = vmatprep.subr.mxu0 0.0
        %1823 = vmatpush1.xpose.msra.mxu0 0.0
        %1824 = vmatprep.subr.mxu0 0.0
        %1825 = vmatpush1.xpose.msra.mxu0 0.0
        %1826 = vmatprep.subr.mxu0 0.0
        %1827 = vmatpush1.xpose.msra.mxu0 0.0
        %1828 = vmatprep.subr.mxu0 0.0
        %1829 = vmatpush1.xpose.msra.mxu0 0.0
        %1830 = vmatprep.mubr.f32.mxu0 0.0
        %1831 = vmatmul.mubr.f32.gmra.mrb[0].mxu0 %v1755
        %v1832 = vpop.f32.mrb[0].mxu0
        %v1833 = vadd.f32 0.0, %v1832
        %v1834 = vpop.f32.mrb[0].mxu0
        %1835 = vmatprep.mubr.f32.mxu0 0.0
        %1836 = vmatmul.mubr.f32.gmra.mrb[0].mxu0 %v1758
        %v1837 = vpop.f32.mrb[0].mxu0
        %v1838 = vadd.f32 0.0, %v1837
        %v1839 = vpop.f32.mrb[0].mxu0
        %1840 = vdwg.mxu0
        %v1842 = vsel %vm1753, %v1098, 0
        %v1845 = vsel %vm1753, %v1166, 0
        %v1848 = vsel %vm1753, %v1390, 0
        %v1851 = vsel %vm1753, %v1458, 0
        %1853 = vmatprep.subr.mxu0 0.0
        %1854 = vmatpush1.xpose.msra.mxu0 %v1848
        %1855 = vmatprep.subr.mxu0 0.0
        %1856 = vmatpush1.xpose.msra.mxu0 %v1851
        %1857 = vmatprep.subr.mxu0 0.0
        %1858 = vmatpush1.xpose.msra.mxu0 0.0
        %1859 = vmatprep.subr.mxu0 0.0
        %1860 = vmatpush1.xpose.msra.mxu0 0.0
        %1861 = vmatprep.subr.mxu0 0.0
        %1862 = vmatpush1.xpose.msra.mxu0 0.0
        %1863 = vmatprep.subr.mxu0 0.0
        %1864 = vmatpush1.xpose.msra.mxu0 0.0
        %1865 = vmatprep.subr.mxu0 0.0
        %1866 = vmatpush1.xpose.msra.mxu0 0.0
        %1867 = vmatprep.subr.mxu0 0.0
        %1868 = vmatpush1.xpose.msra.mxu0 0.0
        %1869 = vmatprep.subr.mxu0 0.0
        %1870 = vmatpush1.xpose.msra.mxu0 0.0
        %1871 = vmatprep.subr.mxu0 0.0
        %1872 = vmatpush1.xpose.msra.mxu0 0.0
        %1873 = vmatprep.subr.mxu0 0.0
        %1874 = vmatpush1.xpose.msra.mxu0 0.0
        %1875 = vmatprep.subr.mxu0 0.0
        %1876 = vmatpush1.xpose.msra.mxu0 0.0
        %1877 = vmatprep.subr.mxu0 0.0
        %1878 = vmatpush1.xpose.msra.mxu0 0.0
        %1879 = vmatprep.subr.mxu0 0.0
        %1880 = vmatpush1.xpose.msra.mxu0 0.0
        %1881 = vmatprep.subr.mxu0 0.0
        %1882 = vmatpush1.xpose.msra.mxu0 0.0
        %1883 = vmatprep.subr.mxu0 0.0
        %1884 = vmatpush1.xpose.msra.mxu0 0.0
        %1885 = vmatprep.subr.mxu0 0.0
        %1886 = vmatpush1.xpose.msra.mxu0 0.0
        %1887 = vmatprep.subr.mxu0 0.0
        %1888 = vmatpush1.xpose.msra.mxu0 0.0
        %1889 = vmatprep.subr.mxu0 0.0
        %1890 = vmatpush1.xpose.msra.mxu0 0.0
        %1891 = vmatprep.subr.mxu0 0.0
        %1892 = vmatpush1.xpose.msra.mxu0 0.0
        %1893 = vmatprep.subr.mxu0 0.0
        %1894 = vmatpush1.xpose.msra.mxu0 0.0
        %1895 = vmatprep.subr.mxu0 0.0
        %1896 = vmatpush1.xpose.msra.mxu0 0.0
        %1897 = vmatprep.subr.mxu0 0.0
        %1898 = vmatpush1.xpose.msra.mxu0 0.0
        %1899 = vmatprep.subr.mxu0 0.0
        %1900 = vmatpush1.xpose.msra.mxu0 0.0
        %1901 = vmatprep.subr.mxu0 0.0
        %1902 = vmatpush1.xpose.msra.mxu0 0.0
        %1903 = vmatprep.subr.mxu0 0.0
        %1904 = vmatpush1.xpose.msra.mxu0 0.0
        %1905 = vmatprep.subr.mxu0 0.0
        %1906 = vmatpush1.xpose.msra.mxu0 0.0
        %1907 = vmatprep.subr.mxu0 0.0
        %1908 = vmatpush1.xpose.msra.mxu0 0.0
        %1909 = vmatprep.subr.mxu0 0.0
        %1910 = vmatpush1.xpose.msra.mxu0 0.0
        %1911 = vmatprep.subr.mxu0 0.0
        %1912 = vmatpush1.xpose.msra.mxu0 0.0
        %1913 = vmatprep.subr.mxu0 0.0
        %1914 = vmatpush1.xpose.msra.mxu0 0.0
        %1915 = vmatprep.subr.mxu0 0.0
        %1916 = vmatpush1.xpose.msra.mxu0 0.0
        %1917 = vmatprep.mubr.f32.mxu0 0.0
        %1918 = vmatmul.mubr.f32.gmra.mrb[0].mxu0 %v1842
        %v1919 = vpop.f32.mrb[0].mxu0
        %v1920 = vadd.f32 0.0, %v1919
        %v1921 = vpop.f32.mrb[0].mxu0
        %1922 = vmatprep.mubr.f32.mxu0 0.0
        %1923 = vmatmul.mubr.f32.gmra.mrb[0].mxu0 %v1845
        %v1924 = vpop.f32.mrb[0].mxu0
        %v1925 = vadd.f32 0.0, %v1924
        %v1926 = vpop.f32.mrb[0].mxu0
        %1927 = vdwg.mxu0
        %v1929 = vsel %vm1753, %v1099, 0
        %v1932 = vsel %vm1753, %v1167, 0
        %v1935 = vsel %vm1753, %v1391, 0
        %v1938 = vsel %vm1753, %v1459, 0
        %1940 = vmatprep.subr.mxu0 0.0
        %1941 = vmatpush1.xpose.msra.mxu0 %v1935
        %1942 = vmatprep.subr.mxu0 0.0
        %1943 = vmatpush1.xpose.msra.mxu0 %v1938
        %1944 = vmatprep.subr.mxu0 0.0
        %1945 = vmatpush1.xpose.msra.mxu0 0.0
        %1946 = vmatprep.subr.mxu0 0.0
        %1947 = vmatpush1.xpose.msra.mxu0 0.0
        %1948 = vmatprep.subr.mxu0 0.0
        %1949 = vmatpush1.xpose.msra.mxu0 0.0
        %1950 = vmatprep.subr.mxu0 0.0
        %1951 = vmatpush1.xpose.msra.mxu0 0.0
        %1952 = vmatprep.subr.mxu0 0.0
        %1953 = vmatpush1.xpose.msra.mxu0 0.0
        %1954 = vmatprep.subr.mxu0 0.0
        %1955 = vmatpush1.xpose.msra.mxu0 0.0
        %1956 = vmatprep.subr.mxu0 0.0
        %1957 = vmatpush1.xpose.msra.mxu0 0.0
        %1958 = vmatprep.subr.mxu0 0.0
        %1959 = vmatpush1.xpose.msra.mxu0 0.0
        %1960 = vmatprep.subr.mxu0 0.0
        %1961 = vmatpush1.xpose.msra.mxu0 0.0
        %1962 = vmatprep.subr.mxu0 0.0
        %1963 = vmatpush1.xpose.msra.mxu0 0.0
        %1964 = vmatprep.subr.mxu0 0.0
        %1965 = vmatpush1.xpose.msra.mxu0 0.0
        %1966 = vmatprep.subr.mxu0 0.0
        %1967 = vmatpush1.xpose.msra.mxu0 0.0
        %1968 = vmatprep.subr.mxu0 0.0
        %1969 = vmatpush1.xpose.msra.mxu0 0.0
        %1970 = vmatprep.subr.mxu0 0.0
        %1971 = vmatpush1.xpose.msra.mxu0 0.0
        %1972 = vmatprep.subr.mxu0 0.0
        %1973 = vmatpush1.xpose.msra.mxu0 0.0
        %1974 = vmatprep.subr.mxu0 0.0
        %1975 = vmatpush1.xpose.msra.mxu0 0.0
        %1976 = vmatprep.subr.mxu0 0.0
        %1977 = vmatpush1.xpose.msra.mxu0 0.0
        %1978 = vmatprep.subr.mxu0 0.0
        %1979 = vmatpush1.xpose.msra.mxu0 0.0
        %1980 = vmatprep.subr.mxu0 0.0
        %1981 = vmatpush1.xpose.msra.mxu0 0.0
        %1982 = vmatprep.subr.mxu0 0.0
        %1983 = vmatpush1.xpose.msra.mxu0 0.0
        %1984 = vmatprep.subr.mxu0 0.0
        %1985 = vmatpush1.xpose.msra.mxu0 0.0
        %1986 = vmatprep.subr.mxu0 0.0
        %1987 = vmatpush1.xpose.msra.mxu0 0.0
        %1988 = vmatprep.subr.mxu0 0.0
        %1989 = vmatpush1.xpose.msra.mxu0 0.0
        %1990 = vmatprep.subr.mxu0 0.0
        %1991 = vmatpush1.xpose.msra.mxu0 0.0
        %1992 = vmatprep.subr.mxu0 0.0
        %1993 = vmatpush1.xpose.msra.mxu0 0.0
        %1994 = vmatprep.subr.mxu0 0.0
        %1995 = vmatpush1.xpose.msra.mxu0 0.0
        %1996 = vmatprep.subr.mxu0 0.0
        %1997 = vmatpush1.xpose.msra.mxu0 0.0
        %1998 = vmatprep.subr.mxu0 0.0
        %1999 = vmatpush1.xpose.msra.mxu0 0.0
        %2000 = vmatprep.subr.mxu0 0.0
        %2001 = vmatpush1.xpose.msra.mxu0 0.0
        %2002 = vmatprep.subr.mxu0 0.0
        %2003 = vmatpush1.xpose.msra.mxu0 0.0
        %2004 = vmatprep.mubr.f32.mxu0 0.0
        %2005 = vmatmul.mubr.f32.gmra.mrb[0].mxu0 %v1929
        %v2006 = vpop.f32.mrb[0].mxu0
        %v2007 = vadd.f32 0.0, %v2006
        %v2008 = vpop.f32.mrb[0].mxu0
        %2009 = vmatprep.mubr.f32.mxu0 0.0
        %2010 = vmatmul.mubr.f32.gmra.mrb[0].mxu0 %v1932
        %v2011 = vpop.f32.mrb[0].mxu0
        %v2012 = vadd.f32 0.0, %v2011
        %v2013 = vpop.f32.mrb[0].mxu0
        %2014 = vdwg.mxu0
        %v2016 = vsel %vm1753, %v1100, 0
        %v2019 = vsel %vm1753, %v1168, 0
        %v2022 = vsel %vm1753, %v1392, 0
        %v2025 = vsel %vm1753, %v1460, 0
        %2027 = vmatprep.subr.mxu0 0.0
        %2028 = vmatpush1.xpose.msra.mxu0 %v2022
        %2029 = vmatprep.subr.mxu0 0.0
        %2030 = vmatpush1.xpose.msra.mxu0 %v2025
        %2031 = vmatprep.subr.mxu0 0.0
        %2032 = vmatpush1.xpose.msra.mxu0 0.0
        %2033 = vmatprep.subr.mxu0 0.0
        %2034 = vmatpush1.xpose.msra.mxu0 0.0
        %2035 = vmatprep.subr.mxu0 0.0
        %2036 = vmatpush1.xpose.msra.mxu0 0.0
        %2037 = vmatprep.subr.mxu0 0.0
        %2038 = vmatpush1.xpose.msra.mxu0 0.0
        %2039 = vmatprep.subr.mxu0 0.0
        %2040 = vmatpush1.xpose.msra.mxu0 0.0
        %2041 = vmatprep.subr.mxu0 0.0
        %2042 = vmatpush1.xpose.msra.mxu0 0.0
        %2043 = vmatprep.subr.mxu0 0.0
        %2044 = vmatpush1.xpose.msra.mxu0 0.0
        %2045 = vmatprep.subr.mxu0 0.0
        %2046 = vmatpush1.xpose.msra.mxu0 0.0
        %2047 = vmatprep.subr.mxu0 0.0
        %2048 = vmatpush1.xpose.msra.mxu0 0.0
        %2049 = vmatprep.subr.mxu0 0.0
        %2050 = vmatpush1.xpose.msra.mxu0 0.0
        %2051 = vmatprep.subr.mxu0 0.0
        %2052 = vmatpush1.xpose.msra.mxu0 0.0
        %2053 = vmatprep.subr.mxu0 0.0
        %2054 = vmatpush1.xpose.msra.mxu0 0.0
        %2055 = vmatprep.subr.mxu0 0.0
        %2056 = vmatpush1.xpose.msra.mxu0 0.0
        %2057 = vmatprep.subr.mxu0 0.0
        %2058 = vmatpush1.xpose.msra.mxu0 0.0
        %2059 = vmatprep.subr.mxu0 0.0
        %2060 = vmatpush1.xpose.msra.mxu0 0.0
        %2061 = vmatprep.subr.mxu0 0.0
        %2062 = vmatpush1.xpose.msra.mxu0 0.0
        %2063 = vmatprep.subr.mxu0 0.0
        %2064 = vmatpush1.xpose.msra.mxu0 0.0
        %2065 = vmatprep.subr.mxu0 0.0
        %2066 = vmatpush1.xpose.msra.mxu0 0.0
        %2067 = vmatprep.subr.mxu0 0.0
        %2068 = vmatpush1.xpose.msra.mxu0 0.0
        %2069 = vmatprep.subr.mxu0 0.0
        %2070 = vmatpush1.xpose.msra.mxu0 0.0
        %2071 = vmatprep.subr.mxu0 0.0
        %2072 = vmatpush1.xpose.msra.mxu0 0.0
        %2073 = vmatprep.subr.mxu0 0.0
        %2074 = vmatpush1.xpose.msra.mxu0 0.0
        %2075 = vmatprep.subr.mxu0 0.0
        %2076 = vmatpush1.xpose.msra.mxu0 0.0
        %2077 = vmatprep.subr.mxu0 0.0
        %2078 = vmatpush1.xpose.msra.mxu0 0.0
        %2079 = vmatprep.subr.mxu0 0.0
        %2080 = vmatpush1.xpose.msra.mxu0 0.0
        %2081 = vmatprep.subr.mxu0 0.0
        %2082 = vmatpush1.xpose.msra.mxu0 0.0
        %2083 = vmatprep.subr.mxu0 0.0
        %2084 = vmatpush1.xpose.msra.mxu0 0.0
        %2085 = vmatprep.subr.mxu0 0.0
        %2086 = vmatpush1.xpose.msra.mxu0 0.0
        %2087 = vmatprep.subr.mxu0 0.0
        %2088 = vmatpush1.xpose.msra.mxu0 0.0
        %2089 = vmatprep.subr.mxu0 0.0
        %2090 = vmatpush1.xpose.msra.mxu0 0.0
        %2091 = vmatprep.mubr.f32.mxu0 0.0
        %2092 = vmatmul.mubr.f32.gmra.mrb[0].mxu0 %v2016
        %v2093 = vpop.f32.mrb[0].mxu0
        %v2094 = vadd.f32 0.0, %v2093
        %v2095 = vpop.f32.mrb[0].mxu0
        %2096 = vmatprep.mubr.f32.mxu0 0.0
        %2097 = vmatmul.mubr.f32.gmra.mrb[0].mxu0 %v2019
        %v2098 = vpop.f32.mrb[0].mxu0
        %v2099 = vadd.f32 0.0, %v2098
        %v2100 = vpop.f32.mrb[0].mxu0
        %2101 = vdwg.mxu0
        %v2102 = vmul.f32 %v1833, 0.17677669
        %v2103 = vmul.f32 %v1838, 0.17677669
        %v2104 = vmul.f32 %v1920, 0.17677669
        %v2105 = vmul.f32 %v1925, 0.17677669
        %v2106 = vmul.f32 %v2007, 0.17677669
        %v2107 = vmul.f32 %v2012, 0.17677669
        %v2108 = vmul.f32 %v2094, 0.17677669
        %v2109 = vmul.f32 %v2099, 0.17677669
        %v2110 = vlaneseq
        %v2111 = vshrl.u32 %v2110, 7
        %v2112 = vadd.s32 %v2111, 8
        %v2113 = vlaneseq
        %v2114 = vand.u32 %v2113, 127
        %vm2115 = vcmp.ge.s32.totalorder %v2111, %v2114
        %vm2116 = vcmp.ge.s32.totalorder %v2112, %v2114
        %v2117 = vsel %vm2115, 1, 0
        %v2118 = vsel %vm2116, 1, 0
        %vm2119 = vcmp.eq.s32.totalorder %v2117, 1
        %vm2120 = vcmp.eq.s32.totalorder %v2118, 1
        %v2121 = vsel %vm2119, %v2102, -1e+30
        %v2122 = vsel %vm2120, %v2103, -1e+30
        %v2123 = vsel %vm2119, %v2104, -1e+30
        %v2124 = vsel %vm2120, %v2105, -1e+30
        %v2125 = vsel %vm2119, %v2106, -1e+30
        %v2126 = vsel %vm2120, %v2107, -1e+30
        %v2127 = vsel %vm2119, %v2108, -1e+30
        %v2128 = vsel %vm2120, %v2109, -1e+30
        %vm2129 = vcmask 130048
        %v2130 = vsel %vm2129, %v2121, -inf
        %2131 = vmax.xlane.f32.xlu0 %v2130
        %v2132 = vpop.xlane.xlu0 %2131
        %v2133 = vsel %vm2129, %v2122, -inf
        %2134 = vmax.xlane.f32.xlu0 %v2133
        %v2135 = vpop.xlane.xlu0 %2134
        %v2136 = vsel %vm2129, %v2123, -inf
        %2137 = vmax.xlane.f32.xlu0 %v2136
        %v2138 = vpop.xlane.xlu0 %2137
        %v2139 = vsel %vm2129, %v2124, -inf
        %2140 = vmax.xlane.f32.xlu0 %v2139
        %v2141 = vpop.xlane.xlu0 %2140
        %v2142 = vsel %vm2129, %v2125, -inf
        %2143 = vmax.xlane.f32.xlu0 %v2142
        %v2144 = vpop.xlane.xlu0 %2143
        %v2145 = vsel %vm2129, %v2126, -inf
        %2146 = vmax.xlane.f32.xlu0 %v2145
        %v2147 = vpop.xlane.xlu0 %2146
        %v2148 = vsel %vm2129, %v2127, -inf
        %2149 = vmax.xlane.f32.xlu0 %v2148
        %v2150 = vpop.xlane.xlu0 %2149
        %v2151 = vsel %vm2129, %v2128, -inf
        %2152 = vmax.xlane.f32.xlu0 %v2151
        %v2153 = vpop.xlane.xlu0 %2152
        %v2154 = vsub.f32 %v2121, %v2132
        %v2155 = vsub.f32 %v2122, %v2135
        %v2156 = vsub.f32 %v2123, %v2138
        %v2157 = vsub.f32 %v2124, %v2141
        %v2158 = vsub.f32 %v2125, %v2144
        %v2159 = vsub.f32 %v2126, %v2147
        %v2160 = vsub.f32 %v2127, %v2150
        %v2161 = vsub.f32 %v2128, %v2153
        %v2162 = vmul.f32 %v2154, 1.442695
        %v2163 = vpow.pop %v2162
        %v2164 = vmul.f32 %v2155, 1.442695
        %v2165 = vpow.pop %v2164
        %v2166 = vmul.f32 %v2156, 1.442695
        %v2167 = vpow.pop %v2166
        %v2168 = vmul.f32 %v2157, 1.442695
        %v2169 = vpow.pop %v2168
        %v2170 = vmul.f32 %v2158, 1.442695
        %v2171 = vpow.pop %v2170
        %v2172 = vmul.f32 %v2159, 1.442695
        %v2173 = vpow.pop %v2172
        %v2174 = vmul.f32 %v2160, 1.442695
        %v2175 = vpow.pop %v2174
        %v2176 = vmul.f32 %v2161, 1.442695
        %v2177 = vpow.pop %v2176
        %v2178 = vsel %vm2129, %v2163, 0.0
        %2179 = vadd.xlane.f32.xlu0 %v2178
        %v2180 = vpop.xlane.xlu0 %2179
        %v2181 = vsel %vm2129, %v2165, 0.0
        %2182 = vadd.xlane.f32.xlu0 %v2181
        %v2183 = vpop.xlane.xlu0 %2182
        %v2184 = vsel %vm2129, %v2167, 0.0
        %2185 = vadd.xlane.f32.xlu0 %v2184
        %v2186 = vpop.xlane.xlu0 %2185
        %v2187 = vsel %vm2129, %v2169, 0.0
        %2188 = vadd.xlane.f32.xlu0 %v2187
        %v2189 = vpop.xlane.xlu0 %2188
        %v2190 = vsel %vm2129, %v2171, 0.0
        %2191 = vadd.xlane.f32.xlu0 %v2190
        %v2192 = vpop.xlane.xlu0 %2191
        %v2193 = vsel %vm2129, %v2173, 0.0
        %2194 = vadd.xlane.f32.xlu0 %v2193
        %v2195 = vpop.xlane.xlu0 %2194
        %v2196 = vsel %vm2129, %v2175, 0.0
        %2197 = vadd.xlane.f32.xlu0 %v2196
        %v2198 = vpop.xlane.xlu0 %2197
        %v2199 = vsel %vm2129, %v2177, 0.0
        %2200 = vadd.xlane.f32.xlu0 %v2199
        %v2201 = vpop.xlane.xlu0 %2200
        %v2202 = vrcp.pop %v2180
        %v2203 = vrcp.pop %v2183
        %v2204 = vrcp.pop %v2186
        %v2205 = vrcp.pop %v2189
        %v2206 = vrcp.pop %v2192
        %v2207 = vrcp.pop %v2195
        %v2208 = vrcp.pop %v2198
        %v2209 = vrcp.pop %v2201
        %v2210 = vmul.f32 %v2163, %v2202
        %v2211 = vmul.f32 %v2165, %v2203
        %v2212 = vmul.f32 %v2167, %v2204
        %v2213 = vmul.f32 %v2169, %v2205
        %v2214 = vmul.f32 %v2171, %v2206
        %v2215 = vmul.f32 %v2173, %v2207
        %v2216 = vmul.f32 %v2175, %v2208
        %v2217 = vmul.f32 %v2177, %v2209
        %v2219 = vsel %vm2129, %v2210, 0
        %v2222 = vsel %vm2129, %v2211, 0
        %2224 = vmatprep.subr.mxu0 0.0
        %2225 = vmatpush1.msra.mxu0 %v1681
        %2226 = vmatprep.subr.mxu0 0.0
        %2227 = vmatpush1.msra.mxu0 %v1749
        %2228 = vmatprep.subr.mxu0 0.0
        %2229 = vmatpush1.msra.mxu0 0.0
        %2230 = vmatprep.subr.mxu0 0.0
        %2231 = vmatpush1.msra.mxu0 0.0
        %2232 = vmatprep.subr.mxu0 0.0
        %2233 = vmatpush1.msra.mxu0 0.0
        %2234 = vmatprep.subr.mxu0 0.0
        %2235 = vmatpush1.msra.mxu0 0.0
        %2236 = vmatprep.subr.mxu0 0.0
        %2237 = vmatpush1.msra.mxu0 0.0
        %2238 = vmatprep.subr.mxu0 0.0
        %2239 = vmatpush1.msra.mxu0 0.0
        %2240 = vmatprep.subr.mxu0 0.0
        %2241 = vmatpush1.msra.mxu0 0.0
        %2242 = vmatprep.subr.mxu0 0.0
        %2243 = vmatpush1.msra.mxu0 0.0
        %2244 = vmatprep.subr.mxu0 0.0
        %2245 = vmatpush1.msra.mxu0 0.0
        %2246 = vmatprep.subr.mxu0 0.0
        %2247 = vmatpush1.msra.mxu0 0.0
        %2248 = vmatprep.subr.mxu0 0.0
        %2249 = vmatpush1.msra.mxu0 0.0
        %2250 = vmatprep.subr.mxu0 0.0
        %2251 = vmatpush1.msra.mxu0 0.0
        %2252 = vmatprep.subr.mxu0 0.0
        %2253 = vmatpush1.msra.mxu0 0.0
        %2254 = vmatprep.subr.mxu0 0.0
        %2255 = vmatpush1.msra.mxu0 0.0
        %2256 = vmatprep.subr.mxu0 0.0
        %2257 = vmatpush1.msra.mxu0 0.0
        %2258 = vmatprep.subr.mxu0 0.0
        %2259 = vmatpush1.msra.mxu0 0.0
        %2260 = vmatprep.subr.mxu0 0.0
        %2261 = vmatpush1.msra.mxu0 0.0
        %2262 = vmatprep.subr.mxu0 0.0
        %2263 = vmatpush1.msra.mxu0 0.0
        %2264 = vmatprep.subr.mxu0 0.0
        %2265 = vmatpush1.msra.mxu0 0.0
        %2266 = vmatprep.subr.mxu0 0.0
        %2267 = vmatpush1.msra.mxu0 0.0
        %2268 = vmatprep.subr.mxu0 0.0
        %2269 = vmatpush1.msra.mxu0 0.0
        %2270 = vmatprep.subr.mxu0 0.0
        %2271 = vmatpush1.msra.mxu0 0.0
        %2272 = vmatprep.subr.mxu0 0.0
        %2273 = vmatpush1.msra.mxu0 0.0
        %2274 = vmatprep.subr.mxu0 0.0
        %2275 = vmatpush1.msra.mxu0 0.0
        %2276 = vmatprep.subr.mxu0 0.0
        %2277 = vmatpush1.msra.mxu0 0.0
        %2278 = vmatprep.subr.mxu0 0.0
        %2279 = vmatpush1.msra.mxu0 0.0
        %2280 = vmatprep.subr.mxu0 0.0
        %2281 = vmatpush1.msra.mxu0 0.0
        %2282 = vmatprep.subr.mxu0 0.0
        %2283 = vmatpush1.msra.mxu0 0.0
        %2284 = vmatprep.subr.mxu0 0.0
        %2285 = vmatpush1.msra.mxu0 0.0
        %2286 = vmatprep.subr.mxu0 0.0
        %2287 = vmatpush1.msra.mxu0 0.0
        %2288 = vmatprep.mubr.f32.mxu0 0.0
        %2289 = vmatmul.mubr.f32.gmra.mrb[0].mxu0 %v2219
        %v2290 = vpop.f32.mrb[0].mxu0
        %v2291 = vadd.f32 0.0, %v2290
        %v2292 = vpop.f32.mrb[0].mxu0
        %2293 = vmatprep.mubr.f32.mxu0 0.0
        %2294 = vmatmul.mubr.f32.gmra.mrb[0].mxu0 %v2222
        %v2295 = vpop.f32.mrb[0].mxu0
        %v2296 = vadd.f32 0.0, %v2295
        %v2297 = vpop.f32.mrb[0].mxu0
        %2298 = vdwg.mxu0
        %v2300 = vsel %vm2129, %v2212, 0
        %v2303 = vsel %vm2129, %v2213, 0
        %2305 = vmatprep.subr.mxu0 0.0
        %2306 = vmatpush1.msra.mxu0 %v1682
        %2307 = vmatprep.subr.mxu0 0.0
        %2308 = vmatpush1.msra.mxu0 %v1750
        %2309 = vmatprep.subr.mxu0 0.0
        %2310 = vmatpush1.msra.mxu0 0.0
        %2311 = vmatprep.subr.mxu0 0.0
        %2312 = vmatpush1.msra.mxu0 0.0
        %2313 = vmatprep.subr.mxu0 0.0
        %2314 = vmatpush1.msra.mxu0 0.0
        %2315 = vmatprep.subr.mxu0 0.0
        %2316 = vmatpush1.msra.mxu0 0.0
        %2317 = vmatprep.subr.mxu0 0.0
        %2318 = vmatpush1.msra.mxu0 0.0
        %2319 = vmatprep.subr.mxu0 0.0
        %2320 = vmatpush1.msra.mxu0 0.0
        %2321 = vmatprep.subr.mxu0 0.0
        %2322 = vmatpush1.msra.mxu0 0.0
        %2323 = vmatprep.subr.mxu0 0.0
        %2324 = vmatpush1.msra.mxu0 0.0
        %2325 = vmatprep.subr.mxu0 0.0
        %2326 = vmatpush1.msra.mxu0 0.0
        %2327 = vmatprep.subr.mxu0 0.0
        %2328 = vmatpush1.msra.mxu0 0.0
        %2329 = vmatprep.subr.mxu0 0.0
        %2330 = vmatpush1.msra.mxu0 0.0
        %2331 = vmatprep.subr.mxu0 0.0
        %2332 = vmatpush1.msra.mxu0 0.0
        %2333 = vmatprep.subr.mxu0 0.0
        %2334 = vmatpush1.msra.mxu0 0.0
        %2335 = vmatprep.subr.mxu0 0.0
        %2336 = vmatpush1.msra.mxu0 0.0
        %2337 = vmatprep.subr.mxu0 0.0
        %2338 = vmatpush1.msra.mxu0 0.0
        %2339 = vmatprep.subr.mxu0 0.0
        %2340 = vmatpush1.msra.mxu0 0.0
        %2341 = vmatprep.subr.mxu0 0.0
        %2342 = vmatpush1.msra.mxu0 0.0
        %2343 = vmatprep.subr.mxu0 0.0
        %2344 = vmatpush1.msra.mxu0 0.0
        %2345 = vmatprep.subr.mxu0 0.0
        %2346 = vmatpush1.msra.mxu0 0.0
        %2347 = vmatprep.subr.mxu0 0.0
        %2348 = vmatpush1.msra.mxu0 0.0
        %2349 = vmatprep.subr.mxu0 0.0
        %2350 = vmatpush1.msra.mxu0 0.0
        %2351 = vmatprep.subr.mxu0 0.0
        %2352 = vmatpush1.msra.mxu0 0.0
        %2353 = vmatprep.subr.mxu0 0.0
        %2354 = vmatpush1.msra.mxu0 0.0
        %2355 = vmatprep.subr.mxu0 0.0
        %2356 = vmatpush1.msra.mxu0 0.0
        %2357 = vmatprep.subr.mxu0 0.0
        %2358 = vmatpush1.msra.mxu0 0.0
        %2359 = vmatprep.subr.mxu0 0.0
        %2360 = vmatpush1.msra.mxu0 0.0
        %2361 = vmatprep.subr.mxu0 0.0
        %2362 = vmatpush1.msra.mxu0 0.0
        %2363 = vmatprep.subr.mxu0 0.0
        %2364 = vmatpush1.msra.mxu0 0.0
        %2365 = vmatprep.subr.mxu0 0.0
        %2366 = vmatpush1.msra.mxu0 0.0
        %2367 = vmatprep.subr.mxu0 0.0
        %2368 = vmatpush1.msra.mxu0 0.0
        %2369 = vmatprep.mubr.f32.mxu0 0.0
        %2370 = vmatmul.mubr.f32.gmra.mrb[0].mxu0 %v2300
        %v2371 = vpop.f32.mrb[0].mxu0
        %v2372 = vadd.f32 0.0, %v2371
        %v2373 = vpop.f32.mrb[0].mxu0
        %2374 = vmatprep.mubr.f32.mxu0 0.0
        %2375 = vmatmul.mubr.f32.gmra.mrb[0].mxu0 %v2303
        %v2376 = vpop.f32.mrb[0].mxu0
        %v2377 = vadd.f32 0.0, %v2376
        %v2378 = vpop.f32.mrb[0].mxu0
        %2379 = vdwg.mxu0
        %v2381 = vsel %vm2129, %v2214, 0
        %v2384 = vsel %vm2129, %v2215, 0
        %2386 = vmatprep.subr.mxu0 0.0
        %2387 = vmatpush1.msra.mxu0 %v1683
        %2388 = vmatprep.subr.mxu0 0.0
        %2389 = vmatpush1.msra.mxu0 %v1751
        %2390 = vmatprep.subr.mxu0 0.0
        %2391 = vmatpush1.msra.mxu0 0.0
        %2392 = vmatprep.subr.mxu0 0.0
        %2393 = vmatpush1.msra.mxu0 0.0
        %2394 = vmatprep.subr.mxu0 0.0
        %2395 = vmatpush1.msra.mxu0 0.0
        %2396 = vmatprep.subr.mxu0 0.0
        %2397 = vmatpush1.msra.mxu0 0.0
        %2398 = vmatprep.subr.mxu0 0.0
        %2399 = vmatpush1.msra.mxu0 0.0
        %2400 = vmatprep.subr.mxu0 0.0
        %2401 = vmatpush1.msra.mxu0 0.0
        %2402 = vmatprep.subr.mxu0 0.0
        %2403 = vmatpush1.msra.mxu0 0.0
        %2404 = vmatprep.subr.mxu0 0.0
        %2405 = vmatpush1.msra.mxu0 0.0
        %2406 = vmatprep.subr.mxu0 0.0
        %2407 = vmatpush1.msra.mxu0 0.0
        %2408 = vmatprep.subr.mxu0 0.0
        %2409 = vmatpush1.msra.mxu0 0.0
        %2410 = vmatprep.subr.mxu0 0.0
        %2411 = vmatpush1.msra.mxu0 0.0
        %2412 = vmatprep.subr.mxu0 0.0
        %2413 = vmatpush1.msra.mxu0 0.0
        %2414 = vmatprep.subr.mxu0 0.0
        %2415 = vmatpush1.msra.mxu0 0.0
        %2416 = vmatprep.subr.mxu0 0.0
        %2417 = vmatpush1.msra.mxu0 0.0
        %2418 = vmatprep.subr.mxu0 0.0
        %2419 = vmatpush1.msra.mxu0 0.0
        %2420 = vmatprep.subr.mxu0 0.0
        %2421 = vmatpush1.msra.mxu0 0.0
        %2422 = vmatprep.subr.mxu0 0.0
        %2423 = vmatpush1.msra.mxu0 0.0
        %2424 = vmatprep.subr.mxu0 0.0
        %2425 = vmatpush1.msra.mxu0 0.0
        %2426 = vmatprep.subr.mxu0 0.0
        %2427 = vmatpush1.msra.mxu0 0.0
        %2428 = vmatprep.subr.mxu0 0.0
        %2429 = vmatpush1.msra.mxu0 0.0
        %2430 = vmatprep.subr.mxu0 0.0
        %2431 = vmatpush1.msra.mxu0 0.0
        %2432 = vmatprep.subr.mxu0 0.0
        %2433 = vmatpush1.msra.mxu0 0.0
        %2434 = vmatprep.subr.mxu0 0.0
        %2435 = vmatpush1.msra.mxu0 0.0
        %2436 = vmatprep.subr.mxu0 0.0
        %2437 = vmatpush1.msra.mxu0 0.0
        %2438 = vmatprep.subr.mxu0 0.0
        %2439 = vmatpush1.msra.mxu0 0.0
        %2440 = vmatprep.subr.mxu0 0.0
        %2441 = vmatpush1.msra.mxu0 0.0
        %2442 = vmatprep.subr.mxu0 0.0
        %2443 = vmatpush1.msra.mxu0 0.0
        %2444 = vmatprep.subr.mxu0 0.0
        %2445 = vmatpush1.msra.mxu0 0.0
        %2446 = vmatprep.subr.mxu0 0.0
        %2447 = vmatpush1.msra.mxu0 0.0
        %2448 = vmatprep.subr.mxu0 0.0
        %2449 = vmatpush1.msra.mxu0 0.0
        %2450 = vmatprep.mubr.f32.mxu0 0.0
        %2451 = vmatmul.mubr.f32.gmra.mrb[0].mxu0 %v2381
        %v2452 = vpop.f32.mrb[0].mxu0
        %v2453 = vadd.f32 0.0, %v2452
        %v2454 = vpop.f32.mrb[0].mxu0
        %2455 = vmatprep.mubr.f32.mxu0 0.0
        %2456 = vmatmul.mubr.f32.gmra.mrb[0].mxu0 %v2384
        %v2457 = vpop.f32.mrb[0].mxu0
        %v2458 = vadd.f32 0.0, %v2457
        %v2459 = vpop.f32.mrb[0].mxu0
        %2460 = vdwg.mxu0
        %v2462 = vsel %vm2129, %v2216, 0
        %v2465 = vsel %vm2129, %v2217, 0
        %2467 = vmatprep.subr.mxu0 0.0
        %2468 = vmatpush1.msra.mxu0 %v1684
        %2469 = vmatprep.subr.mxu0 0.0
        %2470 = vmatpush1.msra.mxu0 %v1752
        %2471 = vmatprep.subr.mxu0 0.0
        %2472 = vmatpush1.msra.mxu0 0.0
        %2473 = vmatprep.subr.mxu0 0.0
        %2474 = vmatpush1.msra.mxu0 0.0
        %2475 = vmatprep.subr.mxu0 0.0
        %2476 = vmatpush1.msra.mxu0 0.0
        %2477 = vmatprep.subr.mxu0 0.0
        %2478 = vmatpush1.msra.mxu0 0.0
        %2479 = vmatprep.subr.mxu0 0.0
        %2480 = vmatpush1.msra.mxu0 0.0
        %2481 = vmatprep.subr.mxu0 0.0
        %2482 = vmatpush1.msra.mxu0 0.0
        %2483 = vmatprep.subr.mxu0 0.0
        %2484 = vmatpush1.msra.mxu0 0.0
        %2485 = vmatprep.subr.mxu0 0.0
        %2486 = vmatpush1.msra.mxu0 0.0
        %2487 = vmatprep.subr.mxu0 0.0
        %2488 = vmatpush1.msra.mxu0 0.0
        %2489 = vmatprep.subr.mxu0 0.0
        %2490 = vmatpush1.msra.mxu0 0.0
        %2491 = vmatprep.subr.mxu0 0.0
        %2492 = vmatpush1.msra.mxu0 0.0
        %2493 = vmatprep.subr.mxu0 0.0
        %2494 = vmatpush1.msra.mxu0 0.0
        %2495 = vmatprep.subr.mxu0 0.0
        %2496 = vmatpush1.msra.mxu0 0.0
        %2497 = vmatprep.subr.mxu0 0.0
        %2498 = vmatpush1.msra.mxu0 0.0
        %2499 = vmatprep.subr.mxu0 0.0
        %2500 = vmatpush1.msra.mxu0 0.0
        %2501 = vmatprep.subr.mxu0 0.0
        %2502 = vmatpush1.msra.mxu0 0.0
        %2503 = vmatprep.subr.mxu0 0.0
        %2504 = vmatpush1.msra.mxu0 0.0
        %2505 = vmatprep.subr.mxu0 0.0
        %2506 = vmatpush1.msra.mxu0 0.0
        %2507 = vmatprep.subr.mxu0 0.0
        %2508 = vmatpush1.msra.mxu0 0.0
        %2509 = vmatprep.subr.mxu0 0.0
        %2510 = vmatpush1.msra.mxu0 0.0
        %2511 = vmatprep.subr.mxu0 0.0
        %2512 = vmatpush1.msra.mxu0 0.0
        %2513 = vmatprep.subr.mxu0 0.0
        %2514 = vmatpush1.msra.mxu0 0.0
        %2515 = vmatprep.subr.mxu0 0.0
        %2516 = vmatpush1.msra.mxu0 0.0
        %2517 = vmatprep.subr.mxu0 0.0
        %2518 = vmatpush1.msra.mxu0 0.0
        %2519 = vmatprep.subr.mxu0 0.0
        %2520 = vmatpush1.msra.mxu0 0.0
        %2521 = vmatprep.subr.mxu0 0.0
        %2522 = vmatpush1.msra.mxu0 0.0
        %2523 = vmatprep.subr.mxu0 0.0
        %2524 = vmatpush1.msra.mxu0 0.0
        %2525 = vmatprep.subr.mxu0 0.0
        %2526 = vmatpush1.msra.mxu0 0.0
        %2527 = vmatprep.subr.mxu0 0.0
        %2528 = vmatpush1.msra.mxu0 0.0
        %2529 = vmatprep.subr.mxu0 0.0
        %2530 = vmatpush1.msra.mxu0 0.0
        %2531 = vmatprep.mubr.f32.mxu0 0.0
        %2532 = vmatmul.mubr.f32.gmra.mrb[0].mxu0 %v2462
        %v2533 = vpop.f32.mrb[0].mxu0
        %v2534 = vadd.f32 0.0, %v2533
        %v2535 = vpop.f32.mrb[0].mxu0
        %2536 = vmatprep.mubr.f32.mxu0 0.0
        %2537 = vmatmul.mubr.f32.gmra.mrb[0].mxu0 %v2465
        %v2538 = vpop.f32.mrb[0].mxu0
        %v2539 = vadd.f32 0.0, %v2538
        %v2540 = vpop.f32.mrb[0].mxu0
        %2541 = vdwg.mxu0
        %v2542 = vcombine.low %v2291, %v2453
        %v2543 = vcombine.high %v2291, %v2453
        %v2545 = vunpack.c.l.s4 1983009808
        %v2546 = vunpack.c.0.s8 %v2545
        %v2547 = vlaneseq
        %v2548 = vshrl.u32 %v2547, 7
        %v2549 = vsub.s32 %v2546, %v2548
        %v2550 = vrot.slane %v2542, %v2549
        %v2552 = vunpack.c.l.s4 1983009808
        %v2553 = vunpack.c.0.s8 %v2552
        %v2554 = vlaneseq
        %v2555 = vshrl.u32 %v2554, 7
        %v2556 = vsub.s32 %v2553, %v2555
        %v2557 = vrot.slane %v2543, %v2556
        %v2558 = vcombine.low %v2372, %v2534
        %v2559 = vcombine.high %v2372, %v2534
        %v2561 = vunpack.c.l.s4 1983009808
        %v2562 = vunpack.c.0.s8 %v2561
        %v2563 = vlaneseq
        %v2564 = vshrl.u32 %v2563, 7
        %v2565 = vsub.s32 %v2562, %v2564
        %v2566 = vrot.slane %v2558, %v2565
        %v2568 = vunpack.c.l.s4 1983009808
        %v2569 = vunpack.c.0.s8 %v2568
        %v2570 = vlaneseq
        %v2571 = vshrl.u32 %v2570, 7
        %v2572 = vsub.s32 %v2569, %v2571
        %v2573 = vrot.slane %v2559, %v2572
        %v2574 = vcombine.low %v2550, %v2566
        %v2575 = vcombine.high %v2550, %v2566
        %v2577 = vunpack.c.l.s4 1934713408
        %v2578 = vunpack.c.0.s8 %v2577
        %v2579 = vlaneseq
        %v2580 = vshrl.u32 %v2579, 7
        %v2581 = vsub.s32 %v2578, %v2580
        %v2582 = vrot.slane %v2574, %v2581
        %v2584 = vunpack.c.l.s4 1934713408
        %v2585 = vunpack.c.0.s8 %v2584
        %v2586 = vlaneseq
        %v2587 = vshrl.u32 %v2586, 7
        %v2588 = vsub.s32 %v2585, %v2587
        %v2589 = vrot.slane %v2575, %v2588
        %v2590 = vcombine.low %v2557, %v2573
        %v2591 = vcombine.high %v2557, %v2573
        %v2593 = vunpack.c.l.s4 1934713408
        %v2594 = vunpack.c.0.s8 %v2593
        %v2595 = vlaneseq
        %v2596 = vshrl.u32 %v2595, 7
        %v2597 = vsub.s32 %v2594, %v2596
        %v2598 = vrot.slane %v2590, %v2597
        %v2600 = vunpack.c.l.s4 1934713408
        %v2601 = vunpack.c.0.s8 %v2600
        %v2602 = vlaneseq
        %v2603 = vshrl.u32 %v2602, 7
        %v2604 = vsub.s32 %v2601, %v2603
        %v2605 = vrot.slane %v2591, %v2604
        %v2606 = vcombine.high %v2582, 0.0
        %v2607 = vcombine.high %v2589, 0.0
        %v2608 = vcombine.high %v2598, 0.0
        %v2609 = vcombine.high %v2605, 0.0
        %v2610 = vcombine.low %v2296, %v2458
        %v2611 = vcombine.high %v2296, %v2458
        %v2613 = vunpack.c.l.s4 1983009808
        %v2614 = vunpack.c.0.s8 %v2613
        %v2615 = vlaneseq
        %v2616 = vshrl.u32 %v2615, 7
        %v2617 = vsub.s32 %v2614, %v2616
        %v2618 = vrot.slane %v2610, %v2617
        %v2620 = vunpack.c.l.s4 1983009808
        %v2621 = vunpack.c.0.s8 %v2620
        %v2622 = vlaneseq
        %v2623 = vshrl.u32 %v2622, 7
        %v2624 = vsub.s32 %v2621, %v2623
        %v2625 = vrot.slane %v2611, %v2624
        %v2626 = vcombine.low %v2377, %v2539
        %v2627 = vcombine.high %v2377, %v2539
        %v2629 = vunpack.c.l.s4 1983009808
        %v2630 = vunpack.c.0.s8 %v2629
        %v2631 = vlaneseq
        %v2632 = vshrl.u32 %v2631, 7
        %v2633 = vsub.s32 %v2630, %v2632
        %v2634 = vrot.slane %v2626, %v2633
        %v2636 = vunpack.c.l.s4 1983009808
        %v2637 = vunpack.c.0.s8 %v2636
        %v2638 = vlaneseq
        %v2639 = vshrl.u32 %v2638, 7
        %v2640 = vsub.s32 %v2637, %v2639
        %v2641 = vrot.slane %v2627, %v2640
        %v2642 = vcombine.low %v2618, %v2634
        %v2643 = vcombine.high %v2618, %v2634
        %v2645 = vunpack.c.l.s4 1934713408
        %v2646 = vunpack.c.0.s8 %v2645
        %v2647 = vlaneseq
        %v2648 = vshrl.u32 %v2647, 7
        %v2649 = vsub.s32 %v2646, %v2648
        %v2650 = vrot.slane %v2642, %v2649
        %v2652 = vunpack.c.l.s4 1934713408
        %v2653 = vunpack.c.0.s8 %v2652
        %v2654 = vlaneseq
        %v2655 = vshrl.u32 %v2654, 7
        %v2656 = vsub.s32 %v2653, %v2655
        %v2657 = vrot.slane %v2643, %v2656
        %v2658 = vcombine.low %v2625, %v2641
        %v2659 = vcombine.high %v2625, %v2641
        %v2661 = vunpack.c.l.s4 1934713408
        %v2662 = vunpack.c.0.s8 %v2661
        %v2663 = vlaneseq
        %v2664 = vshrl.u32 %v2663, 7
        %v2665 = vsub.s32 %v2662, %v2664
        %v2666 = vrot.slane %v2658, %v2665
        %v2668 = vunpack.c.l.s4 1934713408
        %v2669 = vunpack.c.0.s8 %v2668
        %v2670 = vlaneseq
        %v2671 = vshrl.u32 %v2670, 7
        %v2672 = vsub.s32 %v2669, %v2671
        %v2673 = vrot.slane %v2659, %v2672
        %v2674 = vcombine.high %v2650, 0.0
        %v2675 = vcombine.high %v2657, 0.0
        %v2676 = vcombine.high %v2666, 0.0
        %v2677 = vcombine.high %v2673, 0.0
        %v2678 = vcombine.low %v2582, %v2589
        %v2680 = vunpack.c.l.s4 1983009808
        %v2681 = vunpack.c.0.s8 %v2680
        %v2682 = vlaneseq
        %v2683 = vshrl.u32 %v2682, 7
        %v2684 = vsub.s32 %v2681, %v2683
        %v2685 = vrot.slane %v2678, %v2684
        %v2686 = vcombine.low %v2606, %v2607
        %v2688 = vunpack.c.l.s4 1983009808
        %v2689 = vunpack.c.0.s8 %v2688
        %v2690 = vlaneseq
        %v2691 = vshrl.u32 %v2690, 7
        %v2692 = vsub.s32 %v2689, %v2691
        %v2693 = vrot.slane %v2686, %v2692
        %v2694 = vcombine.low %v2598, %v2605
        %v2696 = vunpack.c.l.s4 1983009808
        %v2697 = vunpack.c.0.s8 %v2696
        %v2698 = vlaneseq
        %v2699 = vshrl.u32 %v2698, 7
        %v2700 = vsub.s32 %v2697, %v2699
        %v2701 = vrot.slane %v2694, %v2700
        %v2702 = vcombine.low %v2608, %v2609
        %v2704 = vunpack.c.l.s4 1983009808
        %v2705 = vunpack.c.0.s8 %v2704
        %v2706 = vlaneseq
        %v2707 = vshrl.u32 %v2706, 7
        %v2708 = vsub.s32 %v2705, %v2707
        %v2709 = vrot.slane %v2702, %v2708
        %v2710 = vcombine.low %v2685, %v2693
        %v2711 = vcombine.high %v2685, %v2693
        %v2713 = vunpack.c.l.s4 1934713408
        %v2714 = vunpack.c.0.s8 %v2713
        %v2715 = vlaneseq
        %v2716 = vshrl.u32 %v2715, 7
        %v2717 = vsub.s32 %v2714, %v2716
        %v2718 = vrot.slane %v2710, %v2717
        %v2720 = vunpack.c.l.s4 1934713408
        %v2721 = vunpack.c.0.s8 %v2720
        %v2722 = vlaneseq
        %v2723 = vshrl.u32 %v2722, 7
        %v2724 = vsub.s32 %v2721, %v2723
        %v2725 = vrot.slane %v2711, %v2724
        %v2726 = vcombine.low %v2701, %v2709
        %v2727 = vcombine.high %v2701, %v2709
        %v2729 = vunpack.c.l.s4 1934713408
        %v2730 = vunpack.c.0.s8 %v2729
        %v2731 = vlaneseq
        %v2732 = vshrl.u32 %v2731, 7
        %v2733 = vsub.s32 %v2730, %v2732
        %v2734 = vrot.slane %v2726, %v2733
        %v2736 = vunpack.c.l.s4 1934713408
        %v2737 = vunpack.c.0.s8 %v2736
        %v2738 = vlaneseq
        %v2739 = vshrl.u32 %v2738, 7
        %v2740 = vsub.s32 %v2737, %v2739
        %v2741 = vrot.slane %v2727, %v2740
        %v2742 = vcombine.low %v2718, %v2734
        %v2743 = vcombine.high %v2718, %v2734
        %v2744 = vcombine.low %v2725, %v2741
        %v2745 = vcombine.high %v2725, %v2741
        %v2746 = vcombine.low %v2650, %v2657
        %v2748 = vunpack.c.l.s4 1983009808
        %v2749 = vunpack.c.0.s8 %v2748
        %v2750 = vlaneseq
        %v2751 = vshrl.u32 %v2750, 7
        %v2752 = vsub.s32 %v2749, %v2751
        %v2753 = vrot.slane %v2746, %v2752
        %v2754 = vcombine.low %v2674, %v2675
        %v2756 = vunpack.c.l.s4 1983009808
        %v2757 = vunpack.c.0.s8 %v2756
        %v2758 = vlaneseq
        %v2759 = vshrl.u32 %v2758, 7
        %v2760 = vsub.s32 %v2757, %v2759
        %v2761 = vrot.slane %v2754, %v2760
        %v2762 = vcombine.low %v2666, %v2673
        %v2764 = vunpack.c.l.s4 1983009808
        %v2765 = vunpack.c.0.s8 %v2764
        %v2766 = vlaneseq
        %v2767 = vshrl.u32 %v2766, 7
        %v2768 = vsub.s32 %v2765, %v2767
        %v2769 = vrot.slane %v2762, %v2768
        %v2770 = vcombine.low %v2676, %v2677
        %v2772 = vunpack.c.l.s4 1983009808
        %v2773 = vunpack.c.0.s8 %v2772
        %v2774 = vlaneseq
        %v2775 = vshrl.u32 %v2774, 7
        %v2776 = vsub.s32 %v2773, %v2775
        %v2777 = vrot.slane %v2770, %v2776
        %v2778 = vcombine.low %v2753, %v2761
        %v2779 = vcombine.high %v2753, %v2761
        %v2781 = vunpack.c.l.s4 1934713408
        %v2782 = vunpack.c.0.s8 %v2781
        %v2783 = vlaneseq
        %v2784 = vshrl.u32 %v2783, 7
        %v2785 = vsub.s32 %v2782, %v2784
        %v2786 = vrot.slane %v2778, %v2785
        %v2788 = vunpack.c.l.s4 1934713408
        %v2789 = vunpack.c.0.s8 %v2788
        %v2790 = vlaneseq
        %v2791 = vshrl.u32 %v2790, 7
        %v2792 = vsub.s32 %v2789, %v2791
        %v2793 = vrot.slane %v2779, %v2792
        %v2794 = vcombine.low %v2769, %v2777
        %v2795 = vcombine.high %v2769, %v2777
        %v2797 = vunpack.c.l.s4 1934713408
        %v2798 = vunpack.c.0.s8 %v2797
        %v2799 = vlaneseq
        %v2800 = vshrl.u32 %v2799, 7
        %v2801 = vsub.s32 %v2798, %v2800
        %v2802 = vrot.slane %v2794, %v2801
        %v2804 = vunpack.c.l.s4 1934713408
        %v2805 = vunpack.c.0.s8 %v2804
        %v2806 = vlaneseq
        %v2807 = vshrl.u32 %v2806, 7
        %v2808 = vsub.s32 %v2805, %v2807
        %v2809 = vrot.slane %v2795, %v2808
        %v2810 = vcombine.low %v2786, %v2802
        %v2811 = vcombine.high %v2786, %v2802
        %v2812 = vcombine.low %v2793, %v2809
        %v2813 = vcombine.high %v2793, %v2809
        %2816 = vrot.lane.b32.xlu0 %v2743, 32
        %v2817 = vpop.permute.xlu0 %2816
        %2818 = vrot.lane.b32.xlu0 %v2811, 32
        %v2819 = vpop.permute.xlu0 %2818
        %2824 = vrot.lane.b32.xlu0 %v2744, 64
        %v2825 = vpop.permute.xlu0 %2824
        %2826 = vrot.lane.b32.xlu0 %v2812, 64
        %v2827 = vpop.permute.xlu0 %2826
        %2832 = vrot.lane.b32.xlu0 %v2745, 96
        %v2833 = vpop.permute.xlu0 %2832
        %2834 = vrot.lane.b32.xlu0 %v2813, 96
        %v2835 = vpop.permute.xlu0 %2834
        %v2838 = vsel %vm1753, %v2742, %v2817
        %v2839 = vsel %vm1753, %v2810, %v2819
        %vm2840 = vcmask 523264
        %v2841 = vsel %vm2840, %v2838, %v2825
        %v2842 = vsel %vm2840, %v2839, %v2827
        %vm2843 = vcmask 785408
        %v2844 = vsel %vm2843, %v2841, %v2833
        %v2845 = vsel %vm2843, %v2842, %v2835
        %v2846 = vld [vmem:[#allocation10] sm:$0xff]
        %v2847 = vld [vmem:[#allocation10 + $0x8] sm:$0xff]
        %v2848 = vld [vmem:[#allocation10 + $0x10] sm:$0xff]
        %v2849 = vld [vmem:[#allocation10 + $0x18] sm:$0xff]
        %v2850 = vld [vmem:[#allocation10 + $0x20] sm:$0xff]
        %v2851 = vld [vmem:[#allocation10 + $0x28] sm:$0xff]
        %v2852 = vld [vmem:[#allocation10 + $0x30] sm:$0xff]
        %v2853 = vld [vmem:[#allocation10 + $0x38] sm:$0xff]
        %v2854 = vld [vmem:[#allocation10 + $0x40] sm:$0xff]
        %v2855 = vld [vmem:[#allocation10 + $0x48] sm:$0xff]
        %v2856 = vld [vmem:[#allocation10 + $0x50] sm:$0xff]
        %v2857 = vld [vmem:[#allocation10 + $0x58] sm:$0xff]
        %v2858 = vld [vmem:[#allocation10 + $0x60] sm:$0xff]
        %v2859 = vld [vmem:[#allocation10 + $0x68] sm:$0xff]
        %v2860 = vld [vmem:[#allocation10 + $0x70] sm:$0xff]
        %v2861 = vld [vmem:[#allocation10 + $0x78] sm:$0xff]
        %v2862 = vld [vmem:[%s5] sm:$0x1]
        %v2864 = vlaneseq
        %v2865 = vshrl.u32 %v2864, 7
        %v2866 = vsub.s32 0, %v2865
        %v2867 = vrot.slane %v2862, %v2866
        %2869 = vmatprep.subr.mxu0 0.0
        %2870 = vmatpush1.msra.mxu0 %v2846
        %2871 = vmatprep.subr.mxu0 0.0
        %2872 = vmatpush1.msra.mxu0 %v2847
        %2873 = vmatprep.subr.mxu0 0.0
        %2874 = vmatpush1.msra.mxu0 %v2848
        %2875 = vmatprep.subr.mxu0 0.0
        %2876 = vmatpush1.msra.mxu0 %v2849
        %2877 = vmatprep.subr.mxu0 0.0
        %2878 = vmatpush1.msra.mxu0 %v2850
        %2879 = vmatprep.subr.mxu0 0.0
        %2880 = vmatpush1.msra.mxu0 %v2851
        %2881 = vmatprep.subr.mxu0 0.0
        %2882 = vmatpush1.msra.mxu0 %v2852
        %2883 = vmatprep.subr.mxu0 0.0
        %2884 = vmatpush1.msra.mxu0 %v2853
        %2885 = vmatprep.subr.mxu0 0.0
        %2886 = vmatpush1.msra.mxu0 %v2854
        %2887 = vmatprep.subr.mxu0 0.0
        %2888 = vmatpush1.msra.mxu0 %v2855
        %2889 = vmatprep.subr.mxu0 0.0
        %2890 = vmatpush1.msra.mxu0 %v2856
        %2891 = vmatprep.subr.mxu0 0.0
        %2892 = vmatpush1.msra.mxu0 %v2857
        %2893 = vmatprep.subr.mxu0 0.0
        %2894 = vmatpush1.msra.mxu0 %v2858
        %2895 = vmatprep.subr.mxu0 0.0
        %2896 = vmatpush1.msra.mxu0 %v2859
        %2897 = vmatprep.subr.mxu0 0.0
        %2898 = vmatpush1.msra.mxu0 %v2860
        %2899 = vmatprep.subr.mxu0 0.0
        %2900 = vmatpush1.msra.mxu0 %v2861
        %2901 = vmatprep.subr.mxu0 0.0
        %2902 = vmatpush1.msra.mxu0 0.0
        %2903 = vmatprep.subr.mxu0 0.0
        %2904 = vmatpush1.msra.mxu0 0.0
        %2905 = vmatprep.subr.mxu0 0.0
        %2906 = vmatpush1.msra.mxu0 0.0
        %2907 = vmatprep.subr.mxu0 0.0
        %2908 = vmatpush1.msra.mxu0 0.0
        %2909 = vmatprep.subr.mxu0 0.0
        %2910 = vmatpush1.msra.mxu0 0.0
        %2911 = vmatprep.subr.mxu0 0.0
        %2912 = vmatpush1.msra.mxu0 0.0
        %2913 = vmatprep.subr.mxu0 0.0
        %2914 = vmatpush1.msra.mxu0 0.0
        %2915 = vmatprep.subr.mxu0 0.0
        %2916 = vmatpush1.msra.mxu0 0.0
        %2917 = vmatprep.subr.mxu0 0.0
        %2918 = vmatpush1.msra.mxu0 0.0
        %2919 = vmatprep.subr.mxu0 0.0
        %2920 = vmatpush1.msra.mxu0 0.0
        %2921 = vmatprep.subr.mxu0 0.0
        %2922 = vmatpush1.msra.mxu0 0.0
        %2923 = vmatprep.subr.mxu0 0.0
        %2924 = vmatpush1.msra.mxu0 0.0
        %2925 = vmatprep.subr.mxu0 0.0
        %2926 = vmatpush1.msra.mxu0 0.0
        %2927 = vmatprep.subr.mxu0 0.0
        %2928 = vmatpush1.msra.mxu0 0.0
        %2929 = vmatprep.subr.mxu0 0.0
        %2930 = vmatpush1.msra.mxu0 0.0
        %2931 = vmatprep.subr.mxu0 0.0
        %2932 = vmatpush1.msra.mxu0 0.0
        %2933 = vmatprep.mubr.f32.mxu0 0.0
        %2934 = vmatmul.mubr.f32.gmra.mrb[0].mxu0 %v2844
        %v2935 = vpop.f32.mrb[0].mxu0
        %v2936 = vadd.f32 %v2867, %v2935
        %v2937 = vpop.f32.mrb[0].mxu0
        %2938 = vmatprep.mubr.f32.mxu0 0.0
        %2939 = vmatmul.mubr.f32.gmra.mrb[0].mxu0 %v2845
        %v2940 = vpop.f32.mrb[0].mxu0
        %v2941 = vadd.f32 %v2867, %v2940
        %v2942 = vpop.f32.mrb[0].mxu0
        %2943 = vdwg.mxu0
        %v2944 = vadd.f32 %v600, %v2936
        %v2945 = vadd.f32 %v601, %v2941
        %v2946 = vld [vmem:[%s8] sm:$0x1]
        %v2947 = vld [vmem:[%s9] sm:$0x1]
        %2948 = vadd.xlane.f32.xlu0 %v2944
        %v2949 = vpop.xlane.xlu0 %2948
        %2950 = vadd.xlane.f32.xlu0 %v2945
        %v2951 = vpop.xlane.xlu0 %2950
        %v2952 = vmul.f32 %v2944, %v2944
        %v2953 = vmul.f32 %v2945, %v2945
        %2954 = vadd.xlane.f32.xlu0 %v2952
        %v2955 = vpop.xlane.xlu0 %2954
        %2956 = vadd.xlane.f32.xlu0 %v2953
        %v2957 = vpop.xlane.xlu0 %2956
        %v2958 = vmul.f32 %v2949, %v614
        %v2959 = vmul.f32 %v2951, %v614
        %v2960 = vmul.f32 %v2955, %v614
        %v2961 = vmul.f32 %v2957, %v614
        %v2962 = vmul.f32 %v2958, %v2958
        %v2963 = vmul.f32 %v2959, %v2959
        %v2964 = vsub.f32 %v2960, %v2962
        %v2965 = vsub.f32 %v2961, %v2963
        %v2966 = vsub.f32 %v2944, %v2958
        %v2967 = vsub.f32 %v2945, %v2959
        %v2968 = vadd.f32 %v2964, 1e-05
        %v2969 = vadd.f32 %v2965, 1e-05
        %v2970 = vrsqrt.pop %v2968
        %v2971 = vrsqrt.pop %v2969
        %v2972 = vmul.f32 %v2966, %v2970
        %v2973 = vmul.f32 %v2967, %v2971
        %v2975 = vlaneseq
        %v2976 = vshrl.u32 %v2975, 7
        %v2977 = vsub.s32 0, %v2976
        %v2978 = vrot.slane %v2946, %v2977
        %v2980 = vmul.f32 %v2972, %v2978
        %v2981 = vmul.f32 %v2973, %v2978
        %v2983 = vlaneseq
        %v2984 = vshrl.u32 %v2983, 7
        %v2985 = vsub.s32 0, %v2984
        %v2986 = vrot.slane %v2947, %v2985
        %v2988 = vadd.f32 %v2980, %v2986
        %v2989 = vadd.f32 %v2981, %v2986
        %v2990 = vld [vmem:[#allocation11] sm:$0xff]
        %v2991 = vld [vmem:[#allocation11 + $0x8] sm:$0xff]
        %v2992 = vld [vmem:[#allocation11 + $0x10] sm:$0xff]
        %v2993 = vld [vmem:[#allocation11 + $0x18] sm:$0xff]
        %v2994 = vld [vmem:[#allocation11 + $0x20] sm:$0xff]
        %v2995 = vld [vmem:[#allocation11 + $0x28] sm:$0xff]
        %v2996 = vld [vmem:[#allocation11 + $0x30] sm:$0xff]
        %v2997 = vld [vmem:[#allocation11 + $0x38] sm:$0xff]
        %v2998 = vld [vmem:[#allocation11 + $0x40] sm:$0xff]
        %v2999 = vld [vmem:[#allocation11 + $0x48] sm:$0xff]
        %v3000 = vld [vmem:[#allocation11 + $0x50] sm:$0xff]
        %v3001 = vld [vmem:[#allocation11 + $0x58] sm:$0xff]
        %v3002 = vld [vmem:[#allocation11 + $0x60] sm:$0xff]
        %v3003 = vld [vmem:[#allocation11 + $0x68] sm:$0xff]
        %v3004 = vld [vmem:[#allocation11 + $0x70] sm:$0xff]
        %v3005 = vld [vmem:[#allocation11 + $0x78] sm:$0xff]
        %v3006 = vld [vmem:[#allocation11 + $0x80] sm:$0xff]
        %v3007 = vld [vmem:[#allocation11 + $0x88] sm:$0xff]
        %v3008 = vld [vmem:[#allocation11 + $0x90] sm:$0xff]
        %v3009 = vld [vmem:[#allocation11 + $0x98] sm:$0xff]
        %v3010 = vld [vmem:[#allocation11 + $0xa0] sm:$0xff]
        %v3011 = vld [vmem:[#allocation11 + $0xa8] sm:$0xff]
        %v3012 = vld [vmem:[#allocation11 + $0xb0] sm:$0xff]
        %v3013 = vld [vmem:[#allocation11 + $0xb8] sm:$0xff]
        %v3014 = vld [vmem:[#allocation11 + $0xc0] sm:$0xff]
        %v3015 = vld [vmem:[#allocation11 + $0xc8] sm:$0xff]
        %v3016 = vld [vmem:[#allocation11 + $0xd0] sm:$0xff]
        %v3017 = vld [vmem:[#allocation11 + $0xd8] sm:$0xff]
        %v3018 = vld [vmem:[#allocation11 + $0xe0] sm:$0xff]
        %v3019 = vld [vmem:[#allocation11 + $0xe8] sm:$0xff]
        %v3020 = vld [vmem:[#allocation11 + $0xf0] sm:$0xff]
        %v3021 = vld [vmem:[#allocation11 + $0xf8] sm:$0xff]
        %v3022 = vld [vmem:[#allocation11 + $0x100] sm:$0xff]
        %v3023 = vld [vmem:[#allocation11 + $0x108] sm:$0xff]
        %v3024 = vld [vmem:[#allocation11 + $0x110] sm:$0xff]
        %v3025 = vld [vmem:[#allocation11 + $0x118] sm:$0xff]
        %v3026 = vld [vmem:[#allocation11 + $0x120] sm:$0xff]
        %v3027 = vld [vmem:[#allocation11 + $0x128] sm:$0xff]
        %v3028 = vld [vmem:[#allocation11 + $0x130] sm:$0xff]
        %v3029 = vld [vmem:[#allocation11 + $0x138] sm:$0xff]
        %v3030 = vld [vmem:[#allocation11 + $0x140] sm:$0xff]
        %v3031 = vld [vmem:[#allocation11 + $0x148] sm:$0xff]
        %v3032 = vld [vmem:[#allocation11 + $0x150] sm:$0xff]
        %v3033 = vld [vmem:[#allocation11 + $0x158] sm:$0xff]
        %v3034 = vld [vmem:[#allocation11 + $0x160] sm:$0xff]
        %v3035 = vld [vmem:[#allocation11 + $0x168] sm:$0xff]
        %v3036 = vld [vmem:[#allocation11 + $0x170] sm:$0xff]
        %v3037 = vld [vmem:[#allocation11 + $0x178] sm:$0xff]
        %v3038 = vld [vmem:[#allocation11 + $0x180] sm:$0xff]
        %v3039 = vld [vmem:[#allocation11 + $0x188] sm:$0xff]
        %v3040 = vld [vmem:[#allocation11 + $0x190] sm:$0xff]
        %v3041 = vld [vmem:[#allocation11 + $0x198] sm:$0xff]
        %v3042 = vld [vmem:[#allocation11 + $0x1a0] sm:$0xff]
        %v3043 = vld [vmem:[#allocation11 + $0x1a8] sm:$0xff]
        %v3044 = vld [vmem:[#allocation11 + $0x1b0] sm:$0xff]
        %v3045 = vld [vmem:[#allocation11 + $0x1b8] sm:$0xff]
        %v3046 = vld [vmem:[#allocation11 + $0x1c0] sm:$0xff]
        %v3047 = vld [vmem:[#allocation11 + $0x1c8] sm:$0xff]
        %v3048 = vld [vmem:[#allocation11 + $0x1d0] sm:$0xff]
        %v3049 = vld [vmem:[#allocation11 + $0x1d8] sm:$0xff]
        %v3050 = vld [vmem:[#allocation11 + $0x1e0] sm:$0xff]
        %v3051 = vld [vmem:[#allocation11 + $0x1e8] sm:$0xff]
        %v3052 = vld [vmem:[#allocation11 + $0x1f0] sm:$0xff]
        %v3053 = vld [vmem:[#allocation11 + $0x1f8] sm:$0xff]
        %v3054 = vld [vmem:[%s11] sm:$0xf]
        %v3056 = vlaneseq
        %v3057 = vshrl.u32 %v3056, 7
        %v3058 = vsub.s32 0, %v3057
        %v3059 = vrot.slane %v3054, %v3058
        %v3060 = vlaneseq
        %v3061 = vshrl.u32 %v3060, 7
        %v3062 = vsub.s32 1, %v3061
        %v3063 = vrot.slane %v3054, %v3062
        %v3064 = vlaneseq
        %v3065 = vshrl.u32 %v3064, 7
        %v3066 = vsub.s32 2, %v3065
        %v3067 = vrot.slane %v3054, %v3066
        %v3068 = vlaneseq
        %v3069 = vshrl.u32 %v3068, 7
        %v3070 = vsub.s32 3, %v3069
        %v3071 = vrot.slane %v3054, %v3070
        %3076 = vmatprep.subr.mxu0 %v2991
        %3077 = vmatpush1.msra.mxu0 %v2990
        %3078 = vmatprep.subr.mxu0 %v2995
        %3079 = vmatpush1.msra.mxu0 %v2994
        %3080 = vmatprep.subr.mxu0 %v2999
        %3081 = vmatpush1.msra.mxu0 %v2998
        %3082 = vmatprep.subr.mxu0 %v3003
        %3083 = vmatpush1.msra.mxu0 %v3002
        %3084 = vmatprep.subr.mxu0 %v3007
        %3085 = vmatpush1.msra.mxu0 %v3006
        %3086 = vmatprep.subr.mxu0 %v3011
        %3087 = vmatpush1.msra.mxu0 %v3010
        %3088 = vmatprep.subr.mxu0 %v3015
        %3089 = vmatpush1.msra.mxu0 %v3014
        %3090 = vmatprep.subr.mxu0 %v3019
        %3091 = vmatpush1.msra.mxu0 %v3018
        %3092 = vmatprep.subr.mxu0 %v3023
        %3093 = vmatpush1.msra.mxu0 %v3022
        %3094 = vmatprep.subr.mxu0 %v3027
        %3095 = vmatpush1.msra.mxu0 %v3026
        %3096 = vmatprep.subr.mxu0 %v3031
        %3097 = vmatpush1.msra.mxu0 %v3030
        %3098 = vmatprep.subr.mxu0 %v3035
        %3099 = vmatpush1.msra.mxu0 %v3034
        %3100 = vmatprep.subr.mxu0 %v3039
        %3101 = vmatpush1.msra.mxu0 %v3038
        %3102 = vmatprep.subr.mxu0 %v3043
        %3103 = vmatpush1.msra.mxu0 %v3042
        %3104 = vmatprep.subr.mxu0 %v3047
        %3105 = vmatpush1.msra.mxu0 %v3046
        %3106 = vmatprep.subr.mxu0 %v3051
        %3107 = vmatpush1.msra.mxu0 %v3050
        %3108 = vmatprep.subr.mxu0 0.0
        %3109 = vmatpush1.msra.mxu0 0.0
        %3110 = vmatprep.subr.mxu0 0.0
        %3111 = vmatpush1.msra.mxu0 0.0
        %3112 = vmatprep.subr.mxu0 0.0
        %3113 = vmatpush1.msra.mxu0 0.0
        %3114 = vmatprep.subr.mxu0 0.0
        %3115 = vmatpush1.msra.mxu0 0.0
        %3116 = vmatprep.subr.mxu0 0.0
        %3117 = vmatpush1.msra.mxu0 0.0
        %3118 = vmatprep.subr.mxu0 0.0
        %3119 = vmatpush1.msra.mxu0 0.0
        %3120 = vmatprep.subr.mxu0 0.0
        %3121 = vmatpush1.msra.mxu0 0.0
        %3122 = vmatprep.subr.mxu0 0.0
        %3123 = vmatpush1.msra.mxu0 0.0
        %3124 = vmatprep.subr.mxu0 0.0
        %3125 = vmatpush1.msra.mxu0 0.0
        %3126 = vmatprep.subr.mxu0 0.0
        %3127 = vmatpush1.msra.mxu0 0.0
        %3128 = vmatprep.subr.mxu0 0.0
        %3129 = vmatpush1.msra.mxu0 0.0
        %3130 = vmatprep.subr.mxu0 0.0
        %3131 = vmatpush1.msra.mxu0 0.0
        %3132 = vmatprep.subr.mxu0 0.0
        %3133 = vmatpush1.msra.mxu0 0.0
        %3134 = vmatprep.subr.mxu0 0.0
        %3135 = vmatpush1.msra.mxu0 0.0
        %3136 = vmatprep.subr.mxu0 0.0
        %3137 = vmatpush1.msra.mxu0 0.0
        %3138 = vmatprep.subr.mxu0 0.0
        %3139 = vmatpush1.msra.mxu0 0.0
        %3140 = vmatprep.mubr.f32.mxu0 0.0
        %3141 = vmatmul.mubr.f32.gmra.mrb[0].mxu0 %v2988
        %v3142 = vpop.f32.mrb[0].mxu0
        %v3143 = vadd.f32 %v3059, %v3142
        %v3144 = vpop.f32.mrb[0].mxu0
        %v3145 = vadd.f32 %v3063, %v3144
        %3146 = vmatprep.mubr.f32.mxu0 0.0
        %3147 = vmatmul.mubr.f32.gmra.mrb[0].mxu0 %v2989
        %v3148 = vpop.f32.mrb[0].mxu0
        %v3149 = vadd.f32 %v3059, %v3148
        %v3150 = vpop.f32.mrb[0].mxu0
        %v3151 = vadd.f32 %v3063, %v3150
        %3152 = vdwg.mxu0
        %3153 = vmatprep.subr.mxu0 %v2993
        %3154 = vmatpush1.msra.mxu0 %v2992
        %3155 = vmatprep.subr.mxu0 %v2997
        %3156 = vmatpush1.msra.mxu0 %v2996
        %3157 = vmatprep.subr.mxu0 %v3001
        %3158 = vmatpush1.msra.mxu0 %v3000
        %3159 = vmatprep.subr.mxu0 %v3005
        %3160 = vmatpush1.msra.mxu0 %v3004
        %3161 = vmatprep.subr.mxu0 %v3009
        %3162 = vmatpush1.msra.mxu0 %v3008
        %3163 = vmatprep.subr.mxu0 %v3013
        %3164 = vmatpush1.msra.mxu0 %v3012
        %3165 = vmatprep.subr.mxu0 %v3017
        %3166 = vmatpush1.msra.mxu0 %v3016
        %3167 = vmatprep.subr.mxu0 %v3021
        %3168 = vmatpush1.msra.mxu0 %v3020
        %3169 = vmatprep.subr.mxu0 %v3025
        %3170 = vmatpush1.msra.mxu0 %v3024
        %3171 = vmatprep.subr.mxu0 %v3029
        %3172 = vmatpush1.msra.mxu0 %v3028
        %3173 = vmatprep.subr.mxu0 %v3033
        %3174 = vmatpush1.msra.mxu0 %v3032
        %3175 = vmatprep.subr.mxu0 %v3037
        %3176 = vmatpush1.msra.mxu0 %v3036
        %3177 = vmatprep.subr.mxu0 %v3041
        %3178 = vmatpush1.msra.mxu0 %v3040
        %3179 = vmatprep.subr.mxu0 %v3045
        %3180 = vmatpush1.msra.mxu0 %v3044
        %3181 = vmatprep.subr.mxu0 %v3049
        %3182 = vmatpush1.msra.mxu0 %v3048
        %3183 = vmatprep.subr.mxu0 %v3053
        %3184 = vmatpush1.msra.mxu0 %v3052
        %3185 = vmatprep.subr.mxu0 0.0
        %3186 = vmatpush1.msra.mxu0 0.0
        %3187 = vmatprep.subr.mxu0 0.0
        %3188 = vmatpush1.msra.mxu0 0.0
        %3189 = vmatprep.subr.mxu0 0.0
        %3190 = vmatpush1.msra.mxu0 0.0
        %3191 = vmatprep.subr.mxu0 0.0
        %3192 = vmatpush1.msra.mxu0 0.0
        %3193 = vmatprep.subr.mxu0 0.0
        %3194 = vmatpush1.msra.mxu0 0.0
        %3195 = vmatprep.subr.mxu0 0.0
        %3196 = vmatpush1.msra.mxu0 0.0
        %3197 = vmatprep.subr.mxu0 0.0
        %3198 = vmatpush1.msra.mxu0 0.0
        %3199 = vmatprep.subr.mxu0 0.0
        %3200 = vmatpush1.msra.mxu0 0.0
        %3201 = vmatprep.subr.mxu0 0.0
        %3202 = vmatpush1.msra.mxu0 0.0
        %3203 = vmatprep.subr.mxu0 0.0
        %3204 = vmatpush1.msra.mxu0 0.0
        %3205 = vmatprep.subr.mxu0 0.0
        %3206 = vmatpush1.msra.mxu0 0.0
        %3207 = vmatprep.subr.mxu0 0.0
        %3208 = vmatpush1.msra.mxu0 0.0
        %3209 = vmatprep.subr.mxu0 0.0
        %3210 = vmatpush1.msra.mxu0 0.0
        %3211 = vmatprep.subr.mxu0 0.0
        %3212 = vmatpush1.msra.mxu0 0.0
        %3213 = vmatprep.subr.mxu0 0.0
        %3214 = vmatpush1.msra.mxu0 0.0
        %3215 = vmatprep.subr.mxu0 0.0
        %3216 = vmatpush1.msra.mxu0 0.0
        %3217 = vmatprep.mubr.f32.mxu0 0.0
        %3218 = vmatmul.mubr.f32.gmra.mrb[0].mxu0 %v2988
        %v3219 = vpop.f32.mrb[0].mxu0
        %v3220 = vadd.f32 %v3067, %v3219
        %v3221 = vpop.f32.mrb[0].mxu0
        %v3222 = vadd.f32 %v3071, %v3221
        %3223 = vmatprep.mubr.f32.mxu0 0.0
        %3224 = vmatmul.mubr.f32.gmra.mrb[0].mxu0 %v2989
        %v3225 = vpop.f32.mrb[0].mxu0
        %v3226 = vadd.f32 %v3067, %v3225
        %v3227 = vpop.f32.mrb[0].mxu0
        %v3228 = vadd.f32 %v3071, %v3227
        %3229 = vdwg.mxu0
        %v3230 = vmax.f32 %v3143, 0.0
        %v3231 = vmax.f32 %v3145, 0.0
        %v3232 = vmax.f32 %v3220, 0.0
        %v3233 = vmax.f32 %v3222, 0.0
        %v3234 = vmax.f32 %v3149, 0.0
        %v3235 = vmax.f32 %v3151, 0.0
        %v3236 = vmax.f32 %v3226, 0.0
        %v3237 = vmax.f32 %v3228, 0.0
        %v3238 = vld [vmem:[#allocation13] sm:$0xff]
        %v3239 = vld [vmem:[#allocation13 + $0x8] sm:$0xff]
        %v3240 = vld [vmem:[#allocation13 + $0x10] sm:$0xff]
        %v3241 = vld [vmem:[#allocation13 + $0x18] sm:$0xff]
        %v3242 = vld [vmem:[#allocation13 + $0x20] sm:$0xff]
        %v3243 = vld [vmem:[#allocation13 + $0x28] sm:$0xff]
        %v3244 = vld [vmem:[#allocation13 + $0x30] sm:$0xff]
        %v3245 = vld [vmem:[#allocation13 + $0x38] sm:$0xff]
        %v3246 = vld [vmem:[#allocation13 + $0x40] sm:$0xff]
        %v3247 = vld [vmem:[#allocation13 + $0x48] sm:$0xff]
        %v3248 = vld [vmem:[#allocation13 + $0x50] sm:$0xff]
        %v3249 = vld [vmem:[#allocation13 + $0x58] sm:$0xff]
        %v3250 = vld [vmem:[#allocation13 + $0x60] sm:$0xff]
        %v3251 = vld [vmem:[#allocation13 + $0x68] sm:$0xff]
        %v3252 = vld [vmem:[#allocation13 + $0x70] sm:$0xff]
        %v3253 = vld [vmem:[#allocation13 + $0x78] sm:$0xff]
        %v3254 = vld [vmem:[#allocation13 + $0x80] sm:$0xff]
        %v3255 = vld [vmem:[#allocation13 + $0x88] sm:$0xff]
        %v3256 = vld [vmem:[#allocation13 + $0x90] sm:$0xff]
        %v3257 = vld [vmem:[#allocation13 + $0x98] sm:$0xff]
        %v3258 = vld [vmem:[#allocation13 + $0xa0] sm:$0xff]
        %v3259 = vld [vmem:[#allocation13 + $0xa8] sm:$0xff]
        %v3260 = vld [vmem:[#allocation13 + $0xb0] sm:$0xff]
        %v3261 = vld [vmem:[#allocation13 + $0xb8] sm:$0xff]
        %v3262 = vld [vmem:[#allocation13 + $0xc0] sm:$0xff]
        %v3263 = vld [vmem:[#allocation13 + $0xc8] sm:$0xff]
        %v3264 = vld [vmem:[#allocation13 + $0xd0] sm:$0xff]
        %v3265 = vld [vmem:[#allocation13 + $0xd8] sm:$0xff]
        %v3266 = vld [vmem:[#allocation13 + $0xe0] sm:$0xff]
        %v3267 = vld [vmem:[#allocation13 + $0xe8] sm:$0xff]
        %v3268 = vld [vmem:[#allocation13 + $0xf0] sm:$0xff]
        %v3269 = vld [vmem:[#allocation13 + $0xf8] sm:$0xff]
        %v3270 = vld [vmem:[#allocation13 + $0x100] sm:$0xff]
        %v3271 = vld [vmem:[#allocation13 + $0x108] sm:$0xff]
        %v3272 = vld [vmem:[#allocation13 + $0x110] sm:$0xff]
        %v3273 = vld [vmem:[#allocation13 + $0x118] sm:$0xff]
        %v3274 = vld [vmem:[#allocation13 + $0x120] sm:$0xff]
        %v3275 = vld [vmem:[#allocation13 + $0x128] sm:$0xff]
        %v3276 = vld [vmem:[#allocation13 + $0x130] sm:$0xff]
        %v3277 = vld [vmem:[#allocation13 + $0x138] sm:$0xff]
        %v3278 = vld [vmem:[#allocation13 + $0x140] sm:$0xff]
        %v3279 = vld [vmem:[#allocation13 + $0x148] sm:$0xff]
        %v3280 = vld [vmem:[#allocation13 + $0x150] sm:$0xff]
        %v3281 = vld [vmem:[#allocation13 + $0x158] sm:$0xff]
        %v3282 = vld [vmem:[#allocation13 + $0x160] sm:$0xff]
        %v3283 = vld [vmem:[#allocation13 + $0x168] sm:$0xff]
        %v3284 = vld [vmem:[#allocation13 + $0x170] sm:$0xff]
        %v3285 = vld [vmem:[#allocation13 + $0x178] sm:$0xff]
        %v3286 = vld [vmem:[#allocation13 + $0x180] sm:$0xff]
        %v3287 = vld [vmem:[#allocation13 + $0x188] sm:$0xff]
        %v3288 = vld [vmem:[#allocation13 + $0x190] sm:$0xff]
        %v3289 = vld [vmem:[#allocation13 + $0x198] sm:$0xff]
        %v3290 = vld [vmem:[#allocation13 + $0x1a0] sm:$0xff]
        %v3291 = vld [vmem:[#allocation13 + $0x1a8] sm:$0xff]
        %v3292 = vld [vmem:[#allocation13 + $0x1b0] sm:$0xff]
        %v3293 = vld [vmem:[#allocation13 + $0x1b8] sm:$0xff]
        %v3294 = vld [vmem:[#allocation13 + $0x1c0] sm:$0xff]
        %v3295 = vld [vmem:[#allocation13 + $0x1c8] sm:$0xff]
        %v3296 = vld [vmem:[#allocation13 + $0x1d0] sm:$0xff]
        %v3297 = vld [vmem:[#allocation13 + $0x1d8] sm:$0xff]
        %v3298 = vld [vmem:[#allocation13 + $0x1e0] sm:$0xff]
        %v3299 = vld [vmem:[#allocation13 + $0x1e8] sm:$0xff]
        %v3300 = vld [vmem:[#allocation13 + $0x1f0] sm:$0xff]
        %v3301 = vld [vmem:[#allocation13 + $0x1f8] sm:$0xff]
        %v3302 = vld [vmem:[%s13] sm:$0x1]
        %v3304 = vlaneseq
        %v3305 = vshrl.u32 %v3304, 7
        %v3306 = vsub.s32 0, %v3305
        %v3307 = vrot.slane %v3302, %v3306
        %3309 = vmatprep.subr.mxu0 0.0
        %3310 = vmatpush1.msra.mxu0 %v3238
        %3311 = vmatprep.subr.mxu0 0.0
        %3312 = vmatpush1.msra.mxu0 %v3239
        %3313 = vmatprep.subr.mxu0 0.0
        %3314 = vmatpush1.msra.mxu0 %v3240
        %3315 = vmatprep.subr.mxu0 0.0
        %3316 = vmatpush1.msra.mxu0 %v3241
        %3317 = vmatprep.subr.mxu0 0.0
        %3318 = vmatpush1.msra.mxu0 %v3242
        %3319 = vmatprep.subr.mxu0 0.0
        %3320 = vmatpush1.msra.mxu0 %v3243
        %3321 = vmatprep.subr.mxu0 0.0
        %3322 = vmatpush1.msra.mxu0 %v3244
        %3323 = vmatprep.subr.mxu0 0.0
        %3324 = vmatpush1.msra.mxu0 %v3245
        %3325 = vmatprep.subr.mxu0 0.0
        %3326 = vmatpush1.msra.mxu0 %v3246
        %3327 = vmatprep.subr.mxu0 0.0
        %3328 = vmatpush1.msra.mxu0 %v3247
        %3329 = vmatprep.subr.mxu0 0.0
        %3330 = vmatpush1.msra.mxu0 %v3248
        %3331 = vmatprep.subr.mxu0 0.0
        %3332 = vmatpush1.msra.mxu0 %v3249
        %3333 = vmatprep.subr.mxu0 0.0
        %3334 = vmatpush1.msra.mxu0 %v3250
        %3335 = vmatprep.subr.mxu0 0.0
        %3336 = vmatpush1.msra.mxu0 %v3251
        %3337 = vmatprep.subr.mxu0 0.0
        %3338 = vmatpush1.msra.mxu0 %v3252
        %3339 = vmatprep.subr.mxu0 0.0
        %3340 = vmatpush1.msra.mxu0 %v3253
        %3341 = vmatprep.subr.mxu0 0.0
        %3342 = vmatpush1.msra.mxu0 %v3254
        %3343 = vmatprep.subr.mxu0 0.0
        %3344 = vmatpush1.msra.mxu0 %v3255
        %3345 = vmatprep.subr.mxu0 0.0
        %3346 = vmatpush1.msra.mxu0 %v3256
        %3347 = vmatprep.subr.mxu0 0.0
        %3348 = vmatpush1.msra.mxu0 %v3257
        %3349 = vmatprep.subr.mxu0 0.0
        %3350 = vmatpush1.msra.mxu0 %v3258
        %3351 = vmatprep.subr.mxu0 0.0
        %3352 = vmatpush1.msra.mxu0 %v3259
        %3353 = vmatprep.subr.mxu0 0.0
        %3354 = vmatpush1.msra.mxu0 %v3260
        %3355 = vmatprep.subr.mxu0 0.0
        %3356 = vmatpush1.msra.mxu0 %v3261
        %3357 = vmatprep.subr.mxu0 0.0
        %3358 = vmatpush1.msra.mxu0 %v3262
        %3359 = vmatprep.subr.mxu0 0.0
        %3360 = vmatpush1.msra.mxu0 %v3263
        %3361 = vmatprep.subr.mxu0 0.0
        %3362 = vmatpush1.msra.mxu0 %v3264
        %3363 = vmatprep.subr.mxu0 0.0
        %3364 = vmatpush1.msra.mxu0 %v3265
        %3365 = vmatprep.subr.mxu0 0.0
        %3366 = vmatpush1.msra.mxu0 %v3266
        %3367 = vmatprep.subr.mxu0 0.0
        %3368 = vmatpush1.msra.mxu0 %v3267
        %3369 = vmatprep.subr.mxu0 0.0
        %3370 = vmatpush1.msra.mxu0 %v3268
        %3371 = vmatprep.subr.mxu0 0.0
        %3372 = vmatpush1.msra.mxu0 %v3269
        %3373 = vmatprep.mubr.f32.mxu0 %v3231
        %3374 = vmatmul.mubr.f32.gmra.mrb[0].mxu0 %v3230
        %v3375 = vpop.f32.mrb[0].mxu0
        %v3376 = vadd.f32 %v3307, %v3375
        %v3377 = vpop.f32.mrb[0].mxu0
        %3378 = vmatprep.mubr.f32.mxu0 %v3235
        %3379 = vmatmul.mubr.f32.gmra.mrb[0].mxu0 %v3234
        %v3380 = vpop.f32.mrb[0].mxu0
        %v3381 = vadd.f32 %v3307, %v3380
        %v3382 = vpop.f32.mrb[0].mxu0
        %3383 = vdwg.mxu0
        %3384 = vmatprep.subr.mxu0 0.0
        %3385 = vmatpush1.msra.mxu0 %v3270
        %3386 = vmatprep.subr.mxu0 0.0
        %3387 = vmatpush1.msra.mxu0 %v3271
        %3388 = vmatprep.subr.mxu0 0.0
        %3389 = vmatpush1.msra.mxu0 %v3272
        %3390 = vmatprep.subr.mxu0 0.0
        %3391 = vmatpush1.msra.mxu0 %v3273
        %3392 = vmatprep.subr.mxu0 0.0
        %3393 = vmatpush1.msra.mxu0 %v3274
        %3394 = vmatprep.subr.mxu0 0.0
        %3395 = vmatpush1.msra.mxu0 %v3275
        %3396 = vmatprep.subr.mxu0 0.0
        %3397 = vmatpush1.msra.mxu0 %v3276
        %3398 = vmatprep.subr.mxu0 0.0
        %3399 = vmatpush1.msra.mxu0 %v3277
        %3400 = vmatprep.subr.mxu0 0.0
        %3401 = vmatpush1.msra.mxu0 %v3278
        %3402 = vmatprep.subr.mxu0 0.0
        %3403 = vmatpush1.msra.mxu0 %v3279
        %3404 = vmatprep.subr.mxu0 0.0
        %3405 = vmatpush1.msra.mxu0 %v3280
        %3406 = vmatprep.subr.mxu0 0.0
        %3407 = vmatpush1.msra.mxu0 %v3281
        %3408 = vmatprep.subr.mxu0 0.0
        %3409 = vmatpush1.msra.mxu0 %v3282
        %3410 = vmatprep.subr.mxu0 0.0
        %3411 = vmatpush1.msra.mxu0 %v3283
        %3412 = vmatprep.subr.mxu0 0.0
        %3413 = vmatpush1.msra.mxu0 %v3284
        %3414 = vmatprep.subr.mxu0 0.0
        %3415 = vmatpush1.msra.mxu0 %v3285
        %3416 = vmatprep.subr.mxu0 0.0
        %3417 = vmatpush1.msra.mxu0 %v3286
        %3418 = vmatprep.subr.mxu0 0.0
        %3419 = vmatpush1.msra.mxu0 %v3287
        %3420 = vmatprep.subr.mxu0 0.0
        %3421 = vmatpush1.msra.mxu0 %v3288
        %3422 = vmatprep.subr.mxu0 0.0
        %3423 = vmatpush1.msra.mxu0 %v3289
        %3424 = vmatprep.subr.mxu0 0.0
        %3425 = vmatpush1.msra.mxu0 %v3290
        %3426 = vmatprep.subr.mxu0 0.0
        %3427 = vmatpush1.msra.mxu0 %v3291
        %3428 = vmatprep.subr.mxu0 0.0
        %3429 = vmatpush1.msra.mxu0 %v3292
        %3430 = vmatprep.subr.mxu0 0.0
        %3431 = vmatpush1.msra.mxu0 %v3293
        %3432 = vmatprep.subr.mxu0 0.0
        %3433 = vmatpush1.msra.mxu0 %v3294
        %3434 = vmatprep.subr.mxu0 0.0
        %3435 = vmatpush1.msra.mxu0 %v3295
        %3436 = vmatprep.subr.mxu0 0.0
        %3437 = vmatpush1.msra.mxu0 %v3296
        %3438 = vmatprep.subr.mxu0 0.0
        %3439 = vmatpush1.msra.mxu0 %v3297
        %3440 = vmatprep.subr.mxu0 0.0
        %3441 = vmatpush1.msra.mxu0 %v3298
        %3442 = vmatprep.subr.mxu0 0.0
        %3443 = vmatpush1.msra.mxu0 %v3299
        %3444 = vmatprep.subr.mxu0 0.0
        %3445 = vmatpush1.msra.mxu0 %v3300
        %3446 = vmatprep.subr.mxu0 0.0
        %3447 = vmatpush1.msra.mxu0 %v3301
        %3448 = vmatprep.mubr.f32.mxu0 %v3233
        %3449 = vmatmul.mubr.f32.gmra.mrb[0].mxu0 %v3232
        %v3450 = vpop.f32.mrb[0].mxu0
        %v3451 = vadd.f32 %v3376, %v3450
        %v3452 = vpop.f32.mrb[0].mxu0
        %3453 = vmatprep.mubr.f32.mxu0 %v3237
        %3454 = vmatmul.mubr.f32.gmra.mrb[0].mxu0 %v3236
        %v3455 = vpop.f32.mrb[0].mxu0
        %v3456 = vadd.f32 %v3381, %v3455
        %v3457 = vpop.f32.mrb[0].mxu0
        %3458 = vdwg.mxu0
        %v3459 = vadd.f32 %v2944, %v3451
        %v3460 = vadd.f32 %v2945, %v3456
        %3461 = vst [vmem:[%s597] sm:$0xff] %v3459
        %3462 = vst [vmem:[%s597 + $0x8] sm:$0xff] %v3460
        %s3463 = sand.u32 %s348, 1
        %s3464 = scalar_lea.sflag [#allocation4], %s3463
        %s3465 = sand.u32 %s348, 1
        %s3466 = smul.addr %s3465, 16
        %s3467 = scalar_lea.vmem [#allocation14], %s3466
        // Predicated region
        $region105: #{tpu_custom_call.1} parent=75 // pred_check
          %p3468 = pneg %p358
        $region106: #{tpu_custom_call.1} parent=75 // pred_check_branch
          %3470 = sbr.rel (%p3468) target = $region108
        $region107: #{tpu_custom_call.1} parent=75 // pred_region
          %s3472 = ssub.s32 256, 256
          %3473 = vsyncadd %s3464, %s3472
          %s3474 = smul.addr %s36, 2
          %s3475 = smul.addr %s3474, 128
          %s3476 = scalar_lea.hbm %s14, %s3475
          %s3477 = sshll.u32 %s3467, 4
          %s3478 = int_to_ptr.vmem [resolvable:$true] %s3477
          %3483 = dma.vmem_to_hbm [thread:$0]  %s3478, 256, %s3476, %s3464, 128, 128, 8
        $region108: #{tpu_custom_call.1} parent=75 // pred_fallthru
          _
      $region76: #{tpu_custom_call.1} parent=5 // pred_fallthru
        _
      %p3484 = scmp.le.s32.totalorder 2, %s31
      // Predicated region
      $region109: #{tpu_custom_call.1} parent=5 // pred_check
        %p3485 = pneg %p3484
      $region110: #{tpu_custom_call.1} parent=5 // pred_check_branch
        %3487 = sbr.rel (%p3485) target = $region112
      $region111: #{tpu_custom_call.1} parent=5 // pred_region
        %s3488 = ssub.s32 %s31, 2
        // Predicated region
        $region113: #{tpu_custom_call.1} parent=111 // pred_check
          %p3489 = pneg %p364
        $region114: #{tpu_custom_call.1} parent=111 // pred_check_branch
          %3491 = sbr.rel (%p3489) target = $region116
        $region115: #{tpu_custom_call.1} parent=111 // pred_region
          %s3492 = sand.u32 %s349, 1
          %s3493 = scalar_lea.sflag [#allocation4], %s3492
          %s3494 = sand.u32 %s349, 1
          %s3495 = smul.addr %s3494, 16
          %s3496 = scalar_lea.vmem [#allocation14], %s3495
          %3497 = dma.done %s3493, 256
        $region116: #{tpu_custom_call.1} parent=111 // pred_fallthru
          _
      $region112: #{tpu_custom_call.1} parent=5 // pred_fallthru
        _
    $region6: #{tpu_custom_call.1} parent=1 // loop_footer
      %s35 = sadd.s32 1, %s31
    $region7: #{tpu_custom_call.1} parent=1 // loop_footer_branch
      %30 = sbr.rel target = $region3
    $region8: #{tpu_custom_call.1} parent=1 // loop_exit
      _
    %3498 = vsyncpa [#allocation3], 1
    %s3499 = scalar_lea.sflag [#allocation3], 1
    %3500 = vsyncpa %s3499, 1
    %3501 = vsyncpa [#allocation6], 1
    %s3502 = scalar_lea.sflag [#allocation6], 1
    %3503 = vsyncpa %s3502, 1
    %3504 = vsyncpa [#allocation9], 1
    %3505 = vsyncpa [#allocation12], 1
    %3506 = vsyncpa [#allocation4], 1
    %s3507 = scalar_lea.sflag [#allocation4], 1
    %3508 = vsyncpa %s3507, 1

</llo_original>
